<compile_context>
chip_gen: v5e
topology: v5e:2x2
jax: 0.10.0
libtpu: 0.0.40
codegen_flags: <defaults>
</compile_context>

<pallas_src>
import functools

import numpy as np
import jax
import jax.numpy as jnp
from jax.experimental import pallas as pl
from jax.experimental.pallas import tpu as pltpu

GROUPS = 32
_VMEM_ACT_BUDGET = 24 << 20      # activation budget used to size row tiles

# ----------------------------------------------------------------------------
# One-time capability probes (run eagerly, outside jit)
# ----------------------------------------------------------------------------
_ROLL_MODE = None                # "roll_np" | "roll_rev" | "slice"
_BUFFERED_OK = None              # pipeline_mode=pl.Buffered(1) supported?


def _init_roll_mode():
    """Determine pltpu.roll's sign convention once; fall back to slice-shift."""
    global _ROLL_MODE
    if _ROLL_MODE is not None:
        return _ROLL_MODE
    mode = "slice"
    try:
        def k(x_ref, o_ref):
            o_ref[...] = pltpu.roll(x_ref[...], 1, axis=0)

        x = np.arange(8 * 128, dtype=np.float32).reshape(8, 128)
        out = np.asarray(
            pl.pallas_call(
                k, out_shape=jax.ShapeDtypeStruct((8, 128), jnp.float32)
            )(jnp.asarray(x))
        )
        if np.array_equal(out, np.roll(x, 1, axis=0)):
            mode = "roll_np"       # out[i] = x[i - shift]
        elif np.array_equal(out, np.roll(x, -1, axis=0)):
            mode = "roll_rev"      # out[i] = x[i + shift]
    except Exception:
        mode = "slice"
    _ROLL_MODE = mode
    return mode


def _init_buffered_mode():
    """Probe single-buffered (pl.Buffered(1)) constant BlockSpecs."""
    global _BUFFERED_OK
    if _BUFFERED_OK is not None:
        return _BUFFERED_OK
    ok = False
    try:
        cspec = pl.BlockSpec((8, 128), lambda i: (0, 0),
                             pipeline_mode=pl.Buffered(1))

        def k(x_ref, w_ref, o_ref):
            o_ref[...] = x_ref[...] + w_ref[...]

        out = pl.pallas_call(
            k, out_shape=jax.ShapeDtypeStruct((16, 128), jnp.float32),
            grid=(2,),
            in_specs=[pl.BlockSpec((8, 128), lambda i: (i, 0)), cspec],
            out_specs=pl.BlockSpec((8, 128), lambda i: (i, 0)),
        )(jnp.ones((16, 128), jnp.float32), jnp.ones((8, 128), jnp.float32))
        ok = bool(np.asarray(out)[0, 0] == 2.0)
    except Exception:
        ok = False
    _BUFFERED_OK = ok
    return ok


# ----------------------------------------------------------------------------
# Temporal shift helper
# ----------------------------------------------------------------------------
def _shifted(y, mode):
    """Return (y_next, y_prev): y_next[i] = y[i+1], y_prev[i] = y[i-1].

    Tile-edge / batch-boundary rows are always zeroed by the caller's vl/vr
    masks (tiles hold whole batch elements), so circular wrap vs zero padding
    at the edges is immaterial.
    """
    tm = y.shape[0]
    if tm <= 1:
        z = jnp.zeros_like(y)
        return z, z
    if mode == "roll_np":
        y_prev = pltpu.roll(y, 1, axis=0)
        y_next = pltpu.roll(y, tm - 1, axis=0)
    elif mode == "roll_rev":
        y_next = pltpu.roll(y, 1, axis=0)
        y_prev = pltpu.roll(y, tm - 1, axis=0)
    else:  # "slice": zero-padded sublane shift (no MXU work, no probe needed)
        zrow = jnp.zeros((1, y.shape[1]), y.dtype)
        y_next = jnp.concatenate([y[1:], zrow], axis=0)
        y_prev = jnp.concatenate([zrow, y[:-1]], axis=0)
    return y_next, y_prev


# ----------------------------------------------------------------------------
# Shared in-kernel building blocks
# ----------------------------------------------------------------------------
def _gts_unit(h, pw, ps, pb, gw, gs, gb, keep, mnext, mprev, mode):
    """GTSConvUnit: perm conv+BN+ReLU -> grouped temporal shift -> grouped conv+BN.

    `h` is bf16; the shift/mask epilogue runs in bf16 (masks are exact 0/1) and
    feeds the grouped matmul directly.  Returns the f32 pre-activation.
    """
    y = jnp.dot(h, pw[...], preferred_element_type=jnp.float32)
    y = jnp.maximum(y * ps[...] + pb[...], 0.0).astype(jnp.bfloat16)
    y_next, y_prev = _shifted(y, mode)
    ys = y * keep + y_next * mnext + y_prev * mprev
    z = jnp.dot(ys, gw[...], preferred_element_type=jnp.float32)
    return z * gs[...] + gb[...]


def _block_tail(xp, units, sc, chl, chr_, vl, vr, mode):
    """unit1 -> ReLU -> unit2 -> ReLU -> unit3, + shortcut, ReLU."""
    keep = 1.0 - chl - chr_            # (1, C) bf16 (exact 0/1)
    mnext = chl * vl                   # (tm, C) bf16
    mprev = chr_ * vr
    (p1w, p1s, p1b, g1w, g1s, g1b,
     p2w, p2s, p2b, g2w, g2s, g2b,
     p3w, p3s, p3b, g3w, g3s, g3b) = units
    h1 = jnp.maximum(_gts_unit(xp, p1w, p1s, p1b, g1w, g1s, g1b,
                               keep, mnext, mprev, mode), 0.0).astype(jnp.bfloat16)
    h2 = jnp.maximum(_gts_unit(h1, p2w, p2s, p2b, g2w, g2s, g2b,
                               keep, mnext, mprev, mode), 0.0).astype(jnp.bfloat16)
    h3 = _gts_unit(h2, p3w, p3s, p3b, g3w, g3s, g3b, keep, mnext, mprev, mode)
    return jnp.maximum(h3 + sc, 0.0)


# ----------------------------------------------------------------------------
# Pallas kernels
# ----------------------------------------------------------------------------
def _stem_block1_kernel(*refs, mode, first_ch):
    """Fused: stem k=3 conv + BN, adaptive_max_pool1d(T->T/2), ResidualBlock1."""
    (x_ref, wmid, wpre, wpost, s2, b2,
     p1w, p1s, p1b, g1w, g1s, g1b,
     p2w, p2s, p2b, g2w, g2s, g2b,
     p3w, p3s, p3b, g3w, g3s, g3b,
     scw, scs, scb,
     chl_ref, chr_ref, vl_ref, vr_ref,
     out_ref) = refs

    x = x_ref[...]                      # (tm, 2*Cin): row k = [x[2k], x[2k+1]]
    vl = vl_ref[...]                    # (tm, 1): 0 where k == Tp-1
    vr = vr_ref[...]                    # (tm, 1): 0 where k == 0
    x_next, x_prev = _shifted(x, mode)  # next/prev pair row

    # Stem output for the even/odd time step of each pair, side by side
    # (2*first_ch lanes), as 3 matmuls against restructured tap weights.
    acc = jnp.dot(x, wmid[...], preferred_element_type=jnp.float32)
    acc += jnp.dot(vr * x_prev, wpre[...], preferred_element_type=jnp.float32)
    acc += jnp.dot(vl * x_next, wpost[...], preferred_element_type=jnp.float32)
    acc = acc * s2[...] + b2[...]       # folded BN + conv bias

    # adaptive_max_pool1d(T -> T/2) == pairwise max of even/odd halves.
    xp = jnp.maximum(acc[:, :first_ch], acc[:, first_ch:]).astype(jnp.bfloat16)

    # Shortcut Conv1d(k=1) + BN (block1 always has the conv shortcut).
    sc = jnp.dot(xp, scw[...], preferred_element_type=jnp.float32)
    sc = sc * scs[...] + scb[...]

    units = (p1w, p1s, p1b, g1w, g1s, g1b,
             p2w, p2s, p2b, g2w, g2s, g2b,
             p3w, p3s, p3b, g3w, g3s, g3b)
    out_ref[...] = _block_tail(xp, units, sc, chl_ref[...], chr_ref[...],
                               vl, vr, mode).astype(out_ref.dtype)


def _block_kernel(*refs, pool, cin, sc_conv, mode):
    """Fused ResidualBlock (blocks 2/3): [maxpool] -> 3 GTS units + shortcut."""
    (x_ref,
     p1w, p1s, p1b, g1w, g1s, g1b,
     p2w, p2s, p2b, g2w, g2s, g2b,
     p3w, p3s, p3b, g3w, g3s, g3b,
     chl_ref, chr_ref, vl_ref, vr_ref) = refs[:23]
    rest = refs[23:]
    if sc_conv:
        scw_ref, scs_ref, scb_ref, out_ref = rest
    else:
        scs_ref, scb_ref, out_ref = rest

    # adaptive_max_pool1d(T -> T/2): rows hold (x[2t], x[2t+1]) pairs side by
    # side, so pooling is a lane-sliced pairwise max.
    if pool:
        xp = jnp.maximum(x_ref[:, :cin], x_ref[:, cin:])   # (tm, cin) bf16
    else:
        xp = x_ref[...]

    if sc_conv:
        sc = jnp.dot(xp, scw_ref[...], preferred_element_type=jnp.float32)
        sc = sc * scs_ref[...] + scb_ref[...]
    else:
        sc = xp.astype(jnp.float32) * scs_ref[...] + scb_ref[...]

    units = (p1w, p1s, p1b, g1w, g1s, g1b,
             p2w, p2s, p2b, g2w, g2s, g2b,
             p3w, p3s, p3b, g3w, g3s, g3b)
    out_ref[...] = _block_tail(xp, units, sc, chl_ref[...], chr_ref[...],
                               vl_ref[...], vr_ref[...], mode).astype(out_ref.dtype)


def _head_kernel(x_ref, w_ref, b_ref, o_ref):
    """adaptive_avg_pool1d(., 1) over T + final Linear for one batch tile."""
    x = x_ref[...].astype(jnp.float32)                    # (nb, T, C)
    xm = jnp.mean(x, axis=1)                              # (nb, C)
    o_ref[...] = jnp.dot(xm.astype(jnp.bfloat16), w_ref[...],
                         preferred_element_type=jnp.float32) + b_ref[...]


# ----------------------------------------------------------------------------
# Tiling / spec helpers
# ----------------------------------------------------------------------------
def _row_tiles(n_batch, t_len, in_lanes, out_lanes):
    """Rows per tile = whole batch elements (the shift never crosses a tile).

    VMEM-budget-driven, preferring >=2 grid steps (v7x megacore) and
    16-sublane alignment (bf16 packing)."""
    per_row = 2 * 2 * (in_lanes + out_lanes) + 8 * 4 * max(in_lanes, out_lanes)
    target = min(2048, max(128, _VMEM_ACT_BUDGET // per_row))
    best_score, best = None, (1, n_batch * t_len)
    for nb in range(1, n_batch + 1):
        if n_batch % nb:
            continue
        tm = nb * t_len
        g = n_batch // nb
        if g > 1 and tm % 8:                 # (8,128) sublane rule for partial blocks
            continue
        fits = tm <= target
        score = (g >= 2 or n_batch == 1, fits, tm % 16 == 0, tm if fits else -tm)
        if best_score is None or score > best_score:
            best_score, best = score, (g, tm)
    return best


def _vmem_limit(tm, in_lanes, out_lanes, const_bytes, buffered_ok):
    act = 2 * 2 * tm * (in_lanes + out_lanes)          # double-buffered bf16 tiles
    consts = const_bytes * (1 if buffered_ok else 2)
    work = 10 * 4 * tm * max(in_lanes, out_lanes)      # in-kernel f32 intermediates
    need = act + consts + work + (4 << 20)
    return int(min(max(need, 32 << 20), 64 << 20))


def _nbytes(arrs):
    return int(sum(int(np.prod(a.shape)) * jnp.dtype(a.dtype).itemsize
                   for a in arrs))


def _const_spec(shape, buffered_ok):
    ndim = len(shape)
    index_map = lambda i: (0,) * ndim
    if buffered_ok:
        return pl.BlockSpec(shape, index_map, pipeline_mode=pl.Buffered(1))
    return pl.BlockSpec(shape, index_map)


def _row_masks(tm, t_len):
    t = np.arange(tm) % t_len
    vl = (t != t_len - 1).astype(np.float32)[:, None]    # valid for y[t+1]
    vr = (t != 0).astype(np.float32)[:, None]            # valid for y[t-1]
    return jnp.asarray(vl, jnp.bfloat16), jnp.asarray(vr, jnp.bfloat16)


def _ch_masks(c, slide):
    idx = np.arange(c)
    chl = ((idx % slide) == 0).astype(np.float32)[None, :]
    chr_ = ((idx % slide) == 1).astype(np.float32)[None, :]
    return jnp.asarray(chl, jnp.bfloat16), jnp.asarray(chr_, jnp.bfloat16)


# ----------------------------------------------------------------------------
# Wrappers (grids / BlockSpecs)
# ----------------------------------------------------------------------------
def stem_block1_fwd(x_pairs, params, n_batch, tp):
    rows, in_lanes = x_pairs.shape
    bp = params["block1"]
    cmid = bp["c1"]["gts_w"].shape[1]                     # 128
    first_ch = params["stem_s2"].shape[1] // 2            # 32
    g, tm = _row_tiles(n_batch, tp, in_lanes, cmid)
    mode = _ROLL_MODE or "slice"
    buffered_ok = bool(_BUFFERED_OK)
    vl, vr = _row_masks(tm, tp)
    chl, chr_ = _ch_masks(cmid, cmid // GROUPS)

    const_args = [params["stem_wmid"], params["stem_wpre"], params["stem_wpost"],
                  params["stem_s2"], params["stem_b2"]]
    for u in ("c1", "c2", "c3"):
        up = bp[u]
        const_args += [up["perm_w"], up["perm_s"], up["perm_b"],
                       up["gts_w"], up["gts_s"], up["gts_b"]]
    const_args += [bp["sc_w"], bp["sc_s"], bp["sc_b"], chl, chr_, vl, vr]

    in_specs = [pl.BlockSpec((tm, in_lanes), lambda i: (i, 0))]
    in_specs += [_const_spec(a.shape, buffered_ok) for a in const_args]

    return pl.pallas_call(
        functools.partial(_stem_block1_kernel, mode=mode, first_ch=first_ch),
        out_shape=jax.ShapeDtypeStruct((rows, cmid), jnp.bfloat16),
        grid=(g,),
        in_specs=in_specs,
        out_specs=pl.BlockSpec((tm, cmid), lambda i: (i, 0)),
        compiler_params=pltpu.CompilerParams(
            dimension_semantics=("parallel",),
            vmem_limit_bytes=_vmem_limit(tm, in_lanes, cmid,
                                         _nbytes(const_args), buffered_ok)),
    )(x_pairs, *const_args)


def residual_block_fwd(h, p, n_batch, t_len, pool):
    cin = h.shape[-1]
    if pool:
        t_len = t_len // 2
        x = h.reshape(n_batch * t_len, 2 * cin)   # free reshape: time pairs -> lanes
    else:
        x = h
    rows = n_batch * t_len
    in_lanes = x.shape[-1]
    cmid = p["c1"]["gts_w"].shape[1]              # n_fs of the block
    cout = cmid
    g, tm = _row_tiles(n_batch, t_len, in_lanes, cout)
    mode = _ROLL_MODE or "slice"
    buffered_ok = bool(_BUFFERED_OK)
    vl, vr = _row_masks(tm, t_len)
    chl, chr_ = _ch_masks(cmid, cmid // GROUPS)
    sc_conv = "sc_w" in p

    const_args = []
    for u in ("c1", "c2", "c3"):
        up = p[u]
        const_args += [up["perm_w"], up["perm_s"], up["perm_b"],
                       up["gts_w"], up["gts_s"], up["gts_b"]]
    const_args += [chl, chr_, vl, vr]
    if sc_conv:
        const_args += [p["sc_w"]]
    const_args += [p["sc_s"], p["sc_b"]]

    in_specs = [pl.BlockSpec((tm, in_lanes), lambda i: (i, 0))]
    in_specs += [_const_spec(a.shape, buffered_ok) for a in const_args]

    out = pl.pallas_call(
        functools.partial(_block_kernel, pool=pool, cin=cin,
                          sc_conv=sc_conv, mode=mode),
        out_shape=jax.ShapeDtypeStruct((rows, cout), jnp.bfloat16),
        grid=(g,),
        in_specs=in_specs,
        out_specs=pl.BlockSpec((tm, cout), lambda i: (i, 0)),
        compiler_params=pltpu.CompilerParams(
            dimension_semantics=("parallel",),
            vmem_limit_bytes=_vmem_limit(tm, in_lanes, cout,
                                         _nbytes(const_args), buffered_ok)),
    )(x, *const_args)
    return out, t_len


def _head_tiles(n):
    best_score, choice = None, n
    for nb in range(1, n + 1):
        if n % nb:
            continue
        if nb != n and nb % 8:                     # output sublane rule
            continue
        g = n // nb
        score = (g >= 2 or n == 1, nb <= 256, nb)
        if best_score is None or score > best_score:
            best_score, choice = score, nb
    return n // choice, choice


def head_fwd(h, n_batch, t_len, w, b):
    c = h.shape[-1]
    k = w.shape[1]
    x3 = h.reshape(n_batch, t_len, c)
    g, nb = _head_tiles(n_batch)
    buffered_ok = bool(_BUFFERED_OK)
    return pl.pallas_call(
        _head_kernel,
        out_shape=jax.ShapeDtypeStruct((n_batch, k), jnp.float32),
        grid=(g,),
        in_specs=[
            pl.BlockSpec((nb, t_len, c), lambda i: (i, 0, 0)),
            _const_spec((c, k), buffered_ok),
            _const_spec((1, k), buffered_ok),
        ],
        out_specs=pl.BlockSpec((nb, k), lambda i: (i, 0)),
        compiler_params=pltpu.CompilerParams(dimension_semantics=("parallel",)),
    )(x3, w, b)


# ----------------------------------------------------------------------------
# Parameter construction (deterministic, synthetic)
# ----------------------------------------------------------------------------
def _bn_fold(key, c, eps=1e-5):
    k1, k2, k3, k4 = jax.random.split(key, 4)
    gamma = 1.0 + 0.1 * jax.random.normal(k1, (c,), jnp.float32)
    beta = 0.1 * jax.random.normal(k2, (c,), jnp.float32)
    mean = 0.1 * jax.random.normal(k3, (c,), jnp.float32)
    var = jax.random.uniform(k4, (c,), jnp.float32, 0.5, 1.5)
    scale = gamma / jnp.sqrt(var + eps)
    bias = beta - mean * scale
    return scale[None, :], bias[None, :]


def _grouped_to_dense(w, groups):
    """w: (Cout, Cin_per_group) from Conv1d(k=1, groups) -> dense (Cin, Cout)."""
    cout, cin_pg = w.shape
    cout_pg = cout // groups
    cin = cin_pg * groups
    dense = jnp.zeros((cin, cout), jnp.float32)
    for g in range(groups):
        blk = w[g * cout_pg:(g + 1) * cout_pg, :].T
        dense = dense.at[g * cin_pg:(g + 1) * cin_pg,
                         g * cout_pg:(g + 1) * cout_pg].set(blk)
    return dense


def _shuffle_perm(c, groups):
    cpg = c // groups
    return jnp.array([(j % groups) * cpg + (j // groups) for j in range(c)],
                     jnp.int32)


def make_gts_unit(key, i_nc, n_fs, groups, first_grouped):
    gc = groups if first_grouped else 1
    k1, k2, k3, k4 = jax.random.split(key, 4)
    cin_pg = i_nc // gc
    perm_w = jax.random.normal(k1, (n_fs, cin_pg), jnp.float32) / jnp.sqrt(cin_pg)
    perm_w = _grouped_to_dense(perm_w, gc)
    perm_s, perm_b = _bn_fold(k2, n_fs)

    gts_cin_pg = n_fs // groups
    gts_w = jax.random.normal(k3, (n_fs, gts_cin_pg), jnp.float32) / jnp.sqrt(gts_cin_pg)
    gts_w = _grouped_to_dense(gts_w, groups)
    gts_s, gts_b = _bn_fold(k4, n_fs)

    # Fold channel_shuffle (pure output-channel permutation) into the weights.
    idx = _shuffle_perm(n_fs, groups)
    gts_w = gts_w[:, idx]
    gts_s = gts_s[:, idx]
    gts_b = gts_b[:, idx]
    return dict(perm_w=perm_w.astype(jnp.bfloat16), perm_s=perm_s, perm_b=perm_b,
                gts_w=gts_w.astype(jnp.bfloat16), gts_s=gts_s, gts_b=gts_b)


def make_block(key, i_nc, n_fs, groups, first_grouped):
    ks = jax.random.split(key, 5)
    p = dict(
        c1=make_gts_unit(ks[0], i_nc, n_fs, groups, first_grouped),
        c2=make_gts_unit(ks[1], n_fs, n_fs, groups, True),
        c3=make_gts_unit(ks[2], n_fs, n_fs, groups, True),
    )
    if i_nc == n_fs:                 # shortcut = BatchNorm1d only
        s, b = _bn_fold(ks[3], n_fs)
        p["sc_s"], p["sc_b"] = s, b
    else:                            # shortcut = Conv1d(k=1) + BatchNorm1d
        w = jax.random.normal(ks[3], (n_fs, i_nc), jnp.float32) / jnp.sqrt(i_nc)
        p["sc_w"] = w.T.astype(jnp.bfloat16)             # (i_nc, n_fs)
        s, b = _bn_fold(ks[4], n_fs)
        p["sc_s"], p["sc_b"] = s, b
    return p


def make_gtsnet_params(key, init_channels, num_classes):
    _init_roll_mode()
    _init_buffered_mode()
    n_fs, groups, fc = 128, GROUPS, 32
    ks = jax.random.split(key, 8)
    cin = init_channels

    stem_w = jax.random.normal(ks[0], (fc, cin, 3),
                               jnp.float32) / jnp.sqrt(3 * cin)
    stem_bias = 0.1 * jax.random.normal(ks[1], (fc,), jnp.float32)
    stem_s, stem_b = _bn_fold(ks[2], fc)
    stem_b = stem_b + stem_s * stem_bias[None, :]        # fold conv bias into BN
    # Tap k multiplies x[t + k - 1]: w_k[cin, cout] = W[cout, cin, k].
    wt = jnp.transpose(stem_w, (2, 1, 0))                # (3, Cin, fc)
    w0, w1, w2 = wt[0], wt[1], wt[2]
    # Restructured weights for the paired-row layout (row k = [x[2k], x[2k+1]]):
    #   even out y[2k]   = x[2k-1] w0 + x[2k] w1 + x[2k+1] w2   -> cols [0:fc)
    #   odd  out y[2k+1] = x[2k]   w0 + x[2k+1] w1 + x[2k+2] w2 -> cols [fc:2fc)
    wmid = jnp.zeros((2 * cin, 2 * fc), jnp.float32)
    wmid = wmid.at[:cin, :fc].set(w1).at[cin:, :fc].set(w2)
    wmid = wmid.at[:cin, fc:].set(w0).at[cin:, fc:].set(w1)
    wpre = jnp.zeros((2 * cin, 2 * fc), jnp.float32).at[cin:, :fc].set(w0)
    wpost = jnp.zeros((2 * cin, 2 * fc), jnp.float32).at[:cin, fc:].set(w2)
    stem_s2 = jnp.concatenate([stem_s, stem_s], axis=1)
    stem_b2 = jnp.concatenate([stem_b, stem_b], axis=1)

    fin_w = jax.random.normal(ks[6], (num_classes, 2 * n_fs),
                              jnp.float32) / jnp.sqrt(2 * n_fs)
    fin_b = 0.1 * jax.random.normal(ks[7], (num_classes,), jnp.float32)

    return dict(
        stem_wmid=wmid.astype(jnp.bfloat16),
        stem_wpre=wpre.astype(jnp.bfloat16),
        stem_wpost=wpost.astype(jnp.bfloat16),
        stem_s2=stem_s2, stem_b2=stem_b2,
        block1=make_block(ks[3], fc, n_fs, groups, False),
        block2=make_block(ks[4], n_fs, 2 * n_fs, groups, True),
        block3=make_block(ks[5], 2 * n_fs, 2 * n_fs, groups, True),
        final_w=fin_w.T.astype(jnp.bfloat16), final_b=fin_b[None, :],
    )


# ----------------------------------------------------------------------------
# Forward pass
# ----------------------------------------------------------------------------
def gtsnet_forward(params, x_nct):
    # Input follows the PyTorch convention (N, C, T).
    n, cin, t = x_nct.shape
    assert t % 4 == 0, "T must be divisible by 4 (two T->T/2 max-pools)"
    tp = t // 2                        # block1's pool is fused into its kernel
    # (N, C, T) -> (N*T/2, 2*C): row k of batch b holds [x[b,:,2k], x[b,:,2k+1]].
    x = jnp.transpose(x_nct, (0, 2, 1)).astype(jnp.bfloat16).reshape(n * tp, 2 * cin)
    h = stem_block1_fwd(x, params, n, tp)                               # (N*T/2, 128)
    h, tp = residual_block_fwd(h, params["block2"], n, tp, pool=True)   # (N*T/4, 256)
    h, tp = residual_block_fwd(h, params["block3"], n, tp, pool=False)  # (N*T/4, 256)
    return head_fwd(h, n, tp, params["final_w"], params["final_b"])


# ----------------------------------------------------------------------------
if __name__ == "__main__":
    _init_roll_mode()                  # probe pltpu.roll convention (once, eager)
    _init_buffered_mode()              # probe pl.Buffered(1) support (once, eager)

    key = jax.random.PRNGKey(0)
    kp, kx = jax.random.split(key)
    init_channels, num_classes = 4, 10
    N, T = 2, 16                       # T must be divisible by 4 (two pools)

    params = make_gtsnet_params(kp, init_channels, num_classes)
    x = jax.random.normal(kx, (N, init_channels, T), jnp.float32)

    fwd = jax.jit(gtsnet_forward)
    out = jax.block_until_ready(fwd(params, x))

    assert out.shape == (N, num_classes), out.shape
    assert bool(jnp.all(jnp.isfinite(out)))
    print("KERNEL_OK")
</pallas_src>

<mosaic_0001>
module attributes {stable_mosaic.version = 11 : i64} {
  func.func @k(%arg0: memref<8x128xf32, #tpu.memory_space<vmem>>, %arg1: memref<8x128xf32, #tpu.memory_space<vmem>>) attributes {dimension_semantics = [], scalar_prefetch = 0 : i64, scratch_operands = 0 : i64, tpu.core_type = #tpu.core_type<tc>} {
    %c0 = arith.constant 0 : index
    %c0_0 = arith.constant 0 : index
    %0 = vector.load %arg0[%c0, %c0_0] : memref<8x128xf32, #tpu.memory_space<vmem>>, vector<8x128xf32>
    %c1_i32 = arith.constant 1 : i32
    %1 = tpu.dynamic_rotate %0 by %c1_i32 dim 0 : vector<8x128xf32>, i32 -> vector<8x128xf32>
    %c0_1 = arith.constant 0 : index
    %c0_2 = arith.constant 0 : index
    %2 = vector.load %arg1[%c0_1, %c0_2] : memref<8x128xf32, #tpu.memory_space<vmem>>, vector<8x128xf32>
    tpu.vector_store %arg1[%c0_1, %c0_2], %1 {strides = array<i32>} : memref<8x128xf32, #tpu.memory_space<vmem>>, vector<8x128xf32>,
    return
  }
}

module attributes {stable_mosaic.version = 11 : i64} {
  func.func @k(%arg0: i32, %arg1: memref<8x128xf32, #tpu.memory_space<vmem>>, %arg2: memref<8x128xf32, #tpu.memory_space<vmem>>, %arg3: memref<8x128xf32, #tpu.memory_space<vmem>>) attributes {dimension_semantics = [#tpu.dimension_semantics<arbitrary>], iteration_bounds = array<i64: 2>, scalar_prefetch = 0 : i64, scratch_operands = 0 : i64, tpu.core_type = #tpu.core_type<tc>, window_params = [{transform_indices = @transform_0, window_bounds = array<i64: 8, 128>}, {pipeline_mode = #tpu.pipeline_mode<synchronous>, transform_indices = @transform_1, window_bounds = array<i64: 8, 128>}, {transform_indices = @transform_2, window_bounds = array<i64: 8, 128>}]} {
    %c0 = arith.constant 0 : index
    %c0_0 = arith.constant 0 : index
    %0 = vector.load %arg1[%c0, %c0_0] : memref<8x128xf32, #tpu.memory_space<vmem>>, vector<8x128xf32>
    %c0_1 = arith.constant 0 : index
    %c0_2 = arith.constant 0 : index
    %1 = vector.load %arg2[%c0_1, %c0_2] : memref<8x128xf32, #tpu.memory_space<vmem>>, vector<8x128xf32>
    %2 = arith.addf %0, %1 : vector<8x128xf32>
    %c0_3 = arith.constant 0 : index
    %c0_4 = arith.constant 0 : index
    %3 = vector.load %arg3[%c0_3, %c0_4] : memref<8x128xf32, #tpu.memory_space<vmem>>, vector<8x128xf32>
    tpu.vector_store %arg3[%c0_3, %c0_4], %2 {strides = array<i32>} : memref<8x128xf32, #tpu.memory_space<vmem>>, vector<8x128xf32>,
    return
  }
  func.func @transform_0(%arg0: i32) -> (i32, i32) {
    %c0_i32 = arith.constant 0 : i32
    %c0_i32_0 = arith.constant 0 : i32
    return %arg0, %c0_i32 : i32, i32
  }
  func.func @transform_1(%arg0: i32) -> (i32, i32) {
    %c0_i32 = arith.constant 0 : i32
    %c0_i32_0 = arith.constant 0 : i32
    %c0_i32_1 = arith.constant 0 : i32
    return %c0_i32, %c0_i32_0 : i32, i32
  }
  func.func @transform_2(%arg0: i32) -> (i32, i32) {
    %c0_i32 = arith.constant 0 : i32
    %c0_i32_0 = arith.constant 0 : i32
    return %arg0, %c0_i32 : i32, i32
  }
}

module attributes {stable_mosaic.version = 11 : i64} {
  func.func @_block_kernel(%arg0: i32, %arg1: memref<8x256xbf16, #tpu.memory_space<vmem>>, %arg2: memref<128x256xbf16, #tpu.memory_space<vmem>>, %arg3: memref<1x256xf32, #tpu.memory_space<vmem>>, %arg4: memref<1x256xf32, #tpu.memory_space<vmem>>, %arg5: memref<256x256xbf16, #tpu.memory_space<vmem>>, %arg6: memref<1x256xf32, #tpu.memory_space<vmem>>, %arg7: memref<1x256xf32, #tpu.memory_space<vmem>>, %arg8: memref<256x256xbf16, #tpu.memory_space<vmem>>, %arg9: memref<1x256xf32, #tpu.memory_space<vmem>>, %arg10: memref<1x256xf32, #tpu.memory_space<vmem>>, %arg11: memref<256x256xbf16, #tpu.memory_space<vmem>>, %arg12: memref<1x256xf32, #tpu.memory_space<vmem>>, %arg13: memref<1x256xf32, #tpu.memory_space<vmem>>, %arg14: memref<256x256xbf16, #tpu.memory_space<vmem>>, %arg15: memref<1x256xf32, #tpu.memory_space<vmem>>, %arg16: memref<1x256xf32, #tpu.memory_space<vmem>>, %arg17: memref<256x256xbf16, #tpu.memory_space<vmem>>, %arg18: memref<1x256xf32, #tpu.memory_space<vmem>>, %arg19: memref<1x256xf32, #tpu.memory_space<vmem>>, %arg20: memref<1x256xbf16, #tpu.memory_space<vmem>>, %arg21: memref<1x256xbf16, #tpu.memory_space<vmem>>, %arg22: memref<8x1xbf16, #tpu.memory_space<vmem>>, %arg23: memref<8x1xbf16, #tpu.memory_space<vmem>>, %arg24: memref<128x256xbf16, #tpu.memory_space<vmem>>, %arg25: memref<1x256xf32, #tpu.memory_space<vmem>>, %arg26: memref<1x256xf32, #tpu.memory_space<vmem>>, %arg27: memref<8x256xbf16, #tpu.memory_space<vmem>>) attributes {dimension_semantics = [#tpu.dimension_semantics<parallel>], iteration_bounds = array<i64: 1>, scalar_prefetch = 0 : i64, scratch_operands = 0 : i64, tpu.core_type = #tpu.core_type<tc>, window_params = [{transform_indices = @transform_0, window_bounds = array<i64: 8, 256>}, {pipeline_mode = #tpu.pipeline_mode<synchronous>, transform_indices = @transform_1, window_bounds = array<i64: 128, 256>}, {pipeline_mode = #tpu.pipeline_mode<synchronous>, transform_indices = @transform_2, window_bounds = array<i64: 1, 256>}, {pipeline_mode = #tpu.pipeline_mode<synchronous>, transform_indices = @transform_3, window_bounds = array<i64: 1, 256>}, {pipeline_mode = #tpu.pipeline_mode<synchronous>, transform_indices = @transform_4, window_bounds = array<i64: 256, 256>}, {pipeline_mode = #tpu.pipeline_mode<synchronous>, transform_indices = @transform_5, window_bounds = array<i64: 1, 256>}, {pipeline_mode = #tpu.pipeline_mode<synchronous>, transform_indices = @transform_6, window_bounds = array<i64: 1, 256>}, {pipeline_mode = #tpu.pipeline_mode<synchronous>, transform_indices = @transform_7, window_bounds = array<i64: 256, 256>}, {pipeline_mode = #tpu.pipeline_mode<synchronous>, transform_indices = @transform_8, window_bounds = array<i64: 1, 256>}, {pipeline_mode = #tpu.pipeline_mode<synchronous>, transform_indices = @transform_9, window_bounds = array<i64: 1, 256>}, {pipeline_mode = #tpu.pipeline_mode<synchronous>, transform_indices = @transform_10, window_bounds = array<i64: 256, 256>}, {pipeline_mode = #tpu.pipeline_mode<synchronous>, transform_indices = @transform_11, window_bounds = array<i64: 1, 256>}, {pipeline_mode = #tpu.pipeline_mode<synchronous>, transform_indices = @transform_12, window_bounds = array<i64: 1, 256>}, {pipeline_mode = #tpu.pipeline_mode<synchronous>, transform_indices = @transform_13, window_bounds = array<i64: 256, 256>}, {pipeline_mode = #tpu.pipeline_mode<synchronous>, transform_indices = @transform_14, window_bounds = array<i64: 1, 256>}, {pipeline_mode = #tpu.pipeline_mode<synchronous>, transform_indices = @transform_15, window_bounds = array<i64: 1, 256>}, {pipeline_mode = #tpu.pipeline_mode<synchronous>, transform_indices = @transform_16, window_bounds = array<i64: 256, 256>}, {pipeline_mode = #tpu.pipeline_mode<synchronous>, transform_indices = @transform_17, window_bounds = array<i64: 1, 256>}, {pipeline_mode = #tpu.pipeline_mode<synchronous>, transform_indices = @transform_18, window_bounds = array<i64: 1, 256>}, {pipeline_mode = #tpu.pipeline_mode<synchronous>, transform_indices = @transform_19, window_bounds = array<i64: 1, 256>}, {pipeline_mode = #tpu.pipeline_mode<synchronous>, transform_indices = @transform_20, window_bounds = array<i64: 1, 256>}, {pipeline_mode = #tpu.pipeline_mode<synchronous>, transform_indices = @transform_21, window_bounds = array<i64: 8, 1>}, {pipeline_mode = #tpu.pipeline_mode<synchronous>, transform_indices = @transform_22, window_bounds = array<i64: 8, 1>}, {pipeline_mode = #tpu.pipeline_mode<synchronous>, transform_indices = @transform_23, window_bounds = array<i64: 128, 256>}, {pipeline_mode = #tpu.pipeline_mode<synchronous>, transform_indices = @transform_24, window_bounds = array<i64: 1, 256>}, {pipeline_mode = #tpu.pipeline_mode<synchronous>, transform_indices = @transform_25, window_bounds = array<i64: 1, 256>}, {transform_indices = @transform_26, window_bounds = array<i64: 8, 256>}]} {
    %c0 = arith.constant 0 : index
    %c0_0 = arith.constant 0 : index
    %0 = vector.load %arg1[%c0, %c0_0] : memref<8x256xbf16, #tpu.memory_space<vmem>>, vector<8x128xbf16>
    %c0_1 = arith.constant 0 : index
    %c128 = arith.constant 128 : index
    %1 = vector.load %arg1[%c0_1, %c128] : memref<8x256xbf16, #tpu.memory_space<vmem>>, vector<8x128xbf16>
    %2 = arith.maximumf %0, %1 : vector<8x128xbf16>
    %c0_2 = arith.constant 0 : index
    %c0_3 = arith.constant 0 : index
    %3 = vector.load %arg24[%c0_2, %c0_3] : memref<128x256xbf16, #tpu.memory_space<vmem>>, vector<128x256xbf16>
    %cst = arith.constant dense<0.000000e+00> : vector<8x256xf32>
    %4 = tpu.matmul %2, %3, %cst {dimension_numbers = #tpu.dot_dimension_numbers<[1], [0], [0], [1], [0, 0, 1, 1], [], []>} : vector<8x128xbf16>, vector<128x256xbf16>, vector<8x256xf32> -> vector<8x256xf32>
    %c0_4 = arith.constant 0 : index
    %c0_5 = arith.constant 0 : index
    %5 = vector.load %arg25[%c0_4, %c0_5] : memref<1x256xf32, #tpu.memory_space<vmem>>, vector<1x256xf32>
    %6 = vector.broadcast %5 : vector<1x256xf32> to vector<8x256xf32>
    %7 = arith.mulf %4, %6 : vector<8x256xf32>
    %c0_6 = arith.constant 0 : index
    %c0_7 = arith.constant 0 : index
    %8 = vector.load %arg26[%c0_6, %c0_7] : memref<1x256xf32, #tpu.memory_space<vmem>>, vector<1x256xf32>
    %9 = vector.broadcast %8 : vector<1x256xf32> to vector<8x256xf32>
    %10 = arith.addf %7, %9 : vector<8x256xf32>
    %c0_8 = arith.constant 0 : index
    %c0_9 = arith.constant 0 : index
    %11 = vector.load %arg20[%c0_8, %c0_9] : memref<1x256xbf16, #tpu.memory_space<vmem>>, vector<1x256xbf16>
    %c0_10 = arith.constant 0 : index
    %c0_11 = arith.constant 0 : index
    %12 = vector.load %arg21[%c0_10, %c0_11] : memref<1x256xbf16, #tpu.memory_space<vmem>>, vector<1x256xbf16>
    %c0_12 = arith.constant 0 : index
    %c0_13 = arith.constant 0 : index
    %13 = vector.load %arg22[%c0_12, %c0_13] : memref<8x1xbf16, #tpu.memory_space<vmem>>, vector<8x1xbf16>
    %c0_14 = arith.constant 0 : index
    %c0_15 = arith.constant 0 : index
    %14 = vector.load %arg23[%c0_14, %c0_15] : memref<8x1xbf16, #tpu.memory_space<vmem>>, vector<8x1xbf16>
    %cst_16 = arith.constant 1.000000e+00 : bf16
    %15 = vector.broadcast %cst_16 : bf16 to vector<1x256xbf16>
    %16 = arith.subf %15, %11 : vector<1x256xbf16>
    %17 = arith.subf %16, %12 : vector<1x256xbf16>
    %18 = vector.broadcast %11 : vector<1x256xbf16> to vector<8x256xbf16>
    %19 = vector.broadcast %13 : vector<8x1xbf16> to vector<8x256xbf16>
    %20 = arith.mulf %18, %19 : vector<8x256xbf16>
    %21 = vector.broadcast %12 : vector<1x256xbf16> to vector<8x256xbf16>
    %22 = vector.broadcast %14 : vector<8x1xbf16> to vector<8x256xbf16>
    %23 = arith.mulf %21, %22 : vector<8x256xbf16>
    %c0_17 = arith.constant 0 : index
    %c0_18 = arith.constant 0 : index
    %24 = vector.load %arg2[%c0_17, %c0_18] : memref<128x256xbf16, #tpu.memory_space<vmem>>, vector<128x256xbf16>
    %cst_19 = arith.constant dense<0.000000e+00> : vector<8x256xf32>
    %25 = tpu.matmul %2, %24, %cst_19 {dimension_numbers = #tpu.dot_dimension_numbers<[1], [0], [0], [1], [0, 0, 1, 1], [], []>} : vector<8x128xbf16>, vector<128x256xbf16>, vector<8x256xf32> -> vector<8x256xf32>
    %c0_20 = arith.constant 0 : index
    %c0_21 = arith.constant 0 : index
    %26 = vector.load %arg3[%c0_20, %c0_21] : memref<1x256xf32, #tpu.memory_space<vmem>>, vector<1x256xf32>
    %27 = vector.broadcast %26 : vector<1x256xf32> to vector<8x256xf32>
    %28 = arith.mulf %25, %27 : vector<8x256xf32>
    %c0_22 = arith.constant 0 : index
    %c0_23 = arith.constant 0 : index
    %29 = vector.load %arg4[%c0_22, %c0_23] : memref<1x256xf32, #tpu.memory_space<vmem>>, vector<1x256xf32>
    %30 = vector.broadcast %29 : vector<1x256xf32> to vector<8x256xf32>
    %31 = arith.addf %28, %30 : vector<8x256xf32>
    %cst_24 = arith.constant 0.000000e+00 : f32
    %32 = vector.broadcast %cst_24 : f32 to vector<8x256xf32>
    %33 = arith.maximumf %31, %32 : vector<8x256xf32>
    %34 = arith.truncf %33 : vector<8x256xf32> to vector<8x256xbf16>
    %cst_25 = arith.constant 0.000000e+00 : bf16
    %35 = vector.broadcast %cst_25 : bf16 to vector<1x256xbf16>
    %36 = vector.extract_strided_slice %34 {offsets = [1, 0], sizes = [7, 256], strides = [1, 1]} : vector<8x256xbf16> to vector<7x256xbf16>
    %37 = tpu.concatenate %36, %35 in 0 : vector<7x256xbf16>, vector<1x256xbf16> -> vector<8x256xbf16>
    %38 = vector.extract_strided_slice %34 {offsets = [0, 0], sizes = [7, 256], strides = [1, 1]} : vector<8x256xbf16> to vector<7x256xbf16>
    %39 = tpu.concatenate %35, %38 in 0 : vector<1x256xbf16>, vector<7x256xbf16> -> vector<8x256xbf16>
    %40 = vector.broadcast %17 : vector<1x256xbf16> to vector<8x256xbf16>
    %41 = arith.mulf %34, %40 : vector<8x256xbf16>
    %42 = arith.mulf %37, %20 : vector<8x256xbf16>
    %43 = arith.addf %41, %42 : vector<8x256xbf16>
    %44 = arith.mulf %39, %23 : vector<8x256xbf16>
    %45 = arith.addf %43, %44 : vector<8x256xbf16>
    %c0_26 = arith.constant 0 : index
    %c0_27 = arith.constant 0 : index
    %46 = vector.load %arg5[%c0_26, %c0_27] : memref<256x256xbf16, #tpu.memory_space<vmem>>, vector<256x256xbf16>
    %cst_28 = arith.constant dense<0.000000e+00> : vector<8x256xf32>
    %47 = tpu.matmul %45, %46, %cst_28 {dimension_numbers = #tpu.dot_dimension_numbers<[1], [0], [0], [1], [0, 0, 1, 1], [], []>} : vector<8x256xbf16>, vector<256x256xbf16>, vector<8x256xf32> -> vector<8x256xf32>
    %c0_29 = arith.constant 0 : index
    %c0_30 = arith.constant 0 : index
    %48 = vector.load %arg6[%c0_29, %c0_30] : memref<1x256xf32, #tpu.memory_space<vmem>>, vector<1x256xf32>
    %49 = vector.broadcast %48 : vector<1x256xf32> to vector<8x256xf32>
    %50 = arith.mulf %47, %49 : vector<8x256xf32>
    %c0_31 = arith.constant 0 : index
    %c0_32 = arith.constant 0 : index
    %51 = vector.load %arg7[%c0_31, %c0_32] : memref<1x256xf32, #tpu.memory_space<vmem>>, vector<1x256xf32>
    %52 = vector.broadcast %51 : vector<1x256xf32> to vector<8x256xf32>
    %53 = arith.addf %50, %52 : vector<8x256xf32>
    %cst_33 = arith.constant 0.000000e+00 : f32
    %54 = vector.broadcast %cst_33 : f32 to vector<8x256xf32>
    %55 = arith.maximumf %53, %54 : vector<8x256xf32>
    %56 = arith.truncf %55 : vector<8x256xf32> to vector<8x256xbf16>
    %c0_34 = arith.constant 0 : index
    %c0_35 = arith.constant 0 : index
    %57 = vector.load %arg8[%c0_34, %c0_35] : memref<256x256xbf16, #tpu.memory_space<vmem>>, vector<256x256xbf16>
    %cst_36 = arith.constant dense<0.000000e+00> : vector<8x256xf32>
    %58 = tpu.matmul %56, %57, %cst_36 {dimension_numbers = #tpu.dot_dimension_numbers<[1], [0], [0], [1], [0, 0, 1, 1], [], []>} : vector<8x256xbf16>, vector<256x256xbf16>, vector<8x256xf32> -> vector<8x256xf32>
    %c0_37 = arith.constant 0 : index
    %c0_38 = arith.constant 0 : index
    %59 = vector.load %arg9[%c0_37, %c0_38] : memref<1x256xf32, #tpu.memory_space<vmem>>, vector<1x256xf32>
    %60 = vector.broadcast %59 : vector<1x256xf32> to vector<8x256xf32>
    %61 = arith.mulf %58, %60 : vector<8x256xf32>
    %c0_39 = arith.constant 0 : index
    %c0_40 = arith.constant 0 : index
    %62 = vector.load %arg10[%c0_39, %c0_40] : memref<1x256xf32, #tpu.memory_space<vmem>>, vector<1x256xf32>
    %63 = vector.broadcast %62 : vector<1x256xf32> to vector<8x256xf32>
    %64 = arith.addf %61, %63 : vector<8x256xf32>
    %cst_41 = arith.constant 0.000000e+00 : f32
    %65 = vector.broadcast %cst_41 : f32 to vector<8x256xf32>
    %66 = arith.maximumf %64, %65 : vector<8x256xf32>
    %67 = arith.truncf %66 : vector<8x256xf32> to vector<8x256xbf16>
    %cst_42 = arith.constant 0.000000e+00 : bf16
    %68 = vector.broadcast %cst_42 : bf16 to vector<1x256xbf16>
    %69 = vector.extract_strided_slice %67 {offsets = [1, 0], sizes = [7, 256], strides = [1, 1]} : vector<8x256xbf16> to vector<7x256xbf16>
    %70 = tpu.concatenate %69, %68 in 0 : vector<7x256xbf16>, vector<1x256xbf16> -> vector<8x256xbf16>
    %71 = vector.extract_strided_slice %67 {offsets = [0, 0], sizes = [7, 256], strides = [1, 1]} : vector<8x256xbf16> to vector<7x256xbf16>
    %72 = tpu.concatenate %68, %71 in 0 : vector<1x256xbf16>, vector<7x256xbf16> -> vector<8x256xbf16>
    %73 = vector.broadcast %17 : vector<1x256xbf16> to vector<8x256xbf16>
    %74 = arith.mulf %67, %73 : vector<8x256xbf16>
    %75 = arith.mulf %70, %20 : vector<8x256xbf16>
    %76 = arith.addf %74, %75 : vector<8x256xbf16>
    %77 = arith.mulf %72, %23 : vector<8x256xbf16>
    %78 = arith.addf %76, %77 : vector<8x256xbf16>
    %c0_43 = arith.constant 0 : index
    %c0_44 = arith.constant 0 : index
    %79 = vector.load %arg11[%c0_43, %c0_44] : memref<256x256xbf16, #tpu.memory_space<vmem>>, vector<256x256xbf16>
    %cst_45 = arith.constant dense<0.000000e+00> : vector<8x256xf32>
    %80 = tpu.matmul %78, %79, %cst_45 {dimension_numbers = #tpu.dot_dimension_numbers<[1], [0], [0], [1], [0, 0, 1, 1], [], []>} : vector<8x256xbf16>, vector<256x256xbf16>, vector<8x256xf32> -> vector<8x256xf32>
    %c0_46 = arith.constant 0 : index
    %c0_47 = arith.constant 0 : index
    %81 = vector.load %arg12[%c0_46, %c0_47] : memref<1x256xf32, #tpu.memory_space<vmem>>, vector<1x256xf32>
    %82 = vector.broadcast %81 : vector<1x256xf32> to vector<8x256xf32>
    %83 = arith.mulf %80, %82 : vector<8x256xf32>
    %c0_48 = arith.constant 0 : index
    %c0_49 = arith.constant 0 : index
    %84 = vector.load %arg13[%c0_48, %c0_49] : memref<1x256xf32, #tpu.memory_space<vmem>>, vector<1x256xf32>
    %85 = vector.broadcast %84 : vector<1x256xf32> to vector<8x256xf32>
    %86 = arith.addf %83, %85 : vector<8x256xf32>
    %cst_50 = arith.constant 0.000000e+00 : f32
    %87 = vector.broadcast %cst_50 : f32 to vector<8x256xf32>
    %88 = arith.maximumf %86, %87 : vector<8x256xf32>
    %89 = arith.truncf %88 : vector<8x256xf32> to vector<8x256xbf16>
    %c0_51 = arith.constant 0 : index
    %c0_52 = arith.constant 0 : index
    %90 = vector.load %arg14[%c0_51, %c0_52] : memref<256x256xbf16, #tpu.memory_space<vmem>>, vector<256x256xbf16>
    %cst_53 = arith.constant dense<0.000000e+00> : vector<8x256xf32>
    %91 = tpu.matmul %89, %90, %cst_53 {dimension_numbers = #tpu.dot_dimension_numbers<[1], [0], [0], [1], [0, 0, 1, 1], [], []>} : vector<8x256xbf16>, vector<256x256xbf16>, vector<8x256xf32> -> vector<8x256xf32>
    %c0_54 = arith.constant 0 : index
    %c0_55 = arith.constant 0 : index
    %92 = vector.load %arg15[%c0_54, %c0_55] : memref<1x256xf32, #tpu.memory_space<vmem>>, vector<1x256xf32>
    %93 = vector.broadcast %92 : vector<1x256xf32> to vector<8x256xf32>
    %94 = arith.mulf %91, %93 : vector<8x256xf32>
    %c0_56 = arith.constant 0 : index
    %c0_57 = arith.constant 0 : index
    %95 = vector.load %arg16[%c0_56, %c0_57] : memref<1x256xf32, #tpu.memory_space<vmem>>, vector<1x256xf32>
    %96 = vector.broadcast %95 : vector<1x256xf32> to vector<8x256xf32>
    %97 = arith.addf %94, %96 : vector<8x256xf32>
    %cst_58 = arith.constant 0.000000e+00 : f32
    %98 = vector.broadcast %cst_58 : f32 to vector<8x256xf32>
    %99 = arith.maximumf %97, %98 : vector<8x256xf32>
    %100 = arith.truncf %99 : vector<8x256xf32> to vector<8x256xbf16>
    %cst_59 = arith.constant 0.000000e+00 : bf16
    %101 = vector.broadcast %cst_59 : bf16 to vector<1x256xbf16>
    %102 = vector.extract_strided_slice %100 {offsets = [1, 0], sizes = [7, 256], strides = [1, 1]} : vector<8x256xbf16> to vector<7x256xbf16>
    %103 = tpu.concatenate %102, %101 in 0 : vector<7x256xbf16>, vector<1x256xbf16> -> vector<8x256xbf16>
    %104 = vector.extract_strided_slice %100 {offsets = [0, 0], sizes = [7, 256], strides = [1, 1]} : vector<8x256xbf16> to vector<7x256xbf16>
    %105 = tpu.concatenate %101, %104 in 0 : vector<1x256xbf16>, vector<7x256xbf16> -> vector<8x256xbf16>
    %106 = vector.broadcast %17 : vector<1x256xbf16> to vector<8x256xbf16>
    %107 = arith.mulf %100, %106 : vector<8x256xbf16>
    %108 = arith.mulf %103, %20 : vector<8x256xbf16>
    %109 = arith.addf %107, %108 : vector<8x256xbf16>
    %110 = arith.mulf %105, %23 : vector<8x256xbf16>
    %111 = arith.addf %109, %110 : vector<8x256xbf16>
    %c0_60 = arith.constant 0 : index
    %c0_61 = arith.constant 0 : index
    %112 = vector.load %arg17[%c0_60, %c0_61] : memref<256x256xbf16, #tpu.memory_space<vmem>>, vector<256x256xbf16>
    %cst_62 = arith.constant dense<0.000000e+00> : vector<8x256xf32>
    %113 = tpu.matmul %111, %112, %cst_62 {dimension_numbers = #tpu.dot_dimension_numbers<[1], [0], [0], [1], [0, 0, 1, 1], [], []>} : vector<8x256xbf16>, vector<256x256xbf16>, vector<8x256xf32> -> vector<8x256xf32>
    %c0_63 = arith.constant 0 : index
    %c0_64 = arith.constant 0 : index
    %114 = vector.load %arg18[%c0_63, %c0_64] : memref<1x256xf32, #tpu.memory_space<vmem>>, vector<1x256xf32>
    %115 = vector.broadcast %114 : vector<1x256xf32> to vector<8x256xf32>
    %116 = arith.mulf %113, %115 : vector<8x256xf32>
    %c0_65 = arith.constant 0 : index
    %c0_66 = arith.constant 0 : index
    %117 = vector.load %arg19[%c0_65, %c0_66] : memref<1x256xf32, #tpu.memory_space<vmem>>, vector<1x256xf32>
    %118 = vector.broadcast %117 : vector<1x256xf32> to vector<8x256xf32>
    %119 = arith.addf %116, %118 : vector<8x256xf32>
    %120 = arith.addf %119, %10 : vector<8x256xf32>
    %cst_67 = arith.constant 0.000000e+00 : f32
    %121 = vector.broadcast %cst_67 : f32 to vector<8x256xf32>
    %122 = arith.maximumf %120, %121 : vector<8x256xf32>
    %123 = arith.truncf %122 : vector<8x256xf32> to vector<8x256xbf16>
    %c0_68 = arith.constant 0 : index
    %c0_69 = arith.constant 0 : index
    %124 = vector.load %arg27[%c0_68, %c0_69] : memref<8x256xbf16, #tpu.memory_space<vmem>>, vector<8x256xbf16>
    tpu.vector_store %arg27[%c0_68, %c0_69], %123 {strides = array<i32>} : memref<8x256xbf16, #tpu.memory_space<vmem>>, vector<8x256xbf16>,
    return
  }
  func.func @transform_0(%arg0: i32) -> (i32, i32) {
    %c0_i32 = arith.constant 0 : i32
    %c0_i32_0 = arith.constant 0 : i32
    return %arg0, %c0_i32 : i32, i32
  }
  func.func @transform_1(%arg0: i32) -> (i32, i32) {
    %c0_i32 = arith.constant 0 : i32
    %c0_i32_0 = arith.constant 0 : i32
    %c0_i32_1 = arith.constant 0 : i32
    return %c0_i32, %c0_i32_0 : i32, i32
  }
  func.func @transform_2(%arg0: i32) -> (i32, i32) {
    %c0_i32 = arith.constant 0 : i32
    %c0_i32_0 = arith.constant 0 : i32
    %c0_i32_1 = arith.constant 0 : i32
    return %c0_i32, %c0_i32_0 : i32, i32
  }
  func.func @transform_3(%arg0: i32) -> (i32, i32) {
    %c0_i32 = arith.constant 0 : i32
    %c0_i32_0 = arith.constant 0 : i32
    %c0_i32_1 = arith.constant 0 : i32
    return %c0_i32, %c0_i32_0 : i32, i32
  }
  func.func @transform_4(%arg0: i32) -> (i32, i32) {
    %c0_i32 = arith.constant 0 : i32
    %c0_i32_0 = arith.constant 0 : i32
    %c0_i32_1 = arith.constant 0 : i32
    return %c0_i32, %c0_i32_0 : i32, i32
  }
  func.func @transform_5(%arg0: i32) -> (i32, i32) {
    %c0_i32 = arith.constant 0 : i32
    %c0_i32_0 = arith.constant 0 : i32
    %c0_i32_1 = arith.constant 0 : i32
    return %c0_i32, %c0_i32_0 : i32, i32
  }
  func.func @transform_6(%arg0: i32) -> (i32, i32) {
    %c0_i32 = arith.constant 0 : i32
    %c0_i32_0 = arith.constant 0 : i32
    %c0_i32_1 = arith.constant 0 : i32
    return %c0_i32, %c0_i32_0 : i32, i32
  }
  func.func @transform_7(%arg0: i32) -> (i32, i32) {
    %c0_i32 = arith.constant 0 : i32
    %c0_i32_0 = arith.constant 0 : i32
    %c0_i32_1 = arith.constant 0 : i32
    return %c0_i32, %c0_i32_0 : i32, i32
  }
  func.func @transform_8(%arg0: i32) -> (i32, i32) {
    %c0_i32 = arith.constant 0 : i32
    %c0_i32_0 = arith.constant 0 : i32
    %c0_i32_1 = arith.constant 0 : i32
    return %c0_i32, %c0_i32_0 : i32, i32
  }
  func.func @transform_9(%arg0: i32) -> (i32, i32) {
    %c0_i32 = arith.constant 0 : i32
    %c0_i32_0 = arith.constant 0 : i32
    %c0_i32_1 = arith.constant 0 : i32
    return %c0_i32, %c0_i32_0 : i32, i32
  }
  func.func @transform_10(%arg0: i32) -> (i32, i32) {
    %c0_i32 = arith.constant 0 : i32
    %c0_i32_0 = arith.constant 0 : i32
    %c0_i32_1 = arith.constant 0 : i32
    return %c0_i32, %c0_i32_0 : i32, i32
  }
  func.func @transform_11(%arg0: i32) -> (i32, i32) {
    %c0_i32 = arith.constant 0 : i32
    %c0_i32_0 = arith.constant 0 : i32
    %c0_i32_1 = arith.constant 0 : i32
    return %c0_i32, %c0_i32_0 : i32, i32
  }
  func.func @transform_12(%arg0: i32) -> (i32, i32) {
    %c0_i32 = arith.constant 0 : i32
    %c0_i32_0 = arith.constant 0 : i32
    %c0_i32_1 = arith.constant 0 : i32
    return %c0_i32, %c0_i32_0 : i32, i32
  }
  func.func @transform_13(%arg0: i32) -> (i32, i32) {
    %c0_i32 = arith.constant 0 : i32
    %c0_i32_0 = arith.constant 0 : i32
    %c0_i32_1 = arith.constant 0 : i32
    return %c0_i32, %c0_i32_0 : i32, i32
  }
  func.func @transform_14(%arg0: i32) -> (i32, i32) {
    %c0_i32 = arith.constant 0 : i32
    %c0_i32_0 = arith.constant 0 : i32
    %c0_i32_1 = arith.constant 0 : i32
    return %c0_i32, %c0_i32_0 : i32, i32
  }
  func.func @transform_15(%arg0: i32) -> (i32, i32) {
    %c0_i32 = arith.constant 0 : i32
    %c0_i32_0 = arith.constant 0 : i32
    %c0_i32_1 = arith.constant 0 : i32
    return %c0_i32, %c0_i32_0 : i32, i32
  }
  func.func @transform_16(%arg0: i32) -> (i32, i32) {
    %c0_i32 = arith.constant 0 : i32
    %c0_i32_0 = arith.constant 0 : i32
    %c0_i32_1 = arith.constant 0 : i32
    return %c0_i32, %c0_i32_0 : i32, i32
  }
  func.func @transform_17(%arg0: i32) -> (i32, i32) {
    %c0_i32 = arith.constant 0 : i32
    %c0_i32_0 = arith.constant 0 : i32
    %c0_i32_1 = arith.constant 0 : i32
    return %c0_i32, %c0_i32_0 : i32, i32
  }
  func.func @transform_18(%arg0: i32) -> (i32, i32) {
    %c0_i32 = arith.constant 0 : i32
    %c0_i32_0 = arith.constant 0 : i32
    %c0_i32_1 = arith.constant 0 : i32
    return %c0_i32, %c0_i32_0 : i32, i32
  }
  func.func @transform_19(%arg0: i32) -> (i32, i32) {
    %c0_i32 = arith.constant 0 : i32
    %c0_i32_0 = arith.constant 0 : i32
    %c0_i32_1 = arith.constant 0 : i32
    return %c0_i32, %c0_i32_0 : i32, i32
  }
  func.func @transform_20(%arg0: i32) -> (i32, i32) {
    %c0_i32 = arith.constant 0 : i32
    %c0_i32_0 = arith.constant 0 : i32
    %c0_i32_1 = arith.constant 0 : i32
    return %c0_i32, %c0_i32_0 : i32, i32
  }
  func.func @transform_21(%arg0: i32) -> (i32, i32) {
    %c0_i32 = arith.constant 0 : i32
    %c0_i32_0 = arith.constant 0 : i32
    %c0_i32_1 = arith.constant 0 : i32
    return %c0_i32, %c0_i32_0 : i32, i32
  }
  func.func @transform_22(%arg0: i32) -> (i32, i32) {
    %c0_i32 = arith.constant 0 : i32
    %c0_i32_0 = arith.constant 0 : i32
    %c0_i32_1 = arith.constant 0 : i32
    return %c0_i32, %c0_i32_0 : i32, i32
  }
  func.func @transform_23(%arg0: i32) -> (i32, i32) {
    %c0_i32 = arith.constant 0 : i32
    %c0_i32_0 = arith.constant 0 : i32
    %c0_i32_1 = arith.constant 0 : i32
    return %c0_i32, %c0_i32_0 : i32, i32
  }
  func.func @transform_24(%arg0: i32) -> (i32, i32) {
    %c0_i32 = arith.constant 0 : i32
    %c0_i32_0 = arith.constant 0 : i32
    %c0_i32_1 = arith.constant 0 : i32
    return %c0_i32, %c0_i32_0 : i32, i32
  }
  func.func @transform_25(%arg0: i32) -> (i32, i32) {
    %c0_i32 = arith.constant 0 : i32
    %c0_i32_0 = arith.constant 0 : i32
    %c0_i32_1 = arith.constant 0 : i32
    return %c0_i32, %c0_i32_0 : i32, i32
  }
  func.func @transform_26(%arg0: i32) -> (i32, i32) {
    %c0_i32 = arith.constant 0 : i32
    %c0_i32_0 = arith.constant 0 : i32
    return %arg0, %c0_i32 : i32, i32
  }
}

module attributes {stable_mosaic.version = 11 : i64} {
  func.func @_block_kernel(%arg0: i32, %arg1: memref<8x256xbf16, #tpu.memory_space<vmem>>, %arg2: memref<256x256xbf16, #tpu.memory_space<vmem>>, %arg3: memref<1x256xf32, #tpu.memory_space<vmem>>, %arg4: memref<1x256xf32, #tpu.memory_space<vmem>>, %arg5: memref<256x256xbf16, #tpu.memory_space<vmem>>, %arg6: memref<1x256xf32, #tpu.memory_space<vmem>>, %arg7: memref<1x256xf32, #tpu.memory_space<vmem>>, %arg8: memref<256x256xbf16, #tpu.memory_space<vmem>>, %arg9: memref<1x256xf32, #tpu.memory_space<vmem>>, %arg10: memref<1x256xf32, #tpu.memory_space<vmem>>, %arg11: memref<256x256xbf16, #tpu.memory_space<vmem>>, %arg12: memref<1x256xf32, #tpu.memory_space<vmem>>, %arg13: memref<1x256xf32, #tpu.memory_space<vmem>>, %arg14: memref<256x256xbf16, #tpu.memory_space<vmem>>, %arg15: memref<1x256xf32, #tpu.memory_space<vmem>>, %arg16: memref<1x256xf32, #tpu.memory_space<vmem>>, %arg17: memref<256x256xbf16, #tpu.memory_space<vmem>>, %arg18: memref<1x256xf32, #tpu.memory_space<vmem>>, %arg19: memref<1x256xf32, #tpu.memory_space<vmem>>, %arg20: memref<1x256xbf16, #tpu.memory_space<vmem>>, %arg21: memref<1x256xbf16, #tpu.memory_space<vmem>>, %arg22: memref<8x1xbf16, #tpu.memory_space<vmem>>, %arg23: memref<8x1xbf16, #tpu.memory_space<vmem>>, %arg24: memref<1x256xf32, #tpu.memory_space<vmem>>, %arg25: memref<1x256xf32, #tpu.memory_space<vmem>>, %arg26: memref<8x256xbf16, #tpu.memory_space<vmem>>) attributes {dimension_semantics = [#tpu.dimension_semantics<parallel>], iteration_bounds = array<i64: 1>, scalar_prefetch = 0 : i64, scratch_operands = 0 : i64, tpu.core_type = #tpu.core_type<tc>, window_params = [{transform_indices = @transform_0, window_bounds = array<i64: 8, 256>}, {pipeline_mode = #tpu.pipeline_mode<synchronous>, transform_indices = @transform_1, window_bounds = array<i64: 256, 256>}, {pipeline_mode = #tpu.pipeline_mode<synchronous>, transform_indices = @transform_2, window_bounds = array<i64: 1, 256>}, {pipeline_mode = #tpu.pipeline_mode<synchronous>, transform_indices = @transform_3, window_bounds = array<i64: 1, 256>}, {pipeline_mode = #tpu.pipeline_mode<synchronous>, transform_indices = @transform_4, window_bounds = array<i64: 256, 256>}, {pipeline_mode = #tpu.pipeline_mode<synchronous>, transform_indices = @transform_5, window_bounds = array<i64: 1, 256>}, {pipeline_mode = #tpu.pipeline_mode<synchronous>, transform_indices = @transform_6, window_bounds = array<i64: 1, 256>}, {pipeline_mode = #tpu.pipeline_mode<synchronous>, transform_indices = @transform_7, window_bounds = array<i64: 256, 256>}, {pipeline_mode = #tpu.pipeline_mode<synchronous>, transform_indices = @transform_8, window_bounds = array<i64: 1, 256>}, {pipeline_mode = #tpu.pipeline_mode<synchronous>, transform_indices = @transform_9, window_bounds = array<i64: 1, 256>}, {pipeline_mode = #tpu.pipeline_mode<synchronous>, transform_indices = @transform_10, window_bounds = array<i64: 256, 256>}, {pipeline_mode = #tpu.pipeline_mode<synchronous>, transform_indices = @transform_11, window_bounds = array<i64: 1, 256>}, {pipeline_mode = #tpu.pipeline_mode<synchronous>, transform_indices = @transform_12, window_bounds = array<i64: 1, 256>}, {pipeline_mode = #tpu.pipeline_mode<synchronous>, transform_indices = @transform_13, window_bounds = array<i64: 256, 256>}, {pipeline_mode = #tpu.pipeline_mode<synchronous>, transform_indices = @transform_14, window_bounds = array<i64: 1, 256>}, {pipeline_mode = #tpu.pipeline_mode<synchronous>, transform_indices = @transform_15, window_bounds = array<i64: 1, 256>}, {pipeline_mode = #tpu.pipeline_mode<synchronous>, transform_indices = @transform_16, window_bounds = array<i64: 256, 256>}, {pipeline_mode = #tpu.pipeline_mode<synchronous>, transform_indices = @transform_17, window_bounds = array<i64: 1, 256>}, {pipeline_mode = #tpu.pipeline_mode<synchronous>, transform_indices = @transform_18, window_bounds = array<i64: 1, 256>}, {pipeline_mode = #tpu.pipeline_mode<synchronous>, transform_indices = @transform_19, window_bounds = array<i64: 1, 256>}, {pipeline_mode = #tpu.pipeline_mode<synchronous>, transform_indices = @transform_20, window_bounds = array<i64: 1, 256>}, {pipeline_mode = #tpu.pipeline_mode<synchronous>, transform_indices = @transform_21, window_bounds = array<i64: 8, 1>}, {pipeline_mode = #tpu.pipeline_mode<synchronous>, transform_indices = @transform_22, window_bounds = array<i64: 8, 1>}, {pipeline_mode = #tpu.pipeline_mode<synchronous>, transform_indices = @transform_23, window_bounds = array<i64: 1, 256>}, {pipeline_mode = #tpu.pipeline_mode<synchronous>, transform_indices = @transform_24, window_bounds = array<i64: 1, 256>}, {transform_indices = @transform_25, window_bounds = array<i64: 8, 256>}]} {
    %c0 = arith.constant 0 : index
    %c0_0 = arith.constant 0 : index
    %0 = vector.load %arg1[%c0, %c0_0] : memref<8x256xbf16, #tpu.memory_space<vmem>>, vector<8x256xbf16>
    %1 = arith.extf %0 : vector<8x256xbf16> to vector<8x256xf32>
    %c0_1 = arith.constant 0 : index
    %c0_2 = arith.constant 0 : index
    %2 = vector.load %arg24[%c0_1, %c0_2] : memref<1x256xf32, #tpu.memory_space<vmem>>, vector<1x256xf32>
    %3 = vector.broadcast %2 : vector<1x256xf32> to vector<8x256xf32>
    %4 = arith.mulf %1, %3 : vector<8x256xf32>
    %c0_3 = arith.constant 0 : index
    %c0_4 = arith.constant 0 : index
    %5 = vector.load %arg25[%c0_3, %c0_4] : memref<1x256xf32, #tpu.memory_space<vmem>>, vector<1x256xf32>
    %6 = vector.broadcast %5 : vector<1x256xf32> to vector<8x256xf32>
    %7 = arith.addf %4, %6 : vector<8x256xf32>
    %c0_5 = arith.constant 0 : index
    %c0_6 = arith.constant 0 : index
    %8 = vector.load %arg20[%c0_5, %c0_6] : memref<1x256xbf16, #tpu.memory_space<vmem>>, vector<1x256xbf16>
    %c0_7 = arith.constant 0 : index
    %c0_8 = arith.constant 0 : index
    %9 = vector.load %arg21[%c0_7, %c0_8] : memref<1x256xbf16, #tpu.memory_space<vmem>>, vector<1x256xbf16>
    %c0_9 = arith.constant 0 : index
    %c0_10 = arith.constant 0 : index
    %10 = vector.load %arg22[%c0_9, %c0_10] : memref<8x1xbf16, #tpu.memory_space<vmem>>, vector<8x1xbf16>
    %c0_11 = arith.constant 0 : index
    %c0_12 = arith.constant 0 : index
    %11 = vector.load %arg23[%c0_11, %c0_12] : memref<8x1xbf16, #tpu.memory_space<vmem>>, vector<8x1xbf16>
    %cst = arith.constant 1.000000e+00 : bf16
    %12 = vector.broadcast %cst : bf16 to vector<1x256xbf16>
    %13 = arith.subf %12, %8 : vector<1x256xbf16>
    %14 = arith.subf %13, %9 : vector<1x256xbf16>
    %15 = vector.broadcast %8 : vector<1x256xbf16> to vector<8x256xbf16>
    %16 = vector.broadcast %10 : vector<8x1xbf16> to vector<8x256xbf16>
    %17 = arith.mulf %15, %16 : vector<8x256xbf16>
    %18 = vector.broadcast %9 : vector<1x256xbf16> to vector<8x256xbf16>
    %19 = vector.broadcast %11 : vector<8x1xbf16> to vector<8x256xbf16>
    %20 = arith.mulf %18, %19 : vector<8x256xbf16>
    %c0_13 = arith.constant 0 : index
    %c0_14 = arith.constant 0 : index
    %21 = vector.load %arg2[%c0_13, %c0_14] : memref<256x256xbf16, #tpu.memory_space<vmem>>, vector<256x256xbf16>
    %cst_15 = arith.constant dense<0.000000e+00> : vector<8x256xf32>
    %22 = tpu.matmul %0, %21, %cst_15 {dimension_numbers = #tpu.dot_dimension_numbers<[1], [0], [0], [1], [0, 0, 1, 1], [], []>} : vector<8x256xbf16>, vector<256x256xbf16>, vector<8x256xf32> -> vector<8x256xf32>
    %c0_16 = arith.constant 0 : index
    %c0_17 = arith.constant 0 : index
    %23 = vector.load %arg3[%c0_16, %c0_17] : memref<1x256xf32, #tpu.memory_space<vmem>>, vector<1x256xf32>
    %24 = vector.broadcast %23 : vector<1x256xf32> to vector<8x256xf32>
    %25 = arith.mulf %22, %24 : vector<8x256xf32>
    %c0_18 = arith.constant 0 : index
    %c0_19 = arith.constant 0 : index
    %26 = vector.load %arg4[%c0_18, %c0_19] : memref<1x256xf32, #tpu.memory_space<vmem>>, vector<1x256xf32>
    %27 = vector.broadcast %26 : vector<1x256xf32> to vector<8x256xf32>
    %28 = arith.addf %25, %27 : vector<8x256xf32>
    %cst_20 = arith.constant 0.000000e+00 : f32
    %29 = vector.broadcast %cst_20 : f32 to vector<8x256xf32>
    %30 = arith.maximumf %28, %29 : vector<8x256xf32>
    %31 = arith.truncf %30 : vector<8x256xf32> to vector<8x256xbf16>
    %cst_21 = arith.constant 0.000000e+00 : bf16
    %32 = vector.broadcast %cst_21 : bf16 to vector<1x256xbf16>
    %33 = vector.extract_strided_slice %31 {offsets = [1, 0], sizes = [7, 256], strides = [1, 1]} : vector<8x256xbf16> to vector<7x256xbf16>
    %34 = tpu.concatenate %33, %32 in 0 : vector<7x256xbf16>, vector<1x256xbf16> -> vector<8x256xbf16>
    %35 = vector.extract_strided_slice %31 {offsets = [0, 0], sizes = [7, 256], strides = [1, 1]} : vector<8x256xbf16> to vector<7x256xbf16>
    %36 = tpu.concatenate %32, %35 in 0 : vector<1x256xbf16>, vector<7x256xbf16> -> vector<8x256xbf16>
    %37 = vector.broadcast %14 : vector<1x256xbf16> to vector<8x256xbf16>
    %38 = arith.mulf %31, %37 : vector<8x256xbf16>
    %39 = arith.mulf %34, %17 : vector<8x256xbf16>
    %40 = arith.addf %38, %39 : vector<8x256xbf16>
    %41 = arith.mulf %36, %20 : vector<8x256xbf16>
    %42 = arith.addf %40, %41 : vector<8x256xbf16>
    %c0_22 = arith.constant 0 : index
    %c0_23 = arith.constant 0 : index
    %43 = vector.load %arg5[%c0_22, %c0_23] : memref<256x256xbf16, #tpu.memory_space<vmem>>, vector<256x256xbf16>
    %cst_24 = arith.constant dense<0.000000e+00> : vector<8x256xf32>
    %44 = tpu.matmul %42, %43, %cst_24 {dimension_numbers = #tpu.dot_dimension_numbers<[1], [0], [0], [1], [0, 0, 1, 1], [], []>} : vector<8x256xbf16>, vector<256x256xbf16>, vector<8x256xf32> -> vector<8x256xf32>
    %c0_25 = arith.constant 0 : index
    %c0_26 = arith.constant 0 : index
    %45 = vector.load %arg6[%c0_25, %c0_26] : memref<1x256xf32, #tpu.memory_space<vmem>>, vector<1x256xf32>
    %46 = vector.broadcast %45 : vector<1x256xf32> to vector<8x256xf32>
    %47 = arith.mulf %44, %46 : vector<8x256xf32>
    %c0_27 = arith.constant 0 : index
    %c0_28 = arith.constant 0 : index
    %48 = vector.load %arg7[%c0_27, %c0_28] : memref<1x256xf32, #tpu.memory_space<vmem>>, vector<1x256xf32>
    %49 = vector.broadcast %48 : vector<1x256xf32> to vector<8x256xf32>
    %50 = arith.addf %47, %49 : vector<8x256xf32>
    %cst_29 = arith.constant 0.000000e+00 : f32
    %51 = vector.broadcast %cst_29 : f32 to vector<8x256xf32>
    %52 = arith.maximumf %50, %51 : vector<8x256xf32>
    %53 = arith.truncf %52 : vector<8x256xf32> to vector<8x256xbf16>
    %c0_30 = arith.constant 0 : index
    %c0_31 = arith.constant 0 : index
    %54 = vector.load %arg8[%c0_30, %c0_31] : memref<256x256xbf16, #tpu.memory_space<vmem>>, vector<256x256xbf16>
    %cst_32 = arith.constant dense<0.000000e+00> : vector<8x256xf32>
    %55 = tpu.matmul %53, %54, %cst_32 {dimension_numbers = #tpu.dot_dimension_numbers<[1], [0], [0], [1], [0, 0, 1, 1], [], []>} : vector<8x256xbf16>, vector<256x256xbf16>, vector<8x256xf32> -> vector<8x256xf32>
    %c0_33 = arith.constant 0 : index
    %c0_34 = arith.constant 0 : index
    %56 = vector.load %arg9[%c0_33, %c0_34] : memref<1x256xf32, #tpu.memory_space<vmem>>, vector<1x256xf32>
    %57 = vector.broadcast %56 : vector<1x256xf32> to vector<8x256xf32>
    %58 = arith.mulf %55, %57 : vector<8x256xf32>
    %c0_35 = arith.constant 0 : index
    %c0_36 = arith.constant 0 : index
    %59 = vector.load %arg10[%c0_35, %c0_36] : memref<1x256xf32, #tpu.memory_space<vmem>>, vector<1x256xf32>
    %60 = vector.broadcast %59 : vector<1x256xf32> to vector<8x256xf32>
    %61 = arith.addf %58, %60 : vector<8x256xf32>
    %cst_37 = arith.constant 0.000000e+00 : f32
    %62 = vector.broadcast %cst_37 : f32 to vector<8x256xf32>
    %63 = arith.maximumf %61, %62 : vector<8x256xf32>
    %64 = arith.truncf %63 : vector<8x256xf32> to vector<8x256xbf16>
    %cst_38 = arith.constant 0.000000e+00 : bf16
    %65 = vector.broadcast %cst_38 : bf16 to vector<1x256xbf16>
    %66 = vector.extract_strided_slice %64 {offsets = [1, 0], sizes = [7, 256], strides = [1, 1]} : vector<8x256xbf16> to vector<7x256xbf16>
    %67 = tpu.concatenate %66, %65 in 0 : vector<7x256xbf16>, vector<1x256xbf16> -> vector<8x256xbf16>
    %68 = vector.extract_strided_slice %64 {offsets = [0, 0], sizes = [7, 256], strides = [1, 1]} : vector<8x256xbf16> to vector<7x256xbf16>
    %69 = tpu.concatenate %65, %68 in 0 : vector<1x256xbf16>, vector<7x256xbf16> -> vector<8x256xbf16>
    %70 = vector.broadcast %14 : vector<1x256xbf16> to vector<8x256xbf16>
    %71 = arith.mulf %64, %70 : vector<8x256xbf16>
    %72 = arith.mulf %67, %17 : vector<8x256xbf16>
    %73 = arith.addf %71, %72 : vector<8x256xbf16>
    %74 = arith.mulf %69, %20 : vector<8x256xbf16>
    %75 = arith.addf %73, %74 : vector<8x256xbf16>
    %c0_39 = arith.constant 0 : index
    %c0_40 = arith.constant 0 : index
    %76 = vector.load %arg11[%c0_39, %c0_40] : memref<256x256xbf16, #tpu.memory_space<vmem>>, vector<256x256xbf16>
    %cst_41 = arith.constant dense<0.000000e+00> : vector<8x256xf32>
    %77 = tpu.matmul %75, %76, %cst_41 {dimension_numbers = #tpu.dot_dimension_numbers<[1], [0], [0], [1], [0, 0, 1, 1], [], []>} : vector<8x256xbf16>, vector<256x256xbf16>, vector<8x256xf32> -> vector<8x256xf32>
    %c0_42 = arith.constant 0 : index
    %c0_43 = arith.constant 0 : index
    %78 = vector.load %arg12[%c0_42, %c0_43] : memref<1x256xf32, #tpu.memory_space<vmem>>, vector<1x256xf32>
    %79 = vector.broadcast %78 : vector<1x256xf32> to vector<8x256xf32>
    %80 = arith.mulf %77, %79 : vector<8x256xf32>
    %c0_44 = arith.constant 0 : index
    %c0_45 = arith.constant 0 : index
    %81 = vector.load %arg13[%c0_44, %c0_45] : memref<1x256xf32, #tpu.memory_space<vmem>>, vector<1x256xf32>
    %82 = vector.broadcast %81 : vector<1x256xf32> to vector<8x256xf32>
    %83 = arith.addf %80, %82 : vector<8x256xf32>
    %cst_46 = arith.constant 0.000000e+00 : f32
    %84 = vector.broadcast %cst_46 : f32 to vector<8x256xf32>
    %85 = arith.maximumf %83, %84 : vector<8x256xf32>
    %86 = arith.truncf %85 : vector<8x256xf32> to vector<8x256xbf16>
    %c0_47 = arith.constant 0 : index
    %c0_48 = arith.constant 0 : index
    %87 = vector.load %arg14[%c0_47, %c0_48] : memref<256x256xbf16, #tpu.memory_space<vmem>>, vector<256x256xbf16>
    %cst_49 = arith.constant dense<0.000000e+00> : vector<8x256xf32>
    %88 = tpu.matmul %86, %87, %cst_49 {dimension_numbers = #tpu.dot_dimension_numbers<[1], [0], [0], [1], [0, 0, 1, 1], [], []>} : vector<8x256xbf16>, vector<256x256xbf16>, vector<8x256xf32> -> vector<8x256xf32>
    %c0_50 = arith.constant 0 : index
    %c0_51 = arith.constant 0 : index
    %89 = vector.load %arg15[%c0_50, %c0_51] : memref<1x256xf32, #tpu.memory_space<vmem>>, vector<1x256xf32>
    %90 = vector.broadcast %89 : vector<1x256xf32> to vector<8x256xf32>
    %91 = arith.mulf %88, %90 : vector<8x256xf32>
    %c0_52 = arith.constant 0 : index
    %c0_53 = arith.constant 0 : index
    %92 = vector.load %arg16[%c0_52, %c0_53] : memref<1x256xf32, #tpu.memory_space<vmem>>, vector<1x256xf32>
    %93 = vector.broadcast %92 : vector<1x256xf32> to vector<8x256xf32>
    %94 = arith.addf %91, %93 : vector<8x256xf32>
    %cst_54 = arith.constant 0.000000e+00 : f32
    %95 = vector.broadcast %cst_54 : f32 to vector<8x256xf32>
    %96 = arith.maximumf %94, %95 : vector<8x256xf32>
    %97 = arith.truncf %96 : vector<8x256xf32> to vector<8x256xbf16>
    %cst_55 = arith.constant 0.000000e+00 : bf16
    %98 = vector.broadcast %cst_55 : bf16 to vector<1x256xbf16>
    %99 = vector.extract_strided_slice %97 {offsets = [1, 0], sizes = [7, 256], strides = [1, 1]} : vector<8x256xbf16> to vector<7x256xbf16>
    %100 = tpu.concatenate %99, %98 in 0 : vector<7x256xbf16>, vector<1x256xbf16> -> vector<8x256xbf16>
    %101 = vector.extract_strided_slice %97 {offsets = [0, 0], sizes = [7, 256], strides = [1, 1]} : vector<8x256xbf16> to vector<7x256xbf16>
    %102 = tpu.concatenate %98, %101 in 0 : vector<1x256xbf16>, vector<7x256xbf16> -> vector<8x256xbf16>
    %103 = vector.broadcast %14 : vector<1x256xbf16> to vector<8x256xbf16>
    %104 = arith.mulf %97, %103 : vector<8x256xbf16>
    %105 = arith.mulf %100, %17 : vector<8x256xbf16>
    %106 = arith.addf %104, %105 : vector<8x256xbf16>
    %107 = arith.mulf %102, %20 : vector<8x256xbf16>
    %108 = arith.addf %106, %107 : vector<8x256xbf16>
    %c0_56 = arith.constant 0 : index
    %c0_57 = arith.constant 0 : index
    %109 = vector.load %arg17[%c0_56, %c0_57] : memref<256x256xbf16, #tpu.memory_space<vmem>>, vector<256x256xbf16>
    %cst_58 = arith.constant dense<0.000000e+00> : vector<8x256xf32>
    %110 = tpu.matmul %108, %109, %cst_58 {dimension_numbers = #tpu.dot_dimension_numbers<[1], [0], [0], [1], [0, 0, 1, 1], [], []>} : vector<8x256xbf16>, vector<256x256xbf16>, vector<8x256xf32> -> vector<8x256xf32>
    %c0_59 = arith.constant 0 : index
    %c0_60 = arith.constant 0 : index
    %111 = vector.load %arg18[%c0_59, %c0_60] : memref<1x256xf32, #tpu.memory_space<vmem>>, vector<1x256xf32>
    %112 = vector.broadcast %111 : vector<1x256xf32> to vector<8x256xf32>
    %113 = arith.mulf %110, %112 : vector<8x256xf32>
    %c0_61 = arith.constant 0 : index
    %c0_62 = arith.constant 0 : index
    %114 = vector.load %arg19[%c0_61, %c0_62] : memref<1x256xf32, #tpu.memory_space<vmem>>, vector<1x256xf32>
    %115 = vector.broadcast %114 : vector<1x256xf32> to vector<8x256xf32>
    %116 = arith.addf %113, %115 : vector<8x256xf32>
    %117 = arith.addf %116, %7 : vector<8x256xf32>
    %cst_63 = arith.constant 0.000000e+00 : f32
    %118 = vector.broadcast %cst_63 : f32 to vector<8x256xf32>
    %119 = arith.maximumf %117, %118 : vector<8x256xf32>
    %120 = arith.truncf %119 : vector<8x256xf32> to vector<8x256xbf16>
    %c0_64 = arith.constant 0 : index
    %c0_65 = arith.constant 0 : index
    %121 = vector.load %arg26[%c0_64, %c0_65] : memref<8x256xbf16, #tpu.memory_space<vmem>>, vector<8x256xbf16>
    tpu.vector_store %arg26[%c0_64, %c0_65], %120 {strides = array<i32>} : memref<8x256xbf16, #tpu.memory_space<vmem>>, vector<8x256xbf16>,
    return
  }
  func.func @transform_0(%arg0: i32) -> (i32, i32) {
    %c0_i32 = arith.constant 0 : i32
    %c0_i32_0 = arith.constant 0 : i32
    return %arg0, %c0_i32 : i32, i32
  }
  func.func @transform_1(%arg0: i32) -> (i32, i32) {
    %c0_i32 = arith.constant 0 : i32
    %c0_i32_0 = arith.constant 0 : i32
    %c0_i32_1 = arith.constant 0 : i32
    return %c0_i32, %c0_i32_0 : i32, i32
  }
  func.func @transform_2(%arg0: i32) -> (i32, i32) {
    %c0_i32 = arith.constant 0 : i32
    %c0_i32_0 = arith.constant 0 : i32
    %c0_i32_1 = arith.constant 0 : i32
    return %c0_i32, %c0_i32_0 : i32, i32
  }
  func.func @transform_3(%arg0: i32) -> (i32, i32) {
    %c0_i32 = arith.constant 0 : i32
    %c0_i32_0 = arith.constant 0 : i32
    %c0_i32_1 = arith.constant 0 : i32
    return %c0_i32, %c0_i32_0 : i32, i32
  }
  func.func @transform_4(%arg0: i32) -> (i32, i32) {
    %c0_i32 = arith.constant 0 : i32
    %c0_i32_0 = arith.constant 0 : i32
    %c0_i32_1 = arith.constant 0 : i32
    return %c0_i32, %c0_i32_0 : i32, i32
  }
  func.func @transform_5(%arg0: i32) -> (i32, i32) {
    %c0_i32 = arith.constant 0 : i32
    %c0_i32_0 = arith.constant 0 : i32
    %c0_i32_1 = arith.constant 0 : i32
    return %c0_i32, %c0_i32_0 : i32, i32
  }
  func.func @transform_6(%arg0: i32) -> (i32, i32) {
    %c0_i32 = arith.constant 0 : i32
    %c0_i32_0 = arith.constant 0 : i32
    %c0_i32_1 = arith.constant 0 : i32
    return %c0_i32, %c0_i32_0 : i32, i32
  }
  func.func @transform_7(%arg0: i32) -> (i32, i32) {
    %c0_i32 = arith.constant 0 : i32
    %c0_i32_0 = arith.constant 0 : i32
    %c0_i32_1 = arith.constant 0 : i32
    return %c0_i32, %c0_i32_0 : i32, i32
  }
  func.func @transform_8(%arg0: i32) -> (i32, i32) {
    %c0_i32 = arith.constant 0 : i32
    %c0_i32_0 = arith.constant 0 : i32
    %c0_i32_1 = arith.constant 0 : i32
    return %c0_i32, %c0_i32_0 : i32, i32
  }
  func.func @transform_9(%arg0: i32) -> (i32, i32) {
    %c0_i32 = arith.constant 0 : i32
    %c0_i32_0 = arith.constant 0 : i32
    %c0_i32_1 = arith.constant 0 : i32
    return %c0_i32, %c0_i32_0 : i32, i32
  }
  func.func @transform_10(%arg0: i32) -> (i32, i32) {
    %c0_i32 = arith.constant 0 : i32
    %c0_i32_0 = arith.constant 0 : i32
    %c0_i32_1 = arith.constant 0 : i32
    return %c0_i32, %c0_i32_0 : i32, i32
  }
  func.func @transform_11(%arg0: i32) -> (i32, i32) {
    %c0_i32 = arith.constant 0 : i32
    %c0_i32_0 = arith.constant 0 : i32
    %c0_i32_1 = arith.constant 0 : i32
    return %c0_i32, %c0_i32_0 : i32, i32
  }
  func.func @transform_12(%arg0: i32) -> (i32, i32) {
    %c0_i32 = arith.constant 0 : i32
    %c0_i32_0 = arith.constant 0 : i32
    %c0_i32_1 = arith.constant 0 : i32
    return %c0_i32, %c0_i32_0 : i32, i32
  }
  func.func @transform_13(%arg0: i32) -> (i32, i32) {
    %c0_i32 = arith.constant 0 : i32
    %c0_i32_0 = arith.constant 0 : i32
    %c0_i32_1 = arith.constant 0 : i32
    return %c0_i32, %c0_i32_0 : i32, i32
  }
  func.func @transform_14(%arg0: i32) -> (i32, i32) {
    %c0_i32 = arith.constant 0 : i32
    %c0_i32_0 = arith.constant 0 : i32
    %c0_i32_1 = arith.constant 0 : i32
    return %c0_i32, %c0_i32_0 : i32, i32
  }
  func.func @transform_15(%arg0: i32) -> (i32, i32) {
    %c0_i32 = arith.constant 0 : i32
    %c0_i32_0 = arith.constant 0 : i32
    %c0_i32_1 = arith.constant 0 : i32
    return %c0_i32, %c0_i32_0 : i32, i32
  }
  func.func @transform_16(%arg0: i32) -> (i32, i32) {
    %c0_i32 = arith.constant 0 : i32
    %c0_i32_0 = arith.constant 0 : i32
    %c0_i32_1 = arith.constant 0 : i32
    return %c0_i32, %c0_i32_0 : i32, i32
  }
  func.func @transform_17(%arg0: i32) -> (i32, i32) {
    %c0_i32 = arith.constant 0 : i32
    %c0_i32_0 = arith.constant 0 : i32
    %c0_i32_1 = arith.constant 0 : i32
    return %c0_i32, %c0_i32_0 : i32, i32
  }
  func.func @transform_18(%arg0: i32) -> (i32, i32) {
    %c0_i32 = arith.constant 0 : i32
    %c0_i32_0 = arith.constant 0 : i32
    %c0_i32_1 = arith.constant 0 : i32
    return %c0_i32, %c0_i32_0 : i32, i32
  }
  func.func @transform_19(%arg0: i32) -> (i32, i32) {
    %c0_i32 = arith.constant 0 : i32
    %c0_i32_0 = arith.constant 0 : i32
    %c0_i32_1 = arith.constant 0 : i32
    return %c0_i32, %c0_i32_0 : i32, i32
  }
  func.func @transform_20(%arg0: i32) -> (i32, i32) {
    %c0_i32 = arith.constant 0 : i32
    %c0_i32_0 = arith.constant 0 : i32
    %c0_i32_1 = arith.constant 0 : i32
    return %c0_i32, %c0_i32_0 : i32, i32
  }
  func.func @transform_21(%arg0: i32) -> (i32, i32) {
    %c0_i32 = arith.constant 0 : i32
    %c0_i32_0 = arith.constant 0 : i32
    %c0_i32_1 = arith.constant 0 : i32
    return %c0_i32, %c0_i32_0 : i32, i32
  }
  func.func @transform_22(%arg0: i32) -> (i32, i32) {
    %c0_i32 = arith.constant 0 : i32
    %c0_i32_0 = arith.constant 0 : i32
    %c0_i32_1 = arith.constant 0 : i32
    return %c0_i32, %c0_i32_0 : i32, i32
  }
  func.func @transform_23(%arg0: i32) -> (i32, i32) {
    %c0_i32 = arith.constant 0 : i32
    %c0_i32_0 = arith.constant 0 : i32
    %c0_i32_1 = arith.constant 0 : i32
    return %c0_i32, %c0_i32_0 : i32, i32
  }
  func.func @transform_24(%arg0: i32) -> (i32, i32) {
    %c0_i32 = arith.constant 0 : i32
    %c0_i32_0 = arith.constant 0 : i32
    %c0_i32_1 = arith.constant 0 : i32
    return %c0_i32, %c0_i32_0 : i32, i32
  }
  func.func @transform_25(%arg0: i32) -> (i32, i32) {
    %c0_i32 = arith.constant 0 : i32
    %c0_i32_0 = arith.constant 0 : i32
    return %arg0, %c0_i32 : i32, i32
  }
}

module attributes {stable_mosaic.version = 11 : i64} {
  func.func @_stem_block1_kernel(%arg0: i32, %arg1: memref<8x8xbf16, #tpu.memory_space<vmem>>, %arg2: memref<8x64xbf16, #tpu.memory_space<vmem>>, %arg3: memref<8x64xbf16, #tpu.memory_space<vmem>>, %arg4: memref<8x64xbf16, #tpu.memory_space<vmem>>, %arg5: memref<1x64xf32, #tpu.memory_space<vmem>>, %arg6: memref<1x64xf32, #tpu.memory_space<vmem>>, %arg7: memref<32x128xbf16, #tpu.memory_space<vmem>>, %arg8: memref<1x128xf32, #tpu.memory_space<vmem>>, %arg9: memref<1x128xf32, #tpu.memory_space<vmem>>, %arg10: memref<128x128xbf16, #tpu.memory_space<vmem>>, %arg11: memref<1x128xf32, #tpu.memory_space<vmem>>, %arg12: memref<1x128xf32, #tpu.memory_space<vmem>>, %arg13: memref<128x128xbf16, #tpu.memory_space<vmem>>, %arg14: memref<1x128xf32, #tpu.memory_space<vmem>>, %arg15: memref<1x128xf32, #tpu.memory_space<vmem>>, %arg16: memref<128x128xbf16, #tpu.memory_space<vmem>>, %arg17: memref<1x128xf32, #tpu.memory_space<vmem>>, %arg18: memref<1x128xf32, #tpu.memory_space<vmem>>, %arg19: memref<128x128xbf16, #tpu.memory_space<vmem>>, %arg20: memref<1x128xf32, #tpu.memory_space<vmem>>, %arg21: memref<1x128xf32, #tpu.memory_space<vmem>>, %arg22: memref<128x128xbf16, #tpu.memory_space<vmem>>, %arg23: memref<1x128xf32, #tpu.memory_space<vmem>>, %arg24: memref<1x128xf32, #tpu.memory_space<vmem>>, %arg25: memref<32x128xbf16, #tpu.memory_space<vmem>>, %arg26: memref<1x128xf32, #tpu.memory_space<vmem>>, %arg27: memref<1x128xf32, #tpu.memory_space<vmem>>, %arg28: memref<1x128xbf16, #tpu.memory_space<vmem>>, %arg29: memref<1x128xbf16, #tpu.memory_space<vmem>>, %arg30: memref<8x1xbf16, #tpu.memory_space<vmem>>, %arg31: memref<8x1xbf16, #tpu.memory_space<vmem>>, %arg32: memref<8x128xbf16, #tpu.memory_space<vmem>>) attributes {dimension_semantics = [#tpu.dimension_semantics<parallel>], iteration_bounds = array<i64: 2>, scalar_prefetch = 0 : i64, scratch_operands = 0 : i64, tpu.core_type = #tpu.core_type<tc>, window_params = [{transform_indices = @transform_0, window_bounds = array<i64: 8, 8>}, {pipeline_mode = #tpu.pipeline_mode<synchronous>, transform_indices = @transform_1, window_bounds = array<i64: 8, 64>}, {pipeline_mode = #tpu.pipeline_mode<synchronous>, transform_indices = @transform_2, window_bounds = array<i64: 8, 64>}, {pipeline_mode = #tpu.pipeline_mode<synchronous>, transform_indices = @transform_3, window_bounds = array<i64: 8, 64>}, {pipeline_mode = #tpu.pipeline_mode<synchronous>, transform_indices = @transform_4, window_bounds = array<i64: 1, 64>}, {pipeline_mode = #tpu.pipeline_mode<synchronous>, transform_indices = @transform_5, window_bounds = array<i64: 1, 64>}, {pipeline_mode = #tpu.pipeline_mode<synchronous>, transform_indices = @transform_6, window_bounds = array<i64: 32, 128>}, {pipeline_mode = #tpu.pipeline_mode<synchronous>, transform_indices = @transform_7, window_bounds = array<i64: 1, 128>}, {pipeline_mode = #tpu.pipeline_mode<synchronous>, transform_indices = @transform_8, window_bounds = array<i64: 1, 128>}, {pipeline_mode = #tpu.pipeline_mode<synchronous>, transform_indices = @transform_9, window_bounds = array<i64: 128, 128>}, {pipeline_mode = #tpu.pipeline_mode<synchronous>, transform_indices = @transform_10, window_bounds = array<i64: 1, 128>}, {pipeline_mode = #tpu.pipeline_mode<synchronous>, transform_indices = @transform_11, window_bounds = array<i64: 1, 128>}, {pipeline_mode = #tpu.pipeline_mode<synchronous>, transform_indices = @transform_12, window_bounds = array<i64: 128, 128>}, {pipeline_mode = #tpu.pipeline_mode<synchronous>, transform_indices = @transform_13, window_bounds = array<i64: 1, 128>}, {pipeline_mode = #tpu.pipeline_mode<synchronous>, transform_indices = @transform_14, window_bounds = array<i64: 1, 128>}, {pipeline_mode = #tpu.pipeline_mode<synchronous>, transform_indices = @transform_15, window_bounds = array<i64: 128, 128>}, {pipeline_mode = #tpu.pipeline_mode<synchronous>, transform_indices = @transform_16, window_bounds = array<i64: 1, 128>}, {pipeline_mode = #tpu.pipeline_mode<synchronous>, transform_indices = @transform_17, window_bounds = array<i64: 1, 128>}, {pipeline_mode = #tpu.pipeline_mode<synchronous>, transform_indices = @transform_18, window_bounds = array<i64: 128, 128>}, {pipeline_mode = #tpu.pipeline_mode<synchronous>, transform_indices = @transform_19, window_bounds = array<i64: 1, 128>}, {pipeline_mode = #tpu.pipeline_mode<synchronous>, transform_indices = @transform_20, window_bounds = array<i64: 1, 128>}, {pipeline_mode = #tpu.pipeline_mode<synchronous>, transform_indices = @transform_21, window_bounds = array<i64: 128, 128>}, {pipeline_mode = #tpu.pipeline_mode<synchronous>, transform_indices = @transform_22, window_bounds = array<i64: 1, 128>}, {pipeline_mode = #tpu.pipeline_mode<synchronous>, transform_indices = @transform_23, window_bounds = array<i64: 1, 128>}, {pipeline_mode = #tpu.pipeline_mode<synchronous>, transform_indices = @transform_24, window_bounds = array<i64: 32, 128>}, {pipeline_mode = #tpu.pipeline_mode<synchronous>, transform_indices = @transform_25, window_bounds = array<i64: 1, 128>}, {pipeline_mode = #tpu.pipeline_mode<synchronous>, transform_indices = @transform_26, window_bounds = array<i64: 1, 128>}, {pipeline_mode = #tpu.pipeline_mode<synchronous>, transform_indices = @transform_27, window_bounds = array<i64: 1, 128>}, {pipeline_mode = #tpu.pipeline_mode<synchronous>, transform_indices = @transform_28, window_bounds = array<i64: 1, 128>}, {pipeline_mode = #tpu.pipeline_mode<synchronous>, transform_indices = @transform_29, window_bounds = array<i64: 8, 1>}, {pipeline_mode = #tpu.pipeline_mode<synchronous>, transform_indices = @transform_30, window_bounds = array<i64: 8, 1>}, {transform_indices = @transform_31, window_bounds = array<i64: 8, 128>}]} {
    %c0 = arith.constant 0 : index
    %c0_0 = arith.constant 0 : index
    %0 = vector.load %arg1[%c0, %c0_0] : memref<8x8xbf16, #tpu.memory_space<vmem>>, vector<8x8xbf16>
    %c0_1 = arith.constant 0 : index
    %c0_2 = arith.constant 0 : index
    %1 = vector.load %arg30[%c0_1, %c0_2] : memref<8x1xbf16, #tpu.memory_space<vmem>>, vector<8x1xbf16>
    %c0_3 = arith.constant 0 : index
    %c0_4 = arith.constant 0 : index
    %2 = vector.load %arg31[%c0_3, %c0_4] : memref<8x1xbf16, #tpu.memory_space<vmem>>, vector<8x1xbf16>
    %cst = arith.constant 0.000000e+00 : bf16
    %3 = vector.broadcast %cst : bf16 to vector<1x8xbf16>
    %4 = vector.extract_strided_slice %0 {offsets = [1, 0], sizes = [7, 8], strides = [1, 1]} : vector<8x8xbf16> to vector<7x8xbf16>
    %5 = tpu.concatenate %4, %3 in 0 : vector<7x8xbf16>, vector<1x8xbf16> -> vector<8x8xbf16>
    %6 = vector.extract_strided_slice %0 {offsets = [0, 0], sizes = [7, 8], strides = [1, 1]} : vector<8x8xbf16> to vector<7x8xbf16>
    %7 = tpu.concatenate %3, %6 in 0 : vector<1x8xbf16>, vector<7x8xbf16> -> vector<8x8xbf16>
    %c0_5 = arith.constant 0 : index
    %c0_6 = arith.constant 0 : index
    %8 = vector.load %arg2[%c0_5, %c0_6] : memref<8x64xbf16, #tpu.memory_space<vmem>>, vector<8x64xbf16>
    %cst_7 = arith.constant dense<0.000000e+00> : vector<8x64xf32>
    %9 = tpu.matmul %0, %8, %cst_7 {dimension_numbers = #tpu.dot_dimension_numbers<[1], [0], [0], [1], [0, 0, 1, 1], [], []>} : vector<8x8xbf16>, vector<8x64xbf16>, vector<8x64xf32> -> vector<8x64xf32>
    %10 = vector.broadcast %2 : vector<8x1xbf16> to vector<8x8xbf16>
    %11 = arith.mulf %10, %7 : vector<8x8xbf16>
    %c0_8 = arith.constant 0 : index
    %c0_9 = arith.constant 0 : index
    %12 = vector.load %arg3[%c0_8, %c0_9] : memref<8x64xbf16, #tpu.memory_space<vmem>>, vector<8x64xbf16>
    %cst_10 = arith.constant dense<0.000000e+00> : vector<8x64xf32>
    %13 = tpu.matmul %11, %12, %cst_10 {dimension_numbers = #tpu.dot_dimension_numbers<[1], [0], [0], [1], [0, 0, 1, 1], [], []>} : vector<8x8xbf16>, vector<8x64xbf16>, vector<8x64xf32> -> vector<8x64xf32>
    %14 = arith.addf %9, %13 : vector<8x64xf32>
    %15 = vector.broadcast %1 : vector<8x1xbf16> to vector<8x8xbf16>
    %16 = arith.mulf %15, %5 : vector<8x8xbf16>
    %c0_11 = arith.constant 0 : index
    %c0_12 = arith.constant 0 : index
    %17 = vector.load %arg4[%c0_11, %c0_12] : memref<8x64xbf16, #tpu.memory_space<vmem>>, vector<8x64xbf16>
    %cst_13 = arith.constant dense<0.000000e+00> : vector<8x64xf32>
    %18 = tpu.matmul %16, %17, %cst_13 {dimension_numbers = #tpu.dot_dimension_numbers<[1], [0], [0], [1], [0, 0, 1, 1], [], []>} : vector<8x8xbf16>, vector<8x64xbf16>, vector<8x64xf32> -> vector<8x64xf32>
    %19 = arith.addf %14, %18 : vector<8x64xf32>
    %c0_14 = arith.constant 0 : index
    %c0_15 = arith.constant 0 : index
    %20 = vector.load %arg5[%c0_14, %c0_15] : memref<1x64xf32, #tpu.memory_space<vmem>>, vector<1x64xf32>
    %21 = vector.broadcast %20 : vector<1x64xf32> to vector<8x64xf32>
    %22 = arith.mulf %19, %21 : vector<8x64xf32>
    %c0_16 = arith.constant 0 : index
    %c0_17 = arith.constant 0 : index
    %23 = vector.load %arg6[%c0_16, %c0_17] : memref<1x64xf32, #tpu.memory_space<vmem>>, vector<1x64xf32>
    %24 = vector.broadcast %23 : vector<1x64xf32> to vector<8x64xf32>
    %25 = arith.addf %22, %24 : vector<8x64xf32>
    %26 = vector.extract_strided_slice %25 {offsets = [0, 0], sizes = [8, 32], strides = [1, 1]} : vector<8x64xf32> to vector<8x32xf32>
    %27 = vector.extract_strided_slice %25 {offsets = [0, 32], sizes = [8, 32], strides = [1, 1]} : vector<8x64xf32> to vector<8x32xf32>
    %28 = arith.maximumf %26, %27 : vector<8x32xf32>
    %29 = arith.truncf %28 : vector<8x32xf32> to vector<8x32xbf16>
    %c0_18 = arith.constant 0 : index
    %c0_19 = arith.constant 0 : index
    %30 = vector.load %arg25[%c0_18, %c0_19] : memref<32x128xbf16, #tpu.memory_space<vmem>>, vector<32x128xbf16>
    %cst_20 = arith.constant dense<0.000000e+00> : vector<8x128xf32>
    %31 = tpu.matmul %29, %30, %cst_20 {dimension_numbers = #tpu.dot_dimension_numbers<[1], [0], [0], [1], [0, 0, 1, 1], [], []>} : vector<8x32xbf16>, vector<32x128xbf16>, vector<8x128xf32> -> vector<8x128xf32>
    %c0_21 = arith.constant 0 : index
    %c0_22 = arith.constant 0 : index
    %32 = vector.load %arg26[%c0_21, %c0_22] : memref<1x128xf32, #tpu.memory_space<vmem>>, vector<1x128xf32>
    %33 = vector.broadcast %32 : vector<1x128xf32> to vector<8x128xf32>
    %34 = arith.mulf %31, %33 : vector<8x128xf32>
    %c0_23 = arith.constant 0 : index
    %c0_24 = arith.constant 0 : index
    %35 = vector.load %arg27[%c0_23, %c0_24] : memref<1x128xf32, #tpu.memory_space<vmem>>, vector<1x128xf32>
    %36 = vector.broadcast %35 : vector<1x128xf32> to vector<8x128xf32>
    %37 = arith.addf %34, %36 : vector<8x128xf32>
    %c0_25 = arith.constant 0 : index
    %c0_26 = arith.constant 0 : index
    %38 = vector.load %arg28[%c0_25, %c0_26] : memref<1x128xbf16, #tpu.memory_space<vmem>>, vector<1x128xbf16>
    %c0_27 = arith.constant 0 : index
    %c0_28 = arith.constant 0 : index
    %39 = vector.load %arg29[%c0_27, %c0_28] : memref<1x128xbf16, #tpu.memory_space<vmem>>, vector<1x128xbf16>
    %cst_29 = arith.constant 1.000000e+00 : bf16
    %40 = vector.broadcast %cst_29 : bf16 to vector<1x128xbf16>
    %41 = arith.subf %40, %38 : vector<1x128xbf16>
    %42 = arith.subf %41, %39 : vector<1x128xbf16>
    %43 = vector.broadcast %38 : vector<1x128xbf16> to vector<8x128xbf16>
    %44 = vector.broadcast %1 : vector<8x1xbf16> to vector<8x128xbf16>
    %45 = arith.mulf %43, %44 : vector<8x128xbf16>
    %46 = vector.broadcast %39 : vector<1x128xbf16> to vector<8x128xbf16>
    %47 = vector.broadcast %2 : vector<8x1xbf16> to vector<8x128xbf16>
    %48 = arith.mulf %46, %47 : vector<8x128xbf16>
    %c0_30 = arith.constant 0 : index
    %c0_31 = arith.constant 0 : index
    %49 = vector.load %arg7[%c0_30, %c0_31] : memref<32x128xbf16, #tpu.memory_space<vmem>>, vector<32x128xbf16>
    %cst_32 = arith.constant dense<0.000000e+00> : vector<8x128xf32>
    %50 = tpu.matmul %29, %49, %cst_32 {dimension_numbers = #tpu.dot_dimension_numbers<[1], [0], [0], [1], [0, 0, 1, 1], [], []>} : vector<8x32xbf16>, vector<32x128xbf16>, vector<8x128xf32> -> vector<8x128xf32>
    %c0_33 = arith.constant 0 : index
    %c0_34 = arith.constant 0 : index
    %51 = vector.load %arg8[%c0_33, %c0_34] : memref<1x128xf32, #tpu.memory_space<vmem>>, vector<1x128xf32>
    %52 = vector.broadcast %51 : vector<1x128xf32> to vector<8x128xf32>
    %53 = arith.mulf %50, %52 : vector<8x128xf32>
    %c0_35 = arith.constant 0 : index
    %c0_36 = arith.constant 0 : index
    %54 = vector.load %arg9[%c0_35, %c0_36] : memref<1x128xf32, #tpu.memory_space<vmem>>, vector<1x128xf32>
    %55 = vector.broadcast %54 : vector<1x128xf32> to vector<8x128xf32>
    %56 = arith.addf %53, %55 : vector<8x128xf32>
    %cst_37 = arith.constant 0.000000e+00 : f32
    %57 = vector.broadcast %cst_37 : f32 to vector<8x128xf32>
    %58 = arith.maximumf %56, %57 : vector<8x128xf32>
    %59 = arith.truncf %58 : vector<8x128xf32> to vector<8x128xbf16>
    %cst_38 = arith.constant 0.000000e+00 : bf16
    %60 = vector.broadcast %cst_38 : bf16 to vector<1x128xbf16>
    %61 = vector.extract_strided_slice %59 {offsets = [1, 0], sizes = [7, 128], strides = [1, 1]} : vector<8x128xbf16> to vector<7x128xbf16>
    %62 = tpu.concatenate %61, %60 in 0 : vector<7x128xbf16>, vector<1x128xbf16> -> vector<8x128xbf16>
    %63 = vector.extract_strided_slice %59 {offsets = [0, 0], sizes = [7, 128], strides = [1, 1]} : vector<8x128xbf16> to vector<7x128xbf16>
    %64 = tpu.concatenate %60, %63 in 0 : vector<1x128xbf16>, vector<7x128xbf16> -> vector<8x128xbf16>
    %65 = vector.broadcast %42 : vector<1x128xbf16> to vector<8x128xbf16>
    %66 = arith.mulf %59, %65 : vector<8x128xbf16>
    %67 = arith.mulf %62, %45 : vector<8x128xbf16>
    %68 = arith.addf %66, %67 : vector<8x128xbf16>
    %69 = arith.mulf %64, %48 : vector<8x128xbf16>
    %70 = arith.addf %68, %69 : vector<8x128xbf16>
    %c0_39 = arith.constant 0 : index
    %c0_40 = arith.constant 0 : index
    %71 = vector.load %arg10[%c0_39, %c0_40] : memref<128x128xbf16, #tpu.memory_space<vmem>>, vector<128x128xbf16>
    %cst_41 = arith.constant dense<0.000000e+00> : vector<8x128xf32>
    %72 = tpu.matmul %70, %71, %cst_41 {dimension_numbers = #tpu.dot_dimension_numbers<[1], [0], [0], [1], [0, 0, 1, 1], [], []>} : vector<8x128xbf16>, vector<128x128xbf16>, vector<8x128xf32> -> vector<8x128xf32>
    %c0_42 = arith.constant 0 : index
    %c0_43 = arith.constant 0 : index
    %73 = vector.load %arg11[%c0_42, %c0_43] : memref<1x128xf32, #tpu.memory_space<vmem>>, vector<1x128xf32>
    %74 = vector.broadcast %73 : vector<1x128xf32> to vector<8x128xf32>
    %75 = arith.mulf %72, %74 : vector<8x128xf32>
    %c0_44 = arith.constant 0 : index
    %c0_45 = arith.constant 0 : index
    %76 = vector.load %arg12[%c0_44, %c0_45] : memref<1x128xf32, #tpu.memory_space<vmem>>, vector<1x128xf32>
    %77 = vector.broadcast %76 : vector<1x128xf32> to vector<8x128xf32>
    %78 = arith.addf %75, %77 : vector<8x128xf32>
    %cst_46 = arith.constant 0.000000e+00 : f32
    %79 = vector.broadcast %cst_46 : f32 to vector<8x128xf32>
    %80 = arith.maximumf %78, %79 : vector<8x128xf32>
    %81 = arith.truncf %80 : vector<8x128xf32> to vector<8x128xbf16>
    %c0_47 = arith.constant 0 : index
    %c0_48 = arith.constant 0 : index
    %82 = vector.load %arg13[%c0_47, %c0_48] : memref<128x128xbf16, #tpu.memory_space<vmem>>, vector<128x128xbf16>
    %cst_49 = arith.constant dense<0.000000e+00> : vector<8x128xf32>
    %83 = tpu.matmul %81, %82, %cst_49 {dimension_numbers = #tpu.dot_dimension_numbers<[1], [0], [0], [1], [0, 0, 1, 1], [], []>} : vector<8x128xbf16>, vector<128x128xbf16>, vector<8x128xf32> -> vector<8x128xf32>
    %c0_50 = arith.constant 0 : index
    %c0_51 = arith.constant 0 : index
    %84 = vector.load %arg14[%c0_50, %c0_51] : memref<1x128xf32, #tpu.memory_space<vmem>>, vector<1x128xf32>
    %85 = vector.broadcast %84 : vector<1x128xf32> to vector<8x128xf32>
    %86 = arith.mulf %83, %85 : vector<8x128xf32>
    %c0_52 = arith.constant 0 : index
    %c0_53 = arith.constant 0 : index
    %87 = vector.load %arg15[%c0_52, %c0_53] : memref<1x128xf32, #tpu.memory_space<vmem>>, vector<1x128xf32>
    %88 = vector.broadcast %87 : vector<1x128xf32> to vector<8x128xf32>
    %89 = arith.addf %86, %88 : vector<8x128xf32>
    %cst_54 = arith.constant 0.000000e+00 : f32
    %90 = vector.broadcast %cst_54 : f32 to vector<8x128xf32>
    %91 = arith.maximumf %89, %90 : vector<8x128xf32>
    %92 = arith.truncf %91 : vector<8x128xf32> to vector<8x128xbf16>
    %cst_55 = arith.constant 0.000000e+00 : bf16
    %93 = vector.broadcast %cst_55 : bf16 to vector<1x128xbf16>
    %94 = vector.extract_strided_slice %92 {offsets = [1, 0], sizes = [7, 128], strides = [1, 1]} : vector<8x128xbf16> to vector<7x128xbf16>
    %95 = tpu.concatenate %94, %93 in 0 : vector<7x128xbf16>, vector<1x128xbf16> -> vector<8x128xbf16>
    %96 = vector.extract_strided_slice %92 {offsets = [0, 0], sizes = [7, 128], strides = [1, 1]} : vector<8x128xbf16> to vector<7x128xbf16>
    %97 = tpu.concatenate %93, %96 in 0 : vector<1x128xbf16>, vector<7x128xbf16> -> vector<8x128xbf16>
    %98 = vector.broadcast %42 : vector<1x128xbf16> to vector<8x128xbf16>
    %99 = arith.mulf %92, %98 : vector<8x128xbf16>
    %100 = arith.mulf %95, %45 : vector<8x128xbf16>
    %101 = arith.addf %99, %100 : vector<8x128xbf16>
    %102 = arith.mulf %97, %48 : vector<8x128xbf16>
    %103 = arith.addf %101, %102 : vector<8x128xbf16>
    %c0_56 = arith.constant 0 : index
    %c0_57 = arith.constant 0 : index
    %104 = vector.load %arg16[%c0_56, %c0_57] : memref<128x128xbf16, #tpu.memory_space<vmem>>, vector<128x128xbf16>
    %cst_58 = arith.constant dense<0.000000e+00> : vector<8x128xf32>
    %105 = tpu.matmul %103, %104, %cst_58 {dimension_numbers = #tpu.dot_dimension_numbers<[1], [0], [0], [1], [0, 0, 1, 1], [], []>} : vector<8x128xbf16>, vector<128x128xbf16>, vector<8x128xf32> -> vector<8x128xf32>
    %c0_59 = arith.constant 0 : index
    %c0_60 = arith.constant 0 : index
    %106 = vector.load %arg17[%c0_59, %c0_60] : memref<1x128xf32, #tpu.memory_space<vmem>>, vector<1x128xf32>
    %107 = vector.broadcast %106 : vector<1x128xf32> to vector<8x128xf32>
    %108 = arith.mulf %105, %107 : vector<8x128xf32>
    %c0_61 = arith.constant 0 : index
    %c0_62 = arith.constant 0 : index
    %109 = vector.load %arg18[%c0_61, %c0_62] : memref<1x128xf32, #tpu.memory_space<vmem>>, vector<1x128xf32>
    %110 = vector.broadcast %109 : vector<1x128xf32> to vector<8x128xf32>
    %111 = arith.addf %108, %110 : vector<8x128xf32>
    %cst_63 = arith.constant 0.000000e+00 : f32
    %112 = vector.broadcast %cst_63 : f32 to vector<8x128xf32>
    %113 = arith.maximumf %111, %112 : vector<8x128xf32>
    %114 = arith.truncf %113 : vector<8x128xf32> to vector<8x128xbf16>
    %c0_64 = arith.constant 0 : index
    %c0_65 = arith.constant 0 : index
    %115 = vector.load %arg19[%c0_64, %c0_65] : memref<128x128xbf16, #tpu.memory_space<vmem>>, vector<128x128xbf16>
    %cst_66 = arith.constant dense<0.000000e+00> : vector<8x128xf32>
    %116 = tpu.matmul %114, %115, %cst_66 {dimension_numbers = #tpu.dot_dimension_numbers<[1], [0], [0], [1], [0, 0, 1, 1], [], []>} : vector<8x128xbf16>, vector<128x128xbf16>, vector<8x128xf32> -> vector<8x128xf32>
    %c0_67 = arith.constant 0 : index
    %c0_68 = arith.constant 0 : index
    %117 = vector.load %arg20[%c0_67, %c0_68] : memref<1x128xf32, #tpu.memory_space<vmem>>, vector<1x128xf32>
    %118 = vector.broadcast %117 : vector<1x128xf32> to vector<8x128xf32>
    %119 = arith.mulf %116, %118 : vector<8x128xf32>
    %c0_69 = arith.constant 0 : index
    %c0_70 = arith.constant 0 : index
    %120 = vector.load %arg21[%c0_69, %c0_70] : memref<1x128xf32, #tpu.memory_space<vmem>>, vector<1x128xf32>
    %121 = vector.broadcast %120 : vector<1x128xf32> to vector<8x128xf32>
    %122 = arith.addf %119, %121 : vector<8x128xf32>
    %cst_71 = arith.constant 0.000000e+00 : f32
    %123 = vector.broadcast %cst_71 : f32 to vector<8x128xf32>
    %124 = arith.maximumf %122, %123 : vector<8x128xf32>
    %125 = arith.truncf %124 : vector<8x128xf32> to vector<8x128xbf16>
    %cst_72 = arith.constant 0.000000e+00 : bf16
    %126 = vector.broadcast %cst_72 : bf16 to vector<1x128xbf16>
    %127 = vector.extract_strided_slice %125 {offsets = [1, 0], sizes = [7, 128], strides = [1, 1]} : vector<8x128xbf16> to vector<7x128xbf16>
    %128 = tpu.concatenate %127, %126 in 0 : vector<7x128xbf16>, vector<1x128xbf16> -> vector<8x128xbf16>
    %129 = vector.extract_strided_slice %125 {offsets = [0, 0], sizes = [7, 128], strides = [1, 1]} : vector<8x128xbf16> to vector<7x128xbf16>
    %130 = tpu.concatenate %126, %129 in 0 : vector<1x128xbf16>, vector<7x128xbf16> -> vector<8x128xbf16>
    %131 = vector.broadcast %42 : vector<1x128xbf16> to vector<8x128xbf16>
    %132 = arith.mulf %125, %131 : vector<8x128xbf16>
    %133 = arith.mulf %128, %45 : vector<8x128xbf16>
    %134 = arith.addf %132, %133 : vector<8x128xbf16>
    %135 = arith.mulf %130, %48 : vector<8x128xbf16>
    %136 = arith.addf %134, %135 : vector<8x128xbf16>
    %c0_73 = arith.constant 0 : index
    %c0_74 = arith.constant 0 : index
    %137 = vector.load %arg22[%c0_73, %c0_74] : memref<128x128xbf16, #tpu.memory_space<vmem>>, vector<128x128xbf16>
    %cst_75 = arith.constant dense<0.000000e+00> : vector<8x128xf32>
    %138 = tpu.matmul %136, %137, %cst_75 {dimension_numbers = #tpu.dot_dimension_numbers<[1], [0], [0], [1], [0, 0, 1, 1], [], []>} : vector<8x128xbf16>, vector<128x128xbf16>, vector<8x128xf32> -> vector<8x128xf32>
    %c0_76 = arith.constant 0 : index
    %c0_77 = arith.constant 0 : index
    %139 = vector.load %arg23[%c0_76, %c0_77] : memref<1x128xf32, #tpu.memory_space<vmem>>, vector<1x128xf32>
    %140 = vector.broadcast %139 : vector<1x128xf32> to vector<8x128xf32>
    %141 = arith.mulf %138, %140 : vector<8x128xf32>
    %c0_78 = arith.constant 0 : index
    %c0_79 = arith.constant 0 : index
    %142 = vector.load %arg24[%c0_78, %c0_79] : memref<1x128xf32, #tpu.memory_space<vmem>>, vector<1x128xf32>
    %143 = vector.broadcast %142 : vector<1x128xf32> to vector<8x128xf32>
    %144 = arith.addf %141, %143 : vector<8x128xf32>
    %145 = arith.addf %144, %37 : vector<8x128xf32>
    %cst_80 = arith.constant 0.000000e+00 : f32
    %146 = vector.broadcast %cst_80 : f32 to vector<8x128xf32>
    %147 = arith.maximumf %145, %146 : vector<8x128xf32>
    %148 = arith.truncf %147 : vector<8x128xf32> to vector<8x128xbf16>
    %c0_81 = arith.constant 0 : index
    %c0_82 = arith.constant 0 : index
    %149 = vector.load %arg32[%c0_81, %c0_82] : memref<8x128xbf16, #tpu.memory_space<vmem>>, vector<8x128xbf16>
    tpu.vector_store %arg32[%c0_81, %c0_82], %148 {strides = array<i32>} : memref<8x128xbf16, #tpu.memory_space<vmem>>, vector<8x128xbf16>,
    return
  }
  func.func @transform_0(%arg0: i32) -> (i32, i32) {
    %c0_i32 = arith.constant 0 : i32
    %c0_i32_0 = arith.constant 0 : i32
    return %arg0, %c0_i32 : i32, i32
  }
  func.func @transform_1(%arg0: i32) -> (i32, i32) {
    %c0_i32 = arith.constant 0 : i32
    %c0_i32_0 = arith.constant 0 : i32
    %c0_i32_1 = arith.constant 0 : i32
    return %c0_i32, %c0_i32_0 : i32, i32
  }
  func.func @transform_2(%arg0: i32) -> (i32, i32) {
    %c0_i32 = arith.constant 0 : i32
    %c0_i32_0 = arith.constant 0 : i32
    %c0_i32_1 = arith.constant 0 : i32
    return %c0_i32, %c0_i32_0 : i32, i32
  }
  func.func @transform_3(%arg0: i32) -> (i32, i32) {
    %c0_i32 = arith.constant 0 : i32
    %c0_i32_0 = arith.constant 0 : i32
    %c0_i32_1 = arith.constant 0 : i32
    return %c0_i32, %c0_i32_0 : i32, i32
  }
  func.func @transform_4(%arg0: i32) -> (i32, i32) {
    %c0_i32 = arith.constant 0 : i32
    %c0_i32_0 = arith.constant 0 : i32
    %c0_i32_1 = arith.constant 0 : i32
    return %c0_i32, %c0_i32_0 : i32, i32
  }
  func.func @transform_5(%arg0: i32) -> (i32, i32) {
    %c0_i32 = arith.constant 0 : i32
    %c0_i32_0 = arith.constant 0 : i32
    %c0_i32_1 = arith.constant 0 : i32
    return %c0_i32, %c0_i32_0 : i32, i32
  }
  func.func @transform_6(%arg0: i32) -> (i32, i32) {
    %c0_i32 = arith.constant 0 : i32
    %c0_i32_0 = arith.constant 0 : i32
    %c0_i32_1 = arith.constant 0 : i32
    return %c0_i32, %c0_i32_0 : i32, i32
  }
  func.func @transform_7(%arg0: i32) -> (i32, i32) {
    %c0_i32 = arith.constant 0 : i32
    %c0_i32_0 = arith.constant 0 : i32
    %c0_i32_1 = arith.constant 0 : i32
    return %c0_i32, %c0_i32_0 : i32, i32
  }
  func.func @transform_8(%arg0: i32) -> (i32, i32) {
    %c0_i32 = arith.constant 0 : i32
    %c0_i32_0 = arith.constant 0 : i32
    %c0_i32_1 = arith.constant 0 : i32
    return %c0_i32, %c0_i32_0 : i32, i32
  }
  func.func @transform_9(%arg0: i32) -> (i32, i32) {
    %c0_i32 = arith.constant 0 : i32
    %c0_i32_0 = arith.constant 0 : i32
    %c0_i32_1 = arith.constant 0 : i32
    return %c0_i32, %c0_i32_0 : i32, i32
  }
  func.func @transform_10(%arg0: i32) -> (i32, i32) {
    %c0_i32 = arith.constant 0 : i32
    %c0_i32_0 = arith.constant 0 : i32
    %c0_i32_1 = arith.constant 0 : i32
    return %c0_i32, %c0_i32_0 : i32, i32
  }
  func.func @transform_11(%arg0: i32) -> (i32, i32) {
    %c0_i32 = arith.constant 0 : i32
    %c0_i32_0 = arith.constant 0 : i32
    %c0_i32_1 = arith.constant 0 : i32
    return %c0_i32, %c0_i32_0 : i32, i32
  }
  func.func @transform_12(%arg0: i32) -> (i32, i32) {
    %c0_i32 = arith.constant 0 : i32
    %c0_i32_0 = arith.constant 0 : i32
    %c0_i32_1 = arith.constant 0 : i32
    return %c0_i32, %c0_i32_0 : i32, i32
  }
  func.func @transform_13(%arg0: i32) -> (i32, i32) {
    %c0_i32 = arith.constant 0 : i32
    %c0_i32_0 = arith.constant 0 : i32
    %c0_i32_1 = arith.constant 0 : i32
    return %c0_i32, %c0_i32_0 : i32, i32
  }
  func.func @transform_14(%arg0: i32) -> (i32, i32) {
    %c0_i32 = arith.constant 0 : i32
    %c0_i32_0 = arith.constant 0 : i32
    %c0_i32_1 = arith.constant 0 : i32
    return %c0_i32, %c0_i32_0 : i32, i32
  }
  func.func @transform_15(%arg0: i32) -> (i32, i32) {
    %c0_i32 = arith.constant 0 : i32
    %c0_i32_0 = arith.constant 0 : i32
    %c0_i32_1 = arith.constant 0 : i32
    return %c0_i32, %c0_i32_0 : i32, i32
  }
  func.func @transform_16(%arg0: i32) -> (i32, i32) {
    %c0_i32 = arith.constant 0 : i32
    %c0_i32_0 = arith.constant 0 : i32
    %c0_i32_1 = arith.constant 0 : i32
    return %c0_i32, %c0_i32_0 : i32, i32
  }
  func.func @transform_17(%arg0: i32) -> (i32, i32) {
    %c0_i32 = arith.constant 0 : i32
    %c0_i32_0 = arith.constant 0 : i32
    %c0_i32_1 = arith.constant 0 : i32
    return %c0_i32, %c0_i32_0 : i32, i32
  }
  func.func @transform_18(%arg0: i32) -> (i32, i32) {
    %c0_i32 = arith.constant 0 : i32
    %c0_i32_0 = arith.constant 0 : i32
    %c0_i32_1 = arith.constant 0 : i32
    return %c0_i32, %c0_i32_0 : i32, i32
  }
  func.func @transform_19(%arg0: i32) -> (i32, i32) {
    %c0_i32 = arith.constant 0 : i32
    %c0_i32_0 = arith.constant 0 : i32
    %c0_i32_1 = arith.constant 0 : i32
    return %c0_i32, %c0_i32_0 : i32, i32
  }
  func.func @transform_20(%arg0: i32) -> (i32, i32) {
    %c0_i32 = arith.constant 0 : i32
    %c0_i32_0 = arith.constant 0 : i32
    %c0_i32_1 = arith.constant 0 : i32
    return %c0_i32, %c0_i32_0 : i32, i32
  }
  func.func @transform_21(%arg0: i32) -> (i32, i32) {
    %c0_i32 = arith.constant 0 : i32
    %c0_i32_0 = arith.constant 0 : i32
    %c0_i32_1 = arith.constant 0 : i32
    return %c0_i32, %c0_i32_0 : i32, i32
  }
  func.func @transform_22(%arg0: i32) -> (i32, i32) {
    %c0_i32 = arith.constant 0 : i32
    %c0_i32_0 = arith.constant 0 : i32
    %c0_i32_1 = arith.constant 0 : i32
    return %c0_i32, %c0_i32_0 : i32, i32
  }
  func.func @transform_23(%arg0: i32) -> (i32, i32) {
    %c0_i32 = arith.constant 0 : i32
    %c0_i32_0 = arith.constant 0 : i32
    %c0_i32_1 = arith.constant 0 : i32
    return %c0_i32, %c0_i32_0 : i32, i32
  }
  func.func @transform_24(%arg0: i32) -> (i32, i32) {
    %c0_i32 = arith.constant 0 : i32
    %c0_i32_0 = arith.constant 0 : i32
    %c0_i32_1 = arith.constant 0 : i32
    return %c0_i32, %c0_i32_0 : i32, i32
  }
  func.func @transform_25(%arg0: i32) -> (i32, i32) {
    %c0_i32 = arith.constant 0 : i32
    %c0_i32_0 = arith.constant 0 : i32
    %c0_i32_1 = arith.constant 0 : i32
    return %c0_i32, %c0_i32_0 : i32, i32
  }
  func.func @transform_26(%arg0: i32) -> (i32, i32) {
    %c0_i32 = arith.constant 0 : i32
    %c0_i32_0 = arith.constant 0 : i32
    %c0_i32_1 = arith.constant 0 : i32
    return %c0_i32, %c0_i32_0 : i32, i32
  }
  func.func @transform_27(%arg0: i32) -> (i32, i32) {
    %c0_i32 = arith.constant 0 : i32
    %c0_i32_0 = arith.constant 0 : i32
    %c0_i32_1 = arith.constant 0 : i32
    return %c0_i32, %c0_i32_0 : i32, i32
  }
  func.func @transform_28(%arg0: i32) -> (i32, i32) {
    %c0_i32 = arith.constant 0 : i32
    %c0_i32_0 = arith.constant 0 : i32
    %c0_i32_1 = arith.constant 0 : i32
    return %c0_i32, %c0_i32_0 : i32, i32
  }
  func.func @transform_29(%arg0: i32) -> (i32, i32) {
    %c0_i32 = arith.constant 0 : i32
    %c0_i32_0 = arith.constant 0 : i32
    %c0_i32_1 = arith.constant 0 : i32
    return %c0_i32, %c0_i32_0 : i32, i32
  }
  func.func @transform_30(%arg0: i32) -> (i32, i32) {
    %c0_i32 = arith.constant 0 : i32
    %c0_i32_0 = arith.constant 0 : i32
    %c0_i32_1 = arith.constant 0 : i32
    return %c0_i32, %c0_i32_0 : i32, i32
  }
  func.func @transform_31(%arg0: i32) -> (i32, i32) {
    %c0_i32 = arith.constant 0 : i32
    %c0_i32_0 = arith.constant 0 : i32
    return %arg0, %c0_i32 : i32, i32
  }
}

module attributes {stable_mosaic.version = 11 : i64} {
  func.func @_head_kernel(%arg0: i32, %arg1: memref<2x4x256xbf16, #tpu.memory_space<vmem>>, %arg2: memref<256x10xbf16, #tpu.memory_space<vmem>>, %arg3: memref<1x10xf32, #tpu.memory_space<vmem>>, %arg4: memref<2x10xf32, #tpu.memory_space<vmem>>) attributes {dimension_semantics = [#tpu.dimension_semantics<parallel>], iteration_bounds = array<i64: 1>, scalar_prefetch = 0 : i64, scratch_operands = 0 : i64, tpu.core_type = #tpu.core_type<tc>, window_params = [{transform_indices = @transform_0, window_bounds = array<i64: 2, 4, 256>}, {pipeline_mode = #tpu.pipeline_mode<synchronous>, transform_indices = @transform_1, window_bounds = array<i64: 256, 10>}, {pipeline_mode = #tpu.pipeline_mode<synchronous>, transform_indices = @transform_2, window_bounds = array<i64: 1, 10>}, {transform_indices = @transform_3, window_bounds = array<i64: 2, 10>}]} {
    %c0 = arith.constant 0 : index
    %c0_0 = arith.constant 0 : index
    %c0_1 = arith.constant 0 : index
    %0 = vector.load %arg1[%c0, %c0_0, %c0_1] : memref<2x4x256xbf16, #tpu.memory_space<vmem>>, vector<2x4x256xbf16>
    %1 = arith.extf %0 : vector<2x4x256xbf16> to vector<2x4x256xf32>
    %cst = arith.constant dense<0.000000e+00> : vector<2x256xf32>
    %2 = vector.multi_reduction <add>, %1, %cst [1] : vector<2x4x256xf32> to vector<2x256xf32>
    %cst_2 = arith.constant 4.000000e+00 : f32
    %3 = vector.broadcast %cst_2 : f32 to vector<2x256xf32>
    %4 = arith.divf %2, %3 : vector<2x256xf32>
    %5 = arith.truncf %4 : vector<2x256xf32> to vector<2x256xbf16>
    %c0_3 = arith.constant 0 : index
    %c0_4 = arith.constant 0 : index
    %6 = vector.load %arg2[%c0_3, %c0_4] : memref<256x10xbf16, #tpu.memory_space<vmem>>, vector<256x10xbf16>
    %cst_5 = arith.constant dense<0.000000e+00> : vector<2x10xf32>
    %7 = tpu.matmul %5, %6, %cst_5 {dimension_numbers = #tpu.dot_dimension_numbers<[1], [0], [0], [1], [0, 0, 1, 1], [], []>} : vector<2x256xbf16>, vector<256x10xbf16>, vector<2x10xf32> -> vector<2x10xf32>
    %c0_6 = arith.constant 0 : index
    %c0_7 = arith.constant 0 : index
    %8 = vector.load %arg3[%c0_6, %c0_7] : memref<1x10xf32, #tpu.memory_space<vmem>>, vector<1x10xf32>
    %9 = vector.broadcast %8 : vector<1x10xf32> to vector<2x10xf32>
    %10 = arith.addf %7, %9 : vector<2x10xf32>
    %c0_8 = arith.constant 0 : index
    %c0_9 = arith.constant 0 : index
    %11 = vector.load %arg4[%c0_8, %c0_9] : memref<2x10xf32, #tpu.memory_space<vmem>>, vector<2x10xf32>
    tpu.vector_store %arg4[%c0_8, %c0_9], %10 {strides = array<i32>} : memref<2x10xf32, #tpu.memory_space<vmem>>, vector<2x10xf32>,
    return
  }
  func.func @transform_0(%arg0: i32) -> (i32, i32, i32) {
    %c0_i32 = arith.constant 0 : i32
    %c0_i32_0 = arith.constant 0 : i32
    %c0_i32_1 = arith.constant 0 : i32
    return %arg0, %c0_i32, %c0_i32_0 : i32, i32, i32
  }
  func.func @transform_1(%arg0: i32) -> (i32, i32) {
    %c0_i32 = arith.constant 0 : i32
    %c0_i32_0 = arith.constant 0 : i32
    %c0_i32_1 = arith.constant 0 : i32
    return %c0_i32, %c0_i32_0 : i32, i32
  }
  func.func @transform_2(%arg0: i32) -> (i32, i32) {
    %c0_i32 = arith.constant 0 : i32
    %c0_i32_0 = arith.constant 0 : i32
    %c0_i32_1 = arith.constant 0 : i32
    return %c0_i32, %c0_i32_0 : i32, i32
  }
  func.func @transform_3(%arg0: i32) -> (i32, i32) {
    %c0_i32 = arith.constant 0 : i32
    %c0_i32_0 = arith.constant 0 : i32
    return %arg0, %c0_i32 : i32, i32
  }
}

</mosaic_0001>

<llo_original>
// kernel: tpu_custom_call.1
$region0: #{tpu_custom_call.1}
  #allocation0 [shape = 'u32[]', space=smem, size = 0x4, offset = 0x4, fixed_abs, tag = 'smem constant byte address 0x4 - core index']
  #allocation1 [shape = 'u32[72,128]{1,0:T(1,128)}', space=vmem, size = 0x9000, scoped, tag = 'internal scratch']
  %s0 = inlined_call_operand.hbm [shape: f32[8,128], index: 0, kind: input, shape index: {}]
  %s1 = inlined_call_operand.hbm [shape: f32[8,128], index: 1, kind: output, shape index: {}]
  %s2 = sld [smem:[#allocation0]]
  $region18: #{tpu_custom_call.1} parent=0
    _
  %s4 = ssub.s32 1, %s2
  %s5 = scalar_select 0, %s4, %s2
  $region1: #{tpu_custom_call.1} parent=0
    #allocation2 [shape = 'u8[4096]{0}', space=vmem, size = 0x1000, scoped, tag = 'input window, operand 0, single buffered']
    #allocation3 [shape = 's32[1]{0}', space=sflag, size = 0x4, scoped, tag = 'scoped memory for tpu_custom_call.1']
    #allocation4 [shape = 's32[1]{0}', space=sflag, size = 0x4, scoped, tag = 'scoped memory for tpu_custom_call.1']
    #allocation5 [shape = 'u8[4096]{0}', space=vmem, size = 0x1000, scoped, tag = 'output window, operand 0, single buffered']
    %6 = vsyncpa [#allocation3], 0
    %7 = vsyncpa [#allocation4], 0
    // Predicated region
    $region2: #{tpu_custom_call.1} parent=1 // pred_check
      _
    $region3: #{tpu_custom_call.1} parent=1 // pred_check_branch
      %9 = sbr.rel (0) target = $region5
    $region4: #{tpu_custom_call.1} parent=1 // pred_region
      %11 = vsyncadd [#allocation3], 0
      %s13 = sshll.u32 %s0, 4
      %s14 = int_to_ptr.hbm [resolvable:$true] %s13
      %s15 = sshll.u32 [#allocation2], 4
      %s16 = int_to_ptr.vmem [resolvable:$true] %s15
      %18 = dma.hbm_to_vmem [thread:$0]  %s14, 128, %s16, [#allocation3]
    $region5: #{tpu_custom_call.1} parent=1 // pred_fallthru
      _
    // Predicated region
    $region6: #{tpu_custom_call.1} parent=1 // pred_check
      _
    $region7: #{tpu_custom_call.1} parent=1 // pred_check_branch
      %20 = sbr.rel (0) target = $region9
    $region8: #{tpu_custom_call.1} parent=1 // pred_region
      %22 = dma.done [#allocation3], 128
    $region9: #{tpu_custom_call.1} parent=1 // pred_fallthru
      _
    %v23 = vld [vmem:[#allocation2] sm:$0xff]
    %v24 = vrot.slane %v23, 7
    %25 = vst [vmem:[#allocation5] sm:$0xff] %v24
    // Predicated region
    $region10: #{tpu_custom_call.1} parent=1 // pred_check
      _
    $region11: #{tpu_custom_call.1} parent=1 // pred_check_branch
      %27 = sbr.rel (0) target = $region13
    $region12: #{tpu_custom_call.1} parent=1 // pred_region
      %29 = vsyncadd [#allocation4], 0
      %s31 = sshll.u32 [#allocation5], 4
      %s32 = int_to_ptr.vmem [resolvable:$true] %s31
      %s33 = sshll.u32 %s1, 4
      %s34 = int_to_ptr.hbm [resolvable:$true] %s33
      %36 = dma.vmem_to_hbm [thread:$0]  %s32, 128, %s34, [#allocation4]
    $region13: #{tpu_custom_call.1} parent=1 // pred_fallthru
      _
    // Predicated region
    $region14: #{tpu_custom_call.1} parent=1 // pred_check
      _
    $region15: #{tpu_custom_call.1} parent=1 // pred_check_branch
      %38 = sbr.rel (0) target = $region17
    $region16: #{tpu_custom_call.1} parent=1 // pred_region
      %40 = dma.done [#allocation4], 128
    $region17: #{tpu_custom_call.1} parent=1 // pred_fallthru
      _
    %41 = vsyncpa [#allocation3], 1
    %42 = vsyncpa [#allocation4], 1

// kernel: tpu_custom_call.1
$region0: #{tpu_custom_call.1}
  #allocation0 [shape = 'u32[]', space=smem, size = 0x4, offset = 0x4, fixed_abs, tag = 'smem constant byte address 0x4 - core index']
  #allocation1 [shape = 'u32[72,128]{1,0:T(1,128)}', space=vmem, size = 0x9000, scoped, tag = 'internal scratch']
  %s0 = inlined_call_operand.hbm [shape: f32[16,128], index: 0, kind: input, shape index: {}]
  %s1 = inlined_call_operand.hbm [shape: f32[8,128], index: 1, kind: input, shape index: {}]
  %s2 = inlined_call_operand.hbm [shape: f32[16,128], index: 2, kind: output, shape index: {}]
  %s3 = sld [smem:[#allocation0]]
  $region49: #{tpu_custom_call.1} parent=0
    _
  %s5 = ssub.s32 1, %s3
  %s6 = scalar_select 0, %s5, %s3
  $region1: #{tpu_custom_call.1} parent=0
    #allocation2 [shape = 'u8[8192]{0}', space=vmem, size = 0x2000, scoped, tag = 'input window, operand 0']
    #allocation3 [shape = 's32[2]{0}', space=sflag, size = 0x8, scoped, tag = 'scoped memory for tpu_custom_call.1']
    #allocation4 [shape = 's32[2]{0}', space=sflag, size = 0x8, scoped, tag = 'scoped memory for tpu_custom_call.1']
    #allocation5 [shape = 'u8[4096]{0}', space=vmem, size = 0x1000, scoped, tag = 'input window, operand 1, single buffered']
    #allocation6 [shape = 's32[1]{0}', space=sflag, size = 0x4, scoped, tag = 'scoped memory for tpu_custom_call.1']
    #allocation7 [shape = 'u8[8192]{0}', space=vmem, size = 0x2000, scoped, tag = 'output window, operand 0']
    %7 = vsyncpa [#allocation3], 0
    %s8 = scalar_lea.sflag [#allocation3], 1
    %9 = vsyncpa %s8, 0
    %10 = vsyncpa [#allocation6], 0
    %11 = vsyncpa [#allocation4], 0
    %s12 = scalar_lea.sflag [#allocation4], 1
    %13 = vsyncpa %s12, 0
    loop: start=0, step=1, limit=4
    $region2: #{tpu_custom_call.1} parent=1 // loop_pre_header
      _
    $region3: #{tpu_custom_call.1} parent=1 // loop_header
      %s15 = sphi 0, %s19
      %p16 = scmp.ge.s32.totalorder %s15, 4
      %s25 = sphi 0, %s27
      %s28 = sphi 0, %s25
      %s29 = sphi 0, %s28
      %s45 = sphi 0, %s29
      %s49 = sphi 0, %s49
      %s51 = sphi 0, %s49
      %s52 = sphi 0, %s51
      %s66 = sphi 0, %s52
      %s72 = sphi 0, %s74
      %s75 = sphi 0, %s72
      %s76 = sphi 0, %s75
      %s92 = sphi 0, %s76
    $region4: #{tpu_custom_call.1} parent=1 // loop_header_branch
      %18 = sbr.rel (%p16) target = $region8
    $region5: #{tpu_custom_call.1} parent=1 // loop_body
      %s20 = ssub.s32 %s15, 1
      %s21 = ssub.s32 %s15, 2
      %s22 = sadd.s32 %s15, 1
      %s23 = ssub.s32 %s15, %s22
      %p24 = scmp.eq.s32.totalorder %s23, 0
      %s26 = sadd.s32 %s25, 1
      %s27 = scalar_select %p24, %s25, %s26
      %p30 = pneg %p24
      %p31 = scmp.eq.s32.totalorder %s15, 1
      %p32 = por %p30, %p31
      %p33 = scmp.ne.s32.totalorder %s25, %s28
      %p34 = scmp.eq.s32.totalorder %s15, 0
      %p35 = por %p33, %p34
      %p36 = scmp.ne.s32.totalorder %s25, %s28
      %p37 = scmp.eq.s32.totalorder %s20, 1
      %p38 = por %p36, %p37
      %p39 = scmp.ne.s32.totalorder %s28, %s29
      %p40 = scmp.eq.s32.totalorder %s20, 0
      %p41 = por %p39, %p40
      %p42 = scmp.ne.s32.totalorder %s28, %s29
      %p43 = scmp.eq.s32.totalorder %s21, 1
      %p44 = por %p42, %p43
      %p46 = scmp.ne.s32.totalorder %s29, %s45
      %p47 = scmp.eq.s32.totalorder %s21, 0
      %p48 = por %p46, %p47
      %s50 = sadd.s32 %s49, 1
      %p53 = scmp.eq.s32.totalorder %s15, 1
      %p54 = scmp.ne.s32.totalorder %s49, %s51
      %p55 = scmp.eq.s32.totalorder %s15, 0
      %p56 = por %p54, %p55
      %p57 = scmp.ne.s32.totalorder %s49, %s51
      %p58 = scmp.eq.s32.totalorder %s20, 1
      %p59 = por %p57, %p58
      %p60 = scmp.ne.s32.totalorder %s51, %s52
      %p61 = scmp.eq.s32.totalorder %s20, 0
      %p62 = por %p60, %p61
      %p63 = scmp.ne.s32.totalorder %s51, %s52
      %p64 = scmp.eq.s32.totalorder %s21, 1
      %p65 = por %p63, %p64
      %p67 = scmp.ne.s32.totalorder %s52, %s66
      %p68 = scmp.eq.s32.totalorder %s21, 0
      %p69 = por %p67, %p68
      %s70 = ssub.s32 %s15, %s22
      %p71 = scmp.eq.s32.totalorder %s70, 0
      %s73 = sadd.s32 %s72, 1
      %s74 = scalar_select %p71, %s72, %s73
      %p77 = pneg %p71
      %p78 = scmp.eq.s32.totalorder %s15, 1
      %p79 = por %p77, %p78
      %p80 = scmp.ne.s32.totalorder %s72, %s75
      %p81 = scmp.eq.s32.totalorder %s15, 0
      %p82 = por %p80, %p81
      %p83 = scmp.ne.s32.totalorder %s72, %s75
      %p84 = scmp.eq.s32.totalorder %s20, 1
      %p85 = por %p83, %p84
      %p86 = scmp.ne.s32.totalorder %s75, %s76
      %p87 = scmp.eq.s32.totalorder %s20, 0
      %p88 = por %p86, %p87
      %p89 = scmp.ne.s32.totalorder %s75, %s76
      %p90 = scmp.eq.s32.totalorder %s21, 1
      %p91 = por %p89, %p90
      %p93 = scmp.ne.s32.totalorder %s76, %s92
      %p94 = scmp.eq.s32.totalorder %s21, 0
      %p95 = por %p93, %p94
      %p96 = scmp.le.s32.totalorder 1, %s15
      %p97 = scmp.lt.s32.totalorder %s15, 3
      %p98 = pnand %p96, %p97
      %p99 = pneg %p98
      // Predicated region
      $region9: #{tpu_custom_call.1} parent=5 // pred_check
        _
      $region10: #{tpu_custom_call.1} parent=5 // pred_check_branch
        %101 = sbr.rel (%p98) target = $region12
      $region11: #{tpu_custom_call.1} parent=5 // pred_region
        %s102 = ssub.s32 %s15, 1
        // Predicated region
        $region13: #{tpu_custom_call.1} parent=11 // pred_check
          %p103 = pneg %p62
        $region14: #{tpu_custom_call.1} parent=11 // pred_check_branch
          %105 = sbr.rel (%p103) target = $region16
        $region15: #{tpu_custom_call.1} parent=11 // pred_region
          %107 = vsyncadd [#allocation6], 0
          %s109 = sshll.u32 %s1, 4
          %s110 = int_to_ptr.hbm [resolvable:$true] %s109
          %s111 = sshll.u32 [#allocation5], 4
          %s112 = int_to_ptr.vmem [resolvable:$true] %s111
          %114 = dma.hbm_to_vmem [thread:$0]  %s110, 128, %s112, [#allocation6]
        $region16: #{tpu_custom_call.1} parent=11 // pred_fallthru
          _
      $region12: #{tpu_custom_call.1} parent=5 // pred_fallthru
        _
      %p115 = scmp.lt.s32.totalorder %s15, 2
      // Predicated region
      $region17: #{tpu_custom_call.1} parent=5 // pred_check
        %p116 = pneg %p115
      $region18: #{tpu_custom_call.1} parent=5 // pred_check_branch
        %118 = sbr.rel (%p116) target = $region20
      $region19: #{tpu_custom_call.1} parent=5 // pred_region
        // Predicated region
        $region21: #{tpu_custom_call.1} parent=19 // pred_check
          %p119 = pneg %p35
        $region22: #{tpu_custom_call.1} parent=19 // pred_check_branch
          %121 = sbr.rel (%p119) target = $region24
        $region23: #{tpu_custom_call.1} parent=19 // pred_region
          %s122 = sand.u32 %s25, 1
          %s123 = scalar_lea.sflag [#allocation3], %s122
          %s124 = sand.u32 %s25, 1
          %s125 = smul.addr %s124, 8
          %s126 = scalar_lea.vmem [#allocation2], %s125
          %128 = vsyncadd %s123, 0
          %s129 = smul.addr %s15, 8
          %s130 = scalar_lea.hbm %s0, %s129
          %s132 = sshll.u32 %s130, 4
          %s133 = int_to_ptr.hbm [resolvable:$true] %s132
          %s134 = sshll.u32 %s126, 4
          %s135 = int_to_ptr.vmem [resolvable:$true] %s134
          %137 = dma.hbm_to_vmem [thread:$0]  %s133, 128, %s135, %s123
        $region24: #{tpu_custom_call.1} parent=19 // pred_fallthru
          _
      $region20: #{tpu_custom_call.1} parent=5 // pred_fallthru
        _
      %p138 = scmp.le.s32.totalorder 1, %s15
      %p139 = scmp.lt.s32.totalorder %s15, 3
      %p140 = pnand %p138, %p139
      %p141 = pneg %p140
      // Predicated region
      $region25: #{tpu_custom_call.1} parent=5 // pred_check
        _
      $region26: #{tpu_custom_call.1} parent=5 // pred_check_branch
        %143 = sbr.rel (%p140) target = $region28
      $region27: #{tpu_custom_call.1} parent=5 // pred_region
        %s144 = ssub.s32 %s15, 1
        %s145 = sand.u32 %s28, 1
        %s146 = scalar_lea.sflag [#allocation3], %s145
        %s147 = sand.u32 %s28, 1
        %s148 = smul.addr %s147, 8
        %s149 = scalar_lea.vmem [#allocation2], %s148
        // Predicated region
        $region29: #{tpu_custom_call.1} parent=27 // pred_check
          %p150 = pneg %p41
        $region30: #{tpu_custom_call.1} parent=27 // pred_check_branch
          %152 = sbr.rel (%p150) target = $region32
        $region31: #{tpu_custom_call.1} parent=27 // pred_region
          %154 = dma.done %s146, 128
        $region32: #{tpu_custom_call.1} parent=27 // pred_fallthru
          _
        // Predicated region
        $region33: #{tpu_custom_call.1} parent=27 // pred_check
          %p155 = pneg %p62
        $region34: #{tpu_custom_call.1} parent=27 // pred_check_branch
          %157 = sbr.rel (%p155) target = $region36
        $region35: #{tpu_custom_call.1} parent=27 // pred_region
          %159 = dma.done [#allocation6], 128
        $region36: #{tpu_custom_call.1} parent=27 // pred_fallthru
          _
        %s160 = sand.u32 %s28, 1
        %s161 = scalar_lea.sflag [#allocation3], %s160
        %s162 = sand.u32 %s28, 1
        %s163 = smul.addr %s162, 8
        %s164 = scalar_lea.vmem [#allocation2], %s163
        %p165 = pneg %p41
        %p166 = pneg %p38
        %p167 = pneg %p62
        %p168 = pneg %p59
        %p169 = pneg %p88
        %p170 = pneg %p85
        %s171 = sand.u32 %s75, 1
        %s172 = scalar_lea.sflag [#allocation4], %s171
        %s173 = sand.u32 %s75, 1
        %s174 = smul.addr %s173, 8
        %s175 = scalar_lea.vmem [#allocation7], %s174
        %v176 = vld [vmem:[%s149] sm:$0xff]
        %v177 = vld [vmem:[#allocation5] sm:$0xff]
        %v178 = vadd.f32 %v176, %v177
        %179 = vst [vmem:[%s175] sm:$0xff] %v178
        %s180 = sand.u32 %s75, 1
        %s181 = scalar_lea.sflag [#allocation4], %s180
        %s182 = sand.u32 %s75, 1
        %s183 = smul.addr %s182, 8
        %s184 = scalar_lea.vmem [#allocation7], %s183
        // Predicated region
        $region37: #{tpu_custom_call.1} parent=27 // pred_check
          %p185 = pneg %p85
        $region38: #{tpu_custom_call.1} parent=27 // pred_check_branch
          %187 = sbr.rel (%p185) target = $region40
        $region39: #{tpu_custom_call.1} parent=27 // pred_region
          %189 = vsyncadd %s181, 0
          %s190 = smul.addr %s20, 8
          %s191 = scalar_lea.hbm %s2, %s190
          %s193 = sshll.u32 %s184, 4
          %s194 = int_to_ptr.vmem [resolvable:$true] %s193
          %s195 = sshll.u32 %s191, 4
          %s196 = int_to_ptr.hbm [resolvable:$true] %s195
          %198 = dma.vmem_to_hbm [thread:$0]  %s194, 128, %s196, %s181
        $region40: #{tpu_custom_call.1} parent=27 // pred_fallthru
          _
      $region28: #{tpu_custom_call.1} parent=5 // pred_fallthru
        _
      %p199 = scmp.le.s32.totalorder 2, %s15
      // Predicated region
      $region41: #{tpu_custom_call.1} parent=5 // pred_check
        %p200 = pneg %p199
      $region42: #{tpu_custom_call.1} parent=5 // pred_check_branch
        %202 = sbr.rel (%p200) target = $region44
      $region43: #{tpu_custom_call.1} parent=5 // pred_region
        %s203 = ssub.s32 %s15, 2
        // Predicated region
        $region45: #{tpu_custom_call.1} parent=43 // pred_check
          %p204 = pneg %p91
        $region46: #{tpu_custom_call.1} parent=43 // pred_check_branch
          %206 = sbr.rel (%p204) target = $region48
        $region47: #{tpu_custom_call.1} parent=43 // pred_region
          %s207 = sand.u32 %s76, 1
          %s208 = scalar_lea.sflag [#allocation4], %s207
          %s209 = sand.u32 %s76, 1
          %s210 = smul.addr %s209, 8
          %s211 = scalar_lea.vmem [#allocation7], %s210
          %213 = dma.done %s208, 128
        $region48: #{tpu_custom_call.1} parent=43 // pred_fallthru
          _
      $region44: #{tpu_custom_call.1} parent=5 // pred_fallthru
        _
    $region6: #{tpu_custom_call.1} parent=1 // loop_footer
      %s19 = sadd.s32 1, %s15
    $region7: #{tpu_custom_call.1} parent=1 // loop_footer_branch
      %14 = sbr.rel target = $region3
    $region8: #{tpu_custom_call.1} parent=1 // loop_exit
      _
    %214 = vsyncpa [#allocation3], 1
    %s215 = scalar_lea.sflag [#allocation3], 1
    %216 = vsyncpa %s215, 1
    %217 = vsyncpa [#allocation6], 1
    %218 = vsyncpa [#allocation4], 1
    %s219 = scalar_lea.sflag [#allocation4], 1
    %220 = vsyncpa %s219, 1

// kernel: gtsnet_forward.7
$region0: #{gtsnet_forward.7}
  #allocation0 [shape = 'u32[]', space=smem, size = 0x4, offset = 0x4, fixed_abs, tag = 'smem constant byte address 0x4 - core index']
  #allocation1 [shape = 'u32[72,128]{1,0:T(1,128)}', space=vmem, size = 0x9000, scoped, tag = 'internal scratch']
  %s0 = inlined_call_operand.vmem [shape: bf16[2,4,256], index: 0, kind: input, shape index: {}]
  %s1 = inlined_call_operand.vmem [shape: bf16[256,10], index: 1, kind: input, shape index: {}]
  %s2 = inlined_call_operand.vmem [shape: f32[1,10], index: 2, kind: input, shape index: {}]
  %s3 = inlined_call_operand.hbm [shape: f32[2,10], index: 3, kind: output, shape index: {}]
  %s4 = sld [smem:[#allocation0]]
  $region22: #{gtsnet_forward.7} parent=0
    _
  %s6 = ssub.s32 1, %s4
  %s7 = scalar_select 0, %s6, %s4
  $region1: #{gtsnet_forward.7} parent=0
    #allocation2 [shape = 'u8[1024]{0}', space=vmem, size = 0x400, scoped, tag = 'output window, operand 0, single buffered']
    #allocation3 [shape = 's32[1]{0}', space=sflag, size = 0x4, scoped, tag = 'scoped memory for gtsnet_forward.7']
    %8 = vsyncpa [#allocation3], 0
    // Predicated region
    $region2: #{gtsnet_forward.7} parent=1 // pred_check
      _
    $region3: #{gtsnet_forward.7} parent=1 // pred_check_branch
      %10 = sbr.rel (0) target = $region5
    $region4: #{gtsnet_forward.7} parent=1 // pred_region
      _
    $region5: #{gtsnet_forward.7} parent=1 // pred_fallthru
      _
    // Predicated region
    $region6: #{gtsnet_forward.7} parent=1 // pred_check
      _
    $region7: #{gtsnet_forward.7} parent=1 // pred_check_branch
      %12 = sbr.rel (0) target = $region9
    $region8: #{gtsnet_forward.7} parent=1 // pred_region
      _
    $region9: #{gtsnet_forward.7} parent=1 // pred_fallthru
      _
    // Predicated region
    $region10: #{gtsnet_forward.7} parent=1 // pred_check
      _
    $region11: #{gtsnet_forward.7} parent=1 // pred_check_branch
      %14 = sbr.rel (0) target = $region13
    $region12: #{gtsnet_forward.7} parent=1 // pred_region
      _
    $region13: #{gtsnet_forward.7} parent=1 // pred_fallthru
      _
    %v15 = vld [vmem:[%s0] sm:$0xf]
    %v16 = vld [vmem:[%s0 + $0x4] sm:$0xf]
    %v17 = vunpack.c.l.bf16 %v15
    %v18 = vunpack.c.l.bf16 %v16
    %21 = vst [vmem:[#allocation1] ss:$2 sm:$0xff] %v17
    %v22 = vld.sshfl [vmem:[#allocation1] sm:$0xff pattern:$0x75316420]
    %v23 = vld.sshfl [vmem:[#allocation1 + $0x8] sm:$0xff pattern:$0x75316420]
    %s24 = scalar_lea.vmem [#allocation1], 16
    %25 = vst [vmem:[%s24] ss:$2 sm:$0xff] %v18
    %v26 = vld.sshfl [vmem:[#allocation1 + $0x10] sm:$0xff pattern:$0x75316420]
    %v27 = vld.sshfl [vmem:[#allocation1 + $0x18] sm:$0xff pattern:$0x75316420]
    %vm32 = vcmask 1043456
    %v33 = vsel %vm32, %v22, 0.0
    %v34 = vrot.slane %v33, 4
    %v35 = vadd.f32 %v33, %v34
    %v36 = vrot.slane %v35, 2
    %v37 = vadd.f32 %v35, %v36
    %v38 = vrot.slane %v37, 1
    %v39 = vadd.f32 %v37, %v38
    %v40 = vsel %vm32, %v23, 0.0
    %v41 = vrot.slane %v40, 4
    %v42 = vadd.f32 %v40, %v41
    %v43 = vrot.slane %v42, 2
    %v44 = vadd.f32 %v42, %v43
    %v45 = vrot.slane %v44, 1
    %v46 = vadd.f32 %v44, %v45
    %v47 = vsel %vm32, %v26, 0.0
    %v48 = vrot.slane %v47, 4
    %v49 = vadd.f32 %v47, %v48
    %v50 = vrot.slane %v49, 2
    %v51 = vadd.f32 %v49, %v50
    %v52 = vrot.slane %v51, 1
    %v53 = vadd.f32 %v51, %v52
    %v54 = vsel %vm32, %v27, 0.0
    %v55 = vrot.slane %v54, 4
    %v56 = vadd.f32 %v54, %v55
    %v57 = vrot.slane %v56, 2
    %v58 = vadd.f32 %v56, %v57
    %v59 = vrot.slane %v58, 1
    %v60 = vadd.f32 %v58, %v59
    %v61 = vrcp.pop 4.0
    %v62 = vmul.f32 4.0, %v61
    %v63 = vsub.f32 1.0, %v62
    %v64 = vmul.f32 %v61, %v63
    %v65 = vadd.f32 %v61, %v64
    %vm66 = vweird.f32 %v61
    %v67 = vsel %vm66, %v61, %v65
    %v68 = vmul.f32 %v39, %v67
    %v69 = vmul.f32 %v46, %v67
    %v70 = vmul.f32 %v53, %v67
    %v71 = vmul.f32 %v60, %v67
    %v72 = vpack.c.bf16 %v68, %v68
    %v73 = vpack.c.bf16 %v69, %v69
    %v74 = vpack.c.bf16 %v70, %v70
    %v75 = vpack.c.bf16 %v71, %v71
    %v76 = vld [vmem:[%s1] sm:$0xf]
    %v77 = vld [vmem:[%s1 + $0x4] sm:$0xf]
    %v78 = vld [vmem:[%s1 + $0x8] sm:$0xf]
    %v79 = vld [vmem:[%s1 + $0xc] sm:$0xf]
    %v80 = vld [vmem:[%s1 + $0x10] sm:$0xf]
    %v81 = vld [vmem:[%s1 + $0x14] sm:$0xf]
    %v82 = vld [vmem:[%s1 + $0x18] sm:$0xf]
    %v83 = vld [vmem:[%s1 + $0x1c] sm:$0xf]
    %v84 = vld [vmem:[%s1 + $0x20] sm:$0xf]
    %v85 = vld [vmem:[%s1 + $0x24] sm:$0xf]
    %v86 = vld [vmem:[%s1 + $0x28] sm:$0xf]
    %v87 = vld [vmem:[%s1 + $0x2c] sm:$0xf]
    %v88 = vld [vmem:[%s1 + $0x30] sm:$0xf]
    %v89 = vld [vmem:[%s1 + $0x34] sm:$0xf]
    %v90 = vld [vmem:[%s1 + $0x38] sm:$0xf]
    %v91 = vld [vmem:[%s1 + $0x3c] sm:$0xf]
    %v92 = vld [vmem:[%s1 + $0x40] sm:$0xf]
    %v93 = vld [vmem:[%s1 + $0x44] sm:$0xf]
    %v94 = vld [vmem:[%s1 + $0x48] sm:$0xf]
    %v95 = vld [vmem:[%s1 + $0x4c] sm:$0xf]
    %v96 = vld [vmem:[%s1 + $0x50] sm:$0xf]
    %v97 = vld [vmem:[%s1 + $0x54] sm:$0xf]
    %v98 = vld [vmem:[%s1 + $0x58] sm:$0xf]
    %v99 = vld [vmem:[%s1 + $0x5c] sm:$0xf]
    %v100 = vld [vmem:[%s1 + $0x60] sm:$0xf]
    %v101 = vld [vmem:[%s1 + $0x64] sm:$0xf]
    %v102 = vld [vmem:[%s1 + $0x68] sm:$0xf]
    %v103 = vld [vmem:[%s1 + $0x6c] sm:$0xf]
    %v104 = vld [vmem:[%s1 + $0x70] sm:$0xf]
    %v105 = vld [vmem:[%s1 + $0x74] sm:$0xf]
    %v106 = vld [vmem:[%s1 + $0x78] sm:$0xf]
    %v107 = vld [vmem:[%s1 + $0x7c] sm:$0xf]
    %v108 = vld [vmem:[%s2] sm:$0x1]
    %v110 = vperm.slane %v108, 0
    %v116 = vunpack.c.l.b16 %v72
    %v117 = vunpack.c.l.b16 %v73
    %v118 = vunpack.c.l.b16 %v74
    %v119 = vunpack.c.l.b16 %v75
    %vm120 = vcmask 1041409
    %v121 = vsel %vm120, %v118, %v116
    %v122 = vsel %vm120, %v119, %v117
    %v123 = vpack.c.b16 %v121, %v121
    %v124 = vpack.c.b16 %v122, %v122
    %v159 = vunpack.c.l.b16 %v76
    %v160 = vunpack.c.l.b16 %v77
    %v161 = vunpack.c.l.b16 %v78
    %v162 = vunpack.c.l.b16 %v79
    %v163 = vunpack.c.l.b16 %v80
    %v164 = vunpack.c.l.b16 %v81
    %v165 = vunpack.c.l.b16 %v82
    %v166 = vunpack.c.l.b16 %v83
    %v167 = vunpack.c.l.b16 %v84
    %v168 = vunpack.c.l.b16 %v85
    %v169 = vunpack.c.l.b16 %v86
    %v170 = vunpack.c.l.b16 %v87
    %v171 = vunpack.c.l.b16 %v88
    %v172 = vunpack.c.l.b16 %v89
    %v173 = vunpack.c.l.b16 %v90
    %v174 = vunpack.c.l.b16 %v91
    %v175 = vunpack.c.l.b16 %v92
    %v176 = vunpack.c.l.b16 %v93
    %v177 = vunpack.c.l.b16 %v94
    %v178 = vunpack.c.l.b16 %v95
    %v179 = vunpack.c.l.b16 %v96
    %v180 = vunpack.c.l.b16 %v97
    %v181 = vunpack.c.l.b16 %v98
    %v182 = vunpack.c.l.b16 %v99
    %v183 = vunpack.c.l.b16 %v100
    %v184 = vunpack.c.l.b16 %v101
    %v185 = vunpack.c.l.b16 %v102
    %v186 = vunpack.c.l.b16 %v103
    %v187 = vunpack.c.l.b16 %v104
    %v188 = vunpack.c.l.b16 %v105
    %v189 = vunpack.c.l.b16 %v106
    %v190 = vunpack.c.l.b16 %v107
    %v191 = vpack.c.b16 %v160, %v159
    %v192 = vpack.c.b16 %v162, %v161
    %v193 = vpack.c.b16 %v164, %v163
    %v194 = vpack.c.b16 %v166, %v165
    %v195 = vpack.c.b16 %v168, %v167
    %v196 = vpack.c.b16 %v170, %v169
    %v197 = vpack.c.b16 %v172, %v171
    %v198 = vpack.c.b16 %v174, %v173
    %v199 = vpack.c.b16 %v176, %v175
    %v200 = vpack.c.b16 %v178, %v177
    %v201 = vpack.c.b16 %v180, %v179
    %v202 = vpack.c.b16 %v182, %v181
    %v203 = vpack.c.b16 %v184, %v183
    %v204 = vpack.c.b16 %v186, %v185
    %v205 = vpack.c.b16 %v188, %v187
    %v206 = vpack.c.b16 %v190, %v189
    %223 = vmatpush.bf16.msra.mxu0 %v198
    %224 = vmatpush.bf16.msra.mxu0 %v197
    %225 = vmatpush.bf16.msra.mxu0 %v196
    %226 = vmatpush.bf16.msra.mxu0 %v195
    %227 = vmatpush.bf16.msra.mxu0 %v194
    %228 = vmatpush.bf16.msra.mxu0 %v193
    %229 = vmatpush.bf16.msra.mxu0 %v192
    %230 = vmatpush.bf16.msra.mxu0 %v191
    %231 = vmatmul.bf16.gmra.mxu0 %v123
    %v232 = vpop.f32.mrf.mxu0
    %v233 = vadd.f32 %v110, %v232
    %v234 = vpop.f32.mrf.mxu0
    %235 = vdwg.mxu0
    %236 = vmatpush.bf16.msra.mxu0 %v206
    %237 = vmatpush.bf16.msra.mxu0 %v205
    %238 = vmatpush.bf16.msra.mxu0 %v204
    %239 = vmatpush.bf16.msra.mxu0 %v203
    %240 = vmatpush.bf16.msra.mxu0 %v202
    %241 = vmatpush.bf16.msra.mxu0 %v201
    %242 = vmatpush.bf16.msra.mxu0 %v200
    %243 = vmatpush.bf16.msra.mxu0 %v199
    %244 = vmatmul.bf16.gmra.mxu0 %v124
    %v245 = vpop.f32.mrf.mxu0
    %v246 = vadd.f32 %v233, %v245
    %v247 = vpop.f32.mrf.mxu0
    %248 = vdwg.mxu0
    %vm249 = vcmask 74752
    %250 = vst.msk [vmem:[#allocation2] sm:$0x3] %vm249, %v246
    // Predicated region
    $region14: #{gtsnet_forward.7} parent=1 // pred_check
      _
    $region15: #{gtsnet_forward.7} parent=1 // pred_check_branch
      %252 = sbr.rel (0) target = $region17
    $region16: #{gtsnet_forward.7} parent=1 // pred_region
      %254 = vsyncadd [#allocation3], 0
      %s256 = sshll.u32 [#allocation2], 4
      %s257 = int_to_ptr.vmem [resolvable:$true] %s256
      %s258 = sshll.u32 %s3, 4
      %s259 = int_to_ptr.hbm [resolvable:$true] %s258
      %261 = dma.vmem_to_hbm [thread:$0]  %s257, 32, %s259, [#allocation3]
    $region17: #{gtsnet_forward.7} parent=1 // pred_fallthru
      _
    // Predicated region
    $region18: #{gtsnet_forward.7} parent=1 // pred_check
      _
    $region19: #{gtsnet_forward.7} parent=1 // pred_check_branch
      %263 = sbr.rel (0) target = $region21
    $region20: #{gtsnet_forward.7} parent=1 // pred_region
      %265 = dma.done [#allocation3], 32
    $region21: #{gtsnet_forward.7} parent=1 // pred_fallthru
      _
    %266 = vsyncpa [#allocation3], 1

// kernel: gtsnet_forward.4
$region0: #{gtsnet_forward.4}
  #allocation0 [shape = 'u32[]', space=smem, size = 0x4, offset = 0x4, fixed_abs, tag = 'smem constant byte address 0x4 - core index']
  #allocation1 [shape = 'u32[72,128]{1,0:T(1,128)}', space=vmem, size = 0x9000, scoped, tag = 'internal scratch']
  %s0 = inlined_call_operand.smem [shape: u32[32], index: -1, kind: input, shape index: {}]
  %s1 = sld [smem:[%s0]]
  %s2 = scalar_lea.smem %s0, 1
  %s3 = sld [smem:[%s2]]
  %s4 = scalar_lea.smem %s0, 2
  %s5 = sld [smem:[%s4]]
  %s6 = scalar_lea.smem %s0, 3
  %s7 = sld [smem:[%s6]]
  %s8 = scalar_lea.smem %s0, 4
  %s9 = sld [smem:[%s8]]
  %s10 = scalar_lea.smem %s0, 5
  %s11 = sld [smem:[%s10]]
  %s12 = scalar_lea.smem %s0, 6
  %s13 = sld [smem:[%s12]]
  %s14 = scalar_lea.smem %s0, 7
  %s15 = sld [smem:[%s14]]
  %s16 = scalar_lea.smem %s0, 8
  %s17 = sld [smem:[%s16]]
  %s18 = scalar_lea.smem %s0, 9
  %s19 = sld [smem:[%s18]]
  %s20 = scalar_lea.smem %s0, 10
  %s21 = sld [smem:[%s20]]
  %s22 = scalar_lea.smem %s0, 11
  %s23 = sld [smem:[%s22]]
  %s24 = scalar_lea.smem %s0, 12
  %s25 = sld [smem:[%s24]]
  %s26 = scalar_lea.smem %s0, 13
  %s27 = sld [smem:[%s26]]
  %s28 = scalar_lea.smem %s0, 14
  %s29 = sld [smem:[%s28]]
  %s30 = scalar_lea.smem %s0, 15
  %s31 = sld [smem:[%s30]]
  %s32 = scalar_lea.smem %s0, 16
  %s33 = sld [smem:[%s32]]
  %s34 = scalar_lea.smem %s0, 17
  %s35 = sld [smem:[%s34]]
  %s36 = scalar_lea.smem %s0, 18
  %s37 = sld [smem:[%s36]]
  %s38 = scalar_lea.smem %s0, 19
  %s39 = sld [smem:[%s38]]
  %s40 = scalar_lea.smem %s0, 20
  %s41 = sld [smem:[%s40]]
  %s42 = scalar_lea.smem %s0, 21
  %s43 = sld [smem:[%s42]]
  %s44 = scalar_lea.smem %s0, 22
  %s45 = sld [smem:[%s44]]
  %s46 = scalar_lea.smem %s0, 23
  %s47 = sld [smem:[%s46]]
  %s48 = scalar_lea.smem %s0, 24
  %s49 = sld [smem:[%s48]]
  %s50 = scalar_lea.smem %s0, 25
  %s51 = sld [smem:[%s50]]
  %s52 = scalar_lea.smem %s0, 26
  %s53 = sld [smem:[%s52]]
  %s54 = scalar_lea.smem %s0, 27
  %s55 = sld [smem:[%s54]]
  %s56 = scalar_lea.smem %s0, 28
  %s57 = sld [smem:[%s56]]
  %s58 = scalar_lea.smem %s0, 29
  %s59 = sld [smem:[%s58]]
  %s60 = scalar_lea.smem %s0, 30
  %s61 = sld [smem:[%s60]]
  %s62 = scalar_lea.smem %s0, 31
  %s63 = sld [smem:[%s62]]
  %s64 = sld [smem:[#allocation0]]
  $region237: #{gtsnet_forward.4} parent=0
    _
  %s66 = ssub.s32 1, %s64
  %s67 = scalar_select 0, %s66, %s64
  $region1: #{gtsnet_forward.4} parent=0
    #allocation2 [shape = 'u8[8192]{0}', space=vmem, size = 0x2000, scoped, tag = 'input window, operand 6, single buffered']
    #allocation3 [shape = 's32[2]{0}', space=sflag, size = 0x8, scoped, tag = 'scoped memory for gtsnet_forward.4']
    #allocation4 [shape = 'u8[512]{0}', space=vmem, size = 0x400, scoped, tag = 'input window, operand 7, single buffered']
    #allocation5 [shape = 's32[1]{0}', space=sflag, size = 0x4, scoped, tag = 'scoped memory for gtsnet_forward.4']
    #allocation6 [shape = 'u8[512]{0}', space=vmem, size = 0x400, scoped, tag = 'input window, operand 8, single buffered']
    #allocation7 [shape = 'u8[32768]{0}', space=vmem, size = 0x8000, scoped, tag = 'input window, operand 9, single buffered']
    #allocation8 [shape = 's32[1]{0}', space=sflag, size = 0x4, scoped, tag = 'scoped memory for gtsnet_forward.4']
    #allocation9 [shape = 'u8[512]{0}', space=vmem, size = 0x400, scoped, tag = 'input window, operand 10, single buffered']
    #allocation10 [shape = 'u8[512]{0}', space=vmem, size = 0x400, scoped, tag = 'input window, operand 11, single buffered']
    #allocation11 [shape = 's32[1]{0}', space=sflag, size = 0x4, scoped, tag = 'scoped memory for gtsnet_forward.4']
    #allocation12 [shape = 'u8[512]{0}', space=vmem, size = 0x400, scoped, tag = 'input window, operand 13, single buffered']
    #allocation13 [shape = 'u8[512]{0}', space=vmem, size = 0x400, scoped, tag = 'input window, operand 14, single buffered']
    #allocation14 [shape = 's32[1]{0}', space=sflag, size = 0x4, scoped, tag = 'scoped memory for gtsnet_forward.4']
    #allocation15 [shape = 'u8[32768]{0}', space=vmem, size = 0x8000, scoped, tag = 'input window, operand 15, single buffered']
    #allocation16 [shape = 'u8[512]{0}', space=vmem, size = 0x400, scoped, tag = 'input window, operand 16, single buffered']
    #allocation17 [shape = 's32[1]{0}', space=sflag, size = 0x4, scoped, tag = 'scoped memory for gtsnet_forward.4']
    #allocation18 [shape = 'u8[512]{0}', space=vmem, size = 0x400, scoped, tag = 'input window, operand 17, single buffered']
    #allocation19 [shape = 'u8[32768]{0}', space=vmem, size = 0x8000, scoped, tag = 'input window, operand 18, single buffered']
    #allocation20 [shape = 's32[1]{0}', space=sflag, size = 0x4, scoped, tag = 'scoped memory for gtsnet_forward.4']
    #allocation21 [shape = 'u8[512]{0}', space=vmem, size = 0x400, scoped, tag = 'input window, operand 19, single buffered']
    #allocation22 [shape = 'u8[512]{0}', space=vmem, size = 0x400, scoped, tag = 'input window, operand 20, single buffered']
    #allocation23 [shape = 's32[1]{0}', space=sflag, size = 0x4, scoped, tag = 'scoped memory for gtsnet_forward.4']
    #allocation24 [shape = 'u8[32768]{0}', space=vmem, size = 0x8000, scoped, tag = 'input window, operand 21, single buffered']
    #allocation25 [shape = 'u8[512]{0}', space=vmem, size = 0x400, scoped, tag = 'input window, operand 22, single buffered']
    #allocation26 [shape = 's32[1]{0}', space=sflag, size = 0x4, scoped, tag = 'scoped memory for gtsnet_forward.4']
    #allocation27 [shape = 'u8[512]{0}', space=vmem, size = 0x400, scoped, tag = 'input window, operand 23, single buffered']
    #allocation28 [shape = 'u8[8192]{0}', space=vmem, size = 0x2000, scoped, tag = 'input window, operand 24, single buffered']
    #allocation29 [shape = 's32[1]{0}', space=sflag, size = 0x4, scoped, tag = 'scoped memory for gtsnet_forward.4']
    #allocation30 [shape = 'u8[512]{0}', space=vmem, size = 0x400, scoped, tag = 'input window, operand 25, single buffered']
    #allocation31 [shape = 'u8[512]{0}', space=vmem, size = 0x400, scoped, tag = 'input window, operand 26, single buffered']
    #allocation32 [shape = 's32[1]{0}', space=sflag, size = 0x4, scoped, tag = 'scoped memory for gtsnet_forward.4']
    %68 = vsyncpa [#allocation3], 0
    %69 = vsyncpa [#allocation5], 0
    %70 = vsyncpa [#allocation8], 0
    %71 = vsyncpa [#allocation11], 0
    %72 = vsyncpa [#allocation14], 0
    %73 = vsyncpa [#allocation17], 0
    %74 = vsyncpa [#allocation20], 0
    %75 = vsyncpa [#allocation23], 0
    %76 = vsyncpa [#allocation26], 0
    %77 = vsyncpa [#allocation29], 0
    %78 = vsyncpa [#allocation32], 0
    loop: start=0, step=1, limit=4
    $region2: #{gtsnet_forward.4} parent=1 // loop_pre_header
      _
    $region3: #{gtsnet_forward.4} parent=1 // loop_header
      %s80 = sphi 0, %s84
      %p81 = scmp.ge.s32.totalorder %s80, 4
      %s90 = sphi 0, %s92
      %s93 = sphi 0, %s90
      %s94 = sphi 0, %s93
      %s110 = sphi 0, %s94
      %s114 = sphi 0, %s114
      %s116 = sphi 0, %s114
      %s117 = sphi 0, %s116
      %s131 = sphi 0, %s117
      %s135 = sphi 0, %s135
      %s137 = sphi 0, %s135
      %s138 = sphi 0, %s137
      %s152 = sphi 0, %s138
      %s156 = sphi 0, %s156
      %s158 = sphi 0, %s156
      %s159 = sphi 0, %s158
      %s173 = sphi 0, %s159
      %s177 = sphi 0, %s177
      %s179 = sphi 0, %s177
      %s180 = sphi 0, %s179
      %s194 = sphi 0, %s180
      %s198 = sphi 0, %s198
      %s200 = sphi 0, %s198
      %s201 = sphi 0, %s200
      %s215 = sphi 0, %s201
      %s219 = sphi 0, %s219
      %s221 = sphi 0, %s219
      %s222 = sphi 0, %s221
      %s236 = sphi 0, %s222
      %s240 = sphi 0, %s240
      %s242 = sphi 0, %s240
      %s243 = sphi 0, %s242
      %s257 = sphi 0, %s243
      %s261 = sphi 0, %s261
      %s263 = sphi 0, %s261
      %s264 = sphi 0, %s263
      %s278 = sphi 0, %s264
      %s282 = sphi 0, %s282
      %s284 = sphi 0, %s282
      %s285 = sphi 0, %s284
      %s299 = sphi 0, %s285
      %s303 = sphi 0, %s303
      %s305 = sphi 0, %s303
      %s306 = sphi 0, %s305
      %s320 = sphi 0, %s306
      %s324 = sphi 0, %s324
      %s326 = sphi 0, %s324
      %s327 = sphi 0, %s326
      %s341 = sphi 0, %s327
      %s345 = sphi 0, %s345
      %s347 = sphi 0, %s345
      %s348 = sphi 0, %s347
      %s362 = sphi 0, %s348
      %s366 = sphi 0, %s366
      %s368 = sphi 0, %s366
      %s369 = sphi 0, %s368
      %s383 = sphi 0, %s369
      %s387 = sphi 0, %s387
      %s389 = sphi 0, %s387
      %s390 = sphi 0, %s389
      %s404 = sphi 0, %s390
      %s408 = sphi 0, %s408
      %s410 = sphi 0, %s408
      %s411 = sphi 0, %s410
      %s425 = sphi 0, %s411
      %s429 = sphi 0, %s429
      %s431 = sphi 0, %s429
      %s432 = sphi 0, %s431
      %s446 = sphi 0, %s432
      %s450 = sphi 0, %s450
      %s452 = sphi 0, %s450
      %s453 = sphi 0, %s452
      %s467 = sphi 0, %s453
      %s471 = sphi 0, %s471
      %s473 = sphi 0, %s471
      %s474 = sphi 0, %s473
      %s488 = sphi 0, %s474
      %s492 = sphi 0, %s492
      %s494 = sphi 0, %s492
      %s495 = sphi 0, %s494
      %s509 = sphi 0, %s495
      %s513 = sphi 0, %s513
      %s515 = sphi 0, %s513
      %s516 = sphi 0, %s515
      %s530 = sphi 0, %s516
      %s534 = sphi 0, %s534
      %s536 = sphi 0, %s534
      %s537 = sphi 0, %s536
      %s551 = sphi 0, %s537
      %s555 = sphi 0, %s555
      %s557 = sphi 0, %s555
      %s558 = sphi 0, %s557
      %s572 = sphi 0, %s558
      %s576 = sphi 0, %s576
      %s578 = sphi 0, %s576
      %s579 = sphi 0, %s578
      %s593 = sphi 0, %s579
      %s597 = sphi 0, %s597
      %s599 = sphi 0, %s597
      %s600 = sphi 0, %s599
      %s614 = sphi 0, %s600
      %s618 = sphi 0, %s618
      %s620 = sphi 0, %s618
      %s621 = sphi 0, %s620
      %s635 = sphi 0, %s621
      %s639 = sphi 0, %s639
      %s641 = sphi 0, %s639
      %s642 = sphi 0, %s641
      %s656 = sphi 0, %s642
      %s660 = sphi 0, %s660
      %s662 = sphi 0, %s660
      %s663 = sphi 0, %s662
      %s677 = sphi 0, %s663
      %s681 = sphi 0, %s681
      %s683 = sphi 0, %s681
      %s684 = sphi 0, %s683
      %s698 = sphi 0, %s684
      %s702 = sphi 0, %s702
      %s704 = sphi 0, %s702
      %s705 = sphi 0, %s704
      %s719 = sphi 0, %s705
      %s723 = sphi 0, %s723
      %s725 = sphi 0, %s723
      %s726 = sphi 0, %s725
      %s740 = sphi 0, %s726
      %s746 = sphi 0, %s748
      %s749 = sphi 0, %s746
      %s750 = sphi 0, %s749
      %s766 = sphi 0, %s750
    $region4: #{gtsnet_forward.4} parent=1 // loop_header_branch
      %83 = sbr.rel (%p81) target = $region8
    $region5: #{gtsnet_forward.4} parent=1 // loop_body
      %s85 = ssub.s32 %s80, 1
      %s86 = ssub.s32 %s80, 2
      %s87 = sadd.s32 %s80, 1
      %s88 = ssub.s32 %s80, %s87
      %p89 = scmp.eq.s32.totalorder %s88, 0
      %s91 = sadd.s32 %s90, 1
      %s92 = scalar_select %p89, %s90, %s91
      %p95 = pneg %p89
      %p96 = scmp.eq.s32.totalorder %s80, 1
      %p97 = por %p95, %p96
      %p98 = scmp.ne.s32.totalorder %s90, %s93
      %p99 = scmp.eq.s32.totalorder %s80, 0
      %p100 = por %p98, %p99
      %p101 = scmp.ne.s32.totalorder %s90, %s93
      %p102 = scmp.eq.s32.totalorder %s85, 1
      %p103 = por %p101, %p102
      %p104 = scmp.ne.s32.totalorder %s93, %s94
      %p105 = scmp.eq.s32.totalorder %s85, 0
      %p106 = por %p104, %p105
      %p107 = scmp.ne.s32.totalorder %s93, %s94
      %p108 = scmp.eq.s32.totalorder %s86, 1
      %p109 = por %p107, %p108
      %p111 = scmp.ne.s32.totalorder %s94, %s110
      %p112 = scmp.eq.s32.totalorder %s86, 0
      %p113 = por %p111, %p112
      %s115 = sadd.s32 %s114, 1
      %p118 = scmp.eq.s32.totalorder %s80, 1
      %p119 = scmp.ne.s32.totalorder %s114, %s116
      %p120 = scmp.eq.s32.totalorder %s80, 0
      %p121 = por %p119, %p120
      %p122 = scmp.ne.s32.totalorder %s114, %s116
      %p123 = scmp.eq.s32.totalorder %s85, 1
      %p124 = por %p122, %p123
      %p125 = scmp.ne.s32.totalorder %s116, %s117
      %p126 = scmp.eq.s32.totalorder %s85, 0
      %p127 = por %p125, %p126
      %p128 = scmp.ne.s32.totalorder %s116, %s117
      %p129 = scmp.eq.s32.totalorder %s86, 1
      %p130 = por %p128, %p129
      %p132 = scmp.ne.s32.totalorder %s117, %s131
      %p133 = scmp.eq.s32.totalorder %s86, 0
      %p134 = por %p132, %p133
      %s136 = sadd.s32 %s135, 1
      %p139 = scmp.eq.s32.totalorder %s80, 1
      %p140 = scmp.ne.s32.totalorder %s135, %s137
      %p141 = scmp.eq.s32.totalorder %s80, 0
      %p142 = por %p140, %p141
      %p143 = scmp.ne.s32.totalorder %s135, %s137
      %p144 = scmp.eq.s32.totalorder %s85, 1
      %p145 = por %p143, %p144
      %p146 = scmp.ne.s32.totalorder %s137, %s138
      %p147 = scmp.eq.s32.totalorder %s85, 0
      %p148 = por %p146, %p147
      %p149 = scmp.ne.s32.totalorder %s137, %s138
      %p150 = scmp.eq.s32.totalorder %s86, 1
      %p151 = por %p149, %p150
      %p153 = scmp.ne.s32.totalorder %s138, %s152
      %p154 = scmp.eq.s32.totalorder %s86, 0
      %p155 = por %p153, %p154
      %s157 = sadd.s32 %s156, 1
      %p160 = scmp.eq.s32.totalorder %s80, 1
      %p161 = scmp.ne.s32.totalorder %s156, %s158
      %p162 = scmp.eq.s32.totalorder %s80, 0
      %p163 = por %p161, %p162
      %p164 = scmp.ne.s32.totalorder %s156, %s158
      %p165 = scmp.eq.s32.totalorder %s85, 1
      %p166 = por %p164, %p165
      %p167 = scmp.ne.s32.totalorder %s158, %s159
      %p168 = scmp.eq.s32.totalorder %s85, 0
      %p169 = por %p167, %p168
      %p170 = scmp.ne.s32.totalorder %s158, %s159
      %p171 = scmp.eq.s32.totalorder %s86, 1
      %p172 = por %p170, %p171
      %p174 = scmp.ne.s32.totalorder %s159, %s173
      %p175 = scmp.eq.s32.totalorder %s86, 0
      %p176 = por %p174, %p175
      %s178 = sadd.s32 %s177, 1
      %p181 = scmp.eq.s32.totalorder %s80, 1
      %p182 = scmp.ne.s32.totalorder %s177, %s179
      %p183 = scmp.eq.s32.totalorder %s80, 0
      %p184 = por %p182, %p183
      %p185 = scmp.ne.s32.totalorder %s177, %s179
      %p186 = scmp.eq.s32.totalorder %s85, 1
      %p187 = por %p185, %p186
      %p188 = scmp.ne.s32.totalorder %s179, %s180
      %p189 = scmp.eq.s32.totalorder %s85, 0
      %p190 = por %p188, %p189
      %p191 = scmp.ne.s32.totalorder %s179, %s180
      %p192 = scmp.eq.s32.totalorder %s86, 1
      %p193 = por %p191, %p192
      %p195 = scmp.ne.s32.totalorder %s180, %s194
      %p196 = scmp.eq.s32.totalorder %s86, 0
      %p197 = por %p195, %p196
      %s199 = sadd.s32 %s198, 1
      %p202 = scmp.eq.s32.totalorder %s80, 1
      %p203 = scmp.ne.s32.totalorder %s198, %s200
      %p204 = scmp.eq.s32.totalorder %s80, 0
      %p205 = por %p203, %p204
      %p206 = scmp.ne.s32.totalorder %s198, %s200
      %p207 = scmp.eq.s32.totalorder %s85, 1
      %p208 = por %p206, %p207
      %p209 = scmp.ne.s32.totalorder %s200, %s201
      %p210 = scmp.eq.s32.totalorder %s85, 0
      %p211 = por %p209, %p210
      %p212 = scmp.ne.s32.totalorder %s200, %s201
      %p213 = scmp.eq.s32.totalorder %s86, 1
      %p214 = por %p212, %p213
      %p216 = scmp.ne.s32.totalorder %s201, %s215
      %p217 = scmp.eq.s32.totalorder %s86, 0
      %p218 = por %p216, %p217
      %s220 = sadd.s32 %s219, 1
      %p223 = scmp.eq.s32.totalorder %s80, 1
      %p224 = scmp.ne.s32.totalorder %s219, %s221
      %p225 = scmp.eq.s32.totalorder %s80, 0
      %p226 = por %p224, %p225
      %p227 = scmp.ne.s32.totalorder %s219, %s221
      %p228 = scmp.eq.s32.totalorder %s85, 1
      %p229 = por %p227, %p228
      %p230 = scmp.ne.s32.totalorder %s221, %s222
      %p231 = scmp.eq.s32.totalorder %s85, 0
      %p232 = por %p230, %p231
      %p233 = scmp.ne.s32.totalorder %s221, %s222
      %p234 = scmp.eq.s32.totalorder %s86, 1
      %p235 = por %p233, %p234
      %p237 = scmp.ne.s32.totalorder %s222, %s236
      %p238 = scmp.eq.s32.totalorder %s86, 0
      %p239 = por %p237, %p238
      %s241 = sadd.s32 %s240, 1
      %p244 = scmp.eq.s32.totalorder %s80, 1
      %p245 = scmp.ne.s32.totalorder %s240, %s242
      %p246 = scmp.eq.s32.totalorder %s80, 0
      %p247 = por %p245, %p246
      %p248 = scmp.ne.s32.totalorder %s240, %s242
      %p249 = scmp.eq.s32.totalorder %s85, 1
      %p250 = por %p248, %p249
      %p251 = scmp.ne.s32.totalorder %s242, %s243
      %p252 = scmp.eq.s32.totalorder %s85, 0
      %p253 = por %p251, %p252
      %p254 = scmp.ne.s32.totalorder %s242, %s243
      %p255 = scmp.eq.s32.totalorder %s86, 1
      %p256 = por %p254, %p255
      %p258 = scmp.ne.s32.totalorder %s243, %s257
      %p259 = scmp.eq.s32.totalorder %s86, 0
      %p260 = por %p258, %p259
      %s262 = sadd.s32 %s261, 1
      %p265 = scmp.eq.s32.totalorder %s80, 1
      %p266 = scmp.ne.s32.totalorder %s261, %s263
      %p267 = scmp.eq.s32.totalorder %s80, 0
      %p268 = por %p266, %p267
      %p269 = scmp.ne.s32.totalorder %s261, %s263
      %p270 = scmp.eq.s32.totalorder %s85, 1
      %p271 = por %p269, %p270
      %p272 = scmp.ne.s32.totalorder %s263, %s264
      %p273 = scmp.eq.s32.totalorder %s85, 0
      %p274 = por %p272, %p273
      %p275 = scmp.ne.s32.totalorder %s263, %s264
      %p276 = scmp.eq.s32.totalorder %s86, 1
      %p277 = por %p275, %p276
      %p279 = scmp.ne.s32.totalorder %s264, %s278
      %p280 = scmp.eq.s32.totalorder %s86, 0
      %p281 = por %p279, %p280
      %s283 = sadd.s32 %s282, 1
      %p286 = scmp.eq.s32.totalorder %s80, 1
      %p287 = scmp.ne.s32.totalorder %s282, %s284
      %p288 = scmp.eq.s32.totalorder %s80, 0
      %p289 = por %p287, %p288
      %p290 = scmp.ne.s32.totalorder %s282, %s284
      %p291 = scmp.eq.s32.totalorder %s85, 1
      %p292 = por %p290, %p291
      %p293 = scmp.ne.s32.totalorder %s284, %s285
      %p294 = scmp.eq.s32.totalorder %s85, 0
      %p295 = por %p293, %p294
      %p296 = scmp.ne.s32.totalorder %s284, %s285
      %p297 = scmp.eq.s32.totalorder %s86, 1
      %p298 = por %p296, %p297
      %p300 = scmp.ne.s32.totalorder %s285, %s299
      %p301 = scmp.eq.s32.totalorder %s86, 0
      %p302 = por %p300, %p301
      %s304 = sadd.s32 %s303, 1
      %p307 = scmp.eq.s32.totalorder %s80, 1
      %p308 = scmp.ne.s32.totalorder %s303, %s305
      %p309 = scmp.eq.s32.totalorder %s80, 0
      %p310 = por %p308, %p309
      %p311 = scmp.ne.s32.totalorder %s303, %s305
      %p312 = scmp.eq.s32.totalorder %s85, 1
      %p313 = por %p311, %p312
      %p314 = scmp.ne.s32.totalorder %s305, %s306
      %p315 = scmp.eq.s32.totalorder %s85, 0
      %p316 = por %p314, %p315
      %p317 = scmp.ne.s32.totalorder %s305, %s306
      %p318 = scmp.eq.s32.totalorder %s86, 1
      %p319 = por %p317, %p318
      %p321 = scmp.ne.s32.totalorder %s306, %s320
      %p322 = scmp.eq.s32.totalorder %s86, 0
      %p323 = por %p321, %p322
      %s325 = sadd.s32 %s324, 1
      %p328 = scmp.eq.s32.totalorder %s80, 1
      %p329 = scmp.ne.s32.totalorder %s324, %s326
      %p330 = scmp.eq.s32.totalorder %s80, 0
      %p331 = por %p329, %p330
      %p332 = scmp.ne.s32.totalorder %s324, %s326
      %p333 = scmp.eq.s32.totalorder %s85, 1
      %p334 = por %p332, %p333
      %p335 = scmp.ne.s32.totalorder %s326, %s327
      %p336 = scmp.eq.s32.totalorder %s85, 0
      %p337 = por %p335, %p336
      %p338 = scmp.ne.s32.totalorder %s326, %s327
      %p339 = scmp.eq.s32.totalorder %s86, 1
      %p340 = por %p338, %p339
      %p342 = scmp.ne.s32.totalorder %s327, %s341
      %p343 = scmp.eq.s32.totalorder %s86, 0
      %p344 = por %p342, %p343
      %s346 = sadd.s32 %s345, 1
      %p349 = scmp.eq.s32.totalorder %s80, 1
      %p350 = scmp.ne.s32.totalorder %s345, %s347
      %p351 = scmp.eq.s32.totalorder %s80, 0
      %p352 = por %p350, %p351
      %p353 = scmp.ne.s32.totalorder %s345, %s347
      %p354 = scmp.eq.s32.totalorder %s85, 1
      %p355 = por %p353, %p354
      %p356 = scmp.ne.s32.totalorder %s347, %s348
      %p357 = scmp.eq.s32.totalorder %s85, 0
      %p358 = por %p356, %p357
      %p359 = scmp.ne.s32.totalorder %s347, %s348
      %p360 = scmp.eq.s32.totalorder %s86, 1
      %p361 = por %p359, %p360
      %p363 = scmp.ne.s32.totalorder %s348, %s362
      %p364 = scmp.eq.s32.totalorder %s86, 0
      %p365 = por %p363, %p364
      %s367 = sadd.s32 %s366, 1
      %p370 = scmp.eq.s32.totalorder %s80, 1
      %p371 = scmp.ne.s32.totalorder %s366, %s368
      %p372 = scmp.eq.s32.totalorder %s80, 0
      %p373 = por %p371, %p372
      %p374 = scmp.ne.s32.totalorder %s366, %s368
      %p375 = scmp.eq.s32.totalorder %s85, 1
      %p376 = por %p374, %p375
      %p377 = scmp.ne.s32.totalorder %s368, %s369
      %p378 = scmp.eq.s32.totalorder %s85, 0
      %p379 = por %p377, %p378
      %p380 = scmp.ne.s32.totalorder %s368, %s369
      %p381 = scmp.eq.s32.totalorder %s86, 1
      %p382 = por %p380, %p381
      %p384 = scmp.ne.s32.totalorder %s369, %s383
      %p385 = scmp.eq.s32.totalorder %s86, 0
      %p386 = por %p384, %p385
      %s388 = sadd.s32 %s387, 1
      %p391 = scmp.eq.s32.totalorder %s80, 1
      %p392 = scmp.ne.s32.totalorder %s387, %s389
      %p393 = scmp.eq.s32.totalorder %s80, 0
      %p394 = por %p392, %p393
      %p395 = scmp.ne.s32.totalorder %s387, %s389
      %p396 = scmp.eq.s32.totalorder %s85, 1
      %p397 = por %p395, %p396
      %p398 = scmp.ne.s32.totalorder %s389, %s390
      %p399 = scmp.eq.s32.totalorder %s85, 0
      %p400 = por %p398, %p399
      %p401 = scmp.ne.s32.totalorder %s389, %s390
      %p402 = scmp.eq.s32.totalorder %s86, 1
      %p403 = por %p401, %p402
      %p405 = scmp.ne.s32.totalorder %s390, %s404
      %p406 = scmp.eq.s32.totalorder %s86, 0
      %p407 = por %p405, %p406
      %s409 = sadd.s32 %s408, 1
      %p412 = scmp.eq.s32.totalorder %s80, 1
      %p413 = scmp.ne.s32.totalorder %s408, %s410
      %p414 = scmp.eq.s32.totalorder %s80, 0
      %p415 = por %p413, %p414
      %p416 = scmp.ne.s32.totalorder %s408, %s410
      %p417 = scmp.eq.s32.totalorder %s85, 1
      %p418 = por %p416, %p417
      %p419 = scmp.ne.s32.totalorder %s410, %s411
      %p420 = scmp.eq.s32.totalorder %s85, 0
      %p421 = por %p419, %p420
      %p422 = scmp.ne.s32.totalorder %s410, %s411
      %p423 = scmp.eq.s32.totalorder %s86, 1
      %p424 = por %p422, %p423
      %p426 = scmp.ne.s32.totalorder %s411, %s425
      %p427 = scmp.eq.s32.totalorder %s86, 0
      %p428 = por %p426, %p427
      %s430 = sadd.s32 %s429, 1
      %p433 = scmp.eq.s32.totalorder %s80, 1
      %p434 = scmp.ne.s32.totalorder %s429, %s431
      %p435 = scmp.eq.s32.totalorder %s80, 0
      %p436 = por %p434, %p435
      %p437 = scmp.ne.s32.totalorder %s429, %s431
      %p438 = scmp.eq.s32.totalorder %s85, 1
      %p439 = por %p437, %p438
      %p440 = scmp.ne.s32.totalorder %s431, %s432
      %p441 = scmp.eq.s32.totalorder %s85, 0
      %p442 = por %p440, %p441
      %p443 = scmp.ne.s32.totalorder %s431, %s432
      %p444 = scmp.eq.s32.totalorder %s86, 1
      %p445 = por %p443, %p444
      %p447 = scmp.ne.s32.totalorder %s432, %s446
      %p448 = scmp.eq.s32.totalorder %s86, 0
      %p449 = por %p447, %p448
      %s451 = sadd.s32 %s450, 1
      %p454 = scmp.eq.s32.totalorder %s80, 1
      %p455 = scmp.ne.s32.totalorder %s450, %s452
      %p456 = scmp.eq.s32.totalorder %s80, 0
      %p457 = por %p455, %p456
      %p458 = scmp.ne.s32.totalorder %s450, %s452
      %p459 = scmp.eq.s32.totalorder %s85, 1
      %p460 = por %p458, %p459
      %p461 = scmp.ne.s32.totalorder %s452, %s453
      %p462 = scmp.eq.s32.totalorder %s85, 0
      %p463 = por %p461, %p462
      %p464 = scmp.ne.s32.totalorder %s452, %s453
      %p465 = scmp.eq.s32.totalorder %s86, 1
      %p466 = por %p464, %p465
      %p468 = scmp.ne.s32.totalorder %s453, %s467
      %p469 = scmp.eq.s32.totalorder %s86, 0
      %p470 = por %p468, %p469
      %s472 = sadd.s32 %s471, 1
      %p475 = scmp.eq.s32.totalorder %s80, 1
      %p476 = scmp.ne.s32.totalorder %s471, %s473
      %p477 = scmp.eq.s32.totalorder %s80, 0
      %p478 = por %p476, %p477
      %p479 = scmp.ne.s32.totalorder %s471, %s473
      %p480 = scmp.eq.s32.totalorder %s85, 1
      %p481 = por %p479, %p480
      %p482 = scmp.ne.s32.totalorder %s473, %s474
      %p483 = scmp.eq.s32.totalorder %s85, 0
      %p484 = por %p482, %p483
      %p485 = scmp.ne.s32.totalorder %s473, %s474
      %p486 = scmp.eq.s32.totalorder %s86, 1
      %p487 = por %p485, %p486
      %p489 = scmp.ne.s32.totalorder %s474, %s488
      %p490 = scmp.eq.s32.totalorder %s86, 0
      %p491 = por %p489, %p490
      %s493 = sadd.s32 %s492, 1
      %p496 = scmp.eq.s32.totalorder %s80, 1
      %p497 = scmp.ne.s32.totalorder %s492, %s494
      %p498 = scmp.eq.s32.totalorder %s80, 0
      %p499 = por %p497, %p498
      %p500 = scmp.ne.s32.totalorder %s492, %s494
      %p501 = scmp.eq.s32.totalorder %s85, 1
      %p502 = por %p500, %p501
      %p503 = scmp.ne.s32.totalorder %s494, %s495
      %p504 = scmp.eq.s32.totalorder %s85, 0
      %p505 = por %p503, %p504
      %p506 = scmp.ne.s32.totalorder %s494, %s495
      %p507 = scmp.eq.s32.totalorder %s86, 1
      %p508 = por %p506, %p507
      %p510 = scmp.ne.s32.totalorder %s495, %s509
      %p511 = scmp.eq.s32.totalorder %s86, 0
      %p512 = por %p510, %p511
      %s514 = sadd.s32 %s513, 1
      %p517 = scmp.eq.s32.totalorder %s80, 1
      %p518 = scmp.ne.s32.totalorder %s513, %s515
      %p519 = scmp.eq.s32.totalorder %s80, 0
      %p520 = por %p518, %p519
      %p521 = scmp.ne.s32.totalorder %s513, %s515
      %p522 = scmp.eq.s32.totalorder %s85, 1
      %p523 = por %p521, %p522
      %p524 = scmp.ne.s32.totalorder %s515, %s516
      %p525 = scmp.eq.s32.totalorder %s85, 0
      %p526 = por %p524, %p525
      %p527 = scmp.ne.s32.totalorder %s515, %s516
      %p528 = scmp.eq.s32.totalorder %s86, 1
      %p529 = por %p527, %p528
      %p531 = scmp.ne.s32.totalorder %s516, %s530
      %p532 = scmp.eq.s32.totalorder %s86, 0
      %p533 = por %p531, %p532
      %s535 = sadd.s32 %s534, 1
      %p538 = scmp.eq.s32.totalorder %s80, 1
      %p539 = scmp.ne.s32.totalorder %s534, %s536
      %p540 = scmp.eq.s32.totalorder %s80, 0
      %p541 = por %p539, %p540
      %p542 = scmp.ne.s32.totalorder %s534, %s536
      %p543 = scmp.eq.s32.totalorder %s85, 1
      %p544 = por %p542, %p543
      %p545 = scmp.ne.s32.totalorder %s536, %s537
      %p546 = scmp.eq.s32.totalorder %s85, 0
      %p547 = por %p545, %p546
      %p548 = scmp.ne.s32.totalorder %s536, %s537
      %p549 = scmp.eq.s32.totalorder %s86, 1
      %p550 = por %p548, %p549
      %p552 = scmp.ne.s32.totalorder %s537, %s551
      %p553 = scmp.eq.s32.totalorder %s86, 0
      %p554 = por %p552, %p553
      %s556 = sadd.s32 %s555, 1
      %p559 = scmp.eq.s32.totalorder %s80, 1
      %p560 = scmp.ne.s32.totalorder %s555, %s557
      %p561 = scmp.eq.s32.totalorder %s80, 0
      %p562 = por %p560, %p561
      %p563 = scmp.ne.s32.totalorder %s555, %s557
      %p564 = scmp.eq.s32.totalorder %s85, 1
      %p565 = por %p563, %p564
      %p566 = scmp.ne.s32.totalorder %s557, %s558
      %p567 = scmp.eq.s32.totalorder %s85, 0
      %p568 = por %p566, %p567
      %p569 = scmp.ne.s32.totalorder %s557, %s558
      %p570 = scmp.eq.s32.totalorder %s86, 1
      %p571 = por %p569, %p570
      %p573 = scmp.ne.s32.totalorder %s558, %s572
      %p574 = scmp.eq.s32.totalorder %s86, 0
      %p575 = por %p573, %p574
      %s577 = sadd.s32 %s576, 1
      %p580 = scmp.eq.s32.totalorder %s80, 1
      %p581 = scmp.ne.s32.totalorder %s576, %s578
      %p582 = scmp.eq.s32.totalorder %s80, 0
      %p583 = por %p581, %p582
      %p584 = scmp.ne.s32.totalorder %s576, %s578
      %p585 = scmp.eq.s32.totalorder %s85, 1
      %p586 = por %p584, %p585
      %p587 = scmp.ne.s32.totalorder %s578, %s579
      %p588 = scmp.eq.s32.totalorder %s85, 0
      %p589 = por %p587, %p588
      %p590 = scmp.ne.s32.totalorder %s578, %s579
      %p591 = scmp.eq.s32.totalorder %s86, 1
      %p592 = por %p590, %p591
      %p594 = scmp.ne.s32.totalorder %s579, %s593
      %p595 = scmp.eq.s32.totalorder %s86, 0
      %p596 = por %p594, %p595
      %s598 = sadd.s32 %s597, 1
      %p601 = scmp.eq.s32.totalorder %s80, 1
      %p602 = scmp.ne.s32.totalorder %s597, %s599
      %p603 = scmp.eq.s32.totalorder %s80, 0
      %p604 = por %p602, %p603
      %p605 = scmp.ne.s32.totalorder %s597, %s599
      %p606 = scmp.eq.s32.totalorder %s85, 1
      %p607 = por %p605, %p606
      %p608 = scmp.ne.s32.totalorder %s599, %s600
      %p609 = scmp.eq.s32.totalorder %s85, 0
      %p610 = por %p608, %p609
      %p611 = scmp.ne.s32.totalorder %s599, %s600
      %p612 = scmp.eq.s32.totalorder %s86, 1
      %p613 = por %p611, %p612
      %p615 = scmp.ne.s32.totalorder %s600, %s614
      %p616 = scmp.eq.s32.totalorder %s86, 0
      %p617 = por %p615, %p616
      %s619 = sadd.s32 %s618, 1
      %p622 = scmp.eq.s32.totalorder %s80, 1
      %p623 = scmp.ne.s32.totalorder %s618, %s620
      %p624 = scmp.eq.s32.totalorder %s80, 0
      %p625 = por %p623, %p624
      %p626 = scmp.ne.s32.totalorder %s618, %s620
      %p627 = scmp.eq.s32.totalorder %s85, 1
      %p628 = por %p626, %p627
      %p629 = scmp.ne.s32.totalorder %s620, %s621
      %p630 = scmp.eq.s32.totalorder %s85, 0
      %p631 = por %p629, %p630
      %p632 = scmp.ne.s32.totalorder %s620, %s621
      %p633 = scmp.eq.s32.totalorder %s86, 1
      %p634 = por %p632, %p633
      %p636 = scmp.ne.s32.totalorder %s621, %s635
      %p637 = scmp.eq.s32.totalorder %s86, 0
      %p638 = por %p636, %p637
      %s640 = sadd.s32 %s639, 1
      %p643 = scmp.eq.s32.totalorder %s80, 1
      %p644 = scmp.ne.s32.totalorder %s639, %s641
      %p645 = scmp.eq.s32.totalorder %s80, 0
      %p646 = por %p644, %p645
      %p647 = scmp.ne.s32.totalorder %s639, %s641
      %p648 = scmp.eq.s32.totalorder %s85, 1
      %p649 = por %p647, %p648
      %p650 = scmp.ne.s32.totalorder %s641, %s642
      %p651 = scmp.eq.s32.totalorder %s85, 0
      %p652 = por %p650, %p651
      %p653 = scmp.ne.s32.totalorder %s641, %s642
      %p654 = scmp.eq.s32.totalorder %s86, 1
      %p655 = por %p653, %p654
      %p657 = scmp.ne.s32.totalorder %s642, %s656
      %p658 = scmp.eq.s32.totalorder %s86, 0
      %p659 = por %p657, %p658
      %s661 = sadd.s32 %s660, 1
      %p664 = scmp.eq.s32.totalorder %s80, 1
      %p665 = scmp.ne.s32.totalorder %s660, %s662
      %p666 = scmp.eq.s32.totalorder %s80, 0
      %p667 = por %p665, %p666
      %p668 = scmp.ne.s32.totalorder %s660, %s662
      %p669 = scmp.eq.s32.totalorder %s85, 1
      %p670 = por %p668, %p669
      %p671 = scmp.ne.s32.totalorder %s662, %s663
      %p672 = scmp.eq.s32.totalorder %s85, 0
      %p673 = por %p671, %p672
      %p674 = scmp.ne.s32.totalorder %s662, %s663
      %p675 = scmp.eq.s32.totalorder %s86, 1
      %p676 = por %p674, %p675
      %p678 = scmp.ne.s32.totalorder %s663, %s677
      %p679 = scmp.eq.s32.totalorder %s86, 0
      %p680 = por %p678, %p679
      %s682 = sadd.s32 %s681, 1
      %p685 = scmp.eq.s32.totalorder %s80, 1
      %p686 = scmp.ne.s32.totalorder %s681, %s683
      %p687 = scmp.eq.s32.totalorder %s80, 0
      %p688 = por %p686, %p687
      %p689 = scmp.ne.s32.totalorder %s681, %s683
      %p690 = scmp.eq.s32.totalorder %s85, 1
      %p691 = por %p689, %p690
      %p692 = scmp.ne.s32.totalorder %s683, %s684
      %p693 = scmp.eq.s32.totalorder %s85, 0
      %p694 = por %p692, %p693
      %p695 = scmp.ne.s32.totalorder %s683, %s684
      %p696 = scmp.eq.s32.totalorder %s86, 1
      %p697 = por %p695, %p696
      %p699 = scmp.ne.s32.totalorder %s684, %s698
      %p700 = scmp.eq.s32.totalorder %s86, 0
      %p701 = por %p699, %p700
      %s703 = sadd.s32 %s702, 1
      %p706 = scmp.eq.s32.totalorder %s80, 1
      %p707 = scmp.ne.s32.totalorder %s702, %s704
      %p708 = scmp.eq.s32.totalorder %s80, 0
      %p709 = por %p707, %p708
      %p710 = scmp.ne.s32.totalorder %s702, %s704
      %p711 = scmp.eq.s32.totalorder %s85, 1
      %p712 = por %p710, %p711
      %p713 = scmp.ne.s32.totalorder %s704, %s705
      %p714 = scmp.eq.s32.totalorder %s85, 0
      %p715 = por %p713, %p714
      %p716 = scmp.ne.s32.totalorder %s704, %s705
      %p717 = scmp.eq.s32.totalorder %s86, 1
      %p718 = por %p716, %p717
      %p720 = scmp.ne.s32.totalorder %s705, %s719
      %p721 = scmp.eq.s32.totalorder %s86, 0
      %p722 = por %p720, %p721
      %s724 = sadd.s32 %s723, 1
      %p727 = scmp.eq.s32.totalorder %s80, 1
      %p728 = scmp.ne.s32.totalorder %s723, %s725
      %p729 = scmp.eq.s32.totalorder %s80, 0
      %p730 = por %p728, %p729
      %p731 = scmp.ne.s32.totalorder %s723, %s725
      %p732 = scmp.eq.s32.totalorder %s85, 1
      %p733 = por %p731, %p732
      %p734 = scmp.ne.s32.totalorder %s725, %s726
      %p735 = scmp.eq.s32.totalorder %s85, 0
      %p736 = por %p734, %p735
      %p737 = scmp.ne.s32.totalorder %s725, %s726
      %p738 = scmp.eq.s32.totalorder %s86, 1
      %p739 = por %p737, %p738
      %p741 = scmp.ne.s32.totalorder %s726, %s740
      %p742 = scmp.eq.s32.totalorder %s86, 0
      %p743 = por %p741, %p742
      %s744 = ssub.s32 %s80, %s87
      %p745 = scmp.eq.s32.totalorder %s744, 0
      %s747 = sadd.s32 %s746, 1
      %s748 = scalar_select %p745, %s746, %s747
      %p751 = pneg %p745
      %p752 = scmp.eq.s32.totalorder %s80, 1
      %p753 = por %p751, %p752
      %p754 = scmp.ne.s32.totalorder %s746, %s749
      %p755 = scmp.eq.s32.totalorder %s80, 0
      %p756 = por %p754, %p755
      %p757 = scmp.ne.s32.totalorder %s746, %s749
      %p758 = scmp.eq.s32.totalorder %s85, 1
      %p759 = por %p757, %p758
      %p760 = scmp.ne.s32.totalorder %s749, %s750
      %p761 = scmp.eq.s32.totalorder %s85, 0
      %p762 = por %p760, %p761
      %p763 = scmp.ne.s32.totalorder %s749, %s750
      %p764 = scmp.eq.s32.totalorder %s86, 1
      %p765 = por %p763, %p764
      %p767 = scmp.ne.s32.totalorder %s750, %s766
      %p768 = scmp.eq.s32.totalorder %s86, 0
      %p769 = por %p767, %p768
      %p770 = scmp.le.s32.totalorder 1, %s80
      %p771 = scmp.lt.s32.totalorder %s80, 3
      %p772 = pnand %p770, %p771
      %p773 = pneg %p772
      // Predicated region
      $region9: #{gtsnet_forward.4} parent=5 // pred_check
        _
      $region10: #{gtsnet_forward.4} parent=5 // pred_check_branch
        %775 = sbr.rel (%p772) target = $region12
      $region11: #{gtsnet_forward.4} parent=5 // pred_region
        %s776 = ssub.s32 %s80, 1
        // Predicated region
        $region13: #{gtsnet_forward.4} parent=11 // pred_check
          %p777 = pneg %p127
        $region14: #{gtsnet_forward.4} parent=11 // pred_check_branch
          %779 = sbr.rel (%p777) target = $region16
        $region15: #{gtsnet_forward.4} parent=11 // pred_region
          _
        $region16: #{gtsnet_forward.4} parent=11 // pred_fallthru
          _
        // Predicated region
        $region17: #{gtsnet_forward.4} parent=11 // pred_check
          %p780 = pneg %p148
        $region18: #{gtsnet_forward.4} parent=11 // pred_check_branch
          %782 = sbr.rel (%p780) target = $region20
        $region19: #{gtsnet_forward.4} parent=11 // pred_region
          _
        $region20: #{gtsnet_forward.4} parent=11 // pred_fallthru
          _
        // Predicated region
        $region21: #{gtsnet_forward.4} parent=11 // pred_check
          %p783 = pneg %p169
        $region22: #{gtsnet_forward.4} parent=11 // pred_check_branch
          %785 = sbr.rel (%p783) target = $region24
        $region23: #{gtsnet_forward.4} parent=11 // pred_region
          _
        $region24: #{gtsnet_forward.4} parent=11 // pred_fallthru
          _
        // Predicated region
        $region25: #{gtsnet_forward.4} parent=11 // pred_check
          %p786 = pneg %p190
        $region26: #{gtsnet_forward.4} parent=11 // pred_check_branch
          %788 = sbr.rel (%p786) target = $region28
        $region27: #{gtsnet_forward.4} parent=11 // pred_region
          _
        $region28: #{gtsnet_forward.4} parent=11 // pred_fallthru
          _
        // Predicated region
        $region29: #{gtsnet_forward.4} parent=11 // pred_check
          %p789 = pneg %p211
        $region30: #{gtsnet_forward.4} parent=11 // pred_check_branch
          %791 = sbr.rel (%p789) target = $region32
        $region31: #{gtsnet_forward.4} parent=11 // pred_region
          _
        $region32: #{gtsnet_forward.4} parent=11 // pred_fallthru
          _
        // Predicated region
        $region33: #{gtsnet_forward.4} parent=11 // pred_check
          %p792 = pneg %p232
        $region34: #{gtsnet_forward.4} parent=11 // pred_check_branch
          %794 = sbr.rel (%p792) target = $region36
        $region35: #{gtsnet_forward.4} parent=11 // pred_region
          %796 = vsyncadd [#allocation3], 0
          %s797 = sshll.u32 %s13, 4
          %s798 = int_to_ptr.hbm [resolvable:$true] %s797
          %s799 = sshll.u32 [#allocation2], 4
          %s800 = int_to_ptr.vmem [resolvable:$true] %s799
          %805 = dma.hbm_to_vmem [thread:$0]  %s798, 256, %s800, [#allocation3], 64, 64, 4
        $region36: #{gtsnet_forward.4} parent=11 // pred_fallthru
          _
        // Predicated region
        $region37: #{gtsnet_forward.4} parent=11 // pred_check
          %p806 = pneg %p253
        $region38: #{gtsnet_forward.4} parent=11 // pred_check_branch
          %808 = sbr.rel (%p806) target = $region40
        $region39: #{gtsnet_forward.4} parent=11 // pred_region
          %810 = vsyncadd [#allocation5], 0
          %s812 = sshll.u32 %s15, 4
          %s813 = int_to_ptr.hbm [resolvable:$true] %s812
          %s814 = sshll.u32 [#allocation4], 4
          %s815 = int_to_ptr.vmem [resolvable:$true] %s814
          %817 = dma.hbm_to_vmem [thread:$0]  %s813, 16, %s815, [#allocation5]
        $region40: #{gtsnet_forward.4} parent=11 // pred_fallthru
          _
        // Predicated region
        $region41: #{gtsnet_forward.4} parent=11 // pred_check
          %p818 = pneg %p274
        $region42: #{gtsnet_forward.4} parent=11 // pred_check_branch
          %820 = sbr.rel (%p818) target = $region44
        $region43: #{gtsnet_forward.4} parent=11 // pred_region
          %822 = vsyncadd [#allocation5], 0
          %s824 = sshll.u32 %s17, 4
          %s825 = int_to_ptr.hbm [resolvable:$true] %s824
          %s826 = sshll.u32 [#allocation6], 4
          %s827 = int_to_ptr.vmem [resolvable:$true] %s826
          %829 = dma.hbm_to_vmem [thread:$0]  %s825, 16, %s827, [#allocation5]
        $region44: #{gtsnet_forward.4} parent=11 // pred_fallthru
          _
        // Predicated region
        $region45: #{gtsnet_forward.4} parent=11 // pred_check
          %p830 = pneg %p295
        $region46: #{gtsnet_forward.4} parent=11 // pred_check_branch
          %832 = sbr.rel (%p830) target = $region48
        $region47: #{gtsnet_forward.4} parent=11 // pred_region
          %834 = vsyncadd [#allocation8], 0
          %s835 = sshll.u32 %s19, 4
          %s836 = int_to_ptr.hbm [resolvable:$true] %s835
          %s837 = sshll.u32 [#allocation7], 4
          %s838 = int_to_ptr.vmem [resolvable:$true] %s837
          %843 = dma.hbm_to_vmem [thread:$0]  %s836, 1024, %s838, [#allocation8], 64, 64, 4
        $region48: #{gtsnet_forward.4} parent=11 // pred_fallthru
          _
        // Predicated region
        $region49: #{gtsnet_forward.4} parent=11 // pred_check
          %p844 = pneg %p316
        $region50: #{gtsnet_forward.4} parent=11 // pred_check_branch
          %846 = sbr.rel (%p844) target = $region52
        $region51: #{gtsnet_forward.4} parent=11 // pred_region
          %848 = vsyncadd [#allocation8], 0
          %s850 = sshll.u32 %s21, 4
          %s851 = int_to_ptr.hbm [resolvable:$true] %s850
          %s852 = sshll.u32 [#allocation9], 4
          %s853 = int_to_ptr.vmem [resolvable:$true] %s852
          %855 = dma.hbm_to_vmem [thread:$0]  %s851, 16, %s853, [#allocation8]
        $region52: #{gtsnet_forward.4} parent=11 // pred_fallthru
          _
        // Predicated region
        $region53: #{gtsnet_forward.4} parent=11 // pred_check
          %p856 = pneg %p337
        $region54: #{gtsnet_forward.4} parent=11 // pred_check_branch
          %858 = sbr.rel (%p856) target = $region56
        $region55: #{gtsnet_forward.4} parent=11 // pred_region
          %860 = vsyncadd [#allocation11], 0
          %s862 = sshll.u32 %s23, 4
          %s863 = int_to_ptr.hbm [resolvable:$true] %s862
          %s864 = sshll.u32 [#allocation10], 4
          %s865 = int_to_ptr.vmem [resolvable:$true] %s864
          %867 = dma.hbm_to_vmem [thread:$0]  %s863, 16, %s865, [#allocation11]
        $region56: #{gtsnet_forward.4} parent=11 // pred_fallthru
          _
        // Predicated region
        $region57: #{gtsnet_forward.4} parent=11 // pred_check
          %p868 = pneg %p358
        $region58: #{gtsnet_forward.4} parent=11 // pred_check_branch
          %870 = sbr.rel (%p868) target = $region60
        $region59: #{gtsnet_forward.4} parent=11 // pred_region
          _
        $region60: #{gtsnet_forward.4} parent=11 // pred_fallthru
          _
        // Predicated region
        $region61: #{gtsnet_forward.4} parent=11 // pred_check
          %p871 = pneg %p379
        $region62: #{gtsnet_forward.4} parent=11 // pred_check_branch
          %873 = sbr.rel (%p871) target = $region64
        $region63: #{gtsnet_forward.4} parent=11 // pred_region
          %875 = vsyncadd [#allocation11], 0
          %s877 = sshll.u32 %s27, 4
          %s878 = int_to_ptr.hbm [resolvable:$true] %s877
          %s879 = sshll.u32 [#allocation12], 4
          %s880 = int_to_ptr.vmem [resolvable:$true] %s879
          %882 = dma.hbm_to_vmem [thread:$0]  %s878, 16, %s880, [#allocation11]
        $region64: #{gtsnet_forward.4} parent=11 // pred_fallthru
          _
        // Predicated region
        $region65: #{gtsnet_forward.4} parent=11 // pred_check
          %p883 = pneg %p400
        $region66: #{gtsnet_forward.4} parent=11 // pred_check_branch
          %885 = sbr.rel (%p883) target = $region68
        $region67: #{gtsnet_forward.4} parent=11 // pred_region
          %887 = vsyncadd [#allocation14], 0
          %s889 = sshll.u32 %s29, 4
          %s890 = int_to_ptr.hbm [resolvable:$true] %s889
          %s891 = sshll.u32 [#allocation13], 4
          %s892 = int_to_ptr.vmem [resolvable:$true] %s891
          %894 = dma.hbm_to_vmem [thread:$0]  %s890, 16, %s892, [#allocation14]
        $region68: #{gtsnet_forward.4} parent=11 // pred_fallthru
          _
        // Predicated region
        $region69: #{gtsnet_forward.4} parent=11 // pred_check
          %p895 = pneg %p421
        $region70: #{gtsnet_forward.4} parent=11 // pred_check_branch
          %897 = sbr.rel (%p895) target = $region72
        $region71: #{gtsnet_forward.4} parent=11 // pred_region
          %899 = vsyncadd [#allocation14], 0
          %s900 = sshll.u32 %s31, 4
          %s901 = int_to_ptr.hbm [resolvable:$true] %s900
          %s902 = sshll.u32 [#allocation15], 4
          %s903 = int_to_ptr.vmem [resolvable:$true] %s902
          %908 = dma.hbm_to_vmem [thread:$0]  %s901, 1024, %s903, [#allocation14], 64, 64, 4
        $region72: #{gtsnet_forward.4} parent=11 // pred_fallthru
          _
        // Predicated region
        $region73: #{gtsnet_forward.4} parent=11 // pred_check
          %p909 = pneg %p442
        $region74: #{gtsnet_forward.4} parent=11 // pred_check_branch
          %911 = sbr.rel (%p909) target = $region76
        $region75: #{gtsnet_forward.4} parent=11 // pred_region
          %913 = vsyncadd [#allocation17], 0
          %s915 = sshll.u32 %s33, 4
          %s916 = int_to_ptr.hbm [resolvable:$true] %s915
          %s917 = sshll.u32 [#allocation16], 4
          %s918 = int_to_ptr.vmem [resolvable:$true] %s917
          %920 = dma.hbm_to_vmem [thread:$0]  %s916, 16, %s918, [#allocation17]
        $region76: #{gtsnet_forward.4} parent=11 // pred_fallthru
          _
        // Predicated region
        $region77: #{gtsnet_forward.4} parent=11 // pred_check
          %p921 = pneg %p463
        $region78: #{gtsnet_forward.4} parent=11 // pred_check_branch
          %923 = sbr.rel (%p921) target = $region80
        $region79: #{gtsnet_forward.4} parent=11 // pred_region
          %925 = vsyncadd [#allocation17], 0
          %s927 = sshll.u32 %s35, 4
          %s928 = int_to_ptr.hbm [resolvable:$true] %s927
          %s929 = sshll.u32 [#allocation18], 4
          %s930 = int_to_ptr.vmem [resolvable:$true] %s929
          %932 = dma.hbm_to_vmem [thread:$0]  %s928, 16, %s930, [#allocation17]
        $region80: #{gtsnet_forward.4} parent=11 // pred_fallthru
          _
        // Predicated region
        $region81: #{gtsnet_forward.4} parent=11 // pred_check
          %p933 = pneg %p484
        $region82: #{gtsnet_forward.4} parent=11 // pred_check_branch
          %935 = sbr.rel (%p933) target = $region84
        $region83: #{gtsnet_forward.4} parent=11 // pred_region
          %937 = vsyncadd [#allocation20], 0
          %s938 = sshll.u32 %s37, 4
          %s939 = int_to_ptr.hbm [resolvable:$true] %s938
          %s940 = sshll.u32 [#allocation19], 4
          %s941 = int_to_ptr.vmem [resolvable:$true] %s940
          %946 = dma.hbm_to_vmem [thread:$0]  %s939, 1024, %s941, [#allocation20], 64, 64, 4
        $region84: #{gtsnet_forward.4} parent=11 // pred_fallthru
          _
        // Predicated region
        $region85: #{gtsnet_forward.4} parent=11 // pred_check
          %p947 = pneg %p505
        $region86: #{gtsnet_forward.4} parent=11 // pred_check_branch
          %949 = sbr.rel (%p947) target = $region88
        $region87: #{gtsnet_forward.4} parent=11 // pred_region
          %951 = vsyncadd [#allocation20], 0
          %s953 = sshll.u32 %s39, 4
          %s954 = int_to_ptr.hbm [resolvable:$true] %s953
          %s955 = sshll.u32 [#allocation21], 4
          %s956 = int_to_ptr.vmem [resolvable:$true] %s955
          %958 = dma.hbm_to_vmem [thread:$0]  %s954, 16, %s956, [#allocation20]
        $region88: #{gtsnet_forward.4} parent=11 // pred_fallthru
          _
        // Predicated region
        $region89: #{gtsnet_forward.4} parent=11 // pred_check
          %p959 = pneg %p526
        $region90: #{gtsnet_forward.4} parent=11 // pred_check_branch
          %961 = sbr.rel (%p959) target = $region92
        $region91: #{gtsnet_forward.4} parent=11 // pred_region
          %963 = vsyncadd [#allocation23], 0
          %s965 = sshll.u32 %s41, 4
          %s966 = int_to_ptr.hbm [resolvable:$true] %s965
          %s967 = sshll.u32 [#allocation22], 4
          %s968 = int_to_ptr.vmem [resolvable:$true] %s967
          %970 = dma.hbm_to_vmem [thread:$0]  %s966, 16, %s968, [#allocation23]
        $region92: #{gtsnet_forward.4} parent=11 // pred_fallthru
          _
        // Predicated region
        $region93: #{gtsnet_forward.4} parent=11 // pred_check
          %p971 = pneg %p547
        $region94: #{gtsnet_forward.4} parent=11 // pred_check_branch
          %973 = sbr.rel (%p971) target = $region96
        $region95: #{gtsnet_forward.4} parent=11 // pred_region
          %975 = vsyncadd [#allocation23], 0
          %s976 = sshll.u32 %s43, 4
          %s977 = int_to_ptr.hbm [resolvable:$true] %s976
          %s978 = sshll.u32 [#allocation24], 4
          %s979 = int_to_ptr.vmem [resolvable:$true] %s978
          %984 = dma.hbm_to_vmem [thread:$0]  %s977, 1024, %s979, [#allocation23], 64, 64, 4
        $region96: #{gtsnet_forward.4} parent=11 // pred_fallthru
          _
        // Predicated region
        $region97: #{gtsnet_forward.4} parent=11 // pred_check
          %p985 = pneg %p568
        $region98: #{gtsnet_forward.4} parent=11 // pred_check_branch
          %987 = sbr.rel (%p985) target = $region100
        $region99: #{gtsnet_forward.4} parent=11 // pred_region
          %989 = vsyncadd [#allocation26], 0
          %s991 = sshll.u32 %s45, 4
          %s992 = int_to_ptr.hbm [resolvable:$true] %s991
          %s993 = sshll.u32 [#allocation25], 4
          %s994 = int_to_ptr.vmem [resolvable:$true] %s993
          %996 = dma.hbm_to_vmem [thread:$0]  %s992, 16, %s994, [#allocation26]
        $region100: #{gtsnet_forward.4} parent=11 // pred_fallthru
          _
        // Predicated region
        $region101: #{gtsnet_forward.4} parent=11 // pred_check
          %p997 = pneg %p589
        $region102: #{gtsnet_forward.4} parent=11 // pred_check_branch
          %999 = sbr.rel (%p997) target = $region104
        $region103: #{gtsnet_forward.4} parent=11 // pred_region
          %1001 = vsyncadd [#allocation26], 0
          %s1003 = sshll.u32 %s47, 4
          %s1004 = int_to_ptr.hbm [resolvable:$true] %s1003
          %s1005 = sshll.u32 [#allocation27], 4
          %s1006 = int_to_ptr.vmem [resolvable:$true] %s1005
          %1008 = dma.hbm_to_vmem [thread:$0]  %s1004, 16, %s1006, [#allocation26]
        $region104: #{gtsnet_forward.4} parent=11 // pred_fallthru
          _
        // Predicated region
        $region105: #{gtsnet_forward.4} parent=11 // pred_check
          %p1009 = pneg %p610
        $region106: #{gtsnet_forward.4} parent=11 // pred_check_branch
          %1011 = sbr.rel (%p1009) target = $region108
        $region107: #{gtsnet_forward.4} parent=11 // pred_region
          %1013 = vsyncadd [#allocation29], 0
          %s1014 = sshll.u32 %s49, 4
          %s1015 = int_to_ptr.hbm [resolvable:$true] %s1014
          %s1016 = sshll.u32 [#allocation28], 4
          %s1017 = int_to_ptr.vmem [resolvable:$true] %s1016
          %1022 = dma.hbm_to_vmem [thread:$0]  %s1015, 256, %s1017, [#allocation29], 64, 64, 4
        $region108: #{gtsnet_forward.4} parent=11 // pred_fallthru
          _
        // Predicated region
        $region109: #{gtsnet_forward.4} parent=11 // pred_check
          %p1023 = pneg %p631
        $region110: #{gtsnet_forward.4} parent=11 // pred_check_branch
          %1025 = sbr.rel (%p1023) target = $region112
        $region111: #{gtsnet_forward.4} parent=11 // pred_region
          %1027 = vsyncadd [#allocation29], 0
          %s1029 = sshll.u32 %s51, 4
          %s1030 = int_to_ptr.hbm [resolvable:$true] %s1029
          %s1031 = sshll.u32 [#allocation30], 4
          %s1032 = int_to_ptr.vmem [resolvable:$true] %s1031
          %1034 = dma.hbm_to_vmem [thread:$0]  %s1030, 16, %s1032, [#allocation29]
        $region112: #{gtsnet_forward.4} parent=11 // pred_fallthru
          _
        // Predicated region
        $region113: #{gtsnet_forward.4} parent=11 // pred_check
          %p1035 = pneg %p652
        $region114: #{gtsnet_forward.4} parent=11 // pred_check_branch
          %1037 = sbr.rel (%p1035) target = $region116
        $region115: #{gtsnet_forward.4} parent=11 // pred_region
          %1039 = vsyncadd [#allocation32], 0
          %s1041 = sshll.u32 %s53, 4
          %s1042 = int_to_ptr.hbm [resolvable:$true] %s1041
          %s1043 = sshll.u32 [#allocation31], 4
          %s1044 = int_to_ptr.vmem [resolvable:$true] %s1043
          %1046 = dma.hbm_to_vmem [thread:$0]  %s1042, 16, %s1044, [#allocation32]
        $region116: #{gtsnet_forward.4} parent=11 // pred_fallthru
          _
        // Predicated region
        $region117: #{gtsnet_forward.4} parent=11 // pred_check
          %p1047 = pneg %p673
        $region118: #{gtsnet_forward.4} parent=11 // pred_check_branch
          %1049 = sbr.rel (%p1047) target = $region120
        $region119: #{gtsnet_forward.4} parent=11 // pred_region
          _
        $region120: #{gtsnet_forward.4} parent=11 // pred_fallthru
          _
        // Predicated region
        $region121: #{gtsnet_forward.4} parent=11 // pred_check
          %p1050 = pneg %p694
        $region122: #{gtsnet_forward.4} parent=11 // pred_check_branch
          %1052 = sbr.rel (%p1050) target = $region124
        $region123: #{gtsnet_forward.4} parent=11 // pred_region
          _
        $region124: #{gtsnet_forward.4} parent=11 // pred_fallthru
          _
        // Predicated region
        $region125: #{gtsnet_forward.4} parent=11 // pred_check
          %p1053 = pneg %p715
        $region126: #{gtsnet_forward.4} parent=11 // pred_check_branch
          %1055 = sbr.rel (%p1053) target = $region128
        $region127: #{gtsnet_forward.4} parent=11 // pred_region
          _
        $region128: #{gtsnet_forward.4} parent=11 // pred_fallthru
          _
        // Predicated region
        $region129: #{gtsnet_forward.4} parent=11 // pred_check
          %p1056 = pneg %p736
        $region130: #{gtsnet_forward.4} parent=11 // pred_check_branch
          %1058 = sbr.rel (%p1056) target = $region132
        $region131: #{gtsnet_forward.4} parent=11 // pred_region
          _
        $region132: #{gtsnet_forward.4} parent=11 // pred_fallthru
          _
      $region12: #{gtsnet_forward.4} parent=5 // pred_fallthru
        _
      %p1059 = scmp.lt.s32.totalorder %s80, 2
      // Predicated region
      $region133: #{gtsnet_forward.4} parent=5 // pred_check
        %p1060 = pneg %p1059
      $region134: #{gtsnet_forward.4} parent=5 // pred_check_branch
        %1062 = sbr.rel (%p1060) target = $region136
      $region135: #{gtsnet_forward.4} parent=5 // pred_region
        // Predicated region
        $region137: #{gtsnet_forward.4} parent=135 // pred_check
          %p1063 = pneg %p100
        $region138: #{gtsnet_forward.4} parent=135 // pred_check_branch
          %1065 = sbr.rel (%p1063) target = $region140
        $region139: #{gtsnet_forward.4} parent=135 // pred_region
          %p1066 = scmp.lt.s32.totalorder %s80, 1
          %s1067 = scalar_select %p1066, %s80, 1
          %s1068 = smul.addr %s1067, 4
          %s1069 = scalar_lea.vmem %s1, %s1068
        $region140: #{gtsnet_forward.4} parent=135 // pred_fallthru
          _
      $region136: #{gtsnet_forward.4} parent=5 // pred_fallthru
        _
      %p1070 = scmp.le.s32.totalorder 1, %s80
      %p1071 = scmp.lt.s32.totalorder %s80, 3
      %p1072 = pnand %p1070, %p1071
      %p1073 = pneg %p1072
      // Predicated region
      $region141: #{gtsnet_forward.4} parent=5 // pred_check
        _
      $region142: #{gtsnet_forward.4} parent=5 // pred_check_branch
        %1075 = sbr.rel (%p1072) target = $region144
      $region143: #{gtsnet_forward.4} parent=5 // pred_region
        %s1076 = ssub.s32 %s80, 1
        // Predicated region
        $region145: #{gtsnet_forward.4} parent=143 // pred_check
          %p1077 = pneg %p232
        $region146: #{gtsnet_forward.4} parent=143 // pred_check_branch
          %1079 = sbr.rel (%p1077) target = $region148
        $region147: #{gtsnet_forward.4} parent=143 // pred_region
          %1081 = dma.done [#allocation3], 256
        $region148: #{gtsnet_forward.4} parent=143 // pred_fallthru
          _
        // Predicated region
        $region149: #{gtsnet_forward.4} parent=143 // pred_check
          %p1082 = pneg %p253
        $region150: #{gtsnet_forward.4} parent=143 // pred_check_branch
          %1084 = sbr.rel (%p1082) target = $region152
        $region151: #{gtsnet_forward.4} parent=143 // pred_region
          %1086 = dma.done [#allocation5], 16
        $region152: #{gtsnet_forward.4} parent=143 // pred_fallthru
          _
        // Predicated region
        $region153: #{gtsnet_forward.4} parent=143 // pred_check
          %p1087 = pneg %p274
        $region154: #{gtsnet_forward.4} parent=143 // pred_check_branch
          %1089 = sbr.rel (%p1087) target = $region156
        $region155: #{gtsnet_forward.4} parent=143 // pred_region
          %1091 = dma.done [#allocation5], 16
        $region156: #{gtsnet_forward.4} parent=143 // pred_fallthru
          _
        // Predicated region
        $region157: #{gtsnet_forward.4} parent=143 // pred_check
          %p1092 = pneg %p295
        $region158: #{gtsnet_forward.4} parent=143 // pred_check_branch
          %1094 = sbr.rel (%p1092) target = $region160
        $region159: #{gtsnet_forward.4} parent=143 // pred_region
          %1096 = dma.done [#allocation8], 1024
        $region160: #{gtsnet_forward.4} parent=143 // pred_fallthru
          _
        // Predicated region
        $region161: #{gtsnet_forward.4} parent=143 // pred_check
          %p1097 = pneg %p316
        $region162: #{gtsnet_forward.4} parent=143 // pred_check_branch
          %1099 = sbr.rel (%p1097) target = $region164
        $region163: #{gtsnet_forward.4} parent=143 // pred_region
          %1101 = dma.done [#allocation8], 16
        $region164: #{gtsnet_forward.4} parent=143 // pred_fallthru
          _
        // Predicated region
        $region165: #{gtsnet_forward.4} parent=143 // pred_check
          %p1102 = pneg %p337
        $region166: #{gtsnet_forward.4} parent=143 // pred_check_branch
          %1104 = sbr.rel (%p1102) target = $region168
        $region167: #{gtsnet_forward.4} parent=143 // pred_region
          %1106 = dma.done [#allocation11], 16
        $region168: #{gtsnet_forward.4} parent=143 // pred_fallthru
          _
        // Predicated region
        $region169: #{gtsnet_forward.4} parent=143 // pred_check
          %p1107 = pneg %p379
        $region170: #{gtsnet_forward.4} parent=143 // pred_check_branch
          %1109 = sbr.rel (%p1107) target = $region172
        $region171: #{gtsnet_forward.4} parent=143 // pred_region
          %1111 = dma.done [#allocation11], 16
        $region172: #{gtsnet_forward.4} parent=143 // pred_fallthru
          _
        // Predicated region
        $region173: #{gtsnet_forward.4} parent=143 // pred_check
          %p1112 = pneg %p400
        $region174: #{gtsnet_forward.4} parent=143 // pred_check_branch
          %1114 = sbr.rel (%p1112) target = $region176
        $region175: #{gtsnet_forward.4} parent=143 // pred_region
          %1116 = dma.done [#allocation14], 16
        $region176: #{gtsnet_forward.4} parent=143 // pred_fallthru
          _
        // Predicated region
        $region177: #{gtsnet_forward.4} parent=143 // pred_check
          %p1117 = pneg %p421
        $region178: #{gtsnet_forward.4} parent=143 // pred_check_branch
          %1119 = sbr.rel (%p1117) target = $region180
        $region179: #{gtsnet_forward.4} parent=143 // pred_region
          %1121 = dma.done [#allocation14], 1024
        $region180: #{gtsnet_forward.4} parent=143 // pred_fallthru
          _
        // Predicated region
        $region181: #{gtsnet_forward.4} parent=143 // pred_check
          %p1122 = pneg %p442
        $region182: #{gtsnet_forward.4} parent=143 // pred_check_branch
          %1124 = sbr.rel (%p1122) target = $region184
        $region183: #{gtsnet_forward.4} parent=143 // pred_region
          %1126 = dma.done [#allocation17], 16
        $region184: #{gtsnet_forward.4} parent=143 // pred_fallthru
          _
        // Predicated region
        $region185: #{gtsnet_forward.4} parent=143 // pred_check
          %p1127 = pneg %p463
        $region186: #{gtsnet_forward.4} parent=143 // pred_check_branch
          %1129 = sbr.rel (%p1127) target = $region188
        $region187: #{gtsnet_forward.4} parent=143 // pred_region
          %1131 = dma.done [#allocation17], 16
        $region188: #{gtsnet_forward.4} parent=143 // pred_fallthru
          _
        // Predicated region
        $region189: #{gtsnet_forward.4} parent=143 // pred_check
          %p1132 = pneg %p484
        $region190: #{gtsnet_forward.4} parent=143 // pred_check_branch
          %1134 = sbr.rel (%p1132) target = $region192
        $region191: #{gtsnet_forward.4} parent=143 // pred_region
          %1136 = dma.done [#allocation20], 1024
        $region192: #{gtsnet_forward.4} parent=143 // pred_fallthru
          _
        // Predicated region
        $region193: #{gtsnet_forward.4} parent=143 // pred_check
          %p1137 = pneg %p505
        $region194: #{gtsnet_forward.4} parent=143 // pred_check_branch
          %1139 = sbr.rel (%p1137) target = $region196
        $region195: #{gtsnet_forward.4} parent=143 // pred_region
          %1141 = dma.done [#allocation20], 16
        $region196: #{gtsnet_forward.4} parent=143 // pred_fallthru
          _
        // Predicated region
        $region197: #{gtsnet_forward.4} parent=143 // pred_check
          %p1142 = pneg %p526
        $region198: #{gtsnet_forward.4} parent=143 // pred_check_branch
          %1144 = sbr.rel (%p1142) target = $region200
        $region199: #{gtsnet_forward.4} parent=143 // pred_region
          %1146 = dma.done [#allocation23], 16
        $region200: #{gtsnet_forward.4} parent=143 // pred_fallthru
          _
        // Predicated region
        $region201: #{gtsnet_forward.4} parent=143 // pred_check
          %p1147 = pneg %p547
        $region202: #{gtsnet_forward.4} parent=143 // pred_check_branch
          %1149 = sbr.rel (%p1147) target = $region204
        $region203: #{gtsnet_forward.4} parent=143 // pred_region
          %1151 = dma.done [#allocation23], 1024
        $region204: #{gtsnet_forward.4} parent=143 // pred_fallthru
          _
        // Predicated region
        $region205: #{gtsnet_forward.4} parent=143 // pred_check
          %p1152 = pneg %p568
        $region206: #{gtsnet_forward.4} parent=143 // pred_check_branch
          %1154 = sbr.rel (%p1152) target = $region208
        $region207: #{gtsnet_forward.4} parent=143 // pred_region
          %1156 = dma.done [#allocation26], 16
        $region208: #{gtsnet_forward.4} parent=143 // pred_fallthru
          _
        // Predicated region
        $region209: #{gtsnet_forward.4} parent=143 // pred_check
          %p1157 = pneg %p589
        $region210: #{gtsnet_forward.4} parent=143 // pred_check_branch
          %1159 = sbr.rel (%p1157) target = $region212
        $region211: #{gtsnet_forward.4} parent=143 // pred_region
          %1161 = dma.done [#allocation26], 16
        $region212: #{gtsnet_forward.4} parent=143 // pred_fallthru
          _
        // Predicated region
        $region213: #{gtsnet_forward.4} parent=143 // pred_check
          %p1162 = pneg %p610
        $region214: #{gtsnet_forward.4} parent=143 // pred_check_branch
          %1164 = sbr.rel (%p1162) target = $region216
        $region215: #{gtsnet_forward.4} parent=143 // pred_region
          %1166 = dma.done [#allocation29], 256
        $region216: #{gtsnet_forward.4} parent=143 // pred_fallthru
          _
        // Predicated region
        $region217: #{gtsnet_forward.4} parent=143 // pred_check
          %p1167 = pneg %p631
        $region218: #{gtsnet_forward.4} parent=143 // pred_check_branch
          %1169 = sbr.rel (%p1167) target = $region220
        $region219: #{gtsnet_forward.4} parent=143 // pred_region
          %1171 = dma.done [#allocation29], 16
        $region220: #{gtsnet_forward.4} parent=143 // pred_fallthru
          _
        // Predicated region
        $region221: #{gtsnet_forward.4} parent=143 // pred_check
          %p1172 = pneg %p652
        $region222: #{gtsnet_forward.4} parent=143 // pred_check_branch
          %1174 = sbr.rel (%p1172) target = $region224
        $region223: #{gtsnet_forward.4} parent=143 // pred_region
          %1176 = dma.done [#allocation32], 16
        $region224: #{gtsnet_forward.4} parent=143 // pred_fallthru
          _
        %p1177 = scmp.lt.s32.totalorder %s85, 1
        %s1178 = scalar_select %p1177, %s85, 1
        %s1179 = smul.addr %s1178, 4
        %s1180 = scalar_lea.vmem %s1, %s1179
        %p1181 = pneg %p106
        %p1182 = pneg %p103
        %p1183 = pneg %p127
        %p1184 = pneg %p124
        %p1185 = pneg %p148
        %p1186 = pneg %p145
        %p1187 = pneg %p169
        %p1188 = pneg %p166
        %p1189 = pneg %p190
        %p1190 = pneg %p187
        %p1191 = pneg %p211
        %p1192 = pneg %p208
        %p1193 = pneg %p232
        %p1194 = pneg %p229
        %p1195 = pneg %p253
        %p1196 = pneg %p250
        %p1197 = pneg %p274
        %p1198 = pneg %p271
        %p1199 = pneg %p295
        %p1200 = pneg %p292
        %p1201 = pneg %p316
        %p1202 = pneg %p313
        %p1203 = pneg %p337
        %p1204 = pneg %p334
        %p1205 = pneg %p358
        %p1206 = pneg %p355
        %p1207 = pneg %p379
        %p1208 = pneg %p376
        %p1209 = pneg %p400
        %p1210 = pneg %p397
        %p1211 = pneg %p421
        %p1212 = pneg %p418
        %p1213 = pneg %p442
        %p1214 = pneg %p439
        %p1215 = pneg %p463
        %p1216 = pneg %p460
        %p1217 = pneg %p484
        %p1218 = pneg %p481
        %p1219 = pneg %p505
        %p1220 = pneg %p502
        %p1221 = pneg %p526
        %p1222 = pneg %p523
        %p1223 = pneg %p547
        %p1224 = pneg %p544
        %p1225 = pneg %p568
        %p1226 = pneg %p565
        %p1227 = pneg %p589
        %p1228 = pneg %p586
        %p1229 = pneg %p610
        %p1230 = pneg %p607
        %p1231 = pneg %p631
        %p1232 = pneg %p628
        %p1233 = pneg %p652
        %p1234 = pneg %p649
        %p1235 = pneg %p673
        %p1236 = pneg %p670
        %p1237 = pneg %p694
        %p1238 = pneg %p691
        %p1239 = pneg %p715
        %p1240 = pneg %p712
        %p1241 = pneg %p736
        %p1242 = pneg %p733
        %p1243 = pneg %p762
        %p1244 = pneg %p759
        %p1245 = scmp.lt.s32.totalorder %s85, 1
        %s1246 = scalar_select %p1245, %s85, 1
        %s1247 = smul.addr %s1246, 4
        %s1248 = scalar_lea.vmem %s63, %s1247
        %p1249 = scmp.lt.s32.totalorder %s85, 1
        %s1250 = scalar_select %p1249, %s85, 1
        %s1251 = smul.addr %s1250, 4
        %s1252 = scalar_lea.vmem %s1, %s1251
        %p1253 = scmp.lt.s32.totalorder %s85, 1
        %s1254 = scalar_select %p1253, %s85, 1
        %s1255 = smul.addr %s1254, 4
        %s1256 = scalar_lea.vmem %s63, %s1255
        %v1258 = vld [vmem:[%s1252] sm:$0xf]
        %v1259 = vld [vmem:[%s59] sm:$0xf]
        %v1260 = vld [vmem:[%s61] sm:$0xf]
        %v1262 = vunpack.c.l.b16 %v1258
        %v1263 = vpack.c.b16 %v1262, %v1262
        %v1265 = vshrl.u32 %v1263, 16
        %v1267 = vshll.u32 %v1263, 16
        %v1269 = vrot.slane %v1267, 1
        %v1270 = vor.u32 %v1265, %v1269
        %vm1272 = vcmask 1043456
        %vm1273 = vsmask.f32 3328
        %vm1274 = vmand %vm1272, %vm1273
        %v1275 = vsel %vm1274, %v1270, 0
        %v1276 = vrot.slane %v1265, 7
        %v1277 = vor.u32 %v1276, %v1267
        %vm1279 = vcmask 1040384
        %vm1280 = vsmask.f32 256
        %vm1281 = vmand %vm1279, %vm1280
        %v1282 = vsel %vm1281, 0, %v1277
        %v1283 = vld [vmem:[%s3] sm:$0xf]
        %1285 = vset.pattern.permute.xlu0 0
        %1286 = vperm.xlu0 %1285, %v1260
        %v1287 = vpop.permute.xlu0 %1286
        %v1290 = vunpack.c.l.s4 839922192
        %v1291 = vunpack.c.0.s8 %v1290
        %v1292 = vperm.slane %v1287, %v1291
        %v1293 = vunpack.c.l.bf16 %v1292
        %v1294 = vunpack.c.l.bf16 %v1282
        %v1295 = vmul.f32 %v1293, %v1294
        %v1296 = vpack.c.bf16 %v1295, %v1295
        %v1297 = vld [vmem:[%s5] sm:$0xf]
        %vm1298 = vcmask 64512
        %v1300 = vsel %vm1298, %v1296, 0
        %vm1302 = vcmask 1043456
        %v1304 = vsel %vm1302, %v1297, 0
        %1306 = vmatpush.bf16.msra.mxu0 0
        %1307 = vmatpush.bf16.msra.mxu0 0
        %1308 = vmatpush.bf16.msra.mxu0 0
        %1309 = vmatpush.bf16.msra.mxu0 0
        %1310 = vmatpush.bf16.msra.mxu0 0
        %1311 = vmatpush.bf16.msra.mxu0 0
        %1312 = vmatpush.bf16.msra.mxu0 0
        %1313 = vmatpush.bf16.msra.mxu0 %v1304
        %1314 = vmatmul.bf16.gmra.mxu0 %v1300
        %v1315 = vpop.f32.mrf.mxu0
        %v1316 = vadd.f32 0.0, %v1315
        %v1317 = vpop.f32.mrf.mxu0
        %1318 = vdwg.mxu0
        %v1320 = vsel %vm1298, %v1258, 0
        %v1323 = vsel %vm1302, %v1283, 0
        %1325 = vmatpush.bf16.msra.mxu0 0
        %1326 = vmatpush.bf16.msra.mxu0 0
        %1327 = vmatpush.bf16.msra.mxu0 0
        %1328 = vmatpush.bf16.msra.mxu0 0
        %1329 = vmatpush.bf16.msra.mxu0 0
        %1330 = vmatpush.bf16.msra.mxu0 0
        %1331 = vmatpush.bf16.msra.mxu0 0
        %1332 = vmatpush.bf16.msra.mxu0 %v1323
        %1333 = vmatmul.bf16.gmra.mxu0 %v1320
        %v1334 = vpop.f32.mrf.mxu0
        %v1335 = vadd.f32 %v1316, %v1334
        %v1336 = vpop.f32.mrf.mxu0
        %1337 = vdwg.mxu0
        %1339 = vset.pattern.permute.xlu0 0
        %1340 = vperm.xlu0 %1339, %v1259
        %v1341 = vpop.permute.xlu0 %1340
        %v1344 = vunpack.c.l.s4 839922192
        %v1345 = vunpack.c.0.s8 %v1344
        %v1346 = vperm.slane %v1341, %v1345
        %v1347 = vunpack.c.l.bf16 %v1346
        %v1348 = vunpack.c.l.bf16 %v1275
        %v1349 = vmul.f32 %v1347, %v1348
        %v1350 = vpack.c.bf16 %v1349, %v1349
        %v1351 = vld [vmem:[%s7] sm:$0xf]
        %v1353 = vsel %vm1298, %v1350, 0
        %v1356 = vsel %vm1302, %v1351, 0
        %1358 = vmatpush.bf16.msra.mxu0 0
        %1359 = vmatpush.bf16.msra.mxu0 0
        %1360 = vmatpush.bf16.msra.mxu0 0
        %1361 = vmatpush.bf16.msra.mxu0 0
        %1362 = vmatpush.bf16.msra.mxu0 0
        %1363 = vmatpush.bf16.msra.mxu0 0
        %1364 = vmatpush.bf16.msra.mxu0 0
        %1365 = vmatpush.bf16.msra.mxu0 %v1356
        %1366 = vmatmul.bf16.gmra.mxu0 %v1353
        %v1367 = vpop.f32.mrf.mxu0
        %v1368 = vadd.f32 0.0, %v1367
        %v1369 = vpop.f32.mrf.mxu0
        %1370 = vdwg.mxu0
        %v1371 = vadd.f32 %v1335, %v1368
        %v1372 = vld [vmem:[%s9] sm:$0x1]
        %v1374 = vperm.slane %v1372, 0
        %v1376 = vmul.f32 %v1371, %v1374
        %v1377 = vld [vmem:[%s11] sm:$0x1]
        %v1379 = vperm.slane %v1377, 0
        %v1381 = vadd.f32 %v1376, %v1379
        %1383 = vrot.lane.b32.xlu0 %v1381, 96
        %v1384 = vpop.permute.xlu0 %1383
        %v1386 = vmax.f32 %v1381, %v1384
        %v1387 = vpack.c.bf16 %v1386, %v1386
        %v1388 = vld [vmem:[#allocation28] sm:$0xf]
        %v1389 = vld [vmem:[#allocation28 + $0x4] sm:$0xf]
        %v1390 = vld [vmem:[#allocation28 + $0x8] sm:$0xf]
        %v1391 = vld [vmem:[#allocation28 + $0xc] sm:$0xf]
        %v1396 = vunpack.c.l.b16 %v1388
        %v1397 = vunpack.c.l.b16 %v1389
        %v1398 = vunpack.c.l.b16 %v1390
        %v1399 = vunpack.c.l.b16 %v1391
        %v1400 = vpack.c.b16 %v1397, %v1396
        %v1401 = vpack.c.b16 %v1399, %v1398
        %vm1404 = vcmask 261120
        %v1406 = vsel %vm1404, %v1387, 0
        %1408 = vmatpush.bf16.msra.mxu0 0
        %1409 = vmatpush.bf16.msra.mxu0 0
        %1410 = vmatpush.bf16.msra.mxu0 0
        %1411 = vmatpush.bf16.msra.mxu0 0
        %1412 = vmatpush.bf16.msra.mxu0 0
        %1413 = vmatpush.bf16.msra.mxu0 0
        %1414 = vmatpush.bf16.msra.mxu0 %v1401
        %1415 = vmatpush.bf16.msra.mxu0 %v1400
        %1416 = vmatmul.bf16.gmra.mxu0 %v1406
        %v1417 = vpop.f32.mrf.mxu0
        %v1418 = vadd.f32 0.0, %v1417
        %v1419 = vpop.f32.mrf.mxu0
        %1420 = vdwg.mxu0
        %v1421 = vld [vmem:[#allocation30] sm:$0x1]
        %v1423 = vperm.slane %v1421, 0
        %v1425 = vmul.f32 %v1418, %v1423
        %v1426 = vld [vmem:[#allocation31] sm:$0x1]
        %v1428 = vperm.slane %v1426, 0
        %v1430 = vadd.f32 %v1425, %v1428
        %v1431 = vld [vmem:[%s55] sm:$0x1]
        %v1432 = vld [vmem:[%s57] sm:$0x1]
        %v1433 = vunpack.c.l.bf16 %v1431
        %v1434 = vsub.f32 1.0, %v1433
        %v1435 = vpack.c.bf16 %v1434, %v1434
        %v1436 = vunpack.c.l.bf16 %v1435
        %v1437 = vunpack.c.l.bf16 %v1432
        %v1438 = vsub.f32 %v1436, %v1437
        %v1439 = vpack.c.bf16 %v1438, %v1438
        %v1441 = vpack.i.b16 %v1431, %v1431
        %v1443 = vperm.slane %v1441, 0
        %v1444 = vunpack.c.l.bf16 %v1443
        %v1445 = vmul.f32 %v1444, %v1347
        %v1446 = vpack.c.bf16 %v1445, %v1445
        %v1448 = vpack.i.b16 %v1432, %v1432
        %v1450 = vperm.slane %v1448, 0
        %v1451 = vunpack.c.l.bf16 %v1450
        %v1452 = vmul.f32 %v1451, %v1293
        %v1453 = vpack.c.bf16 %v1452, %v1452
        %v1454 = vld [vmem:[#allocation2] sm:$0xf]
        %v1455 = vld [vmem:[#allocation2 + $0x4] sm:$0xf]
        %v1456 = vld [vmem:[#allocation2 + $0x8] sm:$0xf]
        %v1457 = vld [vmem:[#allocation2 + $0xc] sm:$0xf]
        %v1462 = vunpack.c.l.b16 %v1454
        %v1463 = vunpack.c.l.b16 %v1455
        %v1464 = vunpack.c.l.b16 %v1456
        %v1465 = vunpack.c.l.b16 %v1457
        %v1466 = vpack.c.b16 %v1463, %v1462
        %v1467 = vpack.c.b16 %v1465, %v1464
        %1470 = vmatpush.bf16.msra.mxu0 0
        %1471 = vmatpush.bf16.msra.mxu0 0
        %1472 = vmatpush.bf16.msra.mxu0 0
        %1473 = vmatpush.bf16.msra.mxu0 0
        %1474 = vmatpush.bf16.msra.mxu0 0
        %1475 = vmatpush.bf16.msra.mxu0 0
        %1476 = vmatpush.bf16.msra.mxu0 %v1467
        %1477 = vmatpush.bf16.msra.mxu0 %v1466
        %1478 = vmatmul.bf16.gmra.mxu0 %v1406
        %v1479 = vpop.f32.mrf.mxu0
        %v1480 = vadd.f32 0.0, %v1479
        %v1481 = vpop.f32.mrf.mxu0
        %1482 = vdwg.mxu0
        %v1483 = vld [vmem:[#allocation4] sm:$0x1]
        %v1485 = vperm.slane %v1483, 0
        %v1487 = vmul.f32 %v1480, %v1485
        %v1488 = vld [vmem:[#allocation6] sm:$0x1]
        %v1490 = vperm.slane %v1488, 0
        %v1492 = vadd.f32 %v1487, %v1490
        %v1493 = vmax.f32 %v1492, 0.0
        %v1494 = vpack.c.bf16 %v1493, %v1493
        %v1496 = vunpack.c.l.b16 %v1494
        %v1497 = vpack.c.b16 %v1496, %v1496
        %v1499 = vshrl.u32 %v1497, 16
        %v1501 = vshll.u32 %v1497, 16
        %v1503 = vrot.slane %v1501, 1
        %v1504 = vor.u32 %v1499, %v1503
        %v1506 = vsel %vm1274, %v1504, 0
        %v1507 = vrot.slane %v1499, 7
        %v1508 = vor.u32 %v1507, %v1501
        %v1510 = vsel %vm1281, 0, %v1508
        %v1512 = vpack.i.b16 %v1439, %v1439
        %v1514 = vperm.slane %v1512, 0
        %v1515 = vunpack.c.l.bf16 %v1494
        %v1516 = vunpack.c.l.bf16 %v1514
        %v1517 = vmul.f32 %v1515, %v1516
        %v1518 = vpack.c.bf16 %v1517, %v1517
        %v1519 = vunpack.c.l.bf16 %v1506
        %v1520 = vunpack.c.l.bf16 %v1446
        %v1521 = vmul.f32 %v1519, %v1520
        %v1522 = vpack.c.bf16 %v1521, %v1521
        %v1523 = vunpack.c.l.bf16 %v1518
        %v1524 = vunpack.c.l.bf16 %v1522
        %v1525 = vadd.f32 %v1523, %v1524
        %v1526 = vpack.c.bf16 %v1525, %v1525
        %v1527 = vunpack.c.l.bf16 %v1510
        %v1528 = vunpack.c.l.bf16 %v1453
        %v1529 = vmul.f32 %v1527, %v1528
        %v1530 = vpack.c.bf16 %v1529, %v1529
        %v1531 = vunpack.c.l.bf16 %v1526
        %v1532 = vunpack.c.l.bf16 %v1530
        %v1533 = vadd.f32 %v1531, %v1532
        %v1534 = vpack.c.bf16 %v1533, %v1533
        %v1535 = vld [vmem:[#allocation7] sm:$0xf]
        %v1536 = vld [vmem:[#allocation7 + $0x4] sm:$0xf]
        %v1537 = vld [vmem:[#allocation7 + $0x8] sm:$0xf]
        %v1538 = vld [vmem:[#allocation7 + $0xc] sm:$0xf]
        %v1539 = vld [vmem:[#allocation7 + $0x10] sm:$0xf]
        %v1540 = vld [vmem:[#allocation7 + $0x14] sm:$0xf]
        %v1541 = vld [vmem:[#allocation7 + $0x18] sm:$0xf]
        %v1542 = vld [vmem:[#allocation7 + $0x1c] sm:$0xf]
        %v1543 = vld [vmem:[#allocation7 + $0x20] sm:$0xf]
        %v1544 = vld [vmem:[#allocation7 + $0x24] sm:$0xf]
        %v1545 = vld [vmem:[#allocation7 + $0x28] sm:$0xf]
        %v1546 = vld [vmem:[#allocation7 + $0x2c] sm:$0xf]
        %v1547 = vld [vmem:[#allocation7 + $0x30] sm:$0xf]
        %v1548 = vld [vmem:[#allocation7 + $0x34] sm:$0xf]
        %v1549 = vld [vmem:[#allocation7 + $0x38] sm:$0xf]
        %v1550 = vld [vmem:[#allocation7 + $0x3c] sm:$0xf]
        %v1567 = vunpack.c.l.b16 %v1535
        %v1568 = vunpack.c.l.b16 %v1536
        %v1569 = vunpack.c.l.b16 %v1537
        %v1570 = vunpack.c.l.b16 %v1538
        %v1571 = vunpack.c.l.b16 %v1539
        %v1572 = vunpack.c.l.b16 %v1540
        %v1573 = vunpack.c.l.b16 %v1541
        %v1574 = vunpack.c.l.b16 %v1542
        %v1575 = vunpack.c.l.b16 %v1543
        %v1576 = vunpack.c.l.b16 %v1544
        %v1577 = vunpack.c.l.b16 %v1545
        %v1578 = vunpack.c.l.b16 %v1546
        %v1579 = vunpack.c.l.b16 %v1547
        %v1580 = vunpack.c.l.b16 %v1548
        %v1581 = vunpack.c.l.b16 %v1549
        %v1582 = vunpack.c.l.b16 %v1550
        %v1583 = vpack.c.b16 %v1568, %v1567
        %v1584 = vpack.c.b16 %v1570, %v1569
        %v1585 = vpack.c.b16 %v1572, %v1571
        %v1586 = vpack.c.b16 %v1574, %v1573
        %v1587 = vpack.c.b16 %v1576, %v1575
        %v1588 = vpack.c.b16 %v1578, %v1577
        %v1589 = vpack.c.b16 %v1580, %v1579
        %v1590 = vpack.c.b16 %v1582, %v1581
        %1599 = vmatpush.bf16.msra.mxu0 %v1590
        %1600 = vmatpush.bf16.msra.mxu0 %v1589
        %1601 = vmatpush.bf16.msra.mxu0 %v1588
        %1602 = vmatpush.bf16.msra.mxu0 %v1587
        %1603 = vmatpush.bf16.msra.mxu0 %v1586
        %1604 = vmatpush.bf16.msra.mxu0 %v1585
        %1605 = vmatpush.bf16.msra.mxu0 %v1584
        %1606 = vmatpush.bf16.msra.mxu0 %v1583
        %1607 = vmatmul.bf16.gmra.mxu0 %v1534
        %v1608 = vpop.f32.mrf.mxu0
        %v1609 = vadd.f32 0.0, %v1608
        %v1610 = vpop.f32.mrf.mxu0
        %1611 = vdwg.mxu0
        %v1612 = vld [vmem:[#allocation9] sm:$0x1]
        %v1614 = vperm.slane %v1612, 0
        %v1616 = vmul.f32 %v1609, %v1614
        %v1617 = vld [vmem:[#allocation10] sm:$0x1]
        %v1619 = vperm.slane %v1617, 0
        %v1621 = vadd.f32 %v1616, %v1619
        %v1622 = vmax.f32 %v1621, 0.0
        %v1623 = vpack.c.bf16 %v1622, %v1622
        %v1624 = vld [vmem:[%s25] sm:$0xf]
        %v1625 = vld [vmem:[%s25 + $0x4] sm:$0xf]
        %v1626 = vld [vmem:[%s25 + $0x8] sm:$0xf]
        %v1627 = vld [vmem:[%s25 + $0xc] sm:$0xf]
        %v1628 = vld [vmem:[%s25 + $0x10] sm:$0xf]
        %v1629 = vld [vmem:[%s25 + $0x14] sm:$0xf]
        %v1630 = vld [vmem:[%s25 + $0x18] sm:$0xf]
        %v1631 = vld [vmem:[%s25 + $0x1c] sm:$0xf]
        %v1632 = vld [vmem:[%s25 + $0x20] sm:$0xf]
        %v1633 = vld [vmem:[%s25 + $0x24] sm:$0xf]
        %v1634 = vld [vmem:[%s25 + $0x28] sm:$0xf]
        %v1635 = vld [vmem:[%s25 + $0x2c] sm:$0xf]
        %v1636 = vld [vmem:[%s25 + $0x30] sm:$0xf]
        %v1637 = vld [vmem:[%s25 + $0x34] sm:$0xf]
        %v1638 = vld [vmem:[%s25 + $0x38] sm:$0xf]
        %v1639 = vld [vmem:[%s25 + $0x3c] sm:$0xf]
        %v1656 = vunpack.c.l.b16 %v1624
        %v1657 = vunpack.c.l.b16 %v1625
        %v1658 = vunpack.c.l.b16 %v1626
        %v1659 = vunpack.c.l.b16 %v1627
        %v1660 = vunpack.c.l.b16 %v1628
        %v1661 = vunpack.c.l.b16 %v1629
        %v1662 = vunpack.c.l.b16 %v1630
        %v1663 = vunpack.c.l.b16 %v1631
        %v1664 = vunpack.c.l.b16 %v1632
        %v1665 = vunpack.c.l.b16 %v1633
        %v1666 = vunpack.c.l.b16 %v1634
        %v1667 = vunpack.c.l.b16 %v1635
        %v1668 = vunpack.c.l.b16 %v1636
        %v1669 = vunpack.c.l.b16 %v1637
        %v1670 = vunpack.c.l.b16 %v1638
        %v1671 = vunpack.c.l.b16 %v1639
        %v1672 = vpack.c.b16 %v1657, %v1656
        %v1673 = vpack.c.b16 %v1659, %v1658
        %v1674 = vpack.c.b16 %v1661, %v1660
        %v1675 = vpack.c.b16 %v1663, %v1662
        %v1676 = vpack.c.b16 %v1665, %v1664
        %v1677 = vpack.c.b16 %v1667, %v1666
        %v1678 = vpack.c.b16 %v1669, %v1668
        %v1679 = vpack.c.b16 %v1671, %v1670
        %1688 = vmatpush.bf16.msra.mxu0 %v1679
        %1689 = vmatpush.bf16.msra.mxu0 %v1678
        %1690 = vmatpush.bf16.msra.mxu0 %v1677
        %1691 = vmatpush.bf16.msra.mxu0 %v1676
        %1692 = vmatpush.bf16.msra.mxu0 %v1675
        %1693 = vmatpush.bf16.msra.mxu0 %v1674
        %1694 = vmatpush.bf16.msra.mxu0 %v1673
        %1695 = vmatpush.bf16.msra.mxu0 %v1672
        %1696 = vmatmul.bf16.gmra.mxu0 %v1623
        %v1697 = vpop.f32.mrf.mxu0
        %v1698 = vadd.f32 0.0, %v1697
        %v1699 = vpop.f32.mrf.mxu0
        %1700 = vdwg.mxu0
        %v1701 = vld [vmem:[#allocation12] sm:$0x1]
        %v1703 = vperm.slane %v1701, 0
        %v1705 = vmul.f32 %v1698, %v1703
        %v1706 = vld [vmem:[#allocation13] sm:$0x1]
        %v1708 = vperm.slane %v1706, 0
        %v1710 = vadd.f32 %v1705, %v1708
        %v1711 = vmax.f32 %v1710, 0.0
        %v1712 = vpack.c.bf16 %v1711, %v1711
        %v1714 = vunpack.c.l.b16 %v1712
        %v1715 = vpack.c.b16 %v1714, %v1714
        %v1717 = vshrl.u32 %v1715, 16
        %v1719 = vshll.u32 %v1715, 16
        %v1721 = vrot.slane %v1719, 1
        %v1722 = vor.u32 %v1717, %v1721
        %v1724 = vsel %vm1274, %v1722, 0
        %v1725 = vrot.slane %v1717, 7
        %v1726 = vor.u32 %v1725, %v1719
        %v1728 = vsel %vm1281, 0, %v1726
        %v1729 = vunpack.c.l.bf16 %v1712
        %v1730 = vmul.f32 %v1729, %v1516
        %v1731 = vpack.c.bf16 %v1730, %v1730
        %v1732 = vunpack.c.l.bf16 %v1724
        %v1733 = vmul.f32 %v1732, %v1520
        %v1734 = vpack.c.bf16 %v1733, %v1733
        %v1735 = vunpack.c.l.bf16 %v1731
        %v1736 = vunpack.c.l.bf16 %v1734
        %v1737 = vadd.f32 %v1735, %v1736
        %v1738 = vpack.c.bf16 %v1737, %v1737
        %v1739 = vunpack.c.l.bf16 %v1728
        %v1740 = vmul.f32 %v1739, %v1528
        %v1741 = vpack.c.bf16 %v1740, %v1740
        %v1742 = vunpack.c.l.bf16 %v1738
        %v1743 = vunpack.c.l.bf16 %v1741
        %v1744 = vadd.f32 %v1742, %v1743
        %v1745 = vpack.c.bf16 %v1744, %v1744
        %v1746 = vld [vmem:[#allocation15] sm:$0xf]
        %v1747 = vld [vmem:[#allocation15 + $0x4] sm:$0xf]
        %v1748 = vld [vmem:[#allocation15 + $0x8] sm:$0xf]
        %v1749 = vld [vmem:[#allocation15 + $0xc] sm:$0xf]
        %v1750 = vld [vmem:[#allocation15 + $0x10] sm:$0xf]
        %v1751 = vld [vmem:[#allocation15 + $0x14] sm:$0xf]
        %v1752 = vld [vmem:[#allocation15 + $0x18] sm:$0xf]
        %v1753 = vld [vmem:[#allocation15 + $0x1c] sm:$0xf]
        %v1754 = vld [vmem:[#allocation15 + $0x20] sm:$0xf]
        %v1755 = vld [vmem:[#allocation15 + $0x24] sm:$0xf]
        %v1756 = vld [vmem:[#allocation15 + $0x28] sm:$0xf]
        %v1757 = vld [vmem:[#allocation15 + $0x2c] sm:$0xf]
        %v1758 = vld [vmem:[#allocation15 + $0x30] sm:$0xf]
        %v1759 = vld [vmem:[#allocation15 + $0x34] sm:$0xf]
        %v1760 = vld [vmem:[#allocation15 + $0x38] sm:$0xf]
        %v1761 = vld [vmem:[#allocation15 + $0x3c] sm:$0xf]
        %v1778 = vunpack.c.l.b16 %v1746
        %v1779 = vunpack.c.l.b16 %v1747
        %v1780 = vunpack.c.l.b16 %v1748
        %v1781 = vunpack.c.l.b16 %v1749
        %v1782 = vunpack.c.l.b16 %v1750
        %v1783 = vunpack.c.l.b16 %v1751
        %v1784 = vunpack.c.l.b16 %v1752
        %v1785 = vunpack.c.l.b16 %v1753
        %v1786 = vunpack.c.l.b16 %v1754
        %v1787 = vunpack.c.l.b16 %v1755
        %v1788 = vunpack.c.l.b16 %v1756
        %v1789 = vunpack.c.l.b16 %v1757
        %v1790 = vunpack.c.l.b16 %v1758
        %v1791 = vunpack.c.l.b16 %v1759
        %v1792 = vunpack.c.l.b16 %v1760
        %v1793 = vunpack.c.l.b16 %v1761
        %v1794 = vpack.c.b16 %v1779, %v1778
        %v1795 = vpack.c.b16 %v1781, %v1780
        %v1796 = vpack.c.b16 %v1783, %v1782
        %v1797 = vpack.c.b16 %v1785, %v1784
        %v1798 = vpack.c.b16 %v1787, %v1786
        %v1799 = vpack.c.b16 %v1789, %v1788
        %v1800 = vpack.c.b16 %v1791, %v1790
        %v1801 = vpack.c.b16 %v1793, %v1792
        %1810 = vmatpush.bf16.msra.mxu0 %v1801
        %1811 = vmatpush.bf16.msra.mxu0 %v1800
        %1812 = vmatpush.bf16.msra.mxu0 %v1799
        %1813 = vmatpush.bf16.msra.mxu0 %v1798
        %1814 = vmatpush.bf16.msra.mxu0 %v1797
        %1815 = vmatpush.bf16.msra.mxu0 %v1796
        %1816 = vmatpush.bf16.msra.mxu0 %v1795
        %1817 = vmatpush.bf16.msra.mxu0 %v1794
        %1818 = vmatmul.bf16.gmra.mxu0 %v1745
        %v1819 = vpop.f32.mrf.mxu0
        %v1820 = vadd.f32 0.0, %v1819
        %v1821 = vpop.f32.mrf.mxu0
        %1822 = vdwg.mxu0
        %v1823 = vld [vmem:[#allocation16] sm:$0x1]
        %v1825 = vperm.slane %v1823, 0
        %v1827 = vmul.f32 %v1820, %v1825
        %v1828 = vld [vmem:[#allocation18] sm:$0x1]
        %v1830 = vperm.slane %v1828, 0
        %v1832 = vadd.f32 %v1827, %v1830
        %v1833 = vmax.f32 %v1832, 0.0
        %v1834 = vpack.c.bf16 %v1833, %v1833
        %v1835 = vld [vmem:[#allocation19] sm:$0xf]
        %v1836 = vld [vmem:[#allocation19 + $0x4] sm:$0xf]
        %v1837 = vld [vmem:[#allocation19 + $0x8] sm:$0xf]
        %v1838 = vld [vmem:[#allocation19 + $0xc] sm:$0xf]
        %v1839 = vld [vmem:[#allocation19 + $0x10] sm:$0xf]
        %v1840 = vld [vmem:[#allocation19 + $0x14] sm:$0xf]
        %v1841 = vld [vmem:[#allocation19 + $0x18] sm:$0xf]
        %v1842 = vld [vmem:[#allocation19 + $0x1c] sm:$0xf]
        %v1843 = vld [vmem:[#allocation19 + $0x20] sm:$0xf]
        %v1844 = vld [vmem:[#allocation19 + $0x24] sm:$0xf]
        %v1845 = vld [vmem:[#allocation19 + $0x28] sm:$0xf]
        %v1846 = vld [vmem:[#allocation19 + $0x2c] sm:$0xf]
        %v1847 = vld [vmem:[#allocation19 + $0x30] sm:$0xf]
        %v1848 = vld [vmem:[#allocation19 + $0x34] sm:$0xf]
        %v1849 = vld [vmem:[#allocation19 + $0x38] sm:$0xf]
        %v1850 = vld [vmem:[#allocation19 + $0x3c] sm:$0xf]
        %v1867 = vunpack.c.l.b16 %v1835
        %v1868 = vunpack.c.l.b16 %v1836
        %v1869 = vunpack.c.l.b16 %v1837
        %v1870 = vunpack.c.l.b16 %v1838
        %v1871 = vunpack.c.l.b16 %v1839
        %v1872 = vunpack.c.l.b16 %v1840
        %v1873 = vunpack.c.l.b16 %v1841
        %v1874 = vunpack.c.l.b16 %v1842
        %v1875 = vunpack.c.l.b16 %v1843
        %v1876 = vunpack.c.l.b16 %v1844
        %v1877 = vunpack.c.l.b16 %v1845
        %v1878 = vunpack.c.l.b16 %v1846
        %v1879 = vunpack.c.l.b16 %v1847
        %v1880 = vunpack.c.l.b16 %v1848
        %v1881 = vunpack.c.l.b16 %v1849
        %v1882 = vunpack.c.l.b16 %v1850
        %v1883 = vpack.c.b16 %v1868, %v1867
        %v1884 = vpack.c.b16 %v1870, %v1869
        %v1885 = vpack.c.b16 %v1872, %v1871
        %v1886 = vpack.c.b16 %v1874, %v1873
        %v1887 = vpack.c.b16 %v1876, %v1875
        %v1888 = vpack.c.b16 %v1878, %v1877
        %v1889 = vpack.c.b16 %v1880, %v1879
        %v1890 = vpack.c.b16 %v1882, %v1881
        %1899 = vmatpush.bf16.msra.mxu0 %v1890
        %1900 = vmatpush.bf16.msra.mxu0 %v1889
        %1901 = vmatpush.bf16.msra.mxu0 %v1888
        %1902 = vmatpush.bf16.msra.mxu0 %v1887
        %1903 = vmatpush.bf16.msra.mxu0 %v1886
        %1904 = vmatpush.bf16.msra.mxu0 %v1885
        %1905 = vmatpush.bf16.msra.mxu0 %v1884
        %1906 = vmatpush.bf16.msra.mxu0 %v1883
        %1907 = vmatmul.bf16.gmra.mxu0 %v1834
        %v1908 = vpop.f32.mrf.mxu0
        %v1909 = vadd.f32 0.0, %v1908
        %v1910 = vpop.f32.mrf.mxu0
        %1911 = vdwg.mxu0
        %v1912 = vld [vmem:[#allocation21] sm:$0x1]
        %v1914 = vperm.slane %v1912, 0
        %v1916 = vmul.f32 %v1909, %v1914
        %v1917 = vld [vmem:[#allocation22] sm:$0x1]
        %v1919 = vperm.slane %v1917, 0
        %v1921 = vadd.f32 %v1916, %v1919
        %v1922 = vmax.f32 %v1921, 0.0
        %v1923 = vpack.c.bf16 %v1922, %v1922
        %v1925 = vunpack.c.l.b16 %v1923
        %v1926 = vpack.c.b16 %v1925, %v1925
        %v1928 = vshrl.u32 %v1926, 16
        %v1930 = vshll.u32 %v1926, 16
        %v1932 = vrot.slane %v1930, 1
        %v1933 = vor.u32 %v1928, %v1932
        %v1935 = vsel %vm1274, %v1933, 0
        %v1936 = vrot.slane %v1928, 7
        %v1937 = vor.u32 %v1936, %v1930
        %v1939 = vsel %vm1281, 0, %v1937
        %v1940 = vunpack.c.l.bf16 %v1923
        %v1941 = vmul.f32 %v1940, %v1516
        %v1942 = vpack.c.bf16 %v1941, %v1941
        %v1943 = vunpack.c.l.bf16 %v1935
        %v1944 = vmul.f32 %v1943, %v1520
        %v1945 = vpack.c.bf16 %v1944, %v1944
        %v1946 = vunpack.c.l.bf16 %v1942
        %v1947 = vunpack.c.l.bf16 %v1945
        %v1948 = vadd.f32 %v1946, %v1947
        %v1949 = vpack.c.bf16 %v1948, %v1948
        %v1950 = vunpack.c.l.bf16 %v1939
        %v1951 = vmul.f32 %v1950, %v1528
        %v1952 = vpack.c.bf16 %v1951, %v1951
        %v1953 = vunpack.c.l.bf16 %v1949
        %v1954 = vunpack.c.l.bf16 %v1952
        %v1955 = vadd.f32 %v1953, %v1954
        %v1956 = vpack.c.bf16 %v1955, %v1955
        %v1957 = vld [vmem:[#allocation24] sm:$0xf]
        %v1958 = vld [vmem:[#allocation24 + $0x4] sm:$0xf]
        %v1959 = vld [vmem:[#allocation24 + $0x8] sm:$0xf]
        %v1960 = vld [vmem:[#allocation24 + $0xc] sm:$0xf]
        %v1961 = vld [vmem:[#allocation24 + $0x10] sm:$0xf]
        %v1962 = vld [vmem:[#allocation24 + $0x14] sm:$0xf]
        %v1963 = vld [vmem:[#allocation24 + $0x18] sm:$0xf]
        %v1964 = vld [vmem:[#allocation24 + $0x1c] sm:$0xf]
        %v1965 = vld [vmem:[#allocation24 + $0x20] sm:$0xf]
        %v1966 = vld [vmem:[#allocation24 + $0x24] sm:$0xf]
        %v1967 = vld [vmem:[#allocation24 + $0x28] sm:$0xf]
        %v1968 = vld [vmem:[#allocation24 + $0x2c] sm:$0xf]
        %v1969 = vld [vmem:[#allocation24 + $0x30] sm:$0xf]
        %v1970 = vld [vmem:[#allocation24 + $0x34] sm:$0xf]
        %v1971 = vld [vmem:[#allocation24 + $0x38] sm:$0xf]
        %v1972 = vld [vmem:[#allocation24 + $0x3c] sm:$0xf]
        %v1989 = vunpack.c.l.b16 %v1957
        %v1990 = vunpack.c.l.b16 %v1958
        %v1991 = vunpack.c.l.b16 %v1959
        %v1992 = vunpack.c.l.b16 %v1960
        %v1993 = vunpack.c.l.b16 %v1961
        %v1994 = vunpack.c.l.b16 %v1962
        %v1995 = vunpack.c.l.b16 %v1963
        %v1996 = vunpack.c.l.b16 %v1964
        %v1997 = vunpack.c.l.b16 %v1965
        %v1998 = vunpack.c.l.b16 %v1966
        %v1999 = vunpack.c.l.b16 %v1967
        %v2000 = vunpack.c.l.b16 %v1968
        %v2001 = vunpack.c.l.b16 %v1969
        %v2002 = vunpack.c.l.b16 %v1970
        %v2003 = vunpack.c.l.b16 %v1971
        %v2004 = vunpack.c.l.b16 %v1972
        %v2005 = vpack.c.b16 %v1990, %v1989
        %v2006 = vpack.c.b16 %v1992, %v1991
        %v2007 = vpack.c.b16 %v1994, %v1993
        %v2008 = vpack.c.b16 %v1996, %v1995
        %v2009 = vpack.c.b16 %v1998, %v1997
        %v2010 = vpack.c.b16 %v2000, %v1999
        %v2011 = vpack.c.b16 %v2002, %v2001
        %v2012 = vpack.c.b16 %v2004, %v2003
        %2021 = vmatpush.bf16.msra.mxu0 %v2012
        %2022 = vmatpush.bf16.msra.mxu0 %v2011
        %2023 = vmatpush.bf16.msra.mxu0 %v2010
        %2024 = vmatpush.bf16.msra.mxu0 %v2009
        %2025 = vmatpush.bf16.msra.mxu0 %v2008
        %2026 = vmatpush.bf16.msra.mxu0 %v2007
        %2027 = vmatpush.bf16.msra.mxu0 %v2006
        %2028 = vmatpush.bf16.msra.mxu0 %v2005
        %2029 = vmatmul.bf16.gmra.mxu0 %v1956
        %v2030 = vpop.f32.mrf.mxu0
        %v2031 = vadd.f32 0.0, %v2030
        %v2032 = vpop.f32.mrf.mxu0
        %2033 = vdwg.mxu0
        %v2034 = vld [vmem:[#allocation25] sm:$0x1]
        %v2036 = vperm.slane %v2034, 0
        %v2038 = vmul.f32 %v2031, %v2036
        %v2039 = vld [vmem:[#allocation27] sm:$0x1]
        %v2041 = vperm.slane %v2039, 0
        %v2043 = vadd.f32 %v2038, %v2041
        %v2044 = vadd.f32 %v2043, %v1430
        %v2045 = vmax.f32 %v2044, 0.0
        %v2046 = vpack.c.bf16 %v2045, %v2045
        %2047 = vst [vmem:[%s1256] sm:$0xf] %v2046
        %p2048 = scmp.lt.s32.totalorder %s85, 1
        %s2049 = scalar_select %p2048, %s85, 1
        %s2050 = smul.addr %s2049, 4
        %s2051 = scalar_lea.vmem %s63, %s2050
        // Predicated region
        $region225: #{gtsnet_forward.4} parent=143 // pred_check
          %p2052 = pneg %p759
        $region226: #{gtsnet_forward.4} parent=143 // pred_check_branch
          %2054 = sbr.rel (%p2052) target = $region228
        $region227: #{gtsnet_forward.4} parent=143 // pred_region
          _
        $region228: #{gtsnet_forward.4} parent=143 // pred_fallthru
          _
      $region144: #{gtsnet_forward.4} parent=5 // pred_fallthru
        _
      %p2055 = scmp.le.s32.totalorder 2, %s80
      // Predicated region
      $region229: #{gtsnet_forward.4} parent=5 // pred_check
        %p2056 = pneg %p2055
      $region230: #{gtsnet_forward.4} parent=5 // pred_check_branch
        %2058 = sbr.rel (%p2056) target = $region232
      $region231: #{gtsnet_forward.4} parent=5 // pred_region
        %s2059 = ssub.s32 %s80, 2
        // Predicated region
        $region233: #{gtsnet_forward.4} parent=231 // pred_check
          %p2060 = pneg %p765
        $region234: #{gtsnet_forward.4} parent=231 // pred_check_branch
          %2062 = sbr.rel (%p2060) target = $region236
        $region235: #{gtsnet_forward.4} parent=231 // pred_region
          %p2063 = scmp.lt.s32.totalorder %s86, 1
          %s2064 = scalar_select %p2063, %s86, 1
          %s2065 = smul.addr %s2064, 4
          %s2066 = scalar_lea.vmem %s63, %s2065
        $region236: #{gtsnet_forward.4} parent=231 // pred_fallthru
          _
      $region232: #{gtsnet_forward.4} parent=5 // pred_fallthru
        _
    $region6: #{gtsnet_forward.4} parent=1 // loop_footer
      %s84 = sadd.s32 1, %s80
    $region7: #{gtsnet_forward.4} parent=1 // loop_footer_branch
      %79 = sbr.rel target = $region3
    $region8: #{gtsnet_forward.4} parent=1 // loop_exit
      _
    %2067 = vsyncpa [#allocation3], 1
    %s2068 = scalar_lea.sflag [#allocation3], 1
    %2069 = vsyncpa %s2068, 1
    %2070 = vsyncpa [#allocation5], 1
    %2071 = vsyncpa [#allocation8], 1
    %2072 = vsyncpa [#allocation11], 1
    %2073 = vsyncpa [#allocation14], 1
    %2074 = vsyncpa [#allocation17], 1
    %2075 = vsyncpa [#allocation20], 1
    %2076 = vsyncpa [#allocation23], 1
    %2077 = vsyncpa [#allocation26], 1
    %2078 = vsyncpa [#allocation29], 1
    %2079 = vsyncpa [#allocation32], 1

// kernel: gtsnet_forward.6
$region0: #{gtsnet_forward.6}
  #allocation0 [shape = 'u32[]', space=smem, size = 0x4, offset = 0x4, fixed_abs, tag = 'smem constant byte address 0x4 - core index']
  #allocation1 [shape = 'u32[72,128]{1,0:T(1,128)}', space=vmem, size = 0x9000, scoped, tag = 'internal scratch']
  %s0 = inlined_call_operand.vmem [shape: bf16[8,256], index: 0, kind: input, shape index: {}]
  %s1 = inlined_call_operand.hbm [shape: bf16[256,256], index: 1, kind: input, shape index: {}]
  %s2 = inlined_call_operand.vmem [shape: f32[1,256], index: 2, kind: input, shape index: {}]
  %s3 = inlined_call_operand.vmem [shape: f32[1,256], index: 3, kind: input, shape index: {}]
  %s4 = inlined_call_operand.hbm [shape: bf16[256,256], index: 4, kind: input, shape index: {}]
  %s5 = inlined_call_operand.hbm [shape: f32[1,256], index: 5, kind: input, shape index: {}]
  %s6 = inlined_call_operand.hbm [shape: f32[1,256], index: 6, kind: input, shape index: {}]
  %s7 = inlined_call_operand.hbm [shape: bf16[256,256], index: 7, kind: input, shape index: {}]
  %s8 = inlined_call_operand.vmem [shape: f32[1,256], index: 8, kind: input, shape index: {}]
  %s9 = inlined_call_operand.vmem [shape: f32[1,256], index: 9, kind: input, shape index: {}]
  %s10 = inlined_call_operand.hbm [shape: bf16[256,256], index: 10, kind: input, shape index: {}]
  %s11 = inlined_call_operand.hbm [shape: f32[1,256], index: 11, kind: input, shape index: {}]
  %s12 = inlined_call_operand.hbm [shape: f32[1,256], index: 12, kind: input, shape index: {}]
  %s13 = inlined_call_operand.hbm [shape: bf16[256,256], index: 13, kind: input, shape index: {}]
  %s14 = inlined_call_operand.vmem [shape: f32[1,256], index: 14, kind: input, shape index: {}]
  %s15 = inlined_call_operand.vmem [shape: f32[1,256], index: 15, kind: input, shape index: {}]
  %s16 = inlined_call_operand.hbm [shape: bf16[256,256], index: 16, kind: input, shape index: {}]
  %s17 = inlined_call_operand.hbm [shape: f32[1,256], index: 17, kind: input, shape index: {}]
  %s18 = inlined_call_operand.hbm [shape: f32[1,256], index: 18, kind: input, shape index: {}]
  %s19 = inlined_call_operand.vmem [shape: bf16[1,256], index: 19, kind: input, shape index: {}]
  %s20 = inlined_call_operand.vmem [shape: bf16[1,256], index: 20, kind: input, shape index: {}]
  %s21 = inlined_call_operand.vmem [shape: bf16[8,1], index: 21, kind: input, shape index: {}]
  %s22 = inlined_call_operand.vmem [shape: bf16[8,1], index: 22, kind: input, shape index: {}]
  %s23 = inlined_call_operand.vmem [shape: f32[1,256], index: 23, kind: input, shape index: {}]
  %s24 = inlined_call_operand.vmem [shape: f32[1,256], index: 24, kind: input, shape index: {}]
  %s25 = inlined_call_operand.vmem [shape: bf16[8,256], index: 25, kind: output, shape index: {}]
  %s26 = sld [smem:[#allocation0]]
  $region158: #{gtsnet_forward.6} parent=0
    _
  %s28 = ssub.s32 1, %s26
  %s29 = scalar_select 0, %s28, %s26
  $region1: #{gtsnet_forward.6} parent=0
    #allocation2 [shape = 'u8[131072]{0}', space=vmem, size = 0x20000, scoped, tag = 'input window, operand 1, single buffered']
    #allocation3 [shape = 's32[1]{0}', space=sflag, size = 0x4, scoped, tag = 'scoped memory for gtsnet_forward.6']
    #allocation4 [shape = 'u8[131072]{0}', space=vmem, size = 0x20000, scoped, tag = 'input window, operand 4, single buffered']
    #allocation5 [shape = 's32[1]{0}', space=sflag, size = 0x4, scoped, tag = 'scoped memory for gtsnet_forward.6']
    #allocation6 [shape = 'u8[1024]{0}', space=vmem, size = 0x400, scoped, tag = 'input window, operand 5, single buffered']
    #allocation7 [shape = 'u8[1024]{0}', space=vmem, size = 0x400, scoped, tag = 'input window, operand 6, single buffered']
    #allocation8 [shape = 's32[1]{0}', space=sflag, size = 0x4, scoped, tag = 'scoped memory for gtsnet_forward.6']
    #allocation9 [shape = 'u8[131072]{0}', space=vmem, size = 0x20000, scoped, tag = 'input window, operand 7, single buffered']
    #allocation10 [shape = 'u8[131072]{0}', space=vmem, size = 0x20000, scoped, tag = 'input window, operand 10, single buffered']
    #allocation11 [shape = 's32[1]{0}', space=sflag, size = 0x4, scoped, tag = 'scoped memory for gtsnet_forward.6']
    #allocation12 [shape = 'u8[1024]{0}', space=vmem, size = 0x400, scoped, tag = 'input window, operand 11, single buffered']
    #allocation13 [shape = 'u8[1024]{0}', space=vmem, size = 0x400, scoped, tag = 'input window, operand 12, single buffered']
    #allocation14 [shape = 's32[1]{0}', space=sflag, size = 0x4, scoped, tag = 'scoped memory for gtsnet_forward.6']
    #allocation15 [shape = 'u8[131072]{0}', space=vmem, size = 0x20000, scoped, tag = 'input window, operand 13, single buffered']
    #allocation16 [shape = 'u8[131072]{0}', space=vmem, size = 0x20000, scoped, tag = 'input window, operand 16, single buffered']
    #allocation17 [shape = 's32[1]{0}', space=sflag, size = 0x4, scoped, tag = 'scoped memory for gtsnet_forward.6']
    #allocation18 [shape = 'u8[1024]{0}', space=vmem, size = 0x400, scoped, tag = 'input window, operand 17, single buffered']
    #allocation19 [shape = 'u8[1024]{0}', space=vmem, size = 0x400, scoped, tag = 'input window, operand 18, single buffered']
    #allocation20 [shape = 's32[1]{0}', space=sflag, size = 0x4, scoped, tag = 'scoped memory for gtsnet_forward.6']
    %30 = vsyncpa [#allocation3], 0
    %31 = vsyncpa [#allocation5], 0
    %32 = vsyncpa [#allocation8], 0
    %33 = vsyncpa [#allocation11], 0
    %34 = vsyncpa [#allocation14], 0
    %35 = vsyncpa [#allocation17], 0
    %36 = vsyncpa [#allocation20], 0
    // Predicated region
    $region2: #{gtsnet_forward.6} parent=1 // pred_check
      _
    $region3: #{gtsnet_forward.6} parent=1 // pred_check_branch
      %38 = sbr.rel (0) target = $region5
    $region4: #{gtsnet_forward.6} parent=1 // pred_region
      _
    $region5: #{gtsnet_forward.6} parent=1 // pred_fallthru
      _
    // Predicated region
    $region6: #{gtsnet_forward.6} parent=1 // pred_check
      _
    $region7: #{gtsnet_forward.6} parent=1 // pred_check_branch
      %40 = sbr.rel (0) target = $region9
    $region8: #{gtsnet_forward.6} parent=1 // pred_region
      %42 = vsyncadd [#allocation3], 0
      %s43 = sshll.u32 %s1, 4
      %s44 = int_to_ptr.hbm [resolvable:$true] %s43
      %s45 = sshll.u32 [#allocation2], 4
      %s46 = int_to_ptr.vmem [resolvable:$true] %s45
      %51 = dma.hbm_to_vmem [thread:$0]  %s44, 4096, %s46, [#allocation3], 128, 128, 8
    $region9: #{gtsnet_forward.6} parent=1 // pred_fallthru
      _
    // Predicated region
    $region10: #{gtsnet_forward.6} parent=1 // pred_check
      _
    $region11: #{gtsnet_forward.6} parent=1 // pred_check_branch
      %53 = sbr.rel (0) target = $region13
    $region12: #{gtsnet_forward.6} parent=1 // pred_region
      _
    $region13: #{gtsnet_forward.6} parent=1 // pred_fallthru
      _
    // Predicated region
    $region14: #{gtsnet_forward.6} parent=1 // pred_check
      _
    $region15: #{gtsnet_forward.6} parent=1 // pred_check_branch
      %55 = sbr.rel (0) target = $region17
    $region16: #{gtsnet_forward.6} parent=1 // pred_region
      _
    $region17: #{gtsnet_forward.6} parent=1 // pred_fallthru
      _
    // Predicated region
    $region18: #{gtsnet_forward.6} parent=1 // pred_check
      _
    $region19: #{gtsnet_forward.6} parent=1 // pred_check_branch
      %57 = sbr.rel (0) target = $region21
    $region20: #{gtsnet_forward.6} parent=1 // pred_region
      %59 = vsyncadd [#allocation5], 0
      %s60 = sshll.u32 %s4, 4
      %s61 = int_to_ptr.hbm [resolvable:$true] %s60
      %s62 = sshll.u32 [#allocation4], 4
      %s63 = int_to_ptr.vmem [resolvable:$true] %s62
      %68 = dma.hbm_to_vmem [thread:$0]  %s61, 4096, %s63, [#allocation5], 128, 128, 8
    $region21: #{gtsnet_forward.6} parent=1 // pred_fallthru
      _
    // Predicated region
    $region22: #{gtsnet_forward.6} parent=1 // pred_check
      _
    $region23: #{gtsnet_forward.6} parent=1 // pred_check_branch
      %70 = sbr.rel (0) target = $region25
    $region24: #{gtsnet_forward.6} parent=1 // pred_region
      %72 = vsyncadd [#allocation5], 0
      %s74 = sshll.u32 %s5, 4
      %s75 = int_to_ptr.hbm [resolvable:$true] %s74
      %s76 = sshll.u32 [#allocation6], 4
      %s77 = int_to_ptr.vmem [resolvable:$true] %s76
      %79 = dma.hbm_to_vmem [thread:$0]  %s75, 32, %s77, [#allocation5]
    $region25: #{gtsnet_forward.6} parent=1 // pred_fallthru
      _
    // Predicated region
    $region26: #{gtsnet_forward.6} parent=1 // pred_check
      _
    $region27: #{gtsnet_forward.6} parent=1 // pred_check_branch
      %81 = sbr.rel (0) target = $region29
    $region28: #{gtsnet_forward.6} parent=1 // pred_region
      %83 = vsyncadd [#allocation8], 0
      %s85 = sshll.u32 %s6, 4
      %s86 = int_to_ptr.hbm [resolvable:$true] %s85
      %s87 = sshll.u32 [#allocation7], 4
      %s88 = int_to_ptr.vmem [resolvable:$true] %s87
      %90 = dma.hbm_to_vmem [thread:$0]  %s86, 32, %s88, [#allocation8]
    $region29: #{gtsnet_forward.6} parent=1 // pred_fallthru
      _
    // Predicated region
    $region30: #{gtsnet_forward.6} parent=1 // pred_check
      _
    $region31: #{gtsnet_forward.6} parent=1 // pred_check_branch
      %92 = sbr.rel (0) target = $region33
    $region32: #{gtsnet_forward.6} parent=1 // pred_region
      %94 = vsyncadd [#allocation8], 0
      %s95 = sshll.u32 %s7, 4
      %s96 = int_to_ptr.hbm [resolvable:$true] %s95
      %s97 = sshll.u32 [#allocation9], 4
      %s98 = int_to_ptr.vmem [resolvable:$true] %s97
      %103 = dma.hbm_to_vmem [thread:$0]  %s96, 4096, %s98, [#allocation8], 128, 128, 8
    $region33: #{gtsnet_forward.6} parent=1 // pred_fallthru
      _
    // Predicated region
    $region34: #{gtsnet_forward.6} parent=1 // pred_check
      _
    $region35: #{gtsnet_forward.6} parent=1 // pred_check_branch
      %105 = sbr.rel (0) target = $region37
    $region36: #{gtsnet_forward.6} parent=1 // pred_region
      _
    $region37: #{gtsnet_forward.6} parent=1 // pred_fallthru
      _
    // Predicated region
    $region38: #{gtsnet_forward.6} parent=1 // pred_check
      _
    $region39: #{gtsnet_forward.6} parent=1 // pred_check_branch
      %107 = sbr.rel (0) target = $region41
    $region40: #{gtsnet_forward.6} parent=1 // pred_region
      _
    $region41: #{gtsnet_forward.6} parent=1 // pred_fallthru
      _
    // Predicated region
    $region42: #{gtsnet_forward.6} parent=1 // pred_check
      _
    $region43: #{gtsnet_forward.6} parent=1 // pred_check_branch
      %109 = sbr.rel (0) target = $region45
    $region44: #{gtsnet_forward.6} parent=1 // pred_region
      %111 = vsyncadd [#allocation11], 0
      %s112 = sshll.u32 %s10, 4
      %s113 = int_to_ptr.hbm [resolvable:$true] %s112
      %s114 = sshll.u32 [#allocation10], 4
      %s115 = int_to_ptr.vmem [resolvable:$true] %s114
      %120 = dma.hbm_to_vmem [thread:$0]  %s113, 4096, %s115, [#allocation11], 128, 128, 8
    $region45: #{gtsnet_forward.6} parent=1 // pred_fallthru
      _
    // Predicated region
    $region46: #{gtsnet_forward.6} parent=1 // pred_check
      _
    $region47: #{gtsnet_forward.6} parent=1 // pred_check_branch
      %122 = sbr.rel (0) target = $region49
    $region48: #{gtsnet_forward.6} parent=1 // pred_region
      %124 = vsyncadd [#allocation11], 0
      %s126 = sshll.u32 %s11, 4
      %s127 = int_to_ptr.hbm [resolvable:$true] %s126
      %s128 = sshll.u32 [#allocation12], 4
      %s129 = int_to_ptr.vmem [resolvable:$true] %s128
      %131 = dma.hbm_to_vmem [thread:$0]  %s127, 32, %s129, [#allocation11]
    $region49: #{gtsnet_forward.6} parent=1 // pred_fallthru
      _
    // Predicated region
    $region50: #{gtsnet_forward.6} parent=1 // pred_check
      _
    $region51: #{gtsnet_forward.6} parent=1 // pred_check_branch
      %133 = sbr.rel (0) target = $region53
    $region52: #{gtsnet_forward.6} parent=1 // pred_region
      %135 = vsyncadd [#allocation14], 0
      %s137 = sshll.u32 %s12, 4
      %s138 = int_to_ptr.hbm [resolvable:$true] %s137
      %s139 = sshll.u32 [#allocation13], 4
      %s140 = int_to_ptr.vmem [resolvable:$true] %s139
      %142 = dma.hbm_to_vmem [thread:$0]  %s138, 32, %s140, [#allocation14]
    $region53: #{gtsnet_forward.6} parent=1 // pred_fallthru
      _
    // Predicated region
    $region54: #{gtsnet_forward.6} parent=1 // pred_check
      _
    $region55: #{gtsnet_forward.6} parent=1 // pred_check_branch
      %144 = sbr.rel (0) target = $region57
    $region56: #{gtsnet_forward.6} parent=1 // pred_region
      %146 = vsyncadd [#allocation14], 0
      %s147 = sshll.u32 %s13, 4
      %s148 = int_to_ptr.hbm [resolvable:$true] %s147
      %s149 = sshll.u32 [#allocation15], 4
      %s150 = int_to_ptr.vmem [resolvable:$true] %s149
      %155 = dma.hbm_to_vmem [thread:$0]  %s148, 4096, %s150, [#allocation14], 128, 128, 8
    $region57: #{gtsnet_forward.6} parent=1 // pred_fallthru
      _
    // Predicated region
    $region58: #{gtsnet_forward.6} parent=1 // pred_check
      _
    $region59: #{gtsnet_forward.6} parent=1 // pred_check_branch
      %157 = sbr.rel (0) target = $region61
    $region60: #{gtsnet_forward.6} parent=1 // pred_region
      _
    $region61: #{gtsnet_forward.6} parent=1 // pred_fallthru
      _
    // Predicated region
    $region62: #{gtsnet_forward.6} parent=1 // pred_check
      _
    $region63: #{gtsnet_forward.6} parent=1 // pred_check_branch
      %159 = sbr.rel (0) target = $region65
    $region64: #{gtsnet_forward.6} parent=1 // pred_region
      _
    $region65: #{gtsnet_forward.6} parent=1 // pred_fallthru
      _
    // Predicated region
    $region66: #{gtsnet_forward.6} parent=1 // pred_check
      _
    $region67: #{gtsnet_forward.6} parent=1 // pred_check_branch
      %161 = sbr.rel (0) target = $region69
    $region68: #{gtsnet_forward.6} parent=1 // pred_region
      %163 = vsyncadd [#allocation17], 0
      %s164 = sshll.u32 %s16, 4
      %s165 = int_to_ptr.hbm [resolvable:$true] %s164
      %s166 = sshll.u32 [#allocation16], 4
      %s167 = int_to_ptr.vmem [resolvable:$true] %s166
      %172 = dma.hbm_to_vmem [thread:$0]  %s165, 4096, %s167, [#allocation17], 128, 128, 8
    $region69: #{gtsnet_forward.6} parent=1 // pred_fallthru
      _
    // Predicated region
    $region70: #{gtsnet_forward.6} parent=1 // pred_check
      _
    $region71: #{gtsnet_forward.6} parent=1 // pred_check_branch
      %174 = sbr.rel (0) target = $region73
    $region72: #{gtsnet_forward.6} parent=1 // pred_region
      %176 = vsyncadd [#allocation17], 0
      %s178 = sshll.u32 %s17, 4
      %s179 = int_to_ptr.hbm [resolvable:$true] %s178
      %s180 = sshll.u32 [#allocation18], 4
      %s181 = int_to_ptr.vmem [resolvable:$true] %s180
      %183 = dma.hbm_to_vmem [thread:$0]  %s179, 32, %s181, [#allocation17]
    $region73: #{gtsnet_forward.6} parent=1 // pred_fallthru
      _
    // Predicated region
    $region74: #{gtsnet_forward.6} parent=1 // pred_check
      _
    $region75: #{gtsnet_forward.6} parent=1 // pred_check_branch
      %185 = sbr.rel (0) target = $region77
    $region76: #{gtsnet_forward.6} parent=1 // pred_region
      %187 = vsyncadd [#allocation20], 0
      %s189 = sshll.u32 %s18, 4
      %s190 = int_to_ptr.hbm [resolvable:$true] %s189
      %s191 = sshll.u32 [#allocation19], 4
      %s192 = int_to_ptr.vmem [resolvable:$true] %s191
      %194 = dma.hbm_to_vmem [thread:$0]  %s190, 32, %s192, [#allocation20]
    $region77: #{gtsnet_forward.6} parent=1 // pred_fallthru
      _
    // Predicated region
    $region78: #{gtsnet_forward.6} parent=1 // pred_check
      _
    $region79: #{gtsnet_forward.6} parent=1 // pred_check_branch
      %196 = sbr.rel (0) target = $region81
    $region80: #{gtsnet_forward.6} parent=1 // pred_region
      _
    $region81: #{gtsnet_forward.6} parent=1 // pred_fallthru
      _
    // Predicated region
    $region82: #{gtsnet_forward.6} parent=1 // pred_check
      _
    $region83: #{gtsnet_forward.6} parent=1 // pred_check_branch
      %198 = sbr.rel (0) target = $region85
    $region84: #{gtsnet_forward.6} parent=1 // pred_region
      _
    $region85: #{gtsnet_forward.6} parent=1 // pred_fallthru
      _
    // Predicated region
    $region86: #{gtsnet_forward.6} parent=1 // pred_check
      _
    $region87: #{gtsnet_forward.6} parent=1 // pred_check_branch
      %200 = sbr.rel (0) target = $region89
    $region88: #{gtsnet_forward.6} parent=1 // pred_region
      _
    $region89: #{gtsnet_forward.6} parent=1 // pred_fallthru
      _
    // Predicated region
    $region90: #{gtsnet_forward.6} parent=1 // pred_check
      _
    $region91: #{gtsnet_forward.6} parent=1 // pred_check_branch
      %202 = sbr.rel (0) target = $region93
    $region92: #{gtsnet_forward.6} parent=1 // pred_region
      _
    $region93: #{gtsnet_forward.6} parent=1 // pred_fallthru
      _
    // Predicated region
    $region94: #{gtsnet_forward.6} parent=1 // pred_check
      _
    $region95: #{gtsnet_forward.6} parent=1 // pred_check_branch
      %204 = sbr.rel (0) target = $region97
    $region96: #{gtsnet_forward.6} parent=1 // pred_region
      _
    $region97: #{gtsnet_forward.6} parent=1 // pred_fallthru
      _
    // Predicated region
    $region98: #{gtsnet_forward.6} parent=1 // pred_check
      _
    $region99: #{gtsnet_forward.6} parent=1 // pred_check_branch
      %206 = sbr.rel (0) target = $region101
    $region100: #{gtsnet_forward.6} parent=1 // pred_region
      _
    $region101: #{gtsnet_forward.6} parent=1 // pred_fallthru
      _
    // Predicated region
    $region102: #{gtsnet_forward.6} parent=1 // pred_check
      _
    $region103: #{gtsnet_forward.6} parent=1 // pred_check_branch
      %208 = sbr.rel (0) target = $region105
    $region104: #{gtsnet_forward.6} parent=1 // pred_region
      %210 = dma.done [#allocation3], 4096
    $region105: #{gtsnet_forward.6} parent=1 // pred_fallthru
      _
    // Predicated region
    $region106: #{gtsnet_forward.6} parent=1 // pred_check
      _
    $region107: #{gtsnet_forward.6} parent=1 // pred_check_branch
      %212 = sbr.rel (0) target = $region109
    $region108: #{gtsnet_forward.6} parent=1 // pred_region
      %214 = dma.done [#allocation5], 4096
    $region109: #{gtsnet_forward.6} parent=1 // pred_fallthru
      _
    // Predicated region
    $region110: #{gtsnet_forward.6} parent=1 // pred_check
      _
    $region111: #{gtsnet_forward.6} parent=1 // pred_check_branch
      %216 = sbr.rel (0) target = $region113
    $region112: #{gtsnet_forward.6} parent=1 // pred_region
      %218 = dma.done [#allocation5], 32
    $region113: #{gtsnet_forward.6} parent=1 // pred_fallthru
      _
    // Predicated region
    $region114: #{gtsnet_forward.6} parent=1 // pred_check
      _
    $region115: #{gtsnet_forward.6} parent=1 // pred_check_branch
      %220 = sbr.rel (0) target = $region117
    $region116: #{gtsnet_forward.6} parent=1 // pred_region
      %222 = dma.done [#allocation8], 32
    $region117: #{gtsnet_forward.6} parent=1 // pred_fallthru
      _
    // Predicated region
    $region118: #{gtsnet_forward.6} parent=1 // pred_check
      _
    $region119: #{gtsnet_forward.6} parent=1 // pred_check_branch
      %224 = sbr.rel (0) target = $region121
    $region120: #{gtsnet_forward.6} parent=1 // pred_region
      %226 = dma.done [#allocation8], 4096
    $region121: #{gtsnet_forward.6} parent=1 // pred_fallthru
      _
    // Predicated region
    $region122: #{gtsnet_forward.6} parent=1 // pred_check
      _
    $region123: #{gtsnet_forward.6} parent=1 // pred_check_branch
      %228 = sbr.rel (0) target = $region125
    $region124: #{gtsnet_forward.6} parent=1 // pred_region
      %230 = dma.done [#allocation11], 4096
    $region125: #{gtsnet_forward.6} parent=1 // pred_fallthru
      _
    // Predicated region
    $region126: #{gtsnet_forward.6} parent=1 // pred_check
      _
    $region127: #{gtsnet_forward.6} parent=1 // pred_check_branch
      %232 = sbr.rel (0) target = $region129
    $region128: #{gtsnet_forward.6} parent=1 // pred_region
      %234 = dma.done [#allocation11], 32
    $region129: #{gtsnet_forward.6} parent=1 // pred_fallthru
      _
    // Predicated region
    $region130: #{gtsnet_forward.6} parent=1 // pred_check
      _
    $region131: #{gtsnet_forward.6} parent=1 // pred_check_branch
      %236 = sbr.rel (0) target = $region133
    $region132: #{gtsnet_forward.6} parent=1 // pred_region
      %238 = dma.done [#allocation14], 32
    $region133: #{gtsnet_forward.6} parent=1 // pred_fallthru
      _
    // Predicated region
    $region134: #{gtsnet_forward.6} parent=1 // pred_check
      _
    $region135: #{gtsnet_forward.6} parent=1 // pred_check_branch
      %240 = sbr.rel (0) target = $region137
    $region136: #{gtsnet_forward.6} parent=1 // pred_region
      %242 = dma.done [#allocation14], 4096
    $region137: #{gtsnet_forward.6} parent=1 // pred_fallthru
      _
    // Predicated region
    $region138: #{gtsnet_forward.6} parent=1 // pred_check
      _
    $region139: #{gtsnet_forward.6} parent=1 // pred_check_branch
      %244 = sbr.rel (0) target = $region141
    $region140: #{gtsnet_forward.6} parent=1 // pred_region
      %246 = dma.done [#allocation17], 4096
    $region141: #{gtsnet_forward.6} parent=1 // pred_fallthru
      _
    // Predicated region
    $region142: #{gtsnet_forward.6} parent=1 // pred_check
      _
    $region143: #{gtsnet_forward.6} parent=1 // pred_check_branch
      %248 = sbr.rel (0) target = $region145
    $region144: #{gtsnet_forward.6} parent=1 // pred_region
      %250 = dma.done [#allocation17], 32
    $region145: #{gtsnet_forward.6} parent=1 // pred_fallthru
      _
    // Predicated region
    $region146: #{gtsnet_forward.6} parent=1 // pred_check
      _
    $region147: #{gtsnet_forward.6} parent=1 // pred_check_branch
      %252 = sbr.rel (0) target = $region149
    $region148: #{gtsnet_forward.6} parent=1 // pred_region
      %254 = dma.done [#allocation20], 32
    $region149: #{gtsnet_forward.6} parent=1 // pred_fallthru
      _
    %v256 = vld [vmem:[%s0] sm:$0xff]
    %v257 = vunpack.c.l.bf16 %v256
    %v258 = vunpack.c.h.bf16 %v256
    %v259 = vld [vmem:[%s23] sm:$0x3]
    %v261 = vperm.slane %v259, 0
    %v262 = vperm.slane %v259, 1
    %v265 = vmul.f32 %v257, %v261
    %v266 = vmul.f32 %v258, %v262
    %v267 = vld [vmem:[%s24] sm:$0x3]
    %v269 = vperm.slane %v267, 0
    %v270 = vperm.slane %v267, 1
    %v273 = vadd.f32 %v265, %v269
    %v274 = vadd.f32 %v266, %v270
    %v275 = vld [vmem:[%s19] sm:$0x3]
    %v276 = vld [vmem:[%s20] sm:$0x3]
    %v277 = vld [vmem:[%s21] sm:$0xf]
    %v278 = vld [vmem:[%s22] sm:$0xf]
    %v279 = vunpack.c.l.bf16 %v275
    %v280 = vsub.f32 1.0, %v279
    %v282 = vperm.slane %v280, 0
    %v283 = vperm.slane %v280, 2
    %v286 = vpack.c.bf16 %v283, %v282
    %v287 = vunpack.c.l.bf16 %v286
    %v288 = vunpack.c.h.bf16 %v286
    %v289 = vunpack.c.l.bf16 %v276
    %v291 = vperm.slane %v289, 0
    %v292 = vperm.slane %v289, 2
    %v295 = vsub.f32 %v287, %v291
    %v296 = vsub.f32 %v288, %v292
    %v297 = vpack.c.bf16 %v296, %v295
    %299 = vst [vmem:[#allocation1] ss:$9 sm:$0xff] %v275
    %v300 = vld [vmem:[#allocation1] sm:$0xff]
    %v301 = vld [vmem:[#allocation1 + $0x9] sm:$0xff]
    %v302 = vpack.i.b16 %v300, %v300
    %v304 = vperm.slane %v302, 0
    %v305 = vpack.i.b16 %v301, %v301
    %v307 = vperm.slane %v305, 0
    %309 = vset.pattern.permute.xlu0 0
    %310 = vperm.xlu0 %309, %v277
    %v311 = vpop.permute.xlu0 %310
    %v314 = vunpack.c.l.s4 839922192
    %v315 = vunpack.c.0.s8 %v314
    %v316 = vperm.slane %v311, %v315
    %v317 = vunpack.c.l.bf16 %v304
    %v318 = vunpack.c.l.bf16 %v307
    %v319 = vunpack.c.l.bf16 %v316
    %v320 = vmul.f32 %v317, %v319
    %v321 = vmul.f32 %v318, %v319
    %v322 = vpack.c.bf16 %v321, %v320
    %324 = vst [vmem:[#allocation1] ss:$9 sm:$0xff] %v276
    %v325 = vld [vmem:[#allocation1] sm:$0xff]
    %v326 = vld [vmem:[#allocation1 + $0x9] sm:$0xff]
    %v327 = vpack.i.b16 %v325, %v325
    %v329 = vperm.slane %v327, 0
    %v330 = vpack.i.b16 %v326, %v326
    %v332 = vperm.slane %v330, 0
    %334 = vset.pattern.permute.xlu0 0
    %335 = vperm.xlu0 %334, %v278
    %v336 = vpop.permute.xlu0 %335
    %v339 = vunpack.c.l.s4 839922192
    %v340 = vunpack.c.0.s8 %v339
    %v341 = vperm.slane %v336, %v340
    %v342 = vunpack.c.l.bf16 %v329
    %v343 = vunpack.c.l.bf16 %v332
    %v344 = vunpack.c.l.bf16 %v341
    %v345 = vmul.f32 %v342, %v344
    %v346 = vmul.f32 %v343, %v344
    %v347 = vpack.c.bf16 %v346, %v345
    %v348 = vld [vmem:[#allocation2] sm:$0xff]
    %v349 = vld [vmem:[#allocation2 + $0x8] sm:$0xff]
    %v350 = vld [vmem:[#allocation2 + $0x10] sm:$0xff]
    %v351 = vld [vmem:[#allocation2 + $0x18] sm:$0xff]
    %v352 = vld [vmem:[#allocation2 + $0x20] sm:$0xff]
    %v353 = vld [vmem:[#allocation2 + $0x28] sm:$0xff]
    %v354 = vld [vmem:[#allocation2 + $0x30] sm:$0xff]
    %v355 = vld [vmem:[#allocation2 + $0x38] sm:$0xff]
    %v356 = vld [vmem:[#allocation2 + $0x40] sm:$0xff]
    %v357 = vld [vmem:[#allocation2 + $0x48] sm:$0xff]
    %v358 = vld [vmem:[#allocation2 + $0x50] sm:$0xff]
    %v359 = vld [vmem:[#allocation2 + $0x58] sm:$0xff]
    %v360 = vld [vmem:[#allocation2 + $0x60] sm:$0xff]
    %v361 = vld [vmem:[#allocation2 + $0x68] sm:$0xff]
    %v362 = vld [vmem:[#allocation2 + $0x70] sm:$0xff]
    %v363 = vld [vmem:[#allocation2 + $0x78] sm:$0xff]
    %v364 = vld [vmem:[#allocation2 + $0x80] sm:$0xff]
    %v365 = vld [vmem:[#allocation2 + $0x88] sm:$0xff]
    %v366 = vld [vmem:[#allocation2 + $0x90] sm:$0xff]
    %v367 = vld [vmem:[#allocation2 + $0x98] sm:$0xff]
    %v368 = vld [vmem:[#allocation2 + $0xa0] sm:$0xff]
    %v369 = vld [vmem:[#allocation2 + $0xa8] sm:$0xff]
    %v370 = vld [vmem:[#allocation2 + $0xb0] sm:$0xff]
    %v371 = vld [vmem:[#allocation2 + $0xb8] sm:$0xff]
    %v372 = vld [vmem:[#allocation2 + $0xc0] sm:$0xff]
    %v373 = vld [vmem:[#allocation2 + $0xc8] sm:$0xff]
    %v374 = vld [vmem:[#allocation2 + $0xd0] sm:$0xff]
    %v375 = vld [vmem:[#allocation2 + $0xd8] sm:$0xff]
    %v376 = vld [vmem:[#allocation2 + $0xe0] sm:$0xff]
    %v377 = vld [vmem:[#allocation2 + $0xe8] sm:$0xff]
    %v378 = vld [vmem:[#allocation2 + $0xf0] sm:$0xff]
    %v379 = vld [vmem:[#allocation2 + $0xf8] sm:$0xff]
    %v381 = vunpack.c.l.b16 %v256
    %v382 = vunpack.c.h.b16 %v256
    %v383 = vpack.c.b16 %v381, %v381
    %v384 = vpack.c.b16 %v382, %v382
    %v419 = vunpack.c.l.b16 %v348
    %v420 = vunpack.c.h.b16 %v348
    %v421 = vunpack.c.l.b16 %v349
    %v422 = vunpack.c.h.b16 %v349
    %v423 = vunpack.c.l.b16 %v350
    %v424 = vunpack.c.h.b16 %v350
    %v425 = vunpack.c.l.b16 %v351
    %v426 = vunpack.c.h.b16 %v351
    %v427 = vunpack.c.l.b16 %v352
    %v428 = vunpack.c.h.b16 %v352
    %v429 = vunpack.c.l.b16 %v353
    %v430 = vunpack.c.h.b16 %v353
    %v431 = vunpack.c.l.b16 %v354
    %v432 = vunpack.c.h.b16 %v354
    %v433 = vunpack.c.l.b16 %v355
    %v434 = vunpack.c.h.b16 %v355
    %v435 = vunpack.c.l.b16 %v356
    %v436 = vunpack.c.h.b16 %v356
    %v437 = vunpack.c.l.b16 %v357
    %v438 = vunpack.c.h.b16 %v357
    %v439 = vunpack.c.l.b16 %v358
    %v440 = vunpack.c.h.b16 %v358
    %v441 = vunpack.c.l.b16 %v359
    %v442 = vunpack.c.h.b16 %v359
    %v443 = vunpack.c.l.b16 %v360
    %v444 = vunpack.c.h.b16 %v360
    %v445 = vunpack.c.l.b16 %v361
    %v446 = vunpack.c.h.b16 %v361
    %v447 = vunpack.c.l.b16 %v362
    %v448 = vunpack.c.h.b16 %v362
    %v449 = vunpack.c.l.b16 %v363
    %v450 = vunpack.c.h.b16 %v363
    %v451 = vunpack.c.l.b16 %v364
    %v452 = vunpack.c.h.b16 %v364
    %v453 = vunpack.c.l.b16 %v365
    %v454 = vunpack.c.h.b16 %v365
    %v455 = vunpack.c.l.b16 %v366
    %v456 = vunpack.c.h.b16 %v366
    %v457 = vunpack.c.l.b16 %v367
    %v458 = vunpack.c.h.b16 %v367
    %v459 = vunpack.c.l.b16 %v368
    %v460 = vunpack.c.h.b16 %v368
    %v461 = vunpack.c.l.b16 %v369
    %v462 = vunpack.c.h.b16 %v369
    %v463 = vunpack.c.l.b16 %v370
    %v464 = vunpack.c.h.b16 %v370
    %v465 = vunpack.c.l.b16 %v371
    %v466 = vunpack.c.h.b16 %v371
    %v467 = vunpack.c.l.b16 %v372
    %v468 = vunpack.c.h.b16 %v372
    %v469 = vunpack.c.l.b16 %v373
    %v470 = vunpack.c.h.b16 %v373
    %v471 = vunpack.c.l.b16 %v374
    %v472 = vunpack.c.h.b16 %v374
    %v473 = vunpack.c.l.b16 %v375
    %v474 = vunpack.c.h.b16 %v375
    %v475 = vunpack.c.l.b16 %v376
    %v476 = vunpack.c.h.b16 %v376
    %v477 = vunpack.c.l.b16 %v377
    %v478 = vunpack.c.h.b16 %v377
    %v479 = vunpack.c.l.b16 %v378
    %v480 = vunpack.c.h.b16 %v378
    %v481 = vunpack.c.l.b16 %v379
    %v482 = vunpack.c.h.b16 %v379
    %v483 = vpack.c.b16 %v421, %v419
    %v484 = vpack.c.b16 %v422, %v420
    %v485 = vpack.c.b16 %v425, %v423
    %v486 = vpack.c.b16 %v426, %v424
    %v487 = vpack.c.b16 %v429, %v427
    %v488 = vpack.c.b16 %v430, %v428
    %v489 = vpack.c.b16 %v433, %v431
    %v490 = vpack.c.b16 %v434, %v432
    %v491 = vpack.c.b16 %v437, %v435
    %v492 = vpack.c.b16 %v438, %v436
    %v493 = vpack.c.b16 %v441, %v439
    %v494 = vpack.c.b16 %v442, %v440
    %v495 = vpack.c.b16 %v445, %v443
    %v496 = vpack.c.b16 %v446, %v444
    %v497 = vpack.c.b16 %v449, %v447
    %v498 = vpack.c.b16 %v450, %v448
    %v499 = vpack.c.b16 %v453, %v451
    %v500 = vpack.c.b16 %v454, %v452
    %v501 = vpack.c.b16 %v457, %v455
    %v502 = vpack.c.b16 %v458, %v456
    %v503 = vpack.c.b16 %v461, %v459
    %v504 = vpack.c.b16 %v462, %v460
    %v505 = vpack.c.b16 %v465, %v463
    %v506 = vpack.c.b16 %v466, %v464
    %v507 = vpack.c.b16 %v469, %v467
    %v508 = vpack.c.b16 %v470, %v468
    %v509 = vpack.c.b16 %v473, %v471
    %v510 = vpack.c.b16 %v474, %v472
    %v511 = vpack.c.b16 %v477, %v475
    %v512 = vpack.c.b16 %v478, %v476
    %v513 = vpack.c.b16 %v481, %v479
    %v514 = vpack.c.b16 %v482, %v480
    %547 = vmatpush.bf16.msra.mxu0 %v497
    %548 = vmatpush.bf16.msra.mxu0 %v495
    %549 = vmatpush.bf16.msra.mxu0 %v493
    %550 = vmatpush.bf16.msra.mxu0 %v491
    %551 = vmatpush.bf16.msra.mxu0 %v489
    %552 = vmatpush.bf16.msra.mxu0 %v487
    %553 = vmatpush.bf16.msra.mxu0 %v485
    %554 = vmatpush.bf16.msra.mxu0 %v483
    %555 = vmatmul.bf16.gmra.mxu0 %v383
    %v556 = vpop.f32.mrf.mxu0
    %v557 = vadd.f32 0.0, %v556
    %v558 = vpop.f32.mrf.mxu0
    %559 = vdwg.mxu0
    %560 = vmatpush.bf16.msra.mxu0 %v513
    %561 = vmatpush.bf16.msra.mxu0 %v511
    %562 = vmatpush.bf16.msra.mxu0 %v509
    %563 = vmatpush.bf16.msra.mxu0 %v507
    %564 = vmatpush.bf16.msra.mxu0 %v505
    %565 = vmatpush.bf16.msra.mxu0 %v503
    %566 = vmatpush.bf16.msra.mxu0 %v501
    %567 = vmatpush.bf16.msra.mxu0 %v499
    %568 = vmatmul.bf16.gmra.mxu0 %v384
    %v569 = vpop.f32.mrf.mxu0
    %v570 = vadd.f32 %v557, %v569
    %v571 = vpop.f32.mrf.mxu0
    %572 = vdwg.mxu0
    %573 = vmatpush.bf16.msra.mxu0 %v498
    %574 = vmatpush.bf16.msra.mxu0 %v496
    %575 = vmatpush.bf16.msra.mxu0 %v494
    %576 = vmatpush.bf16.msra.mxu0 %v492
    %577 = vmatpush.bf16.msra.mxu0 %v490
    %578 = vmatpush.bf16.msra.mxu0 %v488
    %579 = vmatpush.bf16.msra.mxu0 %v486
    %580 = vmatpush.bf16.msra.mxu0 %v484
    %581 = vmatmul.bf16.gmra.mxu0 %v383
    %v582 = vpop.f32.mrf.mxu0
    %v583 = vadd.f32 0.0, %v582
    %v584 = vpop.f32.mrf.mxu0
    %585 = vdwg.mxu0
    %586 = vmatpush.bf16.msra.mxu0 %v514
    %587 = vmatpush.bf16.msra.mxu0 %v512
    %588 = vmatpush.bf16.msra.mxu0 %v510
    %589 = vmatpush.bf16.msra.mxu0 %v508
    %590 = vmatpush.bf16.msra.mxu0 %v506
    %591 = vmatpush.bf16.msra.mxu0 %v504
    %592 = vmatpush.bf16.msra.mxu0 %v502
    %593 = vmatpush.bf16.msra.mxu0 %v500
    %594 = vmatmul.bf16.gmra.mxu0 %v384
    %v595 = vpop.f32.mrf.mxu0
    %v596 = vadd.f32 %v583, %v595
    %v597 = vpop.f32.mrf.mxu0
    %598 = vdwg.mxu0
    %v599 = vld [vmem:[%s2] sm:$0x3]
    %v601 = vperm.slane %v599, 0
    %v602 = vperm.slane %v599, 1
    %v605 = vmul.f32 %v570, %v601
    %v606 = vmul.f32 %v596, %v602
    %v607 = vld [vmem:[%s3] sm:$0x3]
    %v609 = vperm.slane %v607, 0
    %v610 = vperm.slane %v607, 1
    %v613 = vadd.f32 %v605, %v609
    %v614 = vadd.f32 %v606, %v610
    %v615 = vmax.f32 %v613, 0.0
    %v616 = vmax.f32 %v614, 0.0
    %v617 = vpack.c.bf16 %v616, %v615
    %v619 = vunpack.c.l.b16 %v617
    %v620 = vunpack.c.h.b16 %v617
    %v621 = vpack.c.b16 %v619, %v619
    %v622 = vpack.c.b16 %v620, %v620
    %v624 = vshrl.u32 %v621, 16
    %v626 = vshll.u32 %v621, 16
    %v628 = vrot.slane %v626, 1
    %v629 = vor.u32 %v624, %v628
    %v631 = vshrl.u32 %v622, 16
    %v633 = vshll.u32 %v622, 16
    %v635 = vrot.slane %v633, 1
    %v636 = vor.u32 %v631, %v635
    %vm639 = vcmask 1043456
    %vm640 = vsmask.f32 3328
    %vm641 = vmand %vm639, %vm640
    %v642 = vsel %vm641, %v629, 0
    %v643 = vsel %vm641, %v636, 0
    %v644 = vrot.slane %v624, 7
    %v645 = vor.u32 %v644, %v626
    %v646 = vrot.slane %v631, 7
    %v647 = vor.u32 %v646, %v633
    %vm650 = vcmask 1040384
    %vm651 = vsmask.f32 256
    %vm652 = vmand %vm650, %vm651
    %v653 = vsel %vm652, 0, %v645
    %v654 = vsel %vm652, 0, %v647
    %v656 = vunpack.c.l.b16 %v297
    %v657 = vunpack.c.h.b16 %v297
    %v658 = vpack.c.b16 %v656, %v656
    %v659 = vpack.c.b16 %v657, %v657
    %v661 = vpack.i.b16 %v658, %v658
    %v663 = vperm.slane %v661, 0
    %v665 = vpack.i.b16 %v659, %v659
    %v667 = vperm.slane %v665, 0
    %v668 = vunpack.c.l.bf16 %v617
    %v669 = vunpack.c.h.bf16 %v617
    %v670 = vunpack.c.l.bf16 %v663
    %v671 = vunpack.c.l.bf16 %v667
    %v672 = vmul.f32 %v668, %v670
    %v673 = vmul.f32 %v669, %v671
    %v674 = vpack.c.bf16 %v673, %v672
    %v675 = vunpack.c.l.bf16 %v642
    %v676 = vunpack.c.l.bf16 %v643
    %v677 = vunpack.c.l.bf16 %v322
    %v678 = vunpack.c.h.bf16 %v322
    %v679 = vmul.f32 %v675, %v677
    %v680 = vmul.f32 %v676, %v678
    %v681 = vpack.c.bf16 %v680, %v679
    %v682 = vunpack.c.l.bf16 %v674
    %v683 = vunpack.c.h.bf16 %v674
    %v684 = vunpack.c.l.bf16 %v681
    %v685 = vunpack.c.h.bf16 %v681
    %v686 = vadd.f32 %v682, %v684
    %v687 = vadd.f32 %v683, %v685
    %v688 = vpack.c.bf16 %v687, %v686
    %v689 = vunpack.c.l.bf16 %v653
    %v690 = vunpack.c.l.bf16 %v654
    %v691 = vunpack.c.l.bf16 %v347
    %v692 = vunpack.c.h.bf16 %v347
    %v693 = vmul.f32 %v689, %v691
    %v694 = vmul.f32 %v690, %v692
    %v695 = vpack.c.bf16 %v694, %v693
    %v696 = vunpack.c.l.bf16 %v688
    %v697 = vunpack.c.h.bf16 %v688
    %v698 = vunpack.c.l.bf16 %v695
    %v699 = vunpack.c.h.bf16 %v695
    %v700 = vadd.f32 %v696, %v698
    %v701 = vadd.f32 %v697, %v699
    %v702 = vpack.c.bf16 %v700, %v700
    %v703 = vpack.c.bf16 %v701, %v701
    %v704 = vld [vmem:[#allocation4] sm:$0xff]
    %v705 = vld [vmem:[#allocation4 + $0x8] sm:$0xff]
    %v706 = vld [vmem:[#allocation4 + $0x10] sm:$0xff]
    %v707 = vld [vmem:[#allocation4 + $0x18] sm:$0xff]
    %v708 = vld [vmem:[#allocation4 + $0x20] sm:$0xff]
    %v709 = vld [vmem:[#allocation4 + $0x28] sm:$0xff]
    %v710 = vld [vmem:[#allocation4 + $0x30] sm:$0xff]
    %v711 = vld [vmem:[#allocation4 + $0x38] sm:$0xff]
    %v712 = vld [vmem:[#allocation4 + $0x40] sm:$0xff]
    %v713 = vld [vmem:[#allocation4 + $0x48] sm:$0xff]
    %v714 = vld [vmem:[#allocation4 + $0x50] sm:$0xff]
    %v715 = vld [vmem:[#allocation4 + $0x58] sm:$0xff]
    %v716 = vld [vmem:[#allocation4 + $0x60] sm:$0xff]
    %v717 = vld [vmem:[#allocation4 + $0x68] sm:$0xff]
    %v718 = vld [vmem:[#allocation4 + $0x70] sm:$0xff]
    %v719 = vld [vmem:[#allocation4 + $0x78] sm:$0xff]
    %v720 = vld [vmem:[#allocation4 + $0x80] sm:$0xff]
    %v721 = vld [vmem:[#allocation4 + $0x88] sm:$0xff]
    %v722 = vld [vmem:[#allocation4 + $0x90] sm:$0xff]
    %v723 = vld [vmem:[#allocation4 + $0x98] sm:$0xff]
    %v724 = vld [vmem:[#allocation4 + $0xa0] sm:$0xff]
    %v725 = vld [vmem:[#allocation4 + $0xa8] sm:$0xff]
    %v726 = vld [vmem:[#allocation4 + $0xb0] sm:$0xff]
    %v727 = vld [vmem:[#allocation4 + $0xb8] sm:$0xff]
    %v728 = vld [vmem:[#allocation4 + $0xc0] sm:$0xff]
    %v729 = vld [vmem:[#allocation4 + $0xc8] sm:$0xff]
    %v730 = vld [vmem:[#allocation4 + $0xd0] sm:$0xff]
    %v731 = vld [vmem:[#allocation4 + $0xd8] sm:$0xff]
    %v732 = vld [vmem:[#allocation4 + $0xe0] sm:$0xff]
    %v733 = vld [vmem:[#allocation4 + $0xe8] sm:$0xff]
    %v734 = vld [vmem:[#allocation4 + $0xf0] sm:$0xff]
    %v735 = vld [vmem:[#allocation4 + $0xf8] sm:$0xff]
    %v768 = vunpack.c.l.b16 %v704
    %v769 = vunpack.c.h.b16 %v704
    %v770 = vunpack.c.l.b16 %v705
    %v771 = vunpack.c.h.b16 %v705
    %v772 = vunpack.c.l.b16 %v706
    %v773 = vunpack.c.h.b16 %v706
    %v774 = vunpack.c.l.b16 %v707
    %v775 = vunpack.c.h.b16 %v707
    %v776 = vunpack.c.l.b16 %v708
    %v777 = vunpack.c.h.b16 %v708
    %v778 = vunpack.c.l.b16 %v709
    %v779 = vunpack.c.h.b16 %v709
    %v780 = vunpack.c.l.b16 %v710
    %v781 = vunpack.c.h.b16 %v710
    %v782 = vunpack.c.l.b16 %v711
    %v783 = vunpack.c.h.b16 %v711
    %v784 = vunpack.c.l.b16 %v712
    %v785 = vunpack.c.h.b16 %v712
    %v786 = vunpack.c.l.b16 %v713
    %v787 = vunpack.c.h.b16 %v713
    %v788 = vunpack.c.l.b16 %v714
    %v789 = vunpack.c.h.b16 %v714
    %v790 = vunpack.c.l.b16 %v715
    %v791 = vunpack.c.h.b16 %v715
    %v792 = vunpack.c.l.b16 %v716
    %v793 = vunpack.c.h.b16 %v716
    %v794 = vunpack.c.l.b16 %v717
    %v795 = vunpack.c.h.b16 %v717
    %v796 = vunpack.c.l.b16 %v718
    %v797 = vunpack.c.h.b16 %v718
    %v798 = vunpack.c.l.b16 %v719
    %v799 = vunpack.c.h.b16 %v719
    %v800 = vunpack.c.l.b16 %v720
    %v801 = vunpack.c.h.b16 %v720
    %v802 = vunpack.c.l.b16 %v721
    %v803 = vunpack.c.h.b16 %v721
    %v804 = vunpack.c.l.b16 %v722
    %v805 = vunpack.c.h.b16 %v722
    %v806 = vunpack.c.l.b16 %v723
    %v807 = vunpack.c.h.b16 %v723
    %v808 = vunpack.c.l.b16 %v724
    %v809 = vunpack.c.h.b16 %v724
    %v810 = vunpack.c.l.b16 %v725
    %v811 = vunpack.c.h.b16 %v725
    %v812 = vunpack.c.l.b16 %v726
    %v813 = vunpack.c.h.b16 %v726
    %v814 = vunpack.c.l.b16 %v727
    %v815 = vunpack.c.h.b16 %v727
    %v816 = vunpack.c.l.b16 %v728
    %v817 = vunpack.c.h.b16 %v728
    %v818 = vunpack.c.l.b16 %v729
    %v819 = vunpack.c.h.b16 %v729
    %v820 = vunpack.c.l.b16 %v730
    %v821 = vunpack.c.h.b16 %v730
    %v822 = vunpack.c.l.b16 %v731
    %v823 = vunpack.c.h.b16 %v731
    %v824 = vunpack.c.l.b16 %v732
    %v825 = vunpack.c.h.b16 %v732
    %v826 = vunpack.c.l.b16 %v733
    %v827 = vunpack.c.h.b16 %v733
    %v828 = vunpack.c.l.b16 %v734
    %v829 = vunpack.c.h.b16 %v734
    %v830 = vunpack.c.l.b16 %v735
    %v831 = vunpack.c.h.b16 %v735
    %v832 = vpack.c.b16 %v770, %v768
    %v833 = vpack.c.b16 %v771, %v769
    %v834 = vpack.c.b16 %v774, %v772
    %v835 = vpack.c.b16 %v775, %v773
    %v836 = vpack.c.b16 %v778, %v776
    %v837 = vpack.c.b16 %v779, %v777
    %v838 = vpack.c.b16 %v782, %v780
    %v839 = vpack.c.b16 %v783, %v781
    %v840 = vpack.c.b16 %v786, %v784
    %v841 = vpack.c.b16 %v787, %v785
    %v842 = vpack.c.b16 %v790, %v788
    %v843 = vpack.c.b16 %v791, %v789
    %v844 = vpack.c.b16 %v794, %v792
    %v845 = vpack.c.b16 %v795, %v793
    %v846 = vpack.c.b16 %v798, %v796
    %v847 = vpack.c.b16 %v799, %v797
    %v848 = vpack.c.b16 %v802, %v800
    %v849 = vpack.c.b16 %v803, %v801
    %v850 = vpack.c.b16 %v806, %v804
    %v851 = vpack.c.b16 %v807, %v805
    %v852 = vpack.c.b16 %v810, %v808
    %v853 = vpack.c.b16 %v811, %v809
    %v854 = vpack.c.b16 %v814, %v812
    %v855 = vpack.c.b16 %v815, %v813
    %v856 = vpack.c.b16 %v818, %v816
    %v857 = vpack.c.b16 %v819, %v817
    %v858 = vpack.c.b16 %v822, %v820
    %v859 = vpack.c.b16 %v823, %v821
    %v860 = vpack.c.b16 %v826, %v824
    %v861 = vpack.c.b16 %v827, %v825
    %v862 = vpack.c.b16 %v830, %v828
    %v863 = vpack.c.b16 %v831, %v829
    %896 = vmatpush.bf16.msra.mxu0 %v846
    %897 = vmatpush.bf16.msra.mxu0 %v844
    %898 = vmatpush.bf16.msra.mxu0 %v842
    %899 = vmatpush.bf16.msra.mxu0 %v840
    %900 = vmatpush.bf16.msra.mxu0 %v838
    %901 = vmatpush.bf16.msra.mxu0 %v836
    %902 = vmatpush.bf16.msra.mxu0 %v834
    %903 = vmatpush.bf16.msra.mxu0 %v832
    %904 = vmatmul.bf16.gmra.mxu0 %v702
    %v905 = vpop.f32.mrf.mxu0
    %v906 = vadd.f32 0.0, %v905
    %v907 = vpop.f32.mrf.mxu0
    %908 = vdwg.mxu0
    %909 = vmatpush.bf16.msra.mxu0 %v862
    %910 = vmatpush.bf16.msra.mxu0 %v860
    %911 = vmatpush.bf16.msra.mxu0 %v858
    %912 = vmatpush.bf16.msra.mxu0 %v856
    %913 = vmatpush.bf16.msra.mxu0 %v854
    %914 = vmatpush.bf16.msra.mxu0 %v852
    %915 = vmatpush.bf16.msra.mxu0 %v850
    %916 = vmatpush.bf16.msra.mxu0 %v848
    %917 = vmatmul.bf16.gmra.mxu0 %v703
    %v918 = vpop.f32.mrf.mxu0
    %v919 = vadd.f32 %v906, %v918
    %v920 = vpop.f32.mrf.mxu0
    %921 = vdwg.mxu0
    %922 = vmatpush.bf16.msra.mxu0 %v847
    %923 = vmatpush.bf16.msra.mxu0 %v845
    %924 = vmatpush.bf16.msra.mxu0 %v843
    %925 = vmatpush.bf16.msra.mxu0 %v841
    %926 = vmatpush.bf16.msra.mxu0 %v839
    %927 = vmatpush.bf16.msra.mxu0 %v837
    %928 = vmatpush.bf16.msra.mxu0 %v835
    %929 = vmatpush.bf16.msra.mxu0 %v833
    %930 = vmatmul.bf16.gmra.mxu0 %v702
    %v931 = vpop.f32.mrf.mxu0
    %v932 = vadd.f32 0.0, %v931
    %v933 = vpop.f32.mrf.mxu0
    %934 = vdwg.mxu0
    %935 = vmatpush.bf16.msra.mxu0 %v863
    %936 = vmatpush.bf16.msra.mxu0 %v861
    %937 = vmatpush.bf16.msra.mxu0 %v859
    %938 = vmatpush.bf16.msra.mxu0 %v857
    %939 = vmatpush.bf16.msra.mxu0 %v855
    %940 = vmatpush.bf16.msra.mxu0 %v853
    %941 = vmatpush.bf16.msra.mxu0 %v851
    %942 = vmatpush.bf16.msra.mxu0 %v849
    %943 = vmatmul.bf16.gmra.mxu0 %v703
    %v944 = vpop.f32.mrf.mxu0
    %v945 = vadd.f32 %v932, %v944
    %v946 = vpop.f32.mrf.mxu0
    %947 = vdwg.mxu0
    %v948 = vld [vmem:[#allocation6] sm:$0x3]
    %v950 = vperm.slane %v948, 0
    %v951 = vperm.slane %v948, 1
    %v954 = vmul.f32 %v919, %v950
    %v955 = vmul.f32 %v945, %v951
    %v956 = vld [vmem:[#allocation7] sm:$0x3]
    %v958 = vperm.slane %v956, 0
    %v959 = vperm.slane %v956, 1
    %v962 = vadd.f32 %v954, %v958
    %v963 = vadd.f32 %v955, %v959
    %v964 = vmax.f32 %v962, 0.0
    %v965 = vmax.f32 %v963, 0.0
    %v966 = vpack.c.bf16 %v964, %v964
    %v967 = vpack.c.bf16 %v965, %v965
    %v968 = vld [vmem:[#allocation9] sm:$0xff]
    %v969 = vld [vmem:[#allocation9 + $0x8] sm:$0xff]
    %v970 = vld [vmem:[#allocation9 + $0x10] sm:$0xff]
    %v971 = vld [vmem:[#allocation9 + $0x18] sm:$0xff]
    %v972 = vld [vmem:[#allocation9 + $0x20] sm:$0xff]
    %v973 = vld [vmem:[#allocation9 + $0x28] sm:$0xff]
    %v974 = vld [vmem:[#allocation9 + $0x30] sm:$0xff]
    %v975 = vld [vmem:[#allocation9 + $0x38] sm:$0xff]
    %v976 = vld [vmem:[#allocation9 + $0x40] sm:$0xff]
    %v977 = vld [vmem:[#allocation9 + $0x48] sm:$0xff]
    %v978 = vld [vmem:[#allocation9 + $0x50] sm:$0xff]
    %v979 = vld [vmem:[#allocation9 + $0x58] sm:$0xff]
    %v980 = vld [vmem:[#allocation9 + $0x60] sm:$0xff]
    %v981 = vld [vmem:[#allocation9 + $0x68] sm:$0xff]
    %v982 = vld [vmem:[#allocation9 + $0x70] sm:$0xff]
    %v983 = vld [vmem:[#allocation9 + $0x78] sm:$0xff]
    %v984 = vld [vmem:[#allocation9 + $0x80] sm:$0xff]
    %v985 = vld [vmem:[#allocation9 + $0x88] sm:$0xff]
    %v986 = vld [vmem:[#allocation9 + $0x90] sm:$0xff]
    %v987 = vld [vmem:[#allocation9 + $0x98] sm:$0xff]
    %v988 = vld [vmem:[#allocation9 + $0xa0] sm:$0xff]
    %v989 = vld [vmem:[#allocation9 + $0xa8] sm:$0xff]
    %v990 = vld [vmem:[#allocation9 + $0xb0] sm:$0xff]
    %v991 = vld [vmem:[#allocation9 + $0xb8] sm:$0xff]
    %v992 = vld [vmem:[#allocation9 + $0xc0] sm:$0xff]
    %v993 = vld [vmem:[#allocation9 + $0xc8] sm:$0xff]
    %v994 = vld [vmem:[#allocation9 + $0xd0] sm:$0xff]
    %v995 = vld [vmem:[#allocation9 + $0xd8] sm:$0xff]
    %v996 = vld [vmem:[#allocation9 + $0xe0] sm:$0xff]
    %v997 = vld [vmem:[#allocation9 + $0xe8] sm:$0xff]
    %v998 = vld [vmem:[#allocation9 + $0xf0] sm:$0xff]
    %v999 = vld [vmem:[#allocation9 + $0xf8] sm:$0xff]
    %v1032 = vunpack.c.l.b16 %v968
    %v1033 = vunpack.c.h.b16 %v968
    %v1034 = vunpack.c.l.b16 %v969
    %v1035 = vunpack.c.h.b16 %v969
    %v1036 = vunpack.c.l.b16 %v970
    %v1037 = vunpack.c.h.b16 %v970
    %v1038 = vunpack.c.l.b16 %v971
    %v1039 = vunpack.c.h.b16 %v971
    %v1040 = vunpack.c.l.b16 %v972
    %v1041 = vunpack.c.h.b16 %v972
    %v1042 = vunpack.c.l.b16 %v973
    %v1043 = vunpack.c.h.b16 %v973
    %v1044 = vunpack.c.l.b16 %v974
    %v1045 = vunpack.c.h.b16 %v974
    %v1046 = vunpack.c.l.b16 %v975
    %v1047 = vunpack.c.h.b16 %v975
    %v1048 = vunpack.c.l.b16 %v976
    %v1049 = vunpack.c.h.b16 %v976
    %v1050 = vunpack.c.l.b16 %v977
    %v1051 = vunpack.c.h.b16 %v977
    %v1052 = vunpack.c.l.b16 %v978
    %v1053 = vunpack.c.h.b16 %v978
    %v1054 = vunpack.c.l.b16 %v979
    %v1055 = vunpack.c.h.b16 %v979
    %v1056 = vunpack.c.l.b16 %v980
    %v1057 = vunpack.c.h.b16 %v980
    %v1058 = vunpack.c.l.b16 %v981
    %v1059 = vunpack.c.h.b16 %v981
    %v1060 = vunpack.c.l.b16 %v982
    %v1061 = vunpack.c.h.b16 %v982
    %v1062 = vunpack.c.l.b16 %v983
    %v1063 = vunpack.c.h.b16 %v983
    %v1064 = vunpack.c.l.b16 %v984
    %v1065 = vunpack.c.h.b16 %v984
    %v1066 = vunpack.c.l.b16 %v985
    %v1067 = vunpack.c.h.b16 %v985
    %v1068 = vunpack.c.l.b16 %v986
    %v1069 = vunpack.c.h.b16 %v986
    %v1070 = vunpack.c.l.b16 %v987
    %v1071 = vunpack.c.h.b16 %v987
    %v1072 = vunpack.c.l.b16 %v988
    %v1073 = vunpack.c.h.b16 %v988
    %v1074 = vunpack.c.l.b16 %v989
    %v1075 = vunpack.c.h.b16 %v989
    %v1076 = vunpack.c.l.b16 %v990
    %v1077 = vunpack.c.h.b16 %v990
    %v1078 = vunpack.c.l.b16 %v991
    %v1079 = vunpack.c.h.b16 %v991
    %v1080 = vunpack.c.l.b16 %v992
    %v1081 = vunpack.c.h.b16 %v992
    %v1082 = vunpack.c.l.b16 %v993
    %v1083 = vunpack.c.h.b16 %v993
    %v1084 = vunpack.c.l.b16 %v994
    %v1085 = vunpack.c.h.b16 %v994
    %v1086 = vunpack.c.l.b16 %v995
    %v1087 = vunpack.c.h.b16 %v995
    %v1088 = vunpack.c.l.b16 %v996
    %v1089 = vunpack.c.h.b16 %v996
    %v1090 = vunpack.c.l.b16 %v997
    %v1091 = vunpack.c.h.b16 %v997
    %v1092 = vunpack.c.l.b16 %v998
    %v1093 = vunpack.c.h.b16 %v998
    %v1094 = vunpack.c.l.b16 %v999
    %v1095 = vunpack.c.h.b16 %v999
    %v1096 = vpack.c.b16 %v1034, %v1032
    %v1097 = vpack.c.b16 %v1035, %v1033
    %v1098 = vpack.c.b16 %v1038, %v1036
    %v1099 = vpack.c.b16 %v1039, %v1037
    %v1100 = vpack.c.b16 %v1042, %v1040
    %v1101 = vpack.c.b16 %v1043, %v1041
    %v1102 = vpack.c.b16 %v1046, %v1044
    %v1103 = vpack.c.b16 %v1047, %v1045
    %v1104 = vpack.c.b16 %v1050, %v1048
    %v1105 = vpack.c.b16 %v1051, %v1049
    %v1106 = vpack.c.b16 %v1054, %v1052
    %v1107 = vpack.c.b16 %v1055, %v1053
    %v1108 = vpack.c.b16 %v1058, %v1056
    %v1109 = vpack.c.b16 %v1059, %v1057
    %v1110 = vpack.c.b16 %v1062, %v1060
    %v1111 = vpack.c.b16 %v1063, %v1061
    %v1112 = vpack.c.b16 %v1066, %v1064
    %v1113 = vpack.c.b16 %v1067, %v1065
    %v1114 = vpack.c.b16 %v1070, %v1068
    %v1115 = vpack.c.b16 %v1071, %v1069
    %v1116 = vpack.c.b16 %v1074, %v1072
    %v1117 = vpack.c.b16 %v1075, %v1073
    %v1118 = vpack.c.b16 %v1078, %v1076
    %v1119 = vpack.c.b16 %v1079, %v1077
    %v1120 = vpack.c.b16 %v1082, %v1080
    %v1121 = vpack.c.b16 %v1083, %v1081
    %v1122 = vpack.c.b16 %v1086, %v1084
    %v1123 = vpack.c.b16 %v1087, %v1085
    %v1124 = vpack.c.b16 %v1090, %v1088
    %v1125 = vpack.c.b16 %v1091, %v1089
    %v1126 = vpack.c.b16 %v1094, %v1092
    %v1127 = vpack.c.b16 %v1095, %v1093
    %1160 = vmatpush.bf16.msra.mxu0 %v1110
    %1161 = vmatpush.bf16.msra.mxu0 %v1108
    %1162 = vmatpush.bf16.msra.mxu0 %v1106
    %1163 = vmatpush.bf16.msra.mxu0 %v1104
    %1164 = vmatpush.bf16.msra.mxu0 %v1102
    %1165 = vmatpush.bf16.msra.mxu0 %v1100
    %1166 = vmatpush.bf16.msra.mxu0 %v1098
    %1167 = vmatpush.bf16.msra.mxu0 %v1096
    %1168 = vmatmul.bf16.gmra.mxu0 %v966
    %v1169 = vpop.f32.mrf.mxu0
    %v1170 = vadd.f32 0.0, %v1169
    %v1171 = vpop.f32.mrf.mxu0
    %1172 = vdwg.mxu0
    %1173 = vmatpush.bf16.msra.mxu0 %v1126
    %1174 = vmatpush.bf16.msra.mxu0 %v1124
    %1175 = vmatpush.bf16.msra.mxu0 %v1122
    %1176 = vmatpush.bf16.msra.mxu0 %v1120
    %1177 = vmatpush.bf16.msra.mxu0 %v1118
    %1178 = vmatpush.bf16.msra.mxu0 %v1116
    %1179 = vmatpush.bf16.msra.mxu0 %v1114
    %1180 = vmatpush.bf16.msra.mxu0 %v1112
    %1181 = vmatmul.bf16.gmra.mxu0 %v967
    %v1182 = vpop.f32.mrf.mxu0
    %v1183 = vadd.f32 %v1170, %v1182
    %v1184 = vpop.f32.mrf.mxu0
    %1185 = vdwg.mxu0
    %1186 = vmatpush.bf16.msra.mxu0 %v1111
    %1187 = vmatpush.bf16.msra.mxu0 %v1109
    %1188 = vmatpush.bf16.msra.mxu0 %v1107
    %1189 = vmatpush.bf16.msra.mxu0 %v1105
    %1190 = vmatpush.bf16.msra.mxu0 %v1103
    %1191 = vmatpush.bf16.msra.mxu0 %v1101
    %1192 = vmatpush.bf16.msra.mxu0 %v1099
    %1193 = vmatpush.bf16.msra.mxu0 %v1097
    %1194 = vmatmul.bf16.gmra.mxu0 %v966
    %v1195 = vpop.f32.mrf.mxu0
    %v1196 = vadd.f32 0.0, %v1195
    %v1197 = vpop.f32.mrf.mxu0
    %1198 = vdwg.mxu0
    %1199 = vmatpush.bf16.msra.mxu0 %v1127
    %1200 = vmatpush.bf16.msra.mxu0 %v1125
    %1201 = vmatpush.bf16.msra.mxu0 %v1123
    %1202 = vmatpush.bf16.msra.mxu0 %v1121
    %1203 = vmatpush.bf16.msra.mxu0 %v1119
    %1204 = vmatpush.bf16.msra.mxu0 %v1117
    %1205 = vmatpush.bf16.msra.mxu0 %v1115
    %1206 = vmatpush.bf16.msra.mxu0 %v1113
    %1207 = vmatmul.bf16.gmra.mxu0 %v967
    %v1208 = vpop.f32.mrf.mxu0
    %v1209 = vadd.f32 %v1196, %v1208
    %v1210 = vpop.f32.mrf.mxu0
    %1211 = vdwg.mxu0
    %v1212 = vld [vmem:[%s8] sm:$0x3]
    %v1214 = vperm.slane %v1212, 0
    %v1215 = vperm.slane %v1212, 1
    %v1218 = vmul.f32 %v1183, %v1214
    %v1219 = vmul.f32 %v1209, %v1215
    %v1220 = vld [vmem:[%s9] sm:$0x3]
    %v1222 = vperm.slane %v1220, 0
    %v1223 = vperm.slane %v1220, 1
    %v1226 = vadd.f32 %v1218, %v1222
    %v1227 = vadd.f32 %v1219, %v1223
    %v1228 = vmax.f32 %v1226, 0.0
    %v1229 = vmax.f32 %v1227, 0.0
    %v1230 = vpack.c.bf16 %v1229, %v1228
    %v1232 = vunpack.c.l.b16 %v1230
    %v1233 = vunpack.c.h.b16 %v1230
    %v1234 = vpack.c.b16 %v1232, %v1232
    %v1235 = vpack.c.b16 %v1233, %v1233
    %v1237 = vshrl.u32 %v1234, 16
    %v1239 = vshll.u32 %v1234, 16
    %v1241 = vrot.slane %v1239, 1
    %v1242 = vor.u32 %v1237, %v1241
    %v1244 = vshrl.u32 %v1235, 16
    %v1246 = vshll.u32 %v1235, 16
    %v1248 = vrot.slane %v1246, 1
    %v1249 = vor.u32 %v1244, %v1248
    %v1252 = vsel %vm641, %v1242, 0
    %v1253 = vsel %vm641, %v1249, 0
    %v1254 = vrot.slane %v1237, 7
    %v1255 = vor.u32 %v1254, %v1239
    %v1256 = vrot.slane %v1244, 7
    %v1257 = vor.u32 %v1256, %v1246
    %v1260 = vsel %vm652, 0, %v1255
    %v1261 = vsel %vm652, 0, %v1257
    %v1262 = vunpack.c.l.bf16 %v1230
    %v1263 = vunpack.c.h.bf16 %v1230
    %v1264 = vmul.f32 %v1262, %v670
    %v1265 = vmul.f32 %v1263, %v671
    %v1266 = vpack.c.bf16 %v1265, %v1264
    %v1267 = vunpack.c.l.bf16 %v1252
    %v1268 = vunpack.c.l.bf16 %v1253
    %v1269 = vmul.f32 %v1267, %v677
    %v1270 = vmul.f32 %v1268, %v678
    %v1271 = vpack.c.bf16 %v1270, %v1269
    %v1272 = vunpack.c.l.bf16 %v1266
    %v1273 = vunpack.c.h.bf16 %v1266
    %v1274 = vunpack.c.l.bf16 %v1271
    %v1275 = vunpack.c.h.bf16 %v1271
    %v1276 = vadd.f32 %v1272, %v1274
    %v1277 = vadd.f32 %v1273, %v1275
    %v1278 = vpack.c.bf16 %v1277, %v1276
    %v1279 = vunpack.c.l.bf16 %v1260
    %v1280 = vunpack.c.l.bf16 %v1261
    %v1281 = vmul.f32 %v1279, %v691
    %v1282 = vmul.f32 %v1280, %v692
    %v1283 = vpack.c.bf16 %v1282, %v1281
    %v1284 = vunpack.c.l.bf16 %v1278
    %v1285 = vunpack.c.h.bf16 %v1278
    %v1286 = vunpack.c.l.bf16 %v1283
    %v1287 = vunpack.c.h.bf16 %v1283
    %v1288 = vadd.f32 %v1284, %v1286
    %v1289 = vadd.f32 %v1285, %v1287
    %v1290 = vpack.c.bf16 %v1288, %v1288
    %v1291 = vpack.c.bf16 %v1289, %v1289
    %v1292 = vld [vmem:[#allocation10] sm:$0xff]
    %v1293 = vld [vmem:[#allocation10 + $0x8] sm:$0xff]
    %v1294 = vld [vmem:[#allocation10 + $0x10] sm:$0xff]
    %v1295 = vld [vmem:[#allocation10 + $0x18] sm:$0xff]
    %v1296 = vld [vmem:[#allocation10 + $0x20] sm:$0xff]
    %v1297 = vld [vmem:[#allocation10 + $0x28] sm:$0xff]
    %v1298 = vld [vmem:[#allocation10 + $0x30] sm:$0xff]
    %v1299 = vld [vmem:[#allocation10 + $0x38] sm:$0xff]
    %v1300 = vld [vmem:[#allocation10 + $0x40] sm:$0xff]
    %v1301 = vld [vmem:[#allocation10 + $0x48] sm:$0xff]
    %v1302 = vld [vmem:[#allocation10 + $0x50] sm:$0xff]
    %v1303 = vld [vmem:[#allocation10 + $0x58] sm:$0xff]
    %v1304 = vld [vmem:[#allocation10 + $0x60] sm:$0xff]
    %v1305 = vld [vmem:[#allocation10 + $0x68] sm:$0xff]
    %v1306 = vld [vmem:[#allocation10 + $0x70] sm:$0xff]
    %v1307 = vld [vmem:[#allocation10 + $0x78] sm:$0xff]
    %v1308 = vld [vmem:[#allocation10 + $0x80] sm:$0xff]
    %v1309 = vld [vmem:[#allocation10 + $0x88] sm:$0xff]
    %v1310 = vld [vmem:[#allocation10 + $0x90] sm:$0xff]
    %v1311 = vld [vmem:[#allocation10 + $0x98] sm:$0xff]
    %v1312 = vld [vmem:[#allocation10 + $0xa0] sm:$0xff]
    %v1313 = vld [vmem:[#allocation10 + $0xa8] sm:$0xff]
    %v1314 = vld [vmem:[#allocation10 + $0xb0] sm:$0xff]
    %v1315 = vld [vmem:[#allocation10 + $0xb8] sm:$0xff]
    %v1316 = vld [vmem:[#allocation10 + $0xc0] sm:$0xff]
    %v1317 = vld [vmem:[#allocation10 + $0xc8] sm:$0xff]
    %v1318 = vld [vmem:[#allocation10 + $0xd0] sm:$0xff]
    %v1319 = vld [vmem:[#allocation10 + $0xd8] sm:$0xff]
    %v1320 = vld [vmem:[#allocation10 + $0xe0] sm:$0xff]
    %v1321 = vld [vmem:[#allocation10 + $0xe8] sm:$0xff]
    %v1322 = vld [vmem:[#allocation10 + $0xf0] sm:$0xff]
    %v1323 = vld [vmem:[#allocation10 + $0xf8] sm:$0xff]
    %v1356 = vunpack.c.l.b16 %v1292
    %v1357 = vunpack.c.h.b16 %v1292
    %v1358 = vunpack.c.l.b16 %v1293
    %v1359 = vunpack.c.h.b16 %v1293
    %v1360 = vunpack.c.l.b16 %v1294
    %v1361 = vunpack.c.h.b16 %v1294
    %v1362 = vunpack.c.l.b16 %v1295
    %v1363 = vunpack.c.h.b16 %v1295
    %v1364 = vunpack.c.l.b16 %v1296
    %v1365 = vunpack.c.h.b16 %v1296
    %v1366 = vunpack.c.l.b16 %v1297
    %v1367 = vunpack.c.h.b16 %v1297
    %v1368 = vunpack.c.l.b16 %v1298
    %v1369 = vunpack.c.h.b16 %v1298
    %v1370 = vunpack.c.l.b16 %v1299
    %v1371 = vunpack.c.h.b16 %v1299
    %v1372 = vunpack.c.l.b16 %v1300
    %v1373 = vunpack.c.h.b16 %v1300
    %v1374 = vunpack.c.l.b16 %v1301
    %v1375 = vunpack.c.h.b16 %v1301
    %v1376 = vunpack.c.l.b16 %v1302
    %v1377 = vunpack.c.h.b16 %v1302
    %v1378 = vunpack.c.l.b16 %v1303
    %v1379 = vunpack.c.h.b16 %v1303
    %v1380 = vunpack.c.l.b16 %v1304
    %v1381 = vunpack.c.h.b16 %v1304
    %v1382 = vunpack.c.l.b16 %v1305
    %v1383 = vunpack.c.h.b16 %v1305
    %v1384 = vunpack.c.l.b16 %v1306
    %v1385 = vunpack.c.h.b16 %v1306
    %v1386 = vunpack.c.l.b16 %v1307
    %v1387 = vunpack.c.h.b16 %v1307
    %v1388 = vunpack.c.l.b16 %v1308
    %v1389 = vunpack.c.h.b16 %v1308
    %v1390 = vunpack.c.l.b16 %v1309
    %v1391 = vunpack.c.h.b16 %v1309
    %v1392 = vunpack.c.l.b16 %v1310
    %v1393 = vunpack.c.h.b16 %v1310
    %v1394 = vunpack.c.l.b16 %v1311
    %v1395 = vunpack.c.h.b16 %v1311
    %v1396 = vunpack.c.l.b16 %v1312
    %v1397 = vunpack.c.h.b16 %v1312
    %v1398 = vunpack.c.l.b16 %v1313
    %v1399 = vunpack.c.h.b16 %v1313
    %v1400 = vunpack.c.l.b16 %v1314
    %v1401 = vunpack.c.h.b16 %v1314
    %v1402 = vunpack.c.l.b16 %v1315
    %v1403 = vunpack.c.h.b16 %v1315
    %v1404 = vunpack.c.l.b16 %v1316
    %v1405 = vunpack.c.h.b16 %v1316
    %v1406 = vunpack.c.l.b16 %v1317
    %v1407 = vunpack.c.h.b16 %v1317
    %v1408 = vunpack.c.l.b16 %v1318
    %v1409 = vunpack.c.h.b16 %v1318
    %v1410 = vunpack.c.l.b16 %v1319
    %v1411 = vunpack.c.h.b16 %v1319
    %v1412 = vunpack.c.l.b16 %v1320
    %v1413 = vunpack.c.h.b16 %v1320
    %v1414 = vunpack.c.l.b16 %v1321
    %v1415 = vunpack.c.h.b16 %v1321
    %v1416 = vunpack.c.l.b16 %v1322
    %v1417 = vunpack.c.h.b16 %v1322
    %v1418 = vunpack.c.l.b16 %v1323
    %v1419 = vunpack.c.h.b16 %v1323
    %v1420 = vpack.c.b16 %v1358, %v1356
    %v1421 = vpack.c.b16 %v1359, %v1357
    %v1422 = vpack.c.b16 %v1362, %v1360
    %v1423 = vpack.c.b16 %v1363, %v1361
    %v1424 = vpack.c.b16 %v1366, %v1364
    %v1425 = vpack.c.b16 %v1367, %v1365
    %v1426 = vpack.c.b16 %v1370, %v1368
    %v1427 = vpack.c.b16 %v1371, %v1369
    %v1428 = vpack.c.b16 %v1374, %v1372
    %v1429 = vpack.c.b16 %v1375, %v1373
    %v1430 = vpack.c.b16 %v1378, %v1376
    %v1431 = vpack.c.b16 %v1379, %v1377
    %v1432 = vpack.c.b16 %v1382, %v1380
    %v1433 = vpack.c.b16 %v1383, %v1381
    %v1434 = vpack.c.b16 %v1386, %v1384
    %v1435 = vpack.c.b16 %v1387, %v1385
    %v1436 = vpack.c.b16 %v1390, %v1388
    %v1437 = vpack.c.b16 %v1391, %v1389
    %v1438 = vpack.c.b16 %v1394, %v1392
    %v1439 = vpack.c.b16 %v1395, %v1393
    %v1440 = vpack.c.b16 %v1398, %v1396
    %v1441 = vpack.c.b16 %v1399, %v1397
    %v1442 = vpack.c.b16 %v1402, %v1400
    %v1443 = vpack.c.b16 %v1403, %v1401
    %v1444 = vpack.c.b16 %v1406, %v1404
    %v1445 = vpack.c.b16 %v1407, %v1405
    %v1446 = vpack.c.b16 %v1410, %v1408
    %v1447 = vpack.c.b16 %v1411, %v1409
    %v1448 = vpack.c.b16 %v1414, %v1412
    %v1449 = vpack.c.b16 %v1415, %v1413
    %v1450 = vpack.c.b16 %v1418, %v1416
    %v1451 = vpack.c.b16 %v1419, %v1417
    %1484 = vmatpush.bf16.msra.mxu0 %v1434
    %1485 = vmatpush.bf16.msra.mxu0 %v1432
    %1486 = vmatpush.bf16.msra.mxu0 %v1430
    %1487 = vmatpush.bf16.msra.mxu0 %v1428
    %1488 = vmatpush.bf16.msra.mxu0 %v1426
    %1489 = vmatpush.bf16.msra.mxu0 %v1424
    %1490 = vmatpush.bf16.msra.mxu0 %v1422
    %1491 = vmatpush.bf16.msra.mxu0 %v1420
    %1492 = vmatmul.bf16.gmra.mxu0 %v1290
    %v1493 = vpop.f32.mrf.mxu0
    %v1494 = vadd.f32 0.0, %v1493
    %v1495 = vpop.f32.mrf.mxu0
    %1496 = vdwg.mxu0
    %1497 = vmatpush.bf16.msra.mxu0 %v1450
    %1498 = vmatpush.bf16.msra.mxu0 %v1448
    %1499 = vmatpush.bf16.msra.mxu0 %v1446
    %1500 = vmatpush.bf16.msra.mxu0 %v1444
    %1501 = vmatpush.bf16.msra.mxu0 %v1442
    %1502 = vmatpush.bf16.msra.mxu0 %v1440
    %1503 = vmatpush.bf16.msra.mxu0 %v1438
    %1504 = vmatpush.bf16.msra.mxu0 %v1436
    %1505 = vmatmul.bf16.gmra.mxu0 %v1291
    %v1506 = vpop.f32.mrf.mxu0
    %v1507 = vadd.f32 %v1494, %v1506
    %v1508 = vpop.f32.mrf.mxu0
    %1509 = vdwg.mxu0
    %1510 = vmatpush.bf16.msra.mxu0 %v1435
    %1511 = vmatpush.bf16.msra.mxu0 %v1433
    %1512 = vmatpush.bf16.msra.mxu0 %v1431
    %1513 = vmatpush.bf16.msra.mxu0 %v1429
    %1514 = vmatpush.bf16.msra.mxu0 %v1427
    %1515 = vmatpush.bf16.msra.mxu0 %v1425
    %1516 = vmatpush.bf16.msra.mxu0 %v1423
    %1517 = vmatpush.bf16.msra.mxu0 %v1421
    %1518 = vmatmul.bf16.gmra.mxu0 %v1290
    %v1519 = vpop.f32.mrf.mxu0
    %v1520 = vadd.f32 0.0, %v1519
    %v1521 = vpop.f32.mrf.mxu0
    %1522 = vdwg.mxu0
    %1523 = vmatpush.bf16.msra.mxu0 %v1451
    %1524 = vmatpush.bf16.msra.mxu0 %v1449
    %1525 = vmatpush.bf16.msra.mxu0 %v1447
    %1526 = vmatpush.bf16.msra.mxu0 %v1445
    %1527 = vmatpush.bf16.msra.mxu0 %v1443
    %1528 = vmatpush.bf16.msra.mxu0 %v1441
    %1529 = vmatpush.bf16.msra.mxu0 %v1439
    %1530 = vmatpush.bf16.msra.mxu0 %v1437
    %1531 = vmatmul.bf16.gmra.mxu0 %v1291
    %v1532 = vpop.f32.mrf.mxu0
    %v1533 = vadd.f32 %v1520, %v1532
    %v1534 = vpop.f32.mrf.mxu0
    %1535 = vdwg.mxu0
    %v1536 = vld [vmem:[#allocation12] sm:$0x3]
    %v1538 = vperm.slane %v1536, 0
    %v1539 = vperm.slane %v1536, 1
    %v1542 = vmul.f32 %v1507, %v1538
    %v1543 = vmul.f32 %v1533, %v1539
    %v1544 = vld [vmem:[#allocation13] sm:$0x3]
    %v1546 = vperm.slane %v1544, 0
    %v1547 = vperm.slane %v1544, 1
    %v1550 = vadd.f32 %v1542, %v1546
    %v1551 = vadd.f32 %v1543, %v1547
    %v1552 = vmax.f32 %v1550, 0.0
    %v1553 = vmax.f32 %v1551, 0.0
    %v1554 = vpack.c.bf16 %v1552, %v1552
    %v1555 = vpack.c.bf16 %v1553, %v1553
    %v1556 = vld [vmem:[#allocation15] sm:$0xff]
    %v1557 = vld [vmem:[#allocation15 + $0x8] sm:$0xff]
    %v1558 = vld [vmem:[#allocation15 + $0x10] sm:$0xff]
    %v1559 = vld [vmem:[#allocation15 + $0x18] sm:$0xff]
    %v1560 = vld [vmem:[#allocation15 + $0x20] sm:$0xff]
    %v1561 = vld [vmem:[#allocation15 + $0x28] sm:$0xff]
    %v1562 = vld [vmem:[#allocation15 + $0x30] sm:$0xff]
    %v1563 = vld [vmem:[#allocation15 + $0x38] sm:$0xff]
    %v1564 = vld [vmem:[#allocation15 + $0x40] sm:$0xff]
    %v1565 = vld [vmem:[#allocation15 + $0x48] sm:$0xff]
    %v1566 = vld [vmem:[#allocation15 + $0x50] sm:$0xff]
    %v1567 = vld [vmem:[#allocation15 + $0x58] sm:$0xff]
    %v1568 = vld [vmem:[#allocation15 + $0x60] sm:$0xff]
    %v1569 = vld [vmem:[#allocation15 + $0x68] sm:$0xff]
    %v1570 = vld [vmem:[#allocation15 + $0x70] sm:$0xff]
    %v1571 = vld [vmem:[#allocation15 + $0x78] sm:$0xff]
    %v1572 = vld [vmem:[#allocation15 + $0x80] sm:$0xff]
    %v1573 = vld [vmem:[#allocation15 + $0x88] sm:$0xff]
    %v1574 = vld [vmem:[#allocation15 + $0x90] sm:$0xff]
    %v1575 = vld [vmem:[#allocation15 + $0x98] sm:$0xff]
    %v1576 = vld [vmem:[#allocation15 + $0xa0] sm:$0xff]
    %v1577 = vld [vmem:[#allocation15 + $0xa8] sm:$0xff]
    %v1578 = vld [vmem:[#allocation15 + $0xb0] sm:$0xff]
    %v1579 = vld [vmem:[#allocation15 + $0xb8] sm:$0xff]
    %v1580 = vld [vmem:[#allocation15 + $0xc0] sm:$0xff]
    %v1581 = vld [vmem:[#allocation15 + $0xc8] sm:$0xff]
    %v1582 = vld [vmem:[#allocation15 + $0xd0] sm:$0xff]
    %v1583 = vld [vmem:[#allocation15 + $0xd8] sm:$0xff]
    %v1584 = vld [vmem:[#allocation15 + $0xe0] sm:$0xff]
    %v1585 = vld [vmem:[#allocation15 + $0xe8] sm:$0xff]
    %v1586 = vld [vmem:[#allocation15 + $0xf0] sm:$0xff]
    %v1587 = vld [vmem:[#allocation15 + $0xf8] sm:$0xff]
    %v1620 = vunpack.c.l.b16 %v1556
    %v1621 = vunpack.c.h.b16 %v1556
    %v1622 = vunpack.c.l.b16 %v1557
    %v1623 = vunpack.c.h.b16 %v1557
    %v1624 = vunpack.c.l.b16 %v1558
    %v1625 = vunpack.c.h.b16 %v1558
    %v1626 = vunpack.c.l.b16 %v1559
    %v1627 = vunpack.c.h.b16 %v1559
    %v1628 = vunpack.c.l.b16 %v1560
    %v1629 = vunpack.c.h.b16 %v1560
    %v1630 = vunpack.c.l.b16 %v1561
    %v1631 = vunpack.c.h.b16 %v1561
    %v1632 = vunpack.c.l.b16 %v1562
    %v1633 = vunpack.c.h.b16 %v1562
    %v1634 = vunpack.c.l.b16 %v1563
    %v1635 = vunpack.c.h.b16 %v1563
    %v1636 = vunpack.c.l.b16 %v1564
    %v1637 = vunpack.c.h.b16 %v1564
    %v1638 = vunpack.c.l.b16 %v1565
    %v1639 = vunpack.c.h.b16 %v1565
    %v1640 = vunpack.c.l.b16 %v1566
    %v1641 = vunpack.c.h.b16 %v1566
    %v1642 = vunpack.c.l.b16 %v1567
    %v1643 = vunpack.c.h.b16 %v1567
    %v1644 = vunpack.c.l.b16 %v1568
    %v1645 = vunpack.c.h.b16 %v1568
    %v1646 = vunpack.c.l.b16 %v1569
    %v1647 = vunpack.c.h.b16 %v1569
    %v1648 = vunpack.c.l.b16 %v1570
    %v1649 = vunpack.c.h.b16 %v1570
    %v1650 = vunpack.c.l.b16 %v1571
    %v1651 = vunpack.c.h.b16 %v1571
    %v1652 = vunpack.c.l.b16 %v1572
    %v1653 = vunpack.c.h.b16 %v1572
    %v1654 = vunpack.c.l.b16 %v1573
    %v1655 = vunpack.c.h.b16 %v1573
    %v1656 = vunpack.c.l.b16 %v1574
    %v1657 = vunpack.c.h.b16 %v1574
    %v1658 = vunpack.c.l.b16 %v1575
    %v1659 = vunpack.c.h.b16 %v1575
    %v1660 = vunpack.c.l.b16 %v1576
    %v1661 = vunpack.c.h.b16 %v1576
    %v1662 = vunpack.c.l.b16 %v1577
    %v1663 = vunpack.c.h.b16 %v1577
    %v1664 = vunpack.c.l.b16 %v1578
    %v1665 = vunpack.c.h.b16 %v1578
    %v1666 = vunpack.c.l.b16 %v1579
    %v1667 = vunpack.c.h.b16 %v1579
    %v1668 = vunpack.c.l.b16 %v1580
    %v1669 = vunpack.c.h.b16 %v1580
    %v1670 = vunpack.c.l.b16 %v1581
    %v1671 = vunpack.c.h.b16 %v1581
    %v1672 = vunpack.c.l.b16 %v1582
    %v1673 = vunpack.c.h.b16 %v1582
    %v1674 = vunpack.c.l.b16 %v1583
    %v1675 = vunpack.c.h.b16 %v1583
    %v1676 = vunpack.c.l.b16 %v1584
    %v1677 = vunpack.c.h.b16 %v1584
    %v1678 = vunpack.c.l.b16 %v1585
    %v1679 = vunpack.c.h.b16 %v1585
    %v1680 = vunpack.c.l.b16 %v1586
    %v1681 = vunpack.c.h.b16 %v1586
    %v1682 = vunpack.c.l.b16 %v1587
    %v1683 = vunpack.c.h.b16 %v1587
    %v1684 = vpack.c.b16 %v1622, %v1620
    %v1685 = vpack.c.b16 %v1623, %v1621
    %v1686 = vpack.c.b16 %v1626, %v1624
    %v1687 = vpack.c.b16 %v1627, %v1625
    %v1688 = vpack.c.b16 %v1630, %v1628
    %v1689 = vpack.c.b16 %v1631, %v1629
    %v1690 = vpack.c.b16 %v1634, %v1632
    %v1691 = vpack.c.b16 %v1635, %v1633
    %v1692 = vpack.c.b16 %v1638, %v1636
    %v1693 = vpack.c.b16 %v1639, %v1637
    %v1694 = vpack.c.b16 %v1642, %v1640
    %v1695 = vpack.c.b16 %v1643, %v1641
    %v1696 = vpack.c.b16 %v1646, %v1644
    %v1697 = vpack.c.b16 %v1647, %v1645
    %v1698 = vpack.c.b16 %v1650, %v1648
    %v1699 = vpack.c.b16 %v1651, %v1649
    %v1700 = vpack.c.b16 %v1654, %v1652
    %v1701 = vpack.c.b16 %v1655, %v1653
    %v1702 = vpack.c.b16 %v1658, %v1656
    %v1703 = vpack.c.b16 %v1659, %v1657
    %v1704 = vpack.c.b16 %v1662, %v1660
    %v1705 = vpack.c.b16 %v1663, %v1661
    %v1706 = vpack.c.b16 %v1666, %v1664
    %v1707 = vpack.c.b16 %v1667, %v1665
    %v1708 = vpack.c.b16 %v1670, %v1668
    %v1709 = vpack.c.b16 %v1671, %v1669
    %v1710 = vpack.c.b16 %v1674, %v1672
    %v1711 = vpack.c.b16 %v1675, %v1673
    %v1712 = vpack.c.b16 %v1678, %v1676
    %v1713 = vpack.c.b16 %v1679, %v1677
    %v1714 = vpack.c.b16 %v1682, %v1680
    %v1715 = vpack.c.b16 %v1683, %v1681
    %1748 = vmatpush.bf16.msra.mxu0 %v1698
    %1749 = vmatpush.bf16.msra.mxu0 %v1696
    %1750 = vmatpush.bf16.msra.mxu0 %v1694
    %1751 = vmatpush.bf16.msra.mxu0 %v1692
    %1752 = vmatpush.bf16.msra.mxu0 %v1690
    %1753 = vmatpush.bf16.msra.mxu0 %v1688
    %1754 = vmatpush.bf16.msra.mxu0 %v1686
    %1755 = vmatpush.bf16.msra.mxu0 %v1684
    %1756 = vmatmul.bf16.gmra.mxu0 %v1554
    %v1757 = vpop.f32.mrf.mxu0
    %v1758 = vadd.f32 0.0, %v1757
    %v1759 = vpop.f32.mrf.mxu0
    %1760 = vdwg.mxu0
    %1761 = vmatpush.bf16.msra.mxu0 %v1714
    %1762 = vmatpush.bf16.msra.mxu0 %v1712
    %1763 = vmatpush.bf16.msra.mxu0 %v1710
    %1764 = vmatpush.bf16.msra.mxu0 %v1708
    %1765 = vmatpush.bf16.msra.mxu0 %v1706
    %1766 = vmatpush.bf16.msra.mxu0 %v1704
    %1767 = vmatpush.bf16.msra.mxu0 %v1702
    %1768 = vmatpush.bf16.msra.mxu0 %v1700
    %1769 = vmatmul.bf16.gmra.mxu0 %v1555
    %v1770 = vpop.f32.mrf.mxu0
    %v1771 = vadd.f32 %v1758, %v1770
    %v1772 = vpop.f32.mrf.mxu0
    %1773 = vdwg.mxu0
    %1774 = vmatpush.bf16.msra.mxu0 %v1699
    %1775 = vmatpush.bf16.msra.mxu0 %v1697
    %1776 = vmatpush.bf16.msra.mxu0 %v1695
    %1777 = vmatpush.bf16.msra.mxu0 %v1693
    %1778 = vmatpush.bf16.msra.mxu0 %v1691
    %1779 = vmatpush.bf16.msra.mxu0 %v1689
    %1780 = vmatpush.bf16.msra.mxu0 %v1687
    %1781 = vmatpush.bf16.msra.mxu0 %v1685
    %1782 = vmatmul.bf16.gmra.mxu0 %v1554
    %v1783 = vpop.f32.mrf.mxu0
    %v1784 = vadd.f32 0.0, %v1783
    %v1785 = vpop.f32.mrf.mxu0
    %1786 = vdwg.mxu0
    %1787 = vmatpush.bf16.msra.mxu0 %v1715
    %1788 = vmatpush.bf16.msra.mxu0 %v1713
    %1789 = vmatpush.bf16.msra.mxu0 %v1711
    %1790 = vmatpush.bf16.msra.mxu0 %v1709
    %1791 = vmatpush.bf16.msra.mxu0 %v1707
    %1792 = vmatpush.bf16.msra.mxu0 %v1705
    %1793 = vmatpush.bf16.msra.mxu0 %v1703
    %1794 = vmatpush.bf16.msra.mxu0 %v1701
    %1795 = vmatmul.bf16.gmra.mxu0 %v1555
    %v1796 = vpop.f32.mrf.mxu0
    %v1797 = vadd.f32 %v1784, %v1796
    %v1798 = vpop.f32.mrf.mxu0
    %1799 = vdwg.mxu0
    %v1800 = vld [vmem:[%s14] sm:$0x3]
    %v1802 = vperm.slane %v1800, 0
    %v1803 = vperm.slane %v1800, 1
    %v1806 = vmul.f32 %v1771, %v1802
    %v1807 = vmul.f32 %v1797, %v1803
    %v1808 = vld [vmem:[%s15] sm:$0x3]
    %v1810 = vperm.slane %v1808, 0
    %v1811 = vperm.slane %v1808, 1
    %v1814 = vadd.f32 %v1806, %v1810
    %v1815 = vadd.f32 %v1807, %v1811
    %v1816 = vmax.f32 %v1814, 0.0
    %v1817 = vmax.f32 %v1815, 0.0
    %v1818 = vpack.c.bf16 %v1817, %v1816
    %v1820 = vunpack.c.l.b16 %v1818
    %v1821 = vunpack.c.h.b16 %v1818
    %v1822 = vpack.c.b16 %v1820, %v1820
    %v1823 = vpack.c.b16 %v1821, %v1821
    %v1825 = vshrl.u32 %v1822, 16
    %v1827 = vshll.u32 %v1822, 16
    %v1829 = vrot.slane %v1827, 1
    %v1830 = vor.u32 %v1825, %v1829
    %v1832 = vshrl.u32 %v1823, 16
    %v1834 = vshll.u32 %v1823, 16
    %v1836 = vrot.slane %v1834, 1
    %v1837 = vor.u32 %v1832, %v1836
    %v1840 = vsel %vm641, %v1830, 0
    %v1841 = vsel %vm641, %v1837, 0
    %v1842 = vrot.slane %v1825, 7
    %v1843 = vor.u32 %v1842, %v1827
    %v1844 = vrot.slane %v1832, 7
    %v1845 = vor.u32 %v1844, %v1834
    %v1848 = vsel %vm652, 0, %v1843
    %v1849 = vsel %vm652, 0, %v1845
    %v1850 = vunpack.c.l.bf16 %v1818
    %v1851 = vunpack.c.h.bf16 %v1818
    %v1852 = vmul.f32 %v1850, %v670
    %v1853 = vmul.f32 %v1851, %v671
    %v1854 = vpack.c.bf16 %v1853, %v1852
    %v1855 = vunpack.c.l.bf16 %v1840
    %v1856 = vunpack.c.l.bf16 %v1841
    %v1857 = vmul.f32 %v1855, %v677
    %v1858 = vmul.f32 %v1856, %v678
    %v1859 = vpack.c.bf16 %v1858, %v1857
    %v1860 = vunpack.c.l.bf16 %v1854
    %v1861 = vunpack.c.h.bf16 %v1854
    %v1862 = vunpack.c.l.bf16 %v1859
    %v1863 = vunpack.c.h.bf16 %v1859
    %v1864 = vadd.f32 %v1860, %v1862
    %v1865 = vadd.f32 %v1861, %v1863
    %v1866 = vpack.c.bf16 %v1865, %v1864
    %v1867 = vunpack.c.l.bf16 %v1848
    %v1868 = vunpack.c.l.bf16 %v1849
    %v1869 = vmul.f32 %v1867, %v691
    %v1870 = vmul.f32 %v1868, %v692
    %v1871 = vpack.c.bf16 %v1870, %v1869
    %v1872 = vunpack.c.l.bf16 %v1866
    %v1873 = vunpack.c.h.bf16 %v1866
    %v1874 = vunpack.c.l.bf16 %v1871
    %v1875 = vunpack.c.h.bf16 %v1871
    %v1876 = vadd.f32 %v1872, %v1874
    %v1877 = vadd.f32 %v1873, %v1875
    %v1878 = vpack.c.bf16 %v1876, %v1876
    %v1879 = vpack.c.bf16 %v1877, %v1877
    %v1880 = vld [vmem:[#allocation16] sm:$0xff]
    %v1881 = vld [vmem:[#allocation16 + $0x8] sm:$0xff]
    %v1882 = vld [vmem:[#allocation16 + $0x10] sm:$0xff]
    %v1883 = vld [vmem:[#allocation16 + $0x18] sm:$0xff]
    %v1884 = vld [vmem:[#allocation16 + $0x20] sm:$0xff]
    %v1885 = vld [vmem:[#allocation16 + $0x28] sm:$0xff]
    %v1886 = vld [vmem:[#allocation16 + $0x30] sm:$0xff]
    %v1887 = vld [vmem:[#allocation16 + $0x38] sm:$0xff]
    %v1888 = vld [vmem:[#allocation16 + $0x40] sm:$0xff]
    %v1889 = vld [vmem:[#allocation16 + $0x48] sm:$0xff]
    %v1890 = vld [vmem:[#allocation16 + $0x50] sm:$0xff]
    %v1891 = vld [vmem:[#allocation16 + $0x58] sm:$0xff]
    %v1892 = vld [vmem:[#allocation16 + $0x60] sm:$0xff]
    %v1893 = vld [vmem:[#allocation16 + $0x68] sm:$0xff]
    %v1894 = vld [vmem:[#allocation16 + $0x70] sm:$0xff]
    %v1895 = vld [vmem:[#allocation16 + $0x78] sm:$0xff]
    %v1896 = vld [vmem:[#allocation16 + $0x80] sm:$0xff]
    %v1897 = vld [vmem:[#allocation16 + $0x88] sm:$0xff]
    %v1898 = vld [vmem:[#allocation16 + $0x90] sm:$0xff]
    %v1899 = vld [vmem:[#allocation16 + $0x98] sm:$0xff]
    %v1900 = vld [vmem:[#allocation16 + $0xa0] sm:$0xff]
    %v1901 = vld [vmem:[#allocation16 + $0xa8] sm:$0xff]
    %v1902 = vld [vmem:[#allocation16 + $0xb0] sm:$0xff]
    %v1903 = vld [vmem:[#allocation16 + $0xb8] sm:$0xff]
    %v1904 = vld [vmem:[#allocation16 + $0xc0] sm:$0xff]
    %v1905 = vld [vmem:[#allocation16 + $0xc8] sm:$0xff]
    %v1906 = vld [vmem:[#allocation16 + $0xd0] sm:$0xff]
    %v1907 = vld [vmem:[#allocation16 + $0xd8] sm:$0xff]
    %v1908 = vld [vmem:[#allocation16 + $0xe0] sm:$0xff]
    %v1909 = vld [vmem:[#allocation16 + $0xe8] sm:$0xff]
    %v1910 = vld [vmem:[#allocation16 + $0xf0] sm:$0xff]
    %v1911 = vld [vmem:[#allocation16 + $0xf8] sm:$0xff]
    %v1944 = vunpack.c.l.b16 %v1880
    %v1945 = vunpack.c.h.b16 %v1880
    %v1946 = vunpack.c.l.b16 %v1881
    %v1947 = vunpack.c.h.b16 %v1881
    %v1948 = vunpack.c.l.b16 %v1882
    %v1949 = vunpack.c.h.b16 %v1882
    %v1950 = vunpack.c.l.b16 %v1883
    %v1951 = vunpack.c.h.b16 %v1883
    %v1952 = vunpack.c.l.b16 %v1884
    %v1953 = vunpack.c.h.b16 %v1884
    %v1954 = vunpack.c.l.b16 %v1885
    %v1955 = vunpack.c.h.b16 %v1885
    %v1956 = vunpack.c.l.b16 %v1886
    %v1957 = vunpack.c.h.b16 %v1886
    %v1958 = vunpack.c.l.b16 %v1887
    %v1959 = vunpack.c.h.b16 %v1887
    %v1960 = vunpack.c.l.b16 %v1888
    %v1961 = vunpack.c.h.b16 %v1888
    %v1962 = vunpack.c.l.b16 %v1889
    %v1963 = vunpack.c.h.b16 %v1889
    %v1964 = vunpack.c.l.b16 %v1890
    %v1965 = vunpack.c.h.b16 %v1890
    %v1966 = vunpack.c.l.b16 %v1891
    %v1967 = vunpack.c.h.b16 %v1891
    %v1968 = vunpack.c.l.b16 %v1892
    %v1969 = vunpack.c.h.b16 %v1892
    %v1970 = vunpack.c.l.b16 %v1893
    %v1971 = vunpack.c.h.b16 %v1893
    %v1972 = vunpack.c.l.b16 %v1894
    %v1973 = vunpack.c.h.b16 %v1894
    %v1974 = vunpack.c.l.b16 %v1895
    %v1975 = vunpack.c.h.b16 %v1895
    %v1976 = vunpack.c.l.b16 %v1896
    %v1977 = vunpack.c.h.b16 %v1896
    %v1978 = vunpack.c.l.b16 %v1897
    %v1979 = vunpack.c.h.b16 %v1897
    %v1980 = vunpack.c.l.b16 %v1898
    %v1981 = vunpack.c.h.b16 %v1898
    %v1982 = vunpack.c.l.b16 %v1899
    %v1983 = vunpack.c.h.b16 %v1899
    %v1984 = vunpack.c.l.b16 %v1900
    %v1985 = vunpack.c.h.b16 %v1900
    %v1986 = vunpack.c.l.b16 %v1901
    %v1987 = vunpack.c.h.b16 %v1901
    %v1988 = vunpack.c.l.b16 %v1902
    %v1989 = vunpack.c.h.b16 %v1902
    %v1990 = vunpack.c.l.b16 %v1903
    %v1991 = vunpack.c.h.b16 %v1903
    %v1992 = vunpack.c.l.b16 %v1904
    %v1993 = vunpack.c.h.b16 %v1904
    %v1994 = vunpack.c.l.b16 %v1905
    %v1995 = vunpack.c.h.b16 %v1905
    %v1996 = vunpack.c.l.b16 %v1906
    %v1997 = vunpack.c.h.b16 %v1906
    %v1998 = vunpack.c.l.b16 %v1907
    %v1999 = vunpack.c.h.b16 %v1907
    %v2000 = vunpack.c.l.b16 %v1908
    %v2001 = vunpack.c.h.b16 %v1908
    %v2002 = vunpack.c.l.b16 %v1909
    %v2003 = vunpack.c.h.b16 %v1909
    %v2004 = vunpack.c.l.b16 %v1910
    %v2005 = vunpack.c.h.b16 %v1910
    %v2006 = vunpack.c.l.b16 %v1911
    %v2007 = vunpack.c.h.b16 %v1911
    %v2008 = vpack.c.b16 %v1946, %v1944
    %v2009 = vpack.c.b16 %v1947, %v1945
    %v2010 = vpack.c.b16 %v1950, %v1948
    %v2011 = vpack.c.b16 %v1951, %v1949
    %v2012 = vpack.c.b16 %v1954, %v1952
    %v2013 = vpack.c.b16 %v1955, %v1953
    %v2014 = vpack.c.b16 %v1958, %v1956
    %v2015 = vpack.c.b16 %v1959, %v1957
    %v2016 = vpack.c.b16 %v1962, %v1960
    %v2017 = vpack.c.b16 %v1963, %v1961
    %v2018 = vpack.c.b16 %v1966, %v1964
    %v2019 = vpack.c.b16 %v1967, %v1965
    %v2020 = vpack.c.b16 %v1970, %v1968
    %v2021 = vpack.c.b16 %v1971, %v1969
    %v2022 = vpack.c.b16 %v1974, %v1972
    %v2023 = vpack.c.b16 %v1975, %v1973
    %v2024 = vpack.c.b16 %v1978, %v1976
    %v2025 = vpack.c.b16 %v1979, %v1977
    %v2026 = vpack.c.b16 %v1982, %v1980
    %v2027 = vpack.c.b16 %v1983, %v1981
    %v2028 = vpack.c.b16 %v1986, %v1984
    %v2029 = vpack.c.b16 %v1987, %v1985
    %v2030 = vpack.c.b16 %v1990, %v1988
    %v2031 = vpack.c.b16 %v1991, %v1989
    %v2032 = vpack.c.b16 %v1994, %v1992
    %v2033 = vpack.c.b16 %v1995, %v1993
    %v2034 = vpack.c.b16 %v1998, %v1996
    %v2035 = vpack.c.b16 %v1999, %v1997
    %v2036 = vpack.c.b16 %v2002, %v2000
    %v2037 = vpack.c.b16 %v2003, %v2001
    %v2038 = vpack.c.b16 %v2006, %v2004
    %v2039 = vpack.c.b16 %v2007, %v2005
    %2072 = vmatpush.bf16.msra.mxu0 %v2022
    %2073 = vmatpush.bf16.msra.mxu0 %v2020
    %2074 = vmatpush.bf16.msra.mxu0 %v2018
    %2075 = vmatpush.bf16.msra.mxu0 %v2016
    %2076 = vmatpush.bf16.msra.mxu0 %v2014
    %2077 = vmatpush.bf16.msra.mxu0 %v2012
    %2078 = vmatpush.bf16.msra.mxu0 %v2010
    %2079 = vmatpush.bf16.msra.mxu0 %v2008
    %2080 = vmatmul.bf16.gmra.mxu0 %v1878
    %v2081 = vpop.f32.mrf.mxu0
    %v2082 = vadd.f32 0.0, %v2081
    %v2083 = vpop.f32.mrf.mxu0
    %2084 = vdwg.mxu0
    %2085 = vmatpush.bf16.msra.mxu0 %v2038
    %2086 = vmatpush.bf16.msra.mxu0 %v2036
    %2087 = vmatpush.bf16.msra.mxu0 %v2034
    %2088 = vmatpush.bf16.msra.mxu0 %v2032
    %2089 = vmatpush.bf16.msra.mxu0 %v2030
    %2090 = vmatpush.bf16.msra.mxu0 %v2028
    %2091 = vmatpush.bf16.msra.mxu0 %v2026
    %2092 = vmatpush.bf16.msra.mxu0 %v2024
    %2093 = vmatmul.bf16.gmra.mxu0 %v1879
    %v2094 = vpop.f32.mrf.mxu0
    %v2095 = vadd.f32 %v2082, %v2094
    %v2096 = vpop.f32.mrf.mxu0
    %2097 = vdwg.mxu0
    %2098 = vmatpush.bf16.msra.mxu0 %v2023
    %2099 = vmatpush.bf16.msra.mxu0 %v2021
    %2100 = vmatpush.bf16.msra.mxu0 %v2019
    %2101 = vmatpush.bf16.msra.mxu0 %v2017
    %2102 = vmatpush.bf16.msra.mxu0 %v2015
    %2103 = vmatpush.bf16.msra.mxu0 %v2013
    %2104 = vmatpush.bf16.msra.mxu0 %v2011
    %2105 = vmatpush.bf16.msra.mxu0 %v2009
    %2106 = vmatmul.bf16.gmra.mxu0 %v1878
    %v2107 = vpop.f32.mrf.mxu0
    %v2108 = vadd.f32 0.0, %v2107
    %v2109 = vpop.f32.mrf.mxu0
    %2110 = vdwg.mxu0
    %2111 = vmatpush.bf16.msra.mxu0 %v2039
    %2112 = vmatpush.bf16.msra.mxu0 %v2037
    %2113 = vmatpush.bf16.msra.mxu0 %v2035
    %2114 = vmatpush.bf16.msra.mxu0 %v2033
    %2115 = vmatpush.bf16.msra.mxu0 %v2031
    %2116 = vmatpush.bf16.msra.mxu0 %v2029
    %2117 = vmatpush.bf16.msra.mxu0 %v2027
    %2118 = vmatpush.bf16.msra.mxu0 %v2025
    %2119 = vmatmul.bf16.gmra.mxu0 %v1879
    %v2120 = vpop.f32.mrf.mxu0
    %v2121 = vadd.f32 %v2108, %v2120
    %v2122 = vpop.f32.mrf.mxu0
    %2123 = vdwg.mxu0
    %v2124 = vld [vmem:[#allocation18] sm:$0x3]
    %v2126 = vperm.slane %v2124, 0
    %v2127 = vperm.slane %v2124, 1
    %v2130 = vmul.f32 %v2095, %v2126
    %v2131 = vmul.f32 %v2121, %v2127
    %v2132 = vld [vmem:[#allocation19] sm:$0x3]
    %v2134 = vperm.slane %v2132, 0
    %v2135 = vperm.slane %v2132, 1
    %v2138 = vadd.f32 %v2130, %v2134
    %v2139 = vadd.f32 %v2131, %v2135
    %v2140 = vadd.f32 %v2138, %v273
    %v2141 = vadd.f32 %v2139, %v274
    %v2142 = vmax.f32 %v2140, 0.0
    %v2143 = vmax.f32 %v2141, 0.0
    %v2144 = vpack.c.bf16 %v2143, %v2142
    %2145 = vst [vmem:[%s25] sm:$0xff] %v2144
    // Predicated region
    $region150: #{gtsnet_forward.6} parent=1 // pred_check
      _
    $region151: #{gtsnet_forward.6} parent=1 // pred_check_branch
      %2147 = sbr.rel (0) target = $region153
    $region152: #{gtsnet_forward.6} parent=1 // pred_region
      _
    $region153: #{gtsnet_forward.6} parent=1 // pred_fallthru
      _
    // Predicated region
    $region154: #{gtsnet_forward.6} parent=1 // pred_check
      _
    $region155: #{gtsnet_forward.6} parent=1 // pred_check_branch
      %2149 = sbr.rel (0) target = $region157
    $region156: #{gtsnet_forward.6} parent=1 // pred_region
      _
    $region157: #{gtsnet_forward.6} parent=1 // pred_fallthru
      _
    %2150 = vsyncpa [#allocation3], 1
    %2151 = vsyncpa [#allocation5], 1
    %2152 = vsyncpa [#allocation8], 1
    %2153 = vsyncpa [#allocation11], 1
    %2154 = vsyncpa [#allocation14], 1
    %2155 = vsyncpa [#allocation17], 1
    %2156 = vsyncpa [#allocation20], 1

// kernel: gtsnet_forward.5
$region0: #{gtsnet_forward.5}
  #allocation0 [shape = 'u32[]', space=smem, size = 0x4, offset = 0x4, fixed_abs, tag = 'smem constant byte address 0x4 - core index']
  #allocation1 [shape = 'u32[72,128]{1,0:T(1,128)}', space=vmem, size = 0x9000, scoped, tag = 'internal scratch']
  %s0 = inlined_call_operand.vmem [shape: bf16[8,256], index: 0, kind: input, shape index: {}]
  %s1 = inlined_call_operand.hbm [shape: bf16[128,256], index: 1, kind: input, shape index: {}]
  %s2 = inlined_call_operand.vmem [shape: f32[1,256], index: 2, kind: input, shape index: {}]
  %s3 = inlined_call_operand.vmem [shape: f32[1,256], index: 3, kind: input, shape index: {}]
  %s4 = inlined_call_operand.hbm [shape: bf16[256,256], index: 4, kind: input, shape index: {}]
  %s5 = inlined_call_operand.vmem [shape: f32[1,256], index: 5, kind: input, shape index: {}]
  %s6 = inlined_call_operand.vmem [shape: f32[1,256], index: 6, kind: input, shape index: {}]
  %s7 = inlined_call_operand.hbm [shape: bf16[256,256], index: 7, kind: input, shape index: {}]
  %s8 = inlined_call_operand.hbm [shape: f32[1,256], index: 8, kind: input, shape index: {}]
  %s9 = inlined_call_operand.hbm [shape: f32[1,256], index: 9, kind: input, shape index: {}]
  %s10 = inlined_call_operand.hbm [shape: bf16[256,256], index: 10, kind: input, shape index: {}]
  %s11 = inlined_call_operand.hbm [shape: f32[1,256], index: 11, kind: input, shape index: {}]
  %s12 = inlined_call_operand.hbm [shape: f32[1,256], index: 12, kind: input, shape index: {}]
  %s13 = inlined_call_operand.hbm [shape: bf16[256,256], index: 13, kind: input, shape index: {}]
  %s14 = inlined_call_operand.hbm [shape: f32[1,256], index: 14, kind: input, shape index: {}]
  %s15 = inlined_call_operand.hbm [shape: f32[1,256], index: 15, kind: input, shape index: {}]
  %s16 = inlined_call_operand.hbm [shape: bf16[256,256], index: 16, kind: input, shape index: {}]
  %s17 = inlined_call_operand.hbm [shape: f32[1,256], index: 17, kind: input, shape index: {}]
  %s18 = inlined_call_operand.hbm [shape: f32[1,256], index: 18, kind: input, shape index: {}]
  %s19 = inlined_call_operand.vmem [shape: bf16[1,256], index: 19, kind: input, shape index: {}]
  %s20 = inlined_call_operand.vmem [shape: bf16[1,256], index: 20, kind: input, shape index: {}]
  %s21 = inlined_call_operand.vmem [shape: bf16[8,1], index: 21, kind: input, shape index: {}]
  %s22 = inlined_call_operand.vmem [shape: bf16[8,1], index: 22, kind: input, shape index: {}]
  %s23 = inlined_call_operand.hbm [shape: bf16[128,256], index: 23, kind: input, shape index: {}]
  %s24 = inlined_call_operand.vmem [shape: f32[1,256], index: 24, kind: input, shape index: {}]
  %s25 = inlined_call_operand.hbm [shape: f32[1,256], index: 25, kind: input, shape index: {}]
  %s26 = inlined_call_operand.vmem [shape: bf16[8,256], index: 26, kind: output, shape index: {}]
  %s27 = sld [smem:[#allocation0]]
  $region178: #{gtsnet_forward.5} parent=0
    _
  %s29 = ssub.s32 1, %s27
  %s30 = scalar_select 0, %s29, %s27
  $region1: #{gtsnet_forward.5} parent=0
    #allocation2 [shape = 'u8[65536]{0}', space=vmem, size = 0x10000, scoped, tag = 'input window, operand 1, single buffered']
    #allocation3 [shape = 's32[1]{0}', space=sflag, size = 0x4, scoped, tag = 'scoped memory for gtsnet_forward.5']
    #allocation4 [shape = 'u8[131072]{0}', space=vmem, size = 0x20000, scoped, tag = 'input window, operand 4, single buffered']
    #allocation5 [shape = 's32[1]{0}', space=sflag, size = 0x4, scoped, tag = 'scoped memory for gtsnet_forward.5']
    #allocation6 [shape = 'u8[131072]{0}', space=vmem, size = 0x20000, scoped, tag = 'input window, operand 7, single buffered']
    #allocation7 [shape = 'u8[1024]{0}', space=vmem, size = 0x400, scoped, tag = 'input window, operand 8, single buffered']
    #allocation8 [shape = 's32[1]{0}', space=sflag, size = 0x4, scoped, tag = 'scoped memory for gtsnet_forward.5']
    #allocation9 [shape = 'u8[1024]{0}', space=vmem, size = 0x400, scoped, tag = 'input window, operand 9, single buffered']
    #allocation10 [shape = 'u8[131072]{0}', space=vmem, size = 0x20000, scoped, tag = 'input window, operand 10, single buffered']
    #allocation11 [shape = 's32[1]{0}', space=sflag, size = 0x4, scoped, tag = 'scoped memory for gtsnet_forward.5']
    #allocation12 [shape = 'u8[1024]{0}', space=vmem, size = 0x400, scoped, tag = 'input window, operand 11, single buffered']
    #allocation13 [shape = 'u8[1024]{0}', space=vmem, size = 0x400, scoped, tag = 'input window, operand 12, single buffered']
    #allocation14 [shape = 's32[1]{0}', space=sflag, size = 0x4, scoped, tag = 'scoped memory for gtsnet_forward.5']
    #allocation15 [shape = 'u8[131072]{0}', space=vmem, size = 0x20000, scoped, tag = 'input window, operand 13, single buffered']
    #allocation16 [shape = 'u8[1024]{0}', space=vmem, size = 0x400, scoped, tag = 'input window, operand 14, single buffered']
    #allocation17 [shape = 's32[1]{0}', space=sflag, size = 0x4, scoped, tag = 'scoped memory for gtsnet_forward.5']
    #allocation18 [shape = 'u8[1024]{0}', space=vmem, size = 0x400, scoped, tag = 'input window, operand 15, single buffered']
    #allocation19 [shape = 'u8[131072]{0}', space=vmem, size = 0x20000, scoped, tag = 'input window, operand 16, single buffered']
    #allocation20 [shape = 's32[1]{0}', space=sflag, size = 0x4, scoped, tag = 'scoped memory for gtsnet_forward.5']
    #allocation21 [shape = 'u8[1024]{0}', space=vmem, size = 0x400, scoped, tag = 'input window, operand 17, single buffered']
    #allocation22 [shape = 'u8[1024]{0}', space=vmem, size = 0x400, scoped, tag = 'input window, operand 18, single buffered']
    #allocation23 [shape = 's32[1]{0}', space=sflag, size = 0x4, scoped, tag = 'scoped memory for gtsnet_forward.5']
    #allocation24 [shape = 'u8[65536]{0}', space=vmem, size = 0x10000, scoped, tag = 'input window, operand 23, single buffered']
    #allocation25 [shape = 'u8[1024]{0}', space=vmem, size = 0x400, scoped, tag = 'input window, operand 25, single buffered']
    #allocation26 [shape = 's32[1]{0}', space=sflag, size = 0x4, scoped, tag = 'scoped memory for gtsnet_forward.5']
    %31 = vsyncpa [#allocation3], 0
    %32 = vsyncpa [#allocation5], 0
    %33 = vsyncpa [#allocation8], 0
    %34 = vsyncpa [#allocation11], 0
    %35 = vsyncpa [#allocation14], 0
    %36 = vsyncpa [#allocation17], 0
    %37 = vsyncpa [#allocation20], 0
    %38 = vsyncpa [#allocation23], 0
    %39 = vsyncpa [#allocation26], 0
    // Predicated region
    $region2: #{gtsnet_forward.5} parent=1 // pred_check
      _
    $region3: #{gtsnet_forward.5} parent=1 // pred_check_branch
      %41 = sbr.rel (0) target = $region5
    $region4: #{gtsnet_forward.5} parent=1 // pred_region
      _
    $region5: #{gtsnet_forward.5} parent=1 // pred_fallthru
      _
    // Predicated region
    $region6: #{gtsnet_forward.5} parent=1 // pred_check
      _
    $region7: #{gtsnet_forward.5} parent=1 // pred_check_branch
      %43 = sbr.rel (0) target = $region9
    $region8: #{gtsnet_forward.5} parent=1 // pred_region
      %45 = vsyncadd [#allocation3], 0
      %s46 = sshll.u32 %s1, 4
      %s47 = int_to_ptr.hbm [resolvable:$true] %s46
      %s48 = sshll.u32 [#allocation2], 4
      %s49 = int_to_ptr.vmem [resolvable:$true] %s48
      %54 = dma.hbm_to_vmem [thread:$0]  %s47, 2048, %s49, [#allocation3], 128, 128, 8
    $region9: #{gtsnet_forward.5} parent=1 // pred_fallthru
      _
    // Predicated region
    $region10: #{gtsnet_forward.5} parent=1 // pred_check
      _
    $region11: #{gtsnet_forward.5} parent=1 // pred_check_branch
      %56 = sbr.rel (0) target = $region13
    $region12: #{gtsnet_forward.5} parent=1 // pred_region
      _
    $region13: #{gtsnet_forward.5} parent=1 // pred_fallthru
      _
    // Predicated region
    $region14: #{gtsnet_forward.5} parent=1 // pred_check
      _
    $region15: #{gtsnet_forward.5} parent=1 // pred_check_branch
      %58 = sbr.rel (0) target = $region17
    $region16: #{gtsnet_forward.5} parent=1 // pred_region
      _
    $region17: #{gtsnet_forward.5} parent=1 // pred_fallthru
      _
    // Predicated region
    $region18: #{gtsnet_forward.5} parent=1 // pred_check
      _
    $region19: #{gtsnet_forward.5} parent=1 // pred_check_branch
      %60 = sbr.rel (0) target = $region21
    $region20: #{gtsnet_forward.5} parent=1 // pred_region
      %62 = vsyncadd [#allocation5], 0
      %s63 = sshll.u32 %s4, 4
      %s64 = int_to_ptr.hbm [resolvable:$true] %s63
      %s65 = sshll.u32 [#allocation4], 4
      %s66 = int_to_ptr.vmem [resolvable:$true] %s65
      %71 = dma.hbm_to_vmem [thread:$0]  %s64, 4096, %s66, [#allocation5], 128, 128, 8
    $region21: #{gtsnet_forward.5} parent=1 // pred_fallthru
      _
    // Predicated region
    $region22: #{gtsnet_forward.5} parent=1 // pred_check
      _
    $region23: #{gtsnet_forward.5} parent=1 // pred_check_branch
      %73 = sbr.rel (0) target = $region25
    $region24: #{gtsnet_forward.5} parent=1 // pred_region
      _
    $region25: #{gtsnet_forward.5} parent=1 // pred_fallthru
      _
    // Predicated region
    $region26: #{gtsnet_forward.5} parent=1 // pred_check
      _
    $region27: #{gtsnet_forward.5} parent=1 // pred_check_branch
      %75 = sbr.rel (0) target = $region29
    $region28: #{gtsnet_forward.5} parent=1 // pred_region
      _
    $region29: #{gtsnet_forward.5} parent=1 // pred_fallthru
      _
    // Predicated region
    $region30: #{gtsnet_forward.5} parent=1 // pred_check
      _
    $region31: #{gtsnet_forward.5} parent=1 // pred_check_branch
      %77 = sbr.rel (0) target = $region33
    $region32: #{gtsnet_forward.5} parent=1 // pred_region
      %79 = vsyncadd [#allocation5], 0
      %s80 = sshll.u32 %s7, 4
      %s81 = int_to_ptr.hbm [resolvable:$true] %s80
      %s82 = sshll.u32 [#allocation6], 4
      %s83 = int_to_ptr.vmem [resolvable:$true] %s82
      %88 = dma.hbm_to_vmem [thread:$0]  %s81, 4096, %s83, [#allocation5], 128, 128, 8
    $region33: #{gtsnet_forward.5} parent=1 // pred_fallthru
      _
    // Predicated region
    $region34: #{gtsnet_forward.5} parent=1 // pred_check
      _
    $region35: #{gtsnet_forward.5} parent=1 // pred_check_branch
      %90 = sbr.rel (0) target = $region37
    $region36: #{gtsnet_forward.5} parent=1 // pred_region
      %92 = vsyncadd [#allocation8], 0
      %s94 = sshll.u32 %s8, 4
      %s95 = int_to_ptr.hbm [resolvable:$true] %s94
      %s96 = sshll.u32 [#allocation7], 4
      %s97 = int_to_ptr.vmem [resolvable:$true] %s96
      %99 = dma.hbm_to_vmem [thread:$0]  %s95, 32, %s97, [#allocation8]
    $region37: #{gtsnet_forward.5} parent=1 // pred_fallthru
      _
    // Predicated region
    $region38: #{gtsnet_forward.5} parent=1 // pred_check
      _
    $region39: #{gtsnet_forward.5} parent=1 // pred_check_branch
      %101 = sbr.rel (0) target = $region41
    $region40: #{gtsnet_forward.5} parent=1 // pred_region
      %103 = vsyncadd [#allocation8], 0
      %s105 = sshll.u32 %s9, 4
      %s106 = int_to_ptr.hbm [resolvable:$true] %s105
      %s107 = sshll.u32 [#allocation9], 4
      %s108 = int_to_ptr.vmem [resolvable:$true] %s107
      %110 = dma.hbm_to_vmem [thread:$0]  %s106, 32, %s108, [#allocation8]
    $region41: #{gtsnet_forward.5} parent=1 // pred_fallthru
      _
    // Predicated region
    $region42: #{gtsnet_forward.5} parent=1 // pred_check
      _
    $region43: #{gtsnet_forward.5} parent=1 // pred_check_branch
      %112 = sbr.rel (0) target = $region45
    $region44: #{gtsnet_forward.5} parent=1 // pred_region
      %114 = vsyncadd [#allocation11], 0
      %s115 = sshll.u32 %s10, 4
      %s116 = int_to_ptr.hbm [resolvable:$true] %s115
      %s117 = sshll.u32 [#allocation10], 4
      %s118 = int_to_ptr.vmem [resolvable:$true] %s117
      %123 = dma.hbm_to_vmem [thread:$0]  %s116, 4096, %s118, [#allocation11], 128, 128, 8
    $region45: #{gtsnet_forward.5} parent=1 // pred_fallthru
      _
    // Predicated region
    $region46: #{gtsnet_forward.5} parent=1 // pred_check
      _
    $region47: #{gtsnet_forward.5} parent=1 // pred_check_branch
      %125 = sbr.rel (0) target = $region49
    $region48: #{gtsnet_forward.5} parent=1 // pred_region
      %127 = vsyncadd [#allocation11], 0
      %s129 = sshll.u32 %s11, 4
      %s130 = int_to_ptr.hbm [resolvable:$true] %s129
      %s131 = sshll.u32 [#allocation12], 4
      %s132 = int_to_ptr.vmem [resolvable:$true] %s131
      %134 = dma.hbm_to_vmem [thread:$0]  %s130, 32, %s132, [#allocation11]
    $region49: #{gtsnet_forward.5} parent=1 // pred_fallthru
      _
    // Predicated region
    $region50: #{gtsnet_forward.5} parent=1 // pred_check
      _
    $region51: #{gtsnet_forward.5} parent=1 // pred_check_branch
      %136 = sbr.rel (0) target = $region53
    $region52: #{gtsnet_forward.5} parent=1 // pred_region
      %138 = vsyncadd [#allocation14], 0
      %s140 = sshll.u32 %s12, 4
      %s141 = int_to_ptr.hbm [resolvable:$true] %s140
      %s142 = sshll.u32 [#allocation13], 4
      %s143 = int_to_ptr.vmem [resolvable:$true] %s142
      %145 = dma.hbm_to_vmem [thread:$0]  %s141, 32, %s143, [#allocation14]
    $region53: #{gtsnet_forward.5} parent=1 // pred_fallthru
      _
    // Predicated region
    $region54: #{gtsnet_forward.5} parent=1 // pred_check
      _
    $region55: #{gtsnet_forward.5} parent=1 // pred_check_branch
      %147 = sbr.rel (0) target = $region57
    $region56: #{gtsnet_forward.5} parent=1 // pred_region
      %149 = vsyncadd [#allocation14], 0
      %s150 = sshll.u32 %s13, 4
      %s151 = int_to_ptr.hbm [resolvable:$true] %s150
      %s152 = sshll.u32 [#allocation15], 4
      %s153 = int_to_ptr.vmem [resolvable:$true] %s152
      %158 = dma.hbm_to_vmem [thread:$0]  %s151, 4096, %s153, [#allocation14], 128, 128, 8
    $region57: #{gtsnet_forward.5} parent=1 // pred_fallthru
      _
    // Predicated region
    $region58: #{gtsnet_forward.5} parent=1 // pred_check
      _
    $region59: #{gtsnet_forward.5} parent=1 // pred_check_branch
      %160 = sbr.rel (0) target = $region61
    $region60: #{gtsnet_forward.5} parent=1 // pred_region
      %162 = vsyncadd [#allocation17], 0
      %s164 = sshll.u32 %s14, 4
      %s165 = int_to_ptr.hbm [resolvable:$true] %s164
      %s166 = sshll.u32 [#allocation16], 4
      %s167 = int_to_ptr.vmem [resolvable:$true] %s166
      %169 = dma.hbm_to_vmem [thread:$0]  %s165, 32, %s167, [#allocation17]
    $region61: #{gtsnet_forward.5} parent=1 // pred_fallthru
      _
    // Predicated region
    $region62: #{gtsnet_forward.5} parent=1 // pred_check
      _
    $region63: #{gtsnet_forward.5} parent=1 // pred_check_branch
      %171 = sbr.rel (0) target = $region65
    $region64: #{gtsnet_forward.5} parent=1 // pred_region
      %173 = vsyncadd [#allocation17], 0
      %s175 = sshll.u32 %s15, 4
      %s176 = int_to_ptr.hbm [resolvable:$true] %s175
      %s177 = sshll.u32 [#allocation18], 4
      %s178 = int_to_ptr.vmem [resolvable:$true] %s177
      %180 = dma.hbm_to_vmem [thread:$0]  %s176, 32, %s178, [#allocation17]
    $region65: #{gtsnet_forward.5} parent=1 // pred_fallthru
      _
    // Predicated region
    $region66: #{gtsnet_forward.5} parent=1 // pred_check
      _
    $region67: #{gtsnet_forward.5} parent=1 // pred_check_branch
      %182 = sbr.rel (0) target = $region69
    $region68: #{gtsnet_forward.5} parent=1 // pred_region
      %184 = vsyncadd [#allocation20], 0
      %s185 = sshll.u32 %s16, 4
      %s186 = int_to_ptr.hbm [resolvable:$true] %s185
      %s187 = sshll.u32 [#allocation19], 4
      %s188 = int_to_ptr.vmem [resolvable:$true] %s187
      %193 = dma.hbm_to_vmem [thread:$0]  %s186, 4096, %s188, [#allocation20], 128, 128, 8
    $region69: #{gtsnet_forward.5} parent=1 // pred_fallthru
      _
    // Predicated region
    $region70: #{gtsnet_forward.5} parent=1 // pred_check
      _
    $region71: #{gtsnet_forward.5} parent=1 // pred_check_branch
      %195 = sbr.rel (0) target = $region73
    $region72: #{gtsnet_forward.5} parent=1 // pred_region
      %197 = vsyncadd [#allocation20], 0
      %s199 = sshll.u32 %s17, 4
      %s200 = int_to_ptr.hbm [resolvable:$true] %s199
      %s201 = sshll.u32 [#allocation21], 4
      %s202 = int_to_ptr.vmem [resolvable:$true] %s201
      %204 = dma.hbm_to_vmem [thread:$0]  %s200, 32, %s202, [#allocation20]
    $region73: #{gtsnet_forward.5} parent=1 // pred_fallthru
      _
    // Predicated region
    $region74: #{gtsnet_forward.5} parent=1 // pred_check
      _
    $region75: #{gtsnet_forward.5} parent=1 // pred_check_branch
      %206 = sbr.rel (0) target = $region77
    $region76: #{gtsnet_forward.5} parent=1 // pred_region
      %208 = vsyncadd [#allocation23], 0
      %s210 = sshll.u32 %s18, 4
      %s211 = int_to_ptr.hbm [resolvable:$true] %s210
      %s212 = sshll.u32 [#allocation22], 4
      %s213 = int_to_ptr.vmem [resolvable:$true] %s212
      %215 = dma.hbm_to_vmem [thread:$0]  %s211, 32, %s213, [#allocation23]
    $region77: #{gtsnet_forward.5} parent=1 // pred_fallthru
      _
    // Predicated region
    $region78: #{gtsnet_forward.5} parent=1 // pred_check
      _
    $region79: #{gtsnet_forward.5} parent=1 // pred_check_branch
      %217 = sbr.rel (0) target = $region81
    $region80: #{gtsnet_forward.5} parent=1 // pred_region
      _
    $region81: #{gtsnet_forward.5} parent=1 // pred_fallthru
      _
    // Predicated region
    $region82: #{gtsnet_forward.5} parent=1 // pred_check
      _
    $region83: #{gtsnet_forward.5} parent=1 // pred_check_branch
      %219 = sbr.rel (0) target = $region85
    $region84: #{gtsnet_forward.5} parent=1 // pred_region
      _
    $region85: #{gtsnet_forward.5} parent=1 // pred_fallthru
      _
    // Predicated region
    $region86: #{gtsnet_forward.5} parent=1 // pred_check
      _
    $region87: #{gtsnet_forward.5} parent=1 // pred_check_branch
      %221 = sbr.rel (0) target = $region89
    $region88: #{gtsnet_forward.5} parent=1 // pred_region
      _
    $region89: #{gtsnet_forward.5} parent=1 // pred_fallthru
      _
    // Predicated region
    $region90: #{gtsnet_forward.5} parent=1 // pred_check
      _
    $region91: #{gtsnet_forward.5} parent=1 // pred_check_branch
      %223 = sbr.rel (0) target = $region93
    $region92: #{gtsnet_forward.5} parent=1 // pred_region
      _
    $region93: #{gtsnet_forward.5} parent=1 // pred_fallthru
      _
    // Predicated region
    $region94: #{gtsnet_forward.5} parent=1 // pred_check
      _
    $region95: #{gtsnet_forward.5} parent=1 // pred_check_branch
      %225 = sbr.rel (0) target = $region97
    $region96: #{gtsnet_forward.5} parent=1 // pred_region
      %227 = vsyncadd [#allocation23], 0
      %s228 = sshll.u32 %s23, 4
      %s229 = int_to_ptr.hbm [resolvable:$true] %s228
      %s230 = sshll.u32 [#allocation24], 4
      %s231 = int_to_ptr.vmem [resolvable:$true] %s230
      %236 = dma.hbm_to_vmem [thread:$0]  %s229, 2048, %s231, [#allocation23], 128, 128, 8
    $region97: #{gtsnet_forward.5} parent=1 // pred_fallthru
      _
    // Predicated region
    $region98: #{gtsnet_forward.5} parent=1 // pred_check
      _
    $region99: #{gtsnet_forward.5} parent=1 // pred_check_branch
      %238 = sbr.rel (0) target = $region101
    $region100: #{gtsnet_forward.5} parent=1 // pred_region
      _
    $region101: #{gtsnet_forward.5} parent=1 // pred_fallthru
      _
    // Predicated region
    $region102: #{gtsnet_forward.5} parent=1 // pred_check
      _
    $region103: #{gtsnet_forward.5} parent=1 // pred_check_branch
      %240 = sbr.rel (0) target = $region105
    $region104: #{gtsnet_forward.5} parent=1 // pred_region
      %242 = vsyncadd [#allocation26], 0
      %s244 = sshll.u32 %s25, 4
      %s245 = int_to_ptr.hbm [resolvable:$true] %s244
      %s246 = sshll.u32 [#allocation25], 4
      %s247 = int_to_ptr.vmem [resolvable:$true] %s246
      %249 = dma.hbm_to_vmem [thread:$0]  %s245, 32, %s247, [#allocation26]
    $region105: #{gtsnet_forward.5} parent=1 // pred_fallthru
      _
    // Predicated region
    $region106: #{gtsnet_forward.5} parent=1 // pred_check
      _
    $region107: #{gtsnet_forward.5} parent=1 // pred_check_branch
      %251 = sbr.rel (0) target = $region109
    $region108: #{gtsnet_forward.5} parent=1 // pred_region
      %253 = dma.done [#allocation3], 2048
    $region109: #{gtsnet_forward.5} parent=1 // pred_fallthru
      _
    // Predicated region
    $region110: #{gtsnet_forward.5} parent=1 // pred_check
      _
    $region111: #{gtsnet_forward.5} parent=1 // pred_check_branch
      %255 = sbr.rel (0) target = $region113
    $region112: #{gtsnet_forward.5} parent=1 // pred_region
      %257 = dma.done [#allocation5], 4096
    $region113: #{gtsnet_forward.5} parent=1 // pred_fallthru
      _
    // Predicated region
    $region114: #{gtsnet_forward.5} parent=1 // pred_check
      _
    $region115: #{gtsnet_forward.5} parent=1 // pred_check_branch
      %259 = sbr.rel (0) target = $region117
    $region116: #{gtsnet_forward.5} parent=1 // pred_region
      %261 = dma.done [#allocation5], 4096
    $region117: #{gtsnet_forward.5} parent=1 // pred_fallthru
      _
    // Predicated region
    $region118: #{gtsnet_forward.5} parent=1 // pred_check
      _
    $region119: #{gtsnet_forward.5} parent=1 // pred_check_branch
      %263 = sbr.rel (0) target = $region121
    $region120: #{gtsnet_forward.5} parent=1 // pred_region
      %265 = dma.done [#allocation8], 32
    $region121: #{gtsnet_forward.5} parent=1 // pred_fallthru
      _
    // Predicated region
    $region122: #{gtsnet_forward.5} parent=1 // pred_check
      _
    $region123: #{gtsnet_forward.5} parent=1 // pred_check_branch
      %267 = sbr.rel (0) target = $region125
    $region124: #{gtsnet_forward.5} parent=1 // pred_region
      %269 = dma.done [#allocation8], 32
    $region125: #{gtsnet_forward.5} parent=1 // pred_fallthru
      _
    // Predicated region
    $region126: #{gtsnet_forward.5} parent=1 // pred_check
      _
    $region127: #{gtsnet_forward.5} parent=1 // pred_check_branch
      %271 = sbr.rel (0) target = $region129
    $region128: #{gtsnet_forward.5} parent=1 // pred_region
      %273 = dma.done [#allocation11], 4096
    $region129: #{gtsnet_forward.5} parent=1 // pred_fallthru
      _
    // Predicated region
    $region130: #{gtsnet_forward.5} parent=1 // pred_check
      _
    $region131: #{gtsnet_forward.5} parent=1 // pred_check_branch
      %275 = sbr.rel (0) target = $region133
    $region132: #{gtsnet_forward.5} parent=1 // pred_region
      %277 = dma.done [#allocation11], 32
    $region133: #{gtsnet_forward.5} parent=1 // pred_fallthru
      _
    // Predicated region
    $region134: #{gtsnet_forward.5} parent=1 // pred_check
      _
    $region135: #{gtsnet_forward.5} parent=1 // pred_check_branch
      %279 = sbr.rel (0) target = $region137
    $region136: #{gtsnet_forward.5} parent=1 // pred_region
      %281 = dma.done [#allocation14], 32
    $region137: #{gtsnet_forward.5} parent=1 // pred_fallthru
      _
    // Predicated region
    $region138: #{gtsnet_forward.5} parent=1 // pred_check
      _
    $region139: #{gtsnet_forward.5} parent=1 // pred_check_branch
      %283 = sbr.rel (0) target = $region141
    $region140: #{gtsnet_forward.5} parent=1 // pred_region
      %285 = dma.done [#allocation14], 4096
    $region141: #{gtsnet_forward.5} parent=1 // pred_fallthru
      _
    // Predicated region
    $region142: #{gtsnet_forward.5} parent=1 // pred_check
      _
    $region143: #{gtsnet_forward.5} parent=1 // pred_check_branch
      %287 = sbr.rel (0) target = $region145
    $region144: #{gtsnet_forward.5} parent=1 // pred_region
      %289 = dma.done [#allocation17], 32
    $region145: #{gtsnet_forward.5} parent=1 // pred_fallthru
      _
    // Predicated region
    $region146: #{gtsnet_forward.5} parent=1 // pred_check
      _
    $region147: #{gtsnet_forward.5} parent=1 // pred_check_branch
      %291 = sbr.rel (0) target = $region149
    $region148: #{gtsnet_forward.5} parent=1 // pred_region
      %293 = dma.done [#allocation17], 32
    $region149: #{gtsnet_forward.5} parent=1 // pred_fallthru
      _
    // Predicated region
    $region150: #{gtsnet_forward.5} parent=1 // pred_check
      _
    $region151: #{gtsnet_forward.5} parent=1 // pred_check_branch
      %295 = sbr.rel (0) target = $region153
    $region152: #{gtsnet_forward.5} parent=1 // pred_region
      %297 = dma.done [#allocation20], 4096
    $region153: #{gtsnet_forward.5} parent=1 // pred_fallthru
      _
    // Predicated region
    $region154: #{gtsnet_forward.5} parent=1 // pred_check
      _
    $region155: #{gtsnet_forward.5} parent=1 // pred_check_branch
      %299 = sbr.rel (0) target = $region157
    $region156: #{gtsnet_forward.5} parent=1 // pred_region
      %301 = dma.done [#allocation20], 32
    $region157: #{gtsnet_forward.5} parent=1 // pred_fallthru
      _
    // Predicated region
    $region158: #{gtsnet_forward.5} parent=1 // pred_check
      _
    $region159: #{gtsnet_forward.5} parent=1 // pred_check_branch
      %303 = sbr.rel (0) target = $region161
    $region160: #{gtsnet_forward.5} parent=1 // pred_region
      %305 = dma.done [#allocation23], 32
    $region161: #{gtsnet_forward.5} parent=1 // pred_fallthru
      _
    // Predicated region
    $region162: #{gtsnet_forward.5} parent=1 // pred_check
      _
    $region163: #{gtsnet_forward.5} parent=1 // pred_check_branch
      %307 = sbr.rel (0) target = $region165
    $region164: #{gtsnet_forward.5} parent=1 // pred_region
      %309 = dma.done [#allocation23], 2048
    $region165: #{gtsnet_forward.5} parent=1 // pred_fallthru
      _
    // Predicated region
    $region166: #{gtsnet_forward.5} parent=1 // pred_check
      _
    $region167: #{gtsnet_forward.5} parent=1 // pred_check_branch
      %311 = sbr.rel (0) target = $region169
    $region168: #{gtsnet_forward.5} parent=1 // pred_region
      %313 = dma.done [#allocation26], 32
    $region169: #{gtsnet_forward.5} parent=1 // pred_fallthru
      _
    %v315 = vld [vmem:[%s0] sm:$0xf]
    %v316 = vld [vmem:[%s0 + $0x4] sm:$0xf]
    %v317 = vunpack.c.l.bf16 %v315
    %v318 = vunpack.c.l.bf16 %v316
    %v319 = vmax.f32 %v317, %v318
    %v320 = vpack.c.bf16 %v319, %v319
    %v321 = vld [vmem:[#allocation24] sm:$0xff]
    %v322 = vld [vmem:[#allocation24 + $0x8] sm:$0xff]
    %v323 = vld [vmem:[#allocation24 + $0x10] sm:$0xff]
    %v324 = vld [vmem:[#allocation24 + $0x18] sm:$0xff]
    %v325 = vld [vmem:[#allocation24 + $0x20] sm:$0xff]
    %v326 = vld [vmem:[#allocation24 + $0x28] sm:$0xff]
    %v327 = vld [vmem:[#allocation24 + $0x30] sm:$0xff]
    %v328 = vld [vmem:[#allocation24 + $0x38] sm:$0xff]
    %v329 = vld [vmem:[#allocation24 + $0x40] sm:$0xff]
    %v330 = vld [vmem:[#allocation24 + $0x48] sm:$0xff]
    %v331 = vld [vmem:[#allocation24 + $0x50] sm:$0xff]
    %v332 = vld [vmem:[#allocation24 + $0x58] sm:$0xff]
    %v333 = vld [vmem:[#allocation24 + $0x60] sm:$0xff]
    %v334 = vld [vmem:[#allocation24 + $0x68] sm:$0xff]
    %v335 = vld [vmem:[#allocation24 + $0x70] sm:$0xff]
    %v336 = vld [vmem:[#allocation24 + $0x78] sm:$0xff]
    %v353 = vunpack.c.l.b16 %v321
    %v354 = vunpack.c.h.b16 %v321
    %v355 = vunpack.c.l.b16 %v322
    %v356 = vunpack.c.h.b16 %v322
    %v357 = vunpack.c.l.b16 %v323
    %v358 = vunpack.c.h.b16 %v323
    %v359 = vunpack.c.l.b16 %v324
    %v360 = vunpack.c.h.b16 %v324
    %v361 = vunpack.c.l.b16 %v325
    %v362 = vunpack.c.h.b16 %v325
    %v363 = vunpack.c.l.b16 %v326
    %v364 = vunpack.c.h.b16 %v326
    %v365 = vunpack.c.l.b16 %v327
    %v366 = vunpack.c.h.b16 %v327
    %v367 = vunpack.c.l.b16 %v328
    %v368 = vunpack.c.h.b16 %v328
    %v369 = vunpack.c.l.b16 %v329
    %v370 = vunpack.c.h.b16 %v329
    %v371 = vunpack.c.l.b16 %v330
    %v372 = vunpack.c.h.b16 %v330
    %v373 = vunpack.c.l.b16 %v331
    %v374 = vunpack.c.h.b16 %v331
    %v375 = vunpack.c.l.b16 %v332
    %v376 = vunpack.c.h.b16 %v332
    %v377 = vunpack.c.l.b16 %v333
    %v378 = vunpack.c.h.b16 %v333
    %v379 = vunpack.c.l.b16 %v334
    %v380 = vunpack.c.h.b16 %v334
    %v381 = vunpack.c.l.b16 %v335
    %v382 = vunpack.c.h.b16 %v335
    %v383 = vunpack.c.l.b16 %v336
    %v384 = vunpack.c.h.b16 %v336
    %v385 = vpack.c.b16 %v355, %v353
    %v386 = vpack.c.b16 %v356, %v354
    %v387 = vpack.c.b16 %v359, %v357
    %v388 = vpack.c.b16 %v360, %v358
    %v389 = vpack.c.b16 %v363, %v361
    %v390 = vpack.c.b16 %v364, %v362
    %v391 = vpack.c.b16 %v367, %v365
    %v392 = vpack.c.b16 %v368, %v366
    %v393 = vpack.c.b16 %v371, %v369
    %v394 = vpack.c.b16 %v372, %v370
    %v395 = vpack.c.b16 %v375, %v373
    %v396 = vpack.c.b16 %v376, %v374
    %v397 = vpack.c.b16 %v379, %v377
    %v398 = vpack.c.b16 %v380, %v378
    %v399 = vpack.c.b16 %v383, %v381
    %v400 = vpack.c.b16 %v384, %v382
    %417 = vmatpush.bf16.msra.mxu0 %v399
    %418 = vmatpush.bf16.msra.mxu0 %v397
    %419 = vmatpush.bf16.msra.mxu0 %v395
    %420 = vmatpush.bf16.msra.mxu0 %v393
    %421 = vmatpush.bf16.msra.mxu0 %v391
    %422 = vmatpush.bf16.msra.mxu0 %v389
    %423 = vmatpush.bf16.msra.mxu0 %v387
    %424 = vmatpush.bf16.msra.mxu0 %v385
    %425 = vmatmul.bf16.gmra.mxu0 %v320
    %v426 = vpop.f32.mrf.mxu0
    %v427 = vadd.f32 0.0, %v426
    %v428 = vpop.f32.mrf.mxu0
    %429 = vdwg.mxu0
    %430 = vmatpush.bf16.msra.mxu0 %v400
    %431 = vmatpush.bf16.msra.mxu0 %v398
    %432 = vmatpush.bf16.msra.mxu0 %v396
    %433 = vmatpush.bf16.msra.mxu0 %v394
    %434 = vmatpush.bf16.msra.mxu0 %v392
    %435 = vmatpush.bf16.msra.mxu0 %v390
    %436 = vmatpush.bf16.msra.mxu0 %v388
    %437 = vmatpush.bf16.msra.mxu0 %v386
    %438 = vmatmul.bf16.gmra.mxu0 %v320
    %v439 = vpop.f32.mrf.mxu0
    %v440 = vadd.f32 0.0, %v439
    %v441 = vpop.f32.mrf.mxu0
    %442 = vdwg.mxu0
    %v443 = vld [vmem:[%s24] sm:$0x3]
    %v445 = vperm.slane %v443, 0
    %v446 = vperm.slane %v443, 1
    %v449 = vmul.f32 %v427, %v445
    %v450 = vmul.f32 %v440, %v446
    %v451 = vld [vmem:[#allocation25] sm:$0x3]
    %v453 = vperm.slane %v451, 0
    %v454 = vperm.slane %v451, 1
    %v457 = vadd.f32 %v449, %v453
    %v458 = vadd.f32 %v450, %v454
    %v459 = vld [vmem:[%s19] sm:$0x3]
    %v460 = vld [vmem:[%s20] sm:$0x3]
    %v461 = vld [vmem:[%s21] sm:$0xf]
    %v462 = vld [vmem:[%s22] sm:$0xf]
    %v463 = vunpack.c.l.bf16 %v459
    %v464 = vsub.f32 1.0, %v463
    %v466 = vperm.slane %v464, 0
    %v467 = vperm.slane %v464, 2
    %v470 = vpack.c.bf16 %v467, %v466
    %v471 = vunpack.c.l.bf16 %v470
    %v472 = vunpack.c.h.bf16 %v470
    %v473 = vunpack.c.l.bf16 %v460
    %v475 = vperm.slane %v473, 0
    %v476 = vperm.slane %v473, 2
    %v479 = vsub.f32 %v471, %v475
    %v480 = vsub.f32 %v472, %v476
    %v481 = vpack.c.bf16 %v480, %v479
    %483 = vst [vmem:[#allocation1] ss:$9 sm:$0xff] %v459
    %v484 = vld [vmem:[#allocation1] sm:$0xff]
    %v485 = vld [vmem:[#allocation1 + $0x9] sm:$0xff]
    %v486 = vpack.i.b16 %v484, %v484
    %v488 = vperm.slane %v486, 0
    %v489 = vpack.i.b16 %v485, %v485
    %v491 = vperm.slane %v489, 0
    %493 = vset.pattern.permute.xlu0 0
    %494 = vperm.xlu0 %493, %v461
    %v495 = vpop.permute.xlu0 %494
    %v498 = vunpack.c.l.s4 839922192
    %v499 = vunpack.c.0.s8 %v498
    %v500 = vperm.slane %v495, %v499
    %v501 = vunpack.c.l.bf16 %v488
    %v502 = vunpack.c.l.bf16 %v491
    %v503 = vunpack.c.l.bf16 %v500
    %v504 = vmul.f32 %v501, %v503
    %v505 = vmul.f32 %v502, %v503
    %v506 = vpack.c.bf16 %v505, %v504
    %508 = vst [vmem:[#allocation1] ss:$9 sm:$0xff] %v460
    %v509 = vld [vmem:[#allocation1] sm:$0xff]
    %v510 = vld [vmem:[#allocation1 + $0x9] sm:$0xff]
    %v511 = vpack.i.b16 %v509, %v509
    %v513 = vperm.slane %v511, 0
    %v514 = vpack.i.b16 %v510, %v510
    %v516 = vperm.slane %v514, 0
    %518 = vset.pattern.permute.xlu0 0
    %519 = vperm.xlu0 %518, %v462
    %v520 = vpop.permute.xlu0 %519
    %v523 = vunpack.c.l.s4 839922192
    %v524 = vunpack.c.0.s8 %v523
    %v525 = vperm.slane %v520, %v524
    %v526 = vunpack.c.l.bf16 %v513
    %v527 = vunpack.c.l.bf16 %v516
    %v528 = vunpack.c.l.bf16 %v525
    %v529 = vmul.f32 %v526, %v528
    %v530 = vmul.f32 %v527, %v528
    %v531 = vpack.c.bf16 %v530, %v529
    %v532 = vld [vmem:[#allocation2] sm:$0xff]
    %v533 = vld [vmem:[#allocation2 + $0x8] sm:$0xff]
    %v534 = vld [vmem:[#allocation2 + $0x10] sm:$0xff]
    %v535 = vld [vmem:[#allocation2 + $0x18] sm:$0xff]
    %v536 = vld [vmem:[#allocation2 + $0x20] sm:$0xff]
    %v537 = vld [vmem:[#allocation2 + $0x28] sm:$0xff]
    %v538 = vld [vmem:[#allocation2 + $0x30] sm:$0xff]
    %v539 = vld [vmem:[#allocation2 + $0x38] sm:$0xff]
    %v540 = vld [vmem:[#allocation2 + $0x40] sm:$0xff]
    %v541 = vld [vmem:[#allocation2 + $0x48] sm:$0xff]
    %v542 = vld [vmem:[#allocation2 + $0x50] sm:$0xff]
    %v543 = vld [vmem:[#allocation2 + $0x58] sm:$0xff]
    %v544 = vld [vmem:[#allocation2 + $0x60] sm:$0xff]
    %v545 = vld [vmem:[#allocation2 + $0x68] sm:$0xff]
    %v546 = vld [vmem:[#allocation2 + $0x70] sm:$0xff]
    %v547 = vld [vmem:[#allocation2 + $0x78] sm:$0xff]
    %v564 = vunpack.c.l.b16 %v532
    %v565 = vunpack.c.h.b16 %v532
    %v566 = vunpack.c.l.b16 %v533
    %v567 = vunpack.c.h.b16 %v533
    %v568 = vunpack.c.l.b16 %v534
    %v569 = vunpack.c.h.b16 %v534
    %v570 = vunpack.c.l.b16 %v535
    %v571 = vunpack.c.h.b16 %v535
    %v572 = vunpack.c.l.b16 %v536
    %v573 = vunpack.c.h.b16 %v536
    %v574 = vunpack.c.l.b16 %v537
    %v575 = vunpack.c.h.b16 %v537
    %v576 = vunpack.c.l.b16 %v538
    %v577 = vunpack.c.h.b16 %v538
    %v578 = vunpack.c.l.b16 %v539
    %v579 = vunpack.c.h.b16 %v539
    %v580 = vunpack.c.l.b16 %v540
    %v581 = vunpack.c.h.b16 %v540
    %v582 = vunpack.c.l.b16 %v541
    %v583 = vunpack.c.h.b16 %v541
    %v584 = vunpack.c.l.b16 %v542
    %v585 = vunpack.c.h.b16 %v542
    %v586 = vunpack.c.l.b16 %v543
    %v587 = vunpack.c.h.b16 %v543
    %v588 = vunpack.c.l.b16 %v544
    %v589 = vunpack.c.h.b16 %v544
    %v590 = vunpack.c.l.b16 %v545
    %v591 = vunpack.c.h.b16 %v545
    %v592 = vunpack.c.l.b16 %v546
    %v593 = vunpack.c.h.b16 %v546
    %v594 = vunpack.c.l.b16 %v547
    %v595 = vunpack.c.h.b16 %v547
    %v596 = vpack.c.b16 %v566, %v564
    %v597 = vpack.c.b16 %v567, %v565
    %v598 = vpack.c.b16 %v570, %v568
    %v599 = vpack.c.b16 %v571, %v569
    %v600 = vpack.c.b16 %v574, %v572
    %v601 = vpack.c.b16 %v575, %v573
    %v602 = vpack.c.b16 %v578, %v576
    %v603 = vpack.c.b16 %v579, %v577
    %v604 = vpack.c.b16 %v582, %v580
    %v605 = vpack.c.b16 %v583, %v581
    %v606 = vpack.c.b16 %v586, %v584
    %v607 = vpack.c.b16 %v587, %v585
    %v608 = vpack.c.b16 %v590, %v588
    %v609 = vpack.c.b16 %v591, %v589
    %v610 = vpack.c.b16 %v594, %v592
    %v611 = vpack.c.b16 %v595, %v593
    %628 = vmatpush.bf16.msra.mxu0 %v610
    %629 = vmatpush.bf16.msra.mxu0 %v608
    %630 = vmatpush.bf16.msra.mxu0 %v606
    %631 = vmatpush.bf16.msra.mxu0 %v604
    %632 = vmatpush.bf16.msra.mxu0 %v602
    %633 = vmatpush.bf16.msra.mxu0 %v600
    %634 = vmatpush.bf16.msra.mxu0 %v598
    %635 = vmatpush.bf16.msra.mxu0 %v596
    %636 = vmatmul.bf16.gmra.mxu0 %v320
    %v637 = vpop.f32.mrf.mxu0
    %v638 = vadd.f32 0.0, %v637
    %v639 = vpop.f32.mrf.mxu0
    %640 = vdwg.mxu0
    %641 = vmatpush.bf16.msra.mxu0 %v611
    %642 = vmatpush.bf16.msra.mxu0 %v609
    %643 = vmatpush.bf16.msra.mxu0 %v607
    %644 = vmatpush.bf16.msra.mxu0 %v605
    %645 = vmatpush.bf16.msra.mxu0 %v603
    %646 = vmatpush.bf16.msra.mxu0 %v601
    %647 = vmatpush.bf16.msra.mxu0 %v599
    %648 = vmatpush.bf16.msra.mxu0 %v597
    %649 = vmatmul.bf16.gmra.mxu0 %v320
    %v650 = vpop.f32.mrf.mxu0
    %v651 = vadd.f32 0.0, %v650
    %v652 = vpop.f32.mrf.mxu0
    %653 = vdwg.mxu0
    %v654 = vld [vmem:[%s2] sm:$0x3]
    %v656 = vperm.slane %v654, 0
    %v657 = vperm.slane %v654, 1
    %v660 = vmul.f32 %v638, %v656
    %v661 = vmul.f32 %v651, %v657
    %v662 = vld [vmem:[%s3] sm:$0x3]
    %v664 = vperm.slane %v662, 0
    %v665 = vperm.slane %v662, 1
    %v668 = vadd.f32 %v660, %v664
    %v669 = vadd.f32 %v661, %v665
    %v670 = vmax.f32 %v668, 0.0
    %v671 = vmax.f32 %v669, 0.0
    %v672 = vpack.c.bf16 %v671, %v670
    %v674 = vunpack.c.l.b16 %v672
    %v675 = vunpack.c.h.b16 %v672
    %v676 = vpack.c.b16 %v674, %v674
    %v677 = vpack.c.b16 %v675, %v675
    %v679 = vshrl.u32 %v676, 16
    %v681 = vshll.u32 %v676, 16
    %v683 = vrot.slane %v681, 1
    %v684 = vor.u32 %v679, %v683
    %v686 = vshrl.u32 %v677, 16
    %v688 = vshll.u32 %v677, 16
    %v690 = vrot.slane %v688, 1
    %v691 = vor.u32 %v686, %v690
    %vm694 = vcmask 1043456
    %vm695 = vsmask.f32 3328
    %vm696 = vmand %vm694, %vm695
    %v697 = vsel %vm696, %v684, 0
    %v698 = vsel %vm696, %v691, 0
    %v699 = vrot.slane %v679, 7
    %v700 = vor.u32 %v699, %v681
    %v701 = vrot.slane %v686, 7
    %v702 = vor.u32 %v701, %v688
    %vm705 = vcmask 1040384
    %vm706 = vsmask.f32 256
    %vm707 = vmand %vm705, %vm706
    %v708 = vsel %vm707, 0, %v700
    %v709 = vsel %vm707, 0, %v702
    %v711 = vunpack.c.l.b16 %v481
    %v712 = vunpack.c.h.b16 %v481
    %v713 = vpack.c.b16 %v711, %v711
    %v714 = vpack.c.b16 %v712, %v712
    %v716 = vpack.i.b16 %v713, %v713
    %v718 = vperm.slane %v716, 0
    %v720 = vpack.i.b16 %v714, %v714
    %v722 = vperm.slane %v720, 0
    %v723 = vunpack.c.l.bf16 %v672
    %v724 = vunpack.c.h.bf16 %v672
    %v725 = vunpack.c.l.bf16 %v718
    %v726 = vunpack.c.l.bf16 %v722
    %v727 = vmul.f32 %v723, %v725
    %v728 = vmul.f32 %v724, %v726
    %v729 = vpack.c.bf16 %v728, %v727
    %v730 = vunpack.c.l.bf16 %v697
    %v731 = vunpack.c.l.bf16 %v698
    %v732 = vunpack.c.l.bf16 %v506
    %v733 = vunpack.c.h.bf16 %v506
    %v734 = vmul.f32 %v730, %v732
    %v735 = vmul.f32 %v731, %v733
    %v736 = vpack.c.bf16 %v735, %v734
    %v737 = vunpack.c.l.bf16 %v729
    %v738 = vunpack.c.h.bf16 %v729
    %v739 = vunpack.c.l.bf16 %v736
    %v740 = vunpack.c.h.bf16 %v736
    %v741 = vadd.f32 %v737, %v739
    %v742 = vadd.f32 %v738, %v740
    %v743 = vpack.c.bf16 %v742, %v741
    %v744 = vunpack.c.l.bf16 %v708
    %v745 = vunpack.c.l.bf16 %v709
    %v746 = vunpack.c.l.bf16 %v531
    %v747 = vunpack.c.h.bf16 %v531
    %v748 = vmul.f32 %v744, %v746
    %v749 = vmul.f32 %v745, %v747
    %v750 = vpack.c.bf16 %v749, %v748
    %v751 = vunpack.c.l.bf16 %v743
    %v752 = vunpack.c.h.bf16 %v743
    %v753 = vunpack.c.l.bf16 %v750
    %v754 = vunpack.c.h.bf16 %v750
    %v755 = vadd.f32 %v751, %v753
    %v756 = vadd.f32 %v752, %v754
    %v757 = vpack.c.bf16 %v755, %v755
    %v758 = vpack.c.bf16 %v756, %v756
    %v759 = vld [vmem:[#allocation4] sm:$0xff]
    %v760 = vld [vmem:[#allocation4 + $0x8] sm:$0xff]
    %v761 = vld [vmem:[#allocation4 + $0x10] sm:$0xff]
    %v762 = vld [vmem:[#allocation4 + $0x18] sm:$0xff]
    %v763 = vld [vmem:[#allocation4 + $0x20] sm:$0xff]
    %v764 = vld [vmem:[#allocation4 + $0x28] sm:$0xff]
    %v765 = vld [vmem:[#allocation4 + $0x30] sm:$0xff]
    %v766 = vld [vmem:[#allocation4 + $0x38] sm:$0xff]
    %v767 = vld [vmem:[#allocation4 + $0x40] sm:$0xff]
    %v768 = vld [vmem:[#allocation4 + $0x48] sm:$0xff]
    %v769 = vld [vmem:[#allocation4 + $0x50] sm:$0xff]
    %v770 = vld [vmem:[#allocation4 + $0x58] sm:$0xff]
    %v771 = vld [vmem:[#allocation4 + $0x60] sm:$0xff]
    %v772 = vld [vmem:[#allocation4 + $0x68] sm:$0xff]
    %v773 = vld [vmem:[#allocation4 + $0x70] sm:$0xff]
    %v774 = vld [vmem:[#allocation4 + $0x78] sm:$0xff]
    %v775 = vld [vmem:[#allocation4 + $0x80] sm:$0xff]
    %v776 = vld [vmem:[#allocation4 + $0x88] sm:$0xff]
    %v777 = vld [vmem:[#allocation4 + $0x90] sm:$0xff]
    %v778 = vld [vmem:[#allocation4 + $0x98] sm:$0xff]
    %v779 = vld [vmem:[#allocation4 + $0xa0] sm:$0xff]
    %v780 = vld [vmem:[#allocation4 + $0xa8] sm:$0xff]
    %v781 = vld [vmem:[#allocation4 + $0xb0] sm:$0xff]
    %v782 = vld [vmem:[#allocation4 + $0xb8] sm:$0xff]
    %v783 = vld [vmem:[#allocation4 + $0xc0] sm:$0xff]
    %v784 = vld [vmem:[#allocation4 + $0xc8] sm:$0xff]
    %v785 = vld [vmem:[#allocation4 + $0xd0] sm:$0xff]
    %v786 = vld [vmem:[#allocation4 + $0xd8] sm:$0xff]
    %v787 = vld [vmem:[#allocation4 + $0xe0] sm:$0xff]
    %v788 = vld [vmem:[#allocation4 + $0xe8] sm:$0xff]
    %v789 = vld [vmem:[#allocation4 + $0xf0] sm:$0xff]
    %v790 = vld [vmem:[#allocation4 + $0xf8] sm:$0xff]
    %v823 = vunpack.c.l.b16 %v759
    %v824 = vunpack.c.h.b16 %v759
    %v825 = vunpack.c.l.b16 %v760
    %v826 = vunpack.c.h.b16 %v760
    %v827 = vunpack.c.l.b16 %v761
    %v828 = vunpack.c.h.b16 %v761
    %v829 = vunpack.c.l.b16 %v762
    %v830 = vunpack.c.h.b16 %v762
    %v831 = vunpack.c.l.b16 %v763
    %v832 = vunpack.c.h.b16 %v763
    %v833 = vunpack.c.l.b16 %v764
    %v834 = vunpack.c.h.b16 %v764
    %v835 = vunpack.c.l.b16 %v765
    %v836 = vunpack.c.h.b16 %v765
    %v837 = vunpack.c.l.b16 %v766
    %v838 = vunpack.c.h.b16 %v766
    %v839 = vunpack.c.l.b16 %v767
    %v840 = vunpack.c.h.b16 %v767
    %v841 = vunpack.c.l.b16 %v768
    %v842 = vunpack.c.h.b16 %v768
    %v843 = vunpack.c.l.b16 %v769
    %v844 = vunpack.c.h.b16 %v769
    %v845 = vunpack.c.l.b16 %v770
    %v846 = vunpack.c.h.b16 %v770
    %v847 = vunpack.c.l.b16 %v771
    %v848 = vunpack.c.h.b16 %v771
    %v849 = vunpack.c.l.b16 %v772
    %v850 = vunpack.c.h.b16 %v772
    %v851 = vunpack.c.l.b16 %v773
    %v852 = vunpack.c.h.b16 %v773
    %v853 = vunpack.c.l.b16 %v774
    %v854 = vunpack.c.h.b16 %v774
    %v855 = vunpack.c.l.b16 %v775
    %v856 = vunpack.c.h.b16 %v775
    %v857 = vunpack.c.l.b16 %v776
    %v858 = vunpack.c.h.b16 %v776
    %v859 = vunpack.c.l.b16 %v777
    %v860 = vunpack.c.h.b16 %v777
    %v861 = vunpack.c.l.b16 %v778
    %v862 = vunpack.c.h.b16 %v778
    %v863 = vunpack.c.l.b16 %v779
    %v864 = vunpack.c.h.b16 %v779
    %v865 = vunpack.c.l.b16 %v780
    %v866 = vunpack.c.h.b16 %v780
    %v867 = vunpack.c.l.b16 %v781
    %v868 = vunpack.c.h.b16 %v781
    %v869 = vunpack.c.l.b16 %v782
    %v870 = vunpack.c.h.b16 %v782
    %v871 = vunpack.c.l.b16 %v783
    %v872 = vunpack.c.h.b16 %v783
    %v873 = vunpack.c.l.b16 %v784
    %v874 = vunpack.c.h.b16 %v784
    %v875 = vunpack.c.l.b16 %v785
    %v876 = vunpack.c.h.b16 %v785
    %v877 = vunpack.c.l.b16 %v786
    %v878 = vunpack.c.h.b16 %v786
    %v879 = vunpack.c.l.b16 %v787
    %v880 = vunpack.c.h.b16 %v787
    %v881 = vunpack.c.l.b16 %v788
    %v882 = vunpack.c.h.b16 %v788
    %v883 = vunpack.c.l.b16 %v789
    %v884 = vunpack.c.h.b16 %v789
    %v885 = vunpack.c.l.b16 %v790
    %v886 = vunpack.c.h.b16 %v790
    %v887 = vpack.c.b16 %v825, %v823
    %v888 = vpack.c.b16 %v826, %v824
    %v889 = vpack.c.b16 %v829, %v827
    %v890 = vpack.c.b16 %v830, %v828
    %v891 = vpack.c.b16 %v833, %v831
    %v892 = vpack.c.b16 %v834, %v832
    %v893 = vpack.c.b16 %v837, %v835
    %v894 = vpack.c.b16 %v838, %v836
    %v895 = vpack.c.b16 %v841, %v839
    %v896 = vpack.c.b16 %v842, %v840
    %v897 = vpack.c.b16 %v845, %v843
    %v898 = vpack.c.b16 %v846, %v844
    %v899 = vpack.c.b16 %v849, %v847
    %v900 = vpack.c.b16 %v850, %v848
    %v901 = vpack.c.b16 %v853, %v851
    %v902 = vpack.c.b16 %v854, %v852
    %v903 = vpack.c.b16 %v857, %v855
    %v904 = vpack.c.b16 %v858, %v856
    %v905 = vpack.c.b16 %v861, %v859
    %v906 = vpack.c.b16 %v862, %v860
    %v907 = vpack.c.b16 %v865, %v863
    %v908 = vpack.c.b16 %v866, %v864
    %v909 = vpack.c.b16 %v869, %v867
    %v910 = vpack.c.b16 %v870, %v868
    %v911 = vpack.c.b16 %v873, %v871
    %v912 = vpack.c.b16 %v874, %v872
    %v913 = vpack.c.b16 %v877, %v875
    %v914 = vpack.c.b16 %v878, %v876
    %v915 = vpack.c.b16 %v881, %v879
    %v916 = vpack.c.b16 %v882, %v880
    %v917 = vpack.c.b16 %v885, %v883
    %v918 = vpack.c.b16 %v886, %v884
    %951 = vmatpush.bf16.msra.mxu0 %v901
    %952 = vmatpush.bf16.msra.mxu0 %v899
    %953 = vmatpush.bf16.msra.mxu0 %v897
    %954 = vmatpush.bf16.msra.mxu0 %v895
    %955 = vmatpush.bf16.msra.mxu0 %v893
    %956 = vmatpush.bf16.msra.mxu0 %v891
    %957 = vmatpush.bf16.msra.mxu0 %v889
    %958 = vmatpush.bf16.msra.mxu0 %v887
    %959 = vmatmul.bf16.gmra.mxu0 %v757
    %v960 = vpop.f32.mrf.mxu0
    %v961 = vadd.f32 0.0, %v960
    %v962 = vpop.f32.mrf.mxu0
    %963 = vdwg.mxu0
    %964 = vmatpush.bf16.msra.mxu0 %v917
    %965 = vmatpush.bf16.msra.mxu0 %v915
    %966 = vmatpush.bf16.msra.mxu0 %v913
    %967 = vmatpush.bf16.msra.mxu0 %v911
    %968 = vmatpush.bf16.msra.mxu0 %v909
    %969 = vmatpush.bf16.msra.mxu0 %v907
    %970 = vmatpush.bf16.msra.mxu0 %v905
    %971 = vmatpush.bf16.msra.mxu0 %v903
    %972 = vmatmul.bf16.gmra.mxu0 %v758
    %v973 = vpop.f32.mrf.mxu0
    %v974 = vadd.f32 %v961, %v973
    %v975 = vpop.f32.mrf.mxu0
    %976 = vdwg.mxu0
    %977 = vmatpush.bf16.msra.mxu0 %v902
    %978 = vmatpush.bf16.msra.mxu0 %v900
    %979 = vmatpush.bf16.msra.mxu0 %v898
    %980 = vmatpush.bf16.msra.mxu0 %v896
    %981 = vmatpush.bf16.msra.mxu0 %v894
    %982 = vmatpush.bf16.msra.mxu0 %v892
    %983 = vmatpush.bf16.msra.mxu0 %v890
    %984 = vmatpush.bf16.msra.mxu0 %v888
    %985 = vmatmul.bf16.gmra.mxu0 %v757
    %v986 = vpop.f32.mrf.mxu0
    %v987 = vadd.f32 0.0, %v986
    %v988 = vpop.f32.mrf.mxu0
    %989 = vdwg.mxu0
    %990 = vmatpush.bf16.msra.mxu0 %v918
    %991 = vmatpush.bf16.msra.mxu0 %v916
    %992 = vmatpush.bf16.msra.mxu0 %v914
    %993 = vmatpush.bf16.msra.mxu0 %v912
    %994 = vmatpush.bf16.msra.mxu0 %v910
    %995 = vmatpush.bf16.msra.mxu0 %v908
    %996 = vmatpush.bf16.msra.mxu0 %v906
    %997 = vmatpush.bf16.msra.mxu0 %v904
    %998 = vmatmul.bf16.gmra.mxu0 %v758
    %v999 = vpop.f32.mrf.mxu0
    %v1000 = vadd.f32 %v987, %v999
    %v1001 = vpop.f32.mrf.mxu0
    %1002 = vdwg.mxu0
    %v1003 = vld [vmem:[%s5] sm:$0x3]
    %v1005 = vperm.slane %v1003, 0
    %v1006 = vperm.slane %v1003, 1
    %v1009 = vmul.f32 %v974, %v1005
    %v1010 = vmul.f32 %v1000, %v1006
    %v1011 = vld [vmem:[%s6] sm:$0x3]
    %v1013 = vperm.slane %v1011, 0
    %v1014 = vperm.slane %v1011, 1
    %v1017 = vadd.f32 %v1009, %v1013
    %v1018 = vadd.f32 %v1010, %v1014
    %v1019 = vmax.f32 %v1017, 0.0
    %v1020 = vmax.f32 %v1018, 0.0
    %v1021 = vpack.c.bf16 %v1019, %v1019
    %v1022 = vpack.c.bf16 %v1020, %v1020
    %v1023 = vld [vmem:[#allocation6] sm:$0xff]
    %v1024 = vld [vmem:[#allocation6 + $0x8] sm:$0xff]
    %v1025 = vld [vmem:[#allocation6 + $0x10] sm:$0xff]
    %v1026 = vld [vmem:[#allocation6 + $0x18] sm:$0xff]
    %v1027 = vld [vmem:[#allocation6 + $0x20] sm:$0xff]
    %v1028 = vld [vmem:[#allocation6 + $0x28] sm:$0xff]
    %v1029 = vld [vmem:[#allocation6 + $0x30] sm:$0xff]
    %v1030 = vld [vmem:[#allocation6 + $0x38] sm:$0xff]
    %v1031 = vld [vmem:[#allocation6 + $0x40] sm:$0xff]
    %v1032 = vld [vmem:[#allocation6 + $0x48] sm:$0xff]
    %v1033 = vld [vmem:[#allocation6 + $0x50] sm:$0xff]
    %v1034 = vld [vmem:[#allocation6 + $0x58] sm:$0xff]
    %v1035 = vld [vmem:[#allocation6 + $0x60] sm:$0xff]
    %v1036 = vld [vmem:[#allocation6 + $0x68] sm:$0xff]
    %v1037 = vld [vmem:[#allocation6 + $0x70] sm:$0xff]
    %v1038 = vld [vmem:[#allocation6 + $0x78] sm:$0xff]
    %v1039 = vld [vmem:[#allocation6 + $0x80] sm:$0xff]
    %v1040 = vld [vmem:[#allocation6 + $0x88] sm:$0xff]
    %v1041 = vld [vmem:[#allocation6 + $0x90] sm:$0xff]
    %v1042 = vld [vmem:[#allocation6 + $0x98] sm:$0xff]
    %v1043 = vld [vmem:[#allocation6 + $0xa0] sm:$0xff]
    %v1044 = vld [vmem:[#allocation6 + $0xa8] sm:$0xff]
    %v1045 = vld [vmem:[#allocation6 + $0xb0] sm:$0xff]
    %v1046 = vld [vmem:[#allocation6 + $0xb8] sm:$0xff]
    %v1047 = vld [vmem:[#allocation6 + $0xc0] sm:$0xff]
    %v1048 = vld [vmem:[#allocation6 + $0xc8] sm:$0xff]
    %v1049 = vld [vmem:[#allocation6 + $0xd0] sm:$0xff]
    %v1050 = vld [vmem:[#allocation6 + $0xd8] sm:$0xff]
    %v1051 = vld [vmem:[#allocation6 + $0xe0] sm:$0xff]
    %v1052 = vld [vmem:[#allocation6 + $0xe8] sm:$0xff]
    %v1053 = vld [vmem:[#allocation6 + $0xf0] sm:$0xff]
    %v1054 = vld [vmem:[#allocation6 + $0xf8] sm:$0xff]
    %v1087 = vunpack.c.l.b16 %v1023
    %v1088 = vunpack.c.h.b16 %v1023
    %v1089 = vunpack.c.l.b16 %v1024
    %v1090 = vunpack.c.h.b16 %v1024
    %v1091 = vunpack.c.l.b16 %v1025
    %v1092 = vunpack.c.h.b16 %v1025
    %v1093 = vunpack.c.l.b16 %v1026
    %v1094 = vunpack.c.h.b16 %v1026
    %v1095 = vunpack.c.l.b16 %v1027
    %v1096 = vunpack.c.h.b16 %v1027
    %v1097 = vunpack.c.l.b16 %v1028
    %v1098 = vunpack.c.h.b16 %v1028
    %v1099 = vunpack.c.l.b16 %v1029
    %v1100 = vunpack.c.h.b16 %v1029
    %v1101 = vunpack.c.l.b16 %v1030
    %v1102 = vunpack.c.h.b16 %v1030
    %v1103 = vunpack.c.l.b16 %v1031
    %v1104 = vunpack.c.h.b16 %v1031
    %v1105 = vunpack.c.l.b16 %v1032
    %v1106 = vunpack.c.h.b16 %v1032
    %v1107 = vunpack.c.l.b16 %v1033
    %v1108 = vunpack.c.h.b16 %v1033
    %v1109 = vunpack.c.l.b16 %v1034
    %v1110 = vunpack.c.h.b16 %v1034
    %v1111 = vunpack.c.l.b16 %v1035
    %v1112 = vunpack.c.h.b16 %v1035
    %v1113 = vunpack.c.l.b16 %v1036
    %v1114 = vunpack.c.h.b16 %v1036
    %v1115 = vunpack.c.l.b16 %v1037
    %v1116 = vunpack.c.h.b16 %v1037
    %v1117 = vunpack.c.l.b16 %v1038
    %v1118 = vunpack.c.h.b16 %v1038
    %v1119 = vunpack.c.l.b16 %v1039
    %v1120 = vunpack.c.h.b16 %v1039
    %v1121 = vunpack.c.l.b16 %v1040
    %v1122 = vunpack.c.h.b16 %v1040
    %v1123 = vunpack.c.l.b16 %v1041
    %v1124 = vunpack.c.h.b16 %v1041
    %v1125 = vunpack.c.l.b16 %v1042
    %v1126 = vunpack.c.h.b16 %v1042
    %v1127 = vunpack.c.l.b16 %v1043
    %v1128 = vunpack.c.h.b16 %v1043
    %v1129 = vunpack.c.l.b16 %v1044
    %v1130 = vunpack.c.h.b16 %v1044
    %v1131 = vunpack.c.l.b16 %v1045
    %v1132 = vunpack.c.h.b16 %v1045
    %v1133 = vunpack.c.l.b16 %v1046
    %v1134 = vunpack.c.h.b16 %v1046
    %v1135 = vunpack.c.l.b16 %v1047
    %v1136 = vunpack.c.h.b16 %v1047
    %v1137 = vunpack.c.l.b16 %v1048
    %v1138 = vunpack.c.h.b16 %v1048
    %v1139 = vunpack.c.l.b16 %v1049
    %v1140 = vunpack.c.h.b16 %v1049
    %v1141 = vunpack.c.l.b16 %v1050
    %v1142 = vunpack.c.h.b16 %v1050
    %v1143 = vunpack.c.l.b16 %v1051
    %v1144 = vunpack.c.h.b16 %v1051
    %v1145 = vunpack.c.l.b16 %v1052
    %v1146 = vunpack.c.h.b16 %v1052
    %v1147 = vunpack.c.l.b16 %v1053
    %v1148 = vunpack.c.h.b16 %v1053
    %v1149 = vunpack.c.l.b16 %v1054
    %v1150 = vunpack.c.h.b16 %v1054
    %v1151 = vpack.c.b16 %v1089, %v1087
    %v1152 = vpack.c.b16 %v1090, %v1088
    %v1153 = vpack.c.b16 %v1093, %v1091
    %v1154 = vpack.c.b16 %v1094, %v1092
    %v1155 = vpack.c.b16 %v1097, %v1095
    %v1156 = vpack.c.b16 %v1098, %v1096
    %v1157 = vpack.c.b16 %v1101, %v1099
    %v1158 = vpack.c.b16 %v1102, %v1100
    %v1159 = vpack.c.b16 %v1105, %v1103
    %v1160 = vpack.c.b16 %v1106, %v1104
    %v1161 = vpack.c.b16 %v1109, %v1107
    %v1162 = vpack.c.b16 %v1110, %v1108
    %v1163 = vpack.c.b16 %v1113, %v1111
    %v1164 = vpack.c.b16 %v1114, %v1112
    %v1165 = vpack.c.b16 %v1117, %v1115
    %v1166 = vpack.c.b16 %v1118, %v1116
    %v1167 = vpack.c.b16 %v1121, %v1119
    %v1168 = vpack.c.b16 %v1122, %v1120
    %v1169 = vpack.c.b16 %v1125, %v1123
    %v1170 = vpack.c.b16 %v1126, %v1124
    %v1171 = vpack.c.b16 %v1129, %v1127
    %v1172 = vpack.c.b16 %v1130, %v1128
    %v1173 = vpack.c.b16 %v1133, %v1131
    %v1174 = vpack.c.b16 %v1134, %v1132
    %v1175 = vpack.c.b16 %v1137, %v1135
    %v1176 = vpack.c.b16 %v1138, %v1136
    %v1177 = vpack.c.b16 %v1141, %v1139
    %v1178 = vpack.c.b16 %v1142, %v1140
    %v1179 = vpack.c.b16 %v1145, %v1143
    %v1180 = vpack.c.b16 %v1146, %v1144
    %v1181 = vpack.c.b16 %v1149, %v1147
    %v1182 = vpack.c.b16 %v1150, %v1148
    %1215 = vmatpush.bf16.msra.mxu0 %v1165
    %1216 = vmatpush.bf16.msra.mxu0 %v1163
    %1217 = vmatpush.bf16.msra.mxu0 %v1161
    %1218 = vmatpush.bf16.msra.mxu0 %v1159
    %1219 = vmatpush.bf16.msra.mxu0 %v1157
    %1220 = vmatpush.bf16.msra.mxu0 %v1155
    %1221 = vmatpush.bf16.msra.mxu0 %v1153
    %1222 = vmatpush.bf16.msra.mxu0 %v1151
    %1223 = vmatmul.bf16.gmra.mxu0 %v1021
    %v1224 = vpop.f32.mrf.mxu0
    %v1225 = vadd.f32 0.0, %v1224
    %v1226 = vpop.f32.mrf.mxu0
    %1227 = vdwg.mxu0
    %1228 = vmatpush.bf16.msra.mxu0 %v1181
    %1229 = vmatpush.bf16.msra.mxu0 %v1179
    %1230 = vmatpush.bf16.msra.mxu0 %v1177
    %1231 = vmatpush.bf16.msra.mxu0 %v1175
    %1232 = vmatpush.bf16.msra.mxu0 %v1173
    %1233 = vmatpush.bf16.msra.mxu0 %v1171
    %1234 = vmatpush.bf16.msra.mxu0 %v1169
    %1235 = vmatpush.bf16.msra.mxu0 %v1167
    %1236 = vmatmul.bf16.gmra.mxu0 %v1022
    %v1237 = vpop.f32.mrf.mxu0
    %v1238 = vadd.f32 %v1225, %v1237
    %v1239 = vpop.f32.mrf.mxu0
    %1240 = vdwg.mxu0
    %1241 = vmatpush.bf16.msra.mxu0 %v1166
    %1242 = vmatpush.bf16.msra.mxu0 %v1164
    %1243 = vmatpush.bf16.msra.mxu0 %v1162
    %1244 = vmatpush.bf16.msra.mxu0 %v1160
    %1245 = vmatpush.bf16.msra.mxu0 %v1158
    %1246 = vmatpush.bf16.msra.mxu0 %v1156
    %1247 = vmatpush.bf16.msra.mxu0 %v1154
    %1248 = vmatpush.bf16.msra.mxu0 %v1152
    %1249 = vmatmul.bf16.gmra.mxu0 %v1021
    %v1250 = vpop.f32.mrf.mxu0
    %v1251 = vadd.f32 0.0, %v1250
    %v1252 = vpop.f32.mrf.mxu0
    %1253 = vdwg.mxu0
    %1254 = vmatpush.bf16.msra.mxu0 %v1182
    %1255 = vmatpush.bf16.msra.mxu0 %v1180
    %1256 = vmatpush.bf16.msra.mxu0 %v1178
    %1257 = vmatpush.bf16.msra.mxu0 %v1176
    %1258 = vmatpush.bf16.msra.mxu0 %v1174
    %1259 = vmatpush.bf16.msra.mxu0 %v1172
    %1260 = vmatpush.bf16.msra.mxu0 %v1170
    %1261 = vmatpush.bf16.msra.mxu0 %v1168
    %1262 = vmatmul.bf16.gmra.mxu0 %v1022
    %v1263 = vpop.f32.mrf.mxu0
    %v1264 = vadd.f32 %v1251, %v1263
    %v1265 = vpop.f32.mrf.mxu0
    %1266 = vdwg.mxu0
    %v1267 = vld [vmem:[#allocation7] sm:$0x3]
    %v1269 = vperm.slane %v1267, 0
    %v1270 = vperm.slane %v1267, 1
    %v1273 = vmul.f32 %v1238, %v1269
    %v1274 = vmul.f32 %v1264, %v1270
    %v1275 = vld [vmem:[#allocation9] sm:$0x3]
    %v1277 = vperm.slane %v1275, 0
    %v1278 = vperm.slane %v1275, 1
    %v1281 = vadd.f32 %v1273, %v1277
    %v1282 = vadd.f32 %v1274, %v1278
    %v1283 = vmax.f32 %v1281, 0.0
    %v1284 = vmax.f32 %v1282, 0.0
    %v1285 = vpack.c.bf16 %v1284, %v1283
    %v1287 = vunpack.c.l.b16 %v1285
    %v1288 = vunpack.c.h.b16 %v1285
    %v1289 = vpack.c.b16 %v1287, %v1287
    %v1290 = vpack.c.b16 %v1288, %v1288
    %v1292 = vshrl.u32 %v1289, 16
    %v1294 = vshll.u32 %v1289, 16
    %v1296 = vrot.slane %v1294, 1
    %v1297 = vor.u32 %v1292, %v1296
    %v1299 = vshrl.u32 %v1290, 16
    %v1301 = vshll.u32 %v1290, 16
    %v1303 = vrot.slane %v1301, 1
    %v1304 = vor.u32 %v1299, %v1303
    %v1307 = vsel %vm696, %v1297, 0
    %v1308 = vsel %vm696, %v1304, 0
    %v1309 = vrot.slane %v1292, 7
    %v1310 = vor.u32 %v1309, %v1294
    %v1311 = vrot.slane %v1299, 7
    %v1312 = vor.u32 %v1311, %v1301
    %v1315 = vsel %vm707, 0, %v1310
    %v1316 = vsel %vm707, 0, %v1312
    %v1317 = vunpack.c.l.bf16 %v1285
    %v1318 = vunpack.c.h.bf16 %v1285
    %v1319 = vmul.f32 %v1317, %v725
    %v1320 = vmul.f32 %v1318, %v726
    %v1321 = vpack.c.bf16 %v1320, %v1319
    %v1322 = vunpack.c.l.bf16 %v1307
    %v1323 = vunpack.c.l.bf16 %v1308
    %v1324 = vmul.f32 %v1322, %v732
    %v1325 = vmul.f32 %v1323, %v733
    %v1326 = vpack.c.bf16 %v1325, %v1324
    %v1327 = vunpack.c.l.bf16 %v1321
    %v1328 = vunpack.c.h.bf16 %v1321
    %v1329 = vunpack.c.l.bf16 %v1326
    %v1330 = vunpack.c.h.bf16 %v1326
    %v1331 = vadd.f32 %v1327, %v1329
    %v1332 = vadd.f32 %v1328, %v1330
    %v1333 = vpack.c.bf16 %v1332, %v1331
    %v1334 = vunpack.c.l.bf16 %v1315
    %v1335 = vunpack.c.l.bf16 %v1316
    %v1336 = vmul.f32 %v1334, %v746
    %v1337 = vmul.f32 %v1335, %v747
    %v1338 = vpack.c.bf16 %v1337, %v1336
    %v1339 = vunpack.c.l.bf16 %v1333
    %v1340 = vunpack.c.h.bf16 %v1333
    %v1341 = vunpack.c.l.bf16 %v1338
    %v1342 = vunpack.c.h.bf16 %v1338
    %v1343 = vadd.f32 %v1339, %v1341
    %v1344 = vadd.f32 %v1340, %v1342
    %v1345 = vpack.c.bf16 %v1343, %v1343
    %v1346 = vpack.c.bf16 %v1344, %v1344
    %v1347 = vld [vmem:[#allocation10] sm:$0xff]
    %v1348 = vld [vmem:[#allocation10 + $0x8] sm:$0xff]
    %v1349 = vld [vmem:[#allocation10 + $0x10] sm:$0xff]
    %v1350 = vld [vmem:[#allocation10 + $0x18] sm:$0xff]
    %v1351 = vld [vmem:[#allocation10 + $0x20] sm:$0xff]
    %v1352 = vld [vmem:[#allocation10 + $0x28] sm:$0xff]
    %v1353 = vld [vmem:[#allocation10 + $0x30] sm:$0xff]
    %v1354 = vld [vmem:[#allocation10 + $0x38] sm:$0xff]
    %v1355 = vld [vmem:[#allocation10 + $0x40] sm:$0xff]
    %v1356 = vld [vmem:[#allocation10 + $0x48] sm:$0xff]
    %v1357 = vld [vmem:[#allocation10 + $0x50] sm:$0xff]
    %v1358 = vld [vmem:[#allocation10 + $0x58] sm:$0xff]
    %v1359 = vld [vmem:[#allocation10 + $0x60] sm:$0xff]
    %v1360 = vld [vmem:[#allocation10 + $0x68] sm:$0xff]
    %v1361 = vld [vmem:[#allocation10 + $0x70] sm:$0xff]
    %v1362 = vld [vmem:[#allocation10 + $0x78] sm:$0xff]
    %v1363 = vld [vmem:[#allocation10 + $0x80] sm:$0xff]
    %v1364 = vld [vmem:[#allocation10 + $0x88] sm:$0xff]
    %v1365 = vld [vmem:[#allocation10 + $0x90] sm:$0xff]
    %v1366 = vld [vmem:[#allocation10 + $0x98] sm:$0xff]
    %v1367 = vld [vmem:[#allocation10 + $0xa0] sm:$0xff]
    %v1368 = vld [vmem:[#allocation10 + $0xa8] sm:$0xff]
    %v1369 = vld [vmem:[#allocation10 + $0xb0] sm:$0xff]
    %v1370 = vld [vmem:[#allocation10 + $0xb8] sm:$0xff]
    %v1371 = vld [vmem:[#allocation10 + $0xc0] sm:$0xff]
    %v1372 = vld [vmem:[#allocation10 + $0xc8] sm:$0xff]
    %v1373 = vld [vmem:[#allocation10 + $0xd0] sm:$0xff]
    %v1374 = vld [vmem:[#allocation10 + $0xd8] sm:$0xff]
    %v1375 = vld [vmem:[#allocation10 + $0xe0] sm:$0xff]
    %v1376 = vld [vmem:[#allocation10 + $0xe8] sm:$0xff]
    %v1377 = vld [vmem:[#allocation10 + $0xf0] sm:$0xff]
    %v1378 = vld [vmem:[#allocation10 + $0xf8] sm:$0xff]
    %v1411 = vunpack.c.l.b16 %v1347
    %v1412 = vunpack.c.h.b16 %v1347
    %v1413 = vunpack.c.l.b16 %v1348
    %v1414 = vunpack.c.h.b16 %v1348
    %v1415 = vunpack.c.l.b16 %v1349
    %v1416 = vunpack.c.h.b16 %v1349
    %v1417 = vunpack.c.l.b16 %v1350
    %v1418 = vunpack.c.h.b16 %v1350
    %v1419 = vunpack.c.l.b16 %v1351
    %v1420 = vunpack.c.h.b16 %v1351
    %v1421 = vunpack.c.l.b16 %v1352
    %v1422 = vunpack.c.h.b16 %v1352
    %v1423 = vunpack.c.l.b16 %v1353
    %v1424 = vunpack.c.h.b16 %v1353
    %v1425 = vunpack.c.l.b16 %v1354
    %v1426 = vunpack.c.h.b16 %v1354
    %v1427 = vunpack.c.l.b16 %v1355
    %v1428 = vunpack.c.h.b16 %v1355
    %v1429 = vunpack.c.l.b16 %v1356
    %v1430 = vunpack.c.h.b16 %v1356
    %v1431 = vunpack.c.l.b16 %v1357
    %v1432 = vunpack.c.h.b16 %v1357
    %v1433 = vunpack.c.l.b16 %v1358
    %v1434 = vunpack.c.h.b16 %v1358
    %v1435 = vunpack.c.l.b16 %v1359
    %v1436 = vunpack.c.h.b16 %v1359
    %v1437 = vunpack.c.l.b16 %v1360
    %v1438 = vunpack.c.h.b16 %v1360
    %v1439 = vunpack.c.l.b16 %v1361
    %v1440 = vunpack.c.h.b16 %v1361
    %v1441 = vunpack.c.l.b16 %v1362
    %v1442 = vunpack.c.h.b16 %v1362
    %v1443 = vunpack.c.l.b16 %v1363
    %v1444 = vunpack.c.h.b16 %v1363
    %v1445 = vunpack.c.l.b16 %v1364
    %v1446 = vunpack.c.h.b16 %v1364
    %v1447 = vunpack.c.l.b16 %v1365
    %v1448 = vunpack.c.h.b16 %v1365
    %v1449 = vunpack.c.l.b16 %v1366
    %v1450 = vunpack.c.h.b16 %v1366
    %v1451 = vunpack.c.l.b16 %v1367
    %v1452 = vunpack.c.h.b16 %v1367
    %v1453 = vunpack.c.l.b16 %v1368
    %v1454 = vunpack.c.h.b16 %v1368
    %v1455 = vunpack.c.l.b16 %v1369
    %v1456 = vunpack.c.h.b16 %v1369
    %v1457 = vunpack.c.l.b16 %v1370
    %v1458 = vunpack.c.h.b16 %v1370
    %v1459 = vunpack.c.l.b16 %v1371
    %v1460 = vunpack.c.h.b16 %v1371
    %v1461 = vunpack.c.l.b16 %v1372
    %v1462 = vunpack.c.h.b16 %v1372
    %v1463 = vunpack.c.l.b16 %v1373
    %v1464 = vunpack.c.h.b16 %v1373
    %v1465 = vunpack.c.l.b16 %v1374
    %v1466 = vunpack.c.h.b16 %v1374
    %v1467 = vunpack.c.l.b16 %v1375
    %v1468 = vunpack.c.h.b16 %v1375
    %v1469 = vunpack.c.l.b16 %v1376
    %v1470 = vunpack.c.h.b16 %v1376
    %v1471 = vunpack.c.l.b16 %v1377
    %v1472 = vunpack.c.h.b16 %v1377
    %v1473 = vunpack.c.l.b16 %v1378
    %v1474 = vunpack.c.h.b16 %v1378
    %v1475 = vpack.c.b16 %v1413, %v1411
    %v1476 = vpack.c.b16 %v1414, %v1412
    %v1477 = vpack.c.b16 %v1417, %v1415
    %v1478 = vpack.c.b16 %v1418, %v1416
    %v1479 = vpack.c.b16 %v1421, %v1419
    %v1480 = vpack.c.b16 %v1422, %v1420
    %v1481 = vpack.c.b16 %v1425, %v1423
    %v1482 = vpack.c.b16 %v1426, %v1424
    %v1483 = vpack.c.b16 %v1429, %v1427
    %v1484 = vpack.c.b16 %v1430, %v1428
    %v1485 = vpack.c.b16 %v1433, %v1431
    %v1486 = vpack.c.b16 %v1434, %v1432
    %v1487 = vpack.c.b16 %v1437, %v1435
    %v1488 = vpack.c.b16 %v1438, %v1436
    %v1489 = vpack.c.b16 %v1441, %v1439
    %v1490 = vpack.c.b16 %v1442, %v1440
    %v1491 = vpack.c.b16 %v1445, %v1443
    %v1492 = vpack.c.b16 %v1446, %v1444
    %v1493 = vpack.c.b16 %v1449, %v1447
    %v1494 = vpack.c.b16 %v1450, %v1448
    %v1495 = vpack.c.b16 %v1453, %v1451
    %v1496 = vpack.c.b16 %v1454, %v1452
    %v1497 = vpack.c.b16 %v1457, %v1455
    %v1498 = vpack.c.b16 %v1458, %v1456
    %v1499 = vpack.c.b16 %v1461, %v1459
    %v1500 = vpack.c.b16 %v1462, %v1460
    %v1501 = vpack.c.b16 %v1465, %v1463
    %v1502 = vpack.c.b16 %v1466, %v1464
    %v1503 = vpack.c.b16 %v1469, %v1467
    %v1504 = vpack.c.b16 %v1470, %v1468
    %v1505 = vpack.c.b16 %v1473, %v1471
    %v1506 = vpack.c.b16 %v1474, %v1472
    %1539 = vmatpush.bf16.msra.mxu0 %v1489
    %1540 = vmatpush.bf16.msra.mxu0 %v1487
    %1541 = vmatpush.bf16.msra.mxu0 %v1485
    %1542 = vmatpush.bf16.msra.mxu0 %v1483
    %1543 = vmatpush.bf16.msra.mxu0 %v1481
    %1544 = vmatpush.bf16.msra.mxu0 %v1479
    %1545 = vmatpush.bf16.msra.mxu0 %v1477
    %1546 = vmatpush.bf16.msra.mxu0 %v1475
    %1547 = vmatmul.bf16.gmra.mxu0 %v1345
    %v1548 = vpop.f32.mrf.mxu0
    %v1549 = vadd.f32 0.0, %v1548
    %v1550 = vpop.f32.mrf.mxu0
    %1551 = vdwg.mxu0
    %1552 = vmatpush.bf16.msra.mxu0 %v1505
    %1553 = vmatpush.bf16.msra.mxu0 %v1503
    %1554 = vmatpush.bf16.msra.mxu0 %v1501
    %1555 = vmatpush.bf16.msra.mxu0 %v1499
    %1556 = vmatpush.bf16.msra.mxu0 %v1497
    %1557 = vmatpush.bf16.msra.mxu0 %v1495
    %1558 = vmatpush.bf16.msra.mxu0 %v1493
    %1559 = vmatpush.bf16.msra.mxu0 %v1491
    %1560 = vmatmul.bf16.gmra.mxu0 %v1346
    %v1561 = vpop.f32.mrf.mxu0
    %v1562 = vadd.f32 %v1549, %v1561
    %v1563 = vpop.f32.mrf.mxu0
    %1564 = vdwg.mxu0
    %1565 = vmatpush.bf16.msra.mxu0 %v1490
    %1566 = vmatpush.bf16.msra.mxu0 %v1488
    %1567 = vmatpush.bf16.msra.mxu0 %v1486
    %1568 = vmatpush.bf16.msra.mxu0 %v1484
    %1569 = vmatpush.bf16.msra.mxu0 %v1482
    %1570 = vmatpush.bf16.msra.mxu0 %v1480
    %1571 = vmatpush.bf16.msra.mxu0 %v1478
    %1572 = vmatpush.bf16.msra.mxu0 %v1476
    %1573 = vmatmul.bf16.gmra.mxu0 %v1345
    %v1574 = vpop.f32.mrf.mxu0
    %v1575 = vadd.f32 0.0, %v1574
    %v1576 = vpop.f32.mrf.mxu0
    %1577 = vdwg.mxu0
    %1578 = vmatpush.bf16.msra.mxu0 %v1506
    %1579 = vmatpush.bf16.msra.mxu0 %v1504
    %1580 = vmatpush.bf16.msra.mxu0 %v1502
    %1581 = vmatpush.bf16.msra.mxu0 %v1500
    %1582 = vmatpush.bf16.msra.mxu0 %v1498
    %1583 = vmatpush.bf16.msra.mxu0 %v1496
    %1584 = vmatpush.bf16.msra.mxu0 %v1494
    %1585 = vmatpush.bf16.msra.mxu0 %v1492
    %1586 = vmatmul.bf16.gmra.mxu0 %v1346
    %v1587 = vpop.f32.mrf.mxu0
    %v1588 = vadd.f32 %v1575, %v1587
    %v1589 = vpop.f32.mrf.mxu0
    %1590 = vdwg.mxu0
    %v1591 = vld [vmem:[#allocation12] sm:$0x3]
    %v1593 = vperm.slane %v1591, 0
    %v1594 = vperm.slane %v1591, 1
    %v1597 = vmul.f32 %v1562, %v1593
    %v1598 = vmul.f32 %v1588, %v1594
    %v1599 = vld [vmem:[#allocation13] sm:$0x3]
    %v1601 = vperm.slane %v1599, 0
    %v1602 = vperm.slane %v1599, 1
    %v1605 = vadd.f32 %v1597, %v1601
    %v1606 = vadd.f32 %v1598, %v1602
    %v1607 = vmax.f32 %v1605, 0.0
    %v1608 = vmax.f32 %v1606, 0.0
    %v1609 = vpack.c.bf16 %v1607, %v1607
    %v1610 = vpack.c.bf16 %v1608, %v1608
    %v1611 = vld [vmem:[#allocation15] sm:$0xff]
    %v1612 = vld [vmem:[#allocation15 + $0x8] sm:$0xff]
    %v1613 = vld [vmem:[#allocation15 + $0x10] sm:$0xff]
    %v1614 = vld [vmem:[#allocation15 + $0x18] sm:$0xff]
    %v1615 = vld [vmem:[#allocation15 + $0x20] sm:$0xff]
    %v1616 = vld [vmem:[#allocation15 + $0x28] sm:$0xff]
    %v1617 = vld [vmem:[#allocation15 + $0x30] sm:$0xff]
    %v1618 = vld [vmem:[#allocation15 + $0x38] sm:$0xff]
    %v1619 = vld [vmem:[#allocation15 + $0x40] sm:$0xff]
    %v1620 = vld [vmem:[#allocation15 + $0x48] sm:$0xff]
    %v1621 = vld [vmem:[#allocation15 + $0x50] sm:$0xff]
    %v1622 = vld [vmem:[#allocation15 + $0x58] sm:$0xff]
    %v1623 = vld [vmem:[#allocation15 + $0x60] sm:$0xff]
    %v1624 = vld [vmem:[#allocation15 + $0x68] sm:$0xff]
    %v1625 = vld [vmem:[#allocation15 + $0x70] sm:$0xff]
    %v1626 = vld [vmem:[#allocation15 + $0x78] sm:$0xff]
    %v1627 = vld [vmem:[#allocation15 + $0x80] sm:$0xff]
    %v1628 = vld [vmem:[#allocation15 + $0x88] sm:$0xff]
    %v1629 = vld [vmem:[#allocation15 + $0x90] sm:$0xff]
    %v1630 = vld [vmem:[#allocation15 + $0x98] sm:$0xff]
    %v1631 = vld [vmem:[#allocation15 + $0xa0] sm:$0xff]
    %v1632 = vld [vmem:[#allocation15 + $0xa8] sm:$0xff]
    %v1633 = vld [vmem:[#allocation15 + $0xb0] sm:$0xff]
    %v1634 = vld [vmem:[#allocation15 + $0xb8] sm:$0xff]
    %v1635 = vld [vmem:[#allocation15 + $0xc0] sm:$0xff]
    %v1636 = vld [vmem:[#allocation15 + $0xc8] sm:$0xff]
    %v1637 = vld [vmem:[#allocation15 + $0xd0] sm:$0xff]
    %v1638 = vld [vmem:[#allocation15 + $0xd8] sm:$0xff]
    %v1639 = vld [vmem:[#allocation15 + $0xe0] sm:$0xff]
    %v1640 = vld [vmem:[#allocation15 + $0xe8] sm:$0xff]
    %v1641 = vld [vmem:[#allocation15 + $0xf0] sm:$0xff]
    %v1642 = vld [vmem:[#allocation15 + $0xf8] sm:$0xff]
    %v1675 = vunpack.c.l.b16 %v1611
    %v1676 = vunpack.c.h.b16 %v1611
    %v1677 = vunpack.c.l.b16 %v1612
    %v1678 = vunpack.c.h.b16 %v1612
    %v1679 = vunpack.c.l.b16 %v1613
    %v1680 = vunpack.c.h.b16 %v1613
    %v1681 = vunpack.c.l.b16 %v1614
    %v1682 = vunpack.c.h.b16 %v1614
    %v1683 = vunpack.c.l.b16 %v1615
    %v1684 = vunpack.c.h.b16 %v1615
    %v1685 = vunpack.c.l.b16 %v1616
    %v1686 = vunpack.c.h.b16 %v1616
    %v1687 = vunpack.c.l.b16 %v1617
    %v1688 = vunpack.c.h.b16 %v1617
    %v1689 = vunpack.c.l.b16 %v1618
    %v1690 = vunpack.c.h.b16 %v1618
    %v1691 = vunpack.c.l.b16 %v1619
    %v1692 = vunpack.c.h.b16 %v1619
    %v1693 = vunpack.c.l.b16 %v1620
    %v1694 = vunpack.c.h.b16 %v1620
    %v1695 = vunpack.c.l.b16 %v1621
    %v1696 = vunpack.c.h.b16 %v1621
    %v1697 = vunpack.c.l.b16 %v1622
    %v1698 = vunpack.c.h.b16 %v1622
    %v1699 = vunpack.c.l.b16 %v1623
    %v1700 = vunpack.c.h.b16 %v1623
    %v1701 = vunpack.c.l.b16 %v1624
    %v1702 = vunpack.c.h.b16 %v1624
    %v1703 = vunpack.c.l.b16 %v1625
    %v1704 = vunpack.c.h.b16 %v1625
    %v1705 = vunpack.c.l.b16 %v1626
    %v1706 = vunpack.c.h.b16 %v1626
    %v1707 = vunpack.c.l.b16 %v1627
    %v1708 = vunpack.c.h.b16 %v1627
    %v1709 = vunpack.c.l.b16 %v1628
    %v1710 = vunpack.c.h.b16 %v1628
    %v1711 = vunpack.c.l.b16 %v1629
    %v1712 = vunpack.c.h.b16 %v1629
    %v1713 = vunpack.c.l.b16 %v1630
    %v1714 = vunpack.c.h.b16 %v1630
    %v1715 = vunpack.c.l.b16 %v1631
    %v1716 = vunpack.c.h.b16 %v1631
    %v1717 = vunpack.c.l.b16 %v1632
    %v1718 = vunpack.c.h.b16 %v1632
    %v1719 = vunpack.c.l.b16 %v1633
    %v1720 = vunpack.c.h.b16 %v1633
    %v1721 = vunpack.c.l.b16 %v1634
    %v1722 = vunpack.c.h.b16 %v1634
    %v1723 = vunpack.c.l.b16 %v1635
    %v1724 = vunpack.c.h.b16 %v1635
    %v1725 = vunpack.c.l.b16 %v1636
    %v1726 = vunpack.c.h.b16 %v1636
    %v1727 = vunpack.c.l.b16 %v1637
    %v1728 = vunpack.c.h.b16 %v1637
    %v1729 = vunpack.c.l.b16 %v1638
    %v1730 = vunpack.c.h.b16 %v1638
    %v1731 = vunpack.c.l.b16 %v1639
    %v1732 = vunpack.c.h.b16 %v1639
    %v1733 = vunpack.c.l.b16 %v1640
    %v1734 = vunpack.c.h.b16 %v1640
    %v1735 = vunpack.c.l.b16 %v1641
    %v1736 = vunpack.c.h.b16 %v1641
    %v1737 = vunpack.c.l.b16 %v1642
    %v1738 = vunpack.c.h.b16 %v1642
    %v1739 = vpack.c.b16 %v1677, %v1675
    %v1740 = vpack.c.b16 %v1678, %v1676
    %v1741 = vpack.c.b16 %v1681, %v1679
    %v1742 = vpack.c.b16 %v1682, %v1680
    %v1743 = vpack.c.b16 %v1685, %v1683
    %v1744 = vpack.c.b16 %v1686, %v1684
    %v1745 = vpack.c.b16 %v1689, %v1687
    %v1746 = vpack.c.b16 %v1690, %v1688
    %v1747 = vpack.c.b16 %v1693, %v1691
    %v1748 = vpack.c.b16 %v1694, %v1692
    %v1749 = vpack.c.b16 %v1697, %v1695
    %v1750 = vpack.c.b16 %v1698, %v1696
    %v1751 = vpack.c.b16 %v1701, %v1699
    %v1752 = vpack.c.b16 %v1702, %v1700
    %v1753 = vpack.c.b16 %v1705, %v1703
    %v1754 = vpack.c.b16 %v1706, %v1704
    %v1755 = vpack.c.b16 %v1709, %v1707
    %v1756 = vpack.c.b16 %v1710, %v1708
    %v1757 = vpack.c.b16 %v1713, %v1711
    %v1758 = vpack.c.b16 %v1714, %v1712
    %v1759 = vpack.c.b16 %v1717, %v1715
    %v1760 = vpack.c.b16 %v1718, %v1716
    %v1761 = vpack.c.b16 %v1721, %v1719
    %v1762 = vpack.c.b16 %v1722, %v1720
    %v1763 = vpack.c.b16 %v1725, %v1723
    %v1764 = vpack.c.b16 %v1726, %v1724
    %v1765 = vpack.c.b16 %v1729, %v1727
    %v1766 = vpack.c.b16 %v1730, %v1728
    %v1767 = vpack.c.b16 %v1733, %v1731
    %v1768 = vpack.c.b16 %v1734, %v1732
    %v1769 = vpack.c.b16 %v1737, %v1735
    %v1770 = vpack.c.b16 %v1738, %v1736
    %1803 = vmatpush.bf16.msra.mxu0 %v1753
    %1804 = vmatpush.bf16.msra.mxu0 %v1751
    %1805 = vmatpush.bf16.msra.mxu0 %v1749
    %1806 = vmatpush.bf16.msra.mxu0 %v1747
    %1807 = vmatpush.bf16.msra.mxu0 %v1745
    %1808 = vmatpush.bf16.msra.mxu0 %v1743
    %1809 = vmatpush.bf16.msra.mxu0 %v1741
    %1810 = vmatpush.bf16.msra.mxu0 %v1739
    %1811 = vmatmul.bf16.gmra.mxu0 %v1609
    %v1812 = vpop.f32.mrf.mxu0
    %v1813 = vadd.f32 0.0, %v1812
    %v1814 = vpop.f32.mrf.mxu0
    %1815 = vdwg.mxu0
    %1816 = vmatpush.bf16.msra.mxu0 %v1769
    %1817 = vmatpush.bf16.msra.mxu0 %v1767
    %1818 = vmatpush.bf16.msra.mxu0 %v1765
    %1819 = vmatpush.bf16.msra.mxu0 %v1763
    %1820 = vmatpush.bf16.msra.mxu0 %v1761
    %1821 = vmatpush.bf16.msra.mxu0 %v1759
    %1822 = vmatpush.bf16.msra.mxu0 %v1757
    %1823 = vmatpush.bf16.msra.mxu0 %v1755
    %1824 = vmatmul.bf16.gmra.mxu0 %v1610
    %v1825 = vpop.f32.mrf.mxu0
    %v1826 = vadd.f32 %v1813, %v1825
    %v1827 = vpop.f32.mrf.mxu0
    %1828 = vdwg.mxu0
    %1829 = vmatpush.bf16.msra.mxu0 %v1754
    %1830 = vmatpush.bf16.msra.mxu0 %v1752
    %1831 = vmatpush.bf16.msra.mxu0 %v1750
    %1832 = vmatpush.bf16.msra.mxu0 %v1748
    %1833 = vmatpush.bf16.msra.mxu0 %v1746
    %1834 = vmatpush.bf16.msra.mxu0 %v1744
    %1835 = vmatpush.bf16.msra.mxu0 %v1742
    %1836 = vmatpush.bf16.msra.mxu0 %v1740
    %1837 = vmatmul.bf16.gmra.mxu0 %v1609
    %v1838 = vpop.f32.mrf.mxu0
    %v1839 = vadd.f32 0.0, %v1838
    %v1840 = vpop.f32.mrf.mxu0
    %1841 = vdwg.mxu0
    %1842 = vmatpush.bf16.msra.mxu0 %v1770
    %1843 = vmatpush.bf16.msra.mxu0 %v1768
    %1844 = vmatpush.bf16.msra.mxu0 %v1766
    %1845 = vmatpush.bf16.msra.mxu0 %v1764
    %1846 = vmatpush.bf16.msra.mxu0 %v1762
    %1847 = vmatpush.bf16.msra.mxu0 %v1760
    %1848 = vmatpush.bf16.msra.mxu0 %v1758
    %1849 = vmatpush.bf16.msra.mxu0 %v1756
    %1850 = vmatmul.bf16.gmra.mxu0 %v1610
    %v1851 = vpop.f32.mrf.mxu0
    %v1852 = vadd.f32 %v1839, %v1851
    %v1853 = vpop.f32.mrf.mxu0
    %1854 = vdwg.mxu0
    %v1855 = vld [vmem:[#allocation16] sm:$0x3]
    %v1857 = vperm.slane %v1855, 0
    %v1858 = vperm.slane %v1855, 1
    %v1861 = vmul.f32 %v1826, %v1857
    %v1862 = vmul.f32 %v1852, %v1858
    %v1863 = vld [vmem:[#allocation18] sm:$0x3]
    %v1865 = vperm.slane %v1863, 0
    %v1866 = vperm.slane %v1863, 1
    %v1869 = vadd.f32 %v1861, %v1865
    %v1870 = vadd.f32 %v1862, %v1866
    %v1871 = vmax.f32 %v1869, 0.0
    %v1872 = vmax.f32 %v1870, 0.0
    %v1873 = vpack.c.bf16 %v1872, %v1871
    %v1875 = vunpack.c.l.b16 %v1873
    %v1876 = vunpack.c.h.b16 %v1873
    %v1877 = vpack.c.b16 %v1875, %v1875
    %v1878 = vpack.c.b16 %v1876, %v1876
    %v1880 = vshrl.u32 %v1877, 16
    %v1882 = vshll.u32 %v1877, 16
    %v1884 = vrot.slane %v1882, 1
    %v1885 = vor.u32 %v1880, %v1884
    %v1887 = vshrl.u32 %v1878, 16
    %v1889 = vshll.u32 %v1878, 16
    %v1891 = vrot.slane %v1889, 1
    %v1892 = vor.u32 %v1887, %v1891
    %v1895 = vsel %vm696, %v1885, 0
    %v1896 = vsel %vm696, %v1892, 0
    %v1897 = vrot.slane %v1880, 7
    %v1898 = vor.u32 %v1897, %v1882
    %v1899 = vrot.slane %v1887, 7
    %v1900 = vor.u32 %v1899, %v1889
    %v1903 = vsel %vm707, 0, %v1898
    %v1904 = vsel %vm707, 0, %v1900
    %v1905 = vunpack.c.l.bf16 %v1873
    %v1906 = vunpack.c.h.bf16 %v1873
    %v1907 = vmul.f32 %v1905, %v725
    %v1908 = vmul.f32 %v1906, %v726
    %v1909 = vpack.c.bf16 %v1908, %v1907
    %v1910 = vunpack.c.l.bf16 %v1895
    %v1911 = vunpack.c.l.bf16 %v1896
    %v1912 = vmul.f32 %v1910, %v732
    %v1913 = vmul.f32 %v1911, %v733
    %v1914 = vpack.c.bf16 %v1913, %v1912
    %v1915 = vunpack.c.l.bf16 %v1909
    %v1916 = vunpack.c.h.bf16 %v1909
    %v1917 = vunpack.c.l.bf16 %v1914
    %v1918 = vunpack.c.h.bf16 %v1914
    %v1919 = vadd.f32 %v1915, %v1917
    %v1920 = vadd.f32 %v1916, %v1918
    %v1921 = vpack.c.bf16 %v1920, %v1919
    %v1922 = vunpack.c.l.bf16 %v1903
    %v1923 = vunpack.c.l.bf16 %v1904
    %v1924 = vmul.f32 %v1922, %v746
    %v1925 = vmul.f32 %v1923, %v747
    %v1926 = vpack.c.bf16 %v1925, %v1924
    %v1927 = vunpack.c.l.bf16 %v1921
    %v1928 = vunpack.c.h.bf16 %v1921
    %v1929 = vunpack.c.l.bf16 %v1926
    %v1930 = vunpack.c.h.bf16 %v1926
    %v1931 = vadd.f32 %v1927, %v1929
    %v1932 = vadd.f32 %v1928, %v1930
    %v1933 = vpack.c.bf16 %v1931, %v1931
    %v1934 = vpack.c.bf16 %v1932, %v1932
    %v1935 = vld [vmem:[#allocation19] sm:$0xff]
    %v1936 = vld [vmem:[#allocation19 + $0x8] sm:$0xff]
    %v1937 = vld [vmem:[#allocation19 + $0x10] sm:$0xff]
    %v1938 = vld [vmem:[#allocation19 + $0x18] sm:$0xff]
    %v1939 = vld [vmem:[#allocation19 + $0x20] sm:$0xff]
    %v1940 = vld [vmem:[#allocation19 + $0x28] sm:$0xff]
    %v1941 = vld [vmem:[#allocation19 + $0x30] sm:$0xff]
    %v1942 = vld [vmem:[#allocation19 + $0x38] sm:$0xff]
    %v1943 = vld [vmem:[#allocation19 + $0x40] sm:$0xff]
    %v1944 = vld [vmem:[#allocation19 + $0x48] sm:$0xff]
    %v1945 = vld [vmem:[#allocation19 + $0x50] sm:$0xff]
    %v1946 = vld [vmem:[#allocation19 + $0x58] sm:$0xff]
    %v1947 = vld [vmem:[#allocation19 + $0x60] sm:$0xff]
    %v1948 = vld [vmem:[#allocation19 + $0x68] sm:$0xff]
    %v1949 = vld [vmem:[#allocation19 + $0x70] sm:$0xff]
    %v1950 = vld [vmem:[#allocation19 + $0x78] sm:$0xff]
    %v1951 = vld [vmem:[#allocation19 + $0x80] sm:$0xff]
    %v1952 = vld [vmem:[#allocation19 + $0x88] sm:$0xff]
    %v1953 = vld [vmem:[#allocation19 + $0x90] sm:$0xff]
    %v1954 = vld [vmem:[#allocation19 + $0x98] sm:$0xff]
    %v1955 = vld [vmem:[#allocation19 + $0xa0] sm:$0xff]
    %v1956 = vld [vmem:[#allocation19 + $0xa8] sm:$0xff]
    %v1957 = vld [vmem:[#allocation19 + $0xb0] sm:$0xff]
    %v1958 = vld [vmem:[#allocation19 + $0xb8] sm:$0xff]
    %v1959 = vld [vmem:[#allocation19 + $0xc0] sm:$0xff]
    %v1960 = vld [vmem:[#allocation19 + $0xc8] sm:$0xff]
    %v1961 = vld [vmem:[#allocation19 + $0xd0] sm:$0xff]
    %v1962 = vld [vmem:[#allocation19 + $0xd8] sm:$0xff]
    %v1963 = vld [vmem:[#allocation19 + $0xe0] sm:$0xff]
    %v1964 = vld [vmem:[#allocation19 + $0xe8] sm:$0xff]
    %v1965 = vld [vmem:[#allocation19 + $0xf0] sm:$0xff]
    %v1966 = vld [vmem:[#allocation19 + $0xf8] sm:$0xff]
    %v1999 = vunpack.c.l.b16 %v1935
    %v2000 = vunpack.c.h.b16 %v1935
    %v2001 = vunpack.c.l.b16 %v1936
    %v2002 = vunpack.c.h.b16 %v1936
    %v2003 = vunpack.c.l.b16 %v1937
    %v2004 = vunpack.c.h.b16 %v1937
    %v2005 = vunpack.c.l.b16 %v1938
    %v2006 = vunpack.c.h.b16 %v1938
    %v2007 = vunpack.c.l.b16 %v1939
    %v2008 = vunpack.c.h.b16 %v1939
    %v2009 = vunpack.c.l.b16 %v1940
    %v2010 = vunpack.c.h.b16 %v1940
    %v2011 = vunpack.c.l.b16 %v1941
    %v2012 = vunpack.c.h.b16 %v1941
    %v2013 = vunpack.c.l.b16 %v1942
    %v2014 = vunpack.c.h.b16 %v1942
    %v2015 = vunpack.c.l.b16 %v1943
    %v2016 = vunpack.c.h.b16 %v1943
    %v2017 = vunpack.c.l.b16 %v1944
    %v2018 = vunpack.c.h.b16 %v1944
    %v2019 = vunpack.c.l.b16 %v1945
    %v2020 = vunpack.c.h.b16 %v1945
    %v2021 = vunpack.c.l.b16 %v1946
    %v2022 = vunpack.c.h.b16 %v1946
    %v2023 = vunpack.c.l.b16 %v1947
    %v2024 = vunpack.c.h.b16 %v1947
    %v2025 = vunpack.c.l.b16 %v1948
    %v2026 = vunpack.c.h.b16 %v1948
    %v2027 = vunpack.c.l.b16 %v1949
    %v2028 = vunpack.c.h.b16 %v1949
    %v2029 = vunpack.c.l.b16 %v1950
    %v2030 = vunpack.c.h.b16 %v1950
    %v2031 = vunpack.c.l.b16 %v1951
    %v2032 = vunpack.c.h.b16 %v1951
    %v2033 = vunpack.c.l.b16 %v1952
    %v2034 = vunpack.c.h.b16 %v1952
    %v2035 = vunpack.c.l.b16 %v1953
    %v2036 = vunpack.c.h.b16 %v1953
    %v2037 = vunpack.c.l.b16 %v1954
    %v2038 = vunpack.c.h.b16 %v1954
    %v2039 = vunpack.c.l.b16 %v1955
    %v2040 = vunpack.c.h.b16 %v1955
    %v2041 = vunpack.c.l.b16 %v1956
    %v2042 = vunpack.c.h.b16 %v1956
    %v2043 = vunpack.c.l.b16 %v1957
    %v2044 = vunpack.c.h.b16 %v1957
    %v2045 = vunpack.c.l.b16 %v1958
    %v2046 = vunpack.c.h.b16 %v1958
    %v2047 = vunpack.c.l.b16 %v1959
    %v2048 = vunpack.c.h.b16 %v1959
    %v2049 = vunpack.c.l.b16 %v1960
    %v2050 = vunpack.c.h.b16 %v1960
    %v2051 = vunpack.c.l.b16 %v1961
    %v2052 = vunpack.c.h.b16 %v1961
    %v2053 = vunpack.c.l.b16 %v1962
    %v2054 = vunpack.c.h.b16 %v1962
    %v2055 = vunpack.c.l.b16 %v1963
    %v2056 = vunpack.c.h.b16 %v1963
    %v2057 = vunpack.c.l.b16 %v1964
    %v2058 = vunpack.c.h.b16 %v1964
    %v2059 = vunpack.c.l.b16 %v1965
    %v2060 = vunpack.c.h.b16 %v1965
    %v2061 = vunpack.c.l.b16 %v1966
    %v2062 = vunpack.c.h.b16 %v1966
    %v2063 = vpack.c.b16 %v2001, %v1999
    %v2064 = vpack.c.b16 %v2002, %v2000
    %v2065 = vpack.c.b16 %v2005, %v2003
    %v2066 = vpack.c.b16 %v2006, %v2004
    %v2067 = vpack.c.b16 %v2009, %v2007
    %v2068 = vpack.c.b16 %v2010, %v2008
    %v2069 = vpack.c.b16 %v2013, %v2011
    %v2070 = vpack.c.b16 %v2014, %v2012
    %v2071 = vpack.c.b16 %v2017, %v2015
    %v2072 = vpack.c.b16 %v2018, %v2016
    %v2073 = vpack.c.b16 %v2021, %v2019
    %v2074 = vpack.c.b16 %v2022, %v2020
    %v2075 = vpack.c.b16 %v2025, %v2023
    %v2076 = vpack.c.b16 %v2026, %v2024
    %v2077 = vpack.c.b16 %v2029, %v2027
    %v2078 = vpack.c.b16 %v2030, %v2028
    %v2079 = vpack.c.b16 %v2033, %v2031
    %v2080 = vpack.c.b16 %v2034, %v2032
    %v2081 = vpack.c.b16 %v2037, %v2035
    %v2082 = vpack.c.b16 %v2038, %v2036
    %v2083 = vpack.c.b16 %v2041, %v2039
    %v2084 = vpack.c.b16 %v2042, %v2040
    %v2085 = vpack.c.b16 %v2045, %v2043
    %v2086 = vpack.c.b16 %v2046, %v2044
    %v2087 = vpack.c.b16 %v2049, %v2047
    %v2088 = vpack.c.b16 %v2050, %v2048
    %v2089 = vpack.c.b16 %v2053, %v2051
    %v2090 = vpack.c.b16 %v2054, %v2052
    %v2091 = vpack.c.b16 %v2057, %v2055
    %v2092 = vpack.c.b16 %v2058, %v2056
    %v2093 = vpack.c.b16 %v2061, %v2059
    %v2094 = vpack.c.b16 %v2062, %v2060
    %2127 = vmatpush.bf16.msra.mxu0 %v2077
    %2128 = vmatpush.bf16.msra.mxu0 %v2075
    %2129 = vmatpush.bf16.msra.mxu0 %v2073
    %2130 = vmatpush.bf16.msra.mxu0 %v2071
    %2131 = vmatpush.bf16.msra.mxu0 %v2069
    %2132 = vmatpush.bf16.msra.mxu0 %v2067
    %2133 = vmatpush.bf16.msra.mxu0 %v2065
    %2134 = vmatpush.bf16.msra.mxu0 %v2063
    %2135 = vmatmul.bf16.gmra.mxu0 %v1933
    %v2136 = vpop.f32.mrf.mxu0
    %v2137 = vadd.f32 0.0, %v2136
    %v2138 = vpop.f32.mrf.mxu0
    %2139 = vdwg.mxu0
    %2140 = vmatpush.bf16.msra.mxu0 %v2093
    %2141 = vmatpush.bf16.msra.mxu0 %v2091
    %2142 = vmatpush.bf16.msra.mxu0 %v2089
    %2143 = vmatpush.bf16.msra.mxu0 %v2087
    %2144 = vmatpush.bf16.msra.mxu0 %v2085
    %2145 = vmatpush.bf16.msra.mxu0 %v2083
    %2146 = vmatpush.bf16.msra.mxu0 %v2081
    %2147 = vmatpush.bf16.msra.mxu0 %v2079
    %2148 = vmatmul.bf16.gmra.mxu0 %v1934
    %v2149 = vpop.f32.mrf.mxu0
    %v2150 = vadd.f32 %v2137, %v2149
    %v2151 = vpop.f32.mrf.mxu0
    %2152 = vdwg.mxu0
    %2153 = vmatpush.bf16.msra.mxu0 %v2078
    %2154 = vmatpush.bf16.msra.mxu0 %v2076
    %2155 = vmatpush.bf16.msra.mxu0 %v2074
    %2156 = vmatpush.bf16.msra.mxu0 %v2072
    %2157 = vmatpush.bf16.msra.mxu0 %v2070
    %2158 = vmatpush.bf16.msra.mxu0 %v2068
    %2159 = vmatpush.bf16.msra.mxu0 %v2066
    %2160 = vmatpush.bf16.msra.mxu0 %v2064
    %2161 = vmatmul.bf16.gmra.mxu0 %v1933
    %v2162 = vpop.f32.mrf.mxu0
    %v2163 = vadd.f32 0.0, %v2162
    %v2164 = vpop.f32.mrf.mxu0
    %2165 = vdwg.mxu0
    %2166 = vmatpush.bf16.msra.mxu0 %v2094
    %2167 = vmatpush.bf16.msra.mxu0 %v2092
    %2168 = vmatpush.bf16.msra.mxu0 %v2090
    %2169 = vmatpush.bf16.msra.mxu0 %v2088
    %2170 = vmatpush.bf16.msra.mxu0 %v2086
    %2171 = vmatpush.bf16.msra.mxu0 %v2084
    %2172 = vmatpush.bf16.msra.mxu0 %v2082
    %2173 = vmatpush.bf16.msra.mxu0 %v2080
    %2174 = vmatmul.bf16.gmra.mxu0 %v1934
    %v2175 = vpop.f32.mrf.mxu0
    %v2176 = vadd.f32 %v2163, %v2175
    %v2177 = vpop.f32.mrf.mxu0
    %2178 = vdwg.mxu0
    %v2179 = vld [vmem:[#allocation21] sm:$0x3]
    %v2181 = vperm.slane %v2179, 0
    %v2182 = vperm.slane %v2179, 1
    %v2185 = vmul.f32 %v2150, %v2181
    %v2186 = vmul.f32 %v2176, %v2182
    %v2187 = vld [vmem:[#allocation22] sm:$0x3]
    %v2189 = vperm.slane %v2187, 0
    %v2190 = vperm.slane %v2187, 1
    %v2193 = vadd.f32 %v2185, %v2189
    %v2194 = vadd.f32 %v2186, %v2190
    %v2195 = vadd.f32 %v2193, %v457
    %v2196 = vadd.f32 %v2194, %v458
    %v2197 = vmax.f32 %v2195, 0.0
    %v2198 = vmax.f32 %v2196, 0.0
    %v2199 = vpack.c.bf16 %v2198, %v2197
    %2200 = vst [vmem:[%s26] sm:$0xff] %v2199
    // Predicated region
    $region170: #{gtsnet_forward.5} parent=1 // pred_check
      _
    $region171: #{gtsnet_forward.5} parent=1 // pred_check_branch
      %2202 = sbr.rel (0) target = $region173
    $region172: #{gtsnet_forward.5} parent=1 // pred_region
      _
    $region173: #{gtsnet_forward.5} parent=1 // pred_fallthru
      _
    // Predicated region
    $region174: #{gtsnet_forward.5} parent=1 // pred_check
      _
    $region175: #{gtsnet_forward.5} parent=1 // pred_check_branch
      %2204 = sbr.rel (0) target = $region177
    $region176: #{gtsnet_forward.5} parent=1 // pred_region
      _
    $region177: #{gtsnet_forward.5} parent=1 // pred_fallthru
      _
    %2205 = vsyncpa [#allocation3], 1
    %2206 = vsyncpa [#allocation5], 1
    %2207 = vsyncpa [#allocation8], 1
    %2208 = vsyncpa [#allocation11], 1
    %2209 = vsyncpa [#allocation14], 1
    %2210 = vsyncpa [#allocation17], 1
    %2211 = vsyncpa [#allocation20], 1
    %2212 = vsyncpa [#allocation23], 1
    %2213 = vsyncpa [#allocation26], 1

</llo_original>
